<compile_context>
chip_gen: v6e
topology: v6e:2x2x1
jax: 0.10.0
libtpu: 0.0.40
codegen_flags: <defaults>
</compile_context>

<pallas_src>
import functools
import math

import jax
import jax.numpy as jnp
from jax.experimental import pallas as pl
from jax.experimental.pallas import tpu as pltpu

C_INPUT_DIM = 3
C_OUTPUT_DIM = 1
L_INPUT_DIM = 3          # conv stack (4 valid convs, k=3) maps L=11 -> 3
OUTPUT_DIM = 1
N_STEPS = 10             # forward() hardcodes time-steps 0..9
SEQ_LEN = 11
HID_DIM = 128            # module default is 512; small value for the example run
LIN1 = 512               # hardcoded in the module's linear head
LIN2 = 128
N_LAYERS = 2
LANE = 128

_CONV_CHANNELS = [(C_INPUT_DIM, 16), (16, 32), (32, 16), (16, C_OUTPUT_DIM)]

# TODO(synk): at the real config (HID_DIM=512) store the LSTM/head weights in
# bfloat16 (upcast at the matmul on v5e) and raise vmem_limit_bytes further;
# on v7x the two recurrence directions could also be split across the 2 TCs.


# ---------------------------------------------------------------------------
# Pallas kernel (single fused kernel: conv stack + 2x biLSTM + linear head)
# ---------------------------------------------------------------------------
def _bidir_lstm_layer(gates, whh_f, whh_b, batch, hidden, t_total):
    """One bidirectional LSTM layer with hoisted input projections.

    gates: [T*B, 8H], time-major rows (t*B + b); columns 0:4H are the forward
    direction's input projection (+bias, gate order i,f,g,o), 4H:8H backward.
    Returns (hf_seq, hb_seq): per-timestep hidden states, each a list of
    T arrays of shape [B, H].
    """
    H = hidden
    hf = jnp.zeros((batch, H), jnp.float32)
    cf = jnp.zeros((batch, H), jnp.float32)
    hb = jnp.zeros((batch, H), jnp.float32)
    cb = jnp.zeros((batch, H), jnp.float32)

    def cell(g, c):
        i = jax.nn.sigmoid(g[:, 0 * H:1 * H])
        f = jax.nn.sigmoid(g[:, 1 * H:2 * H])
        gg = jnp.tanh(g[:, 2 * H:3 * H])
        o = jax.nn.sigmoid(g[:, 3 * H:4 * H])
        c_new = f * c + i * gg
        h_new = o * jnp.tanh(c_new)
        return h_new, c_new

    hf_seq = [None] * t_total
    hb_seq = [None] * t_total
    # Forward and backward chains are independent; interleaving them in the
    # same unrolled step lets their recurrent matmuls / EUP ops co-schedule.
    # TODO(synk): at HID_DIM=512 convert this to lax.fori_loop(unroll=True)
    # writing hidden states to a [T, B, 2H] VMEM scratch to bound live ranges.
    for s in range(t_total):
        tf = s
        tb = t_total - 1 - s
        gf = gates[tf * batch:(tf + 1) * batch, 0:4 * H] + jnp.dot(
            hf, whh_f, preferred_element_type=jnp.float32)
        gb = gates[tb * batch:(tb + 1) * batch, 4 * H:8 * H] + jnp.dot(
            hb, whh_b, preferred_element_type=jnp.float32)
        hf, cf = cell(gf, cf)
        hb, cb = cell(gb, cb)
        hf_seq[tf] = hf
        hb_seq[tb] = hb
    return hf_seq, hb_seq


def seq2seq_kernel(x_ref,
                   wa_ref, ba_ref, wb_ref, bb_ref,
                   wih0_ref, b0_ref, whh0f_ref, whh0b_ref,
                   wih1_ref, b1_ref, whh1f_ref, whh1b_ref,
                   wl1_ref, bl1_ref, wl2_ref, bl2_ref, wl3_ref, bl3_ref,
                   out_ref, *, batch, t_total, hidden):
    H = hidden

    # ---- conv stack: 2 precomposed affine matmuls + 2 ReLUs ----
    x = x_ref[...]                                              # [T*B, 33]
    a = jnp.maximum(
        jnp.dot(x, wa_ref[...], preferred_element_type=jnp.float32) + ba_ref[...],
        0.0)                                                    # [T*B, 224]
    seq = jnp.maximum(
        jnp.dot(a, wb_ref[...], preferred_element_type=jnp.float32) + bb_ref[...],
        0.0)                                                    # [T*B, 3]

    # ---- layer 0: hoisted input projection (both dirs, all timesteps) ----
    g0 = jnp.dot(seq, wih0_ref[...],
                 preferred_element_type=jnp.float32) + b0_ref[...]   # [T*B, 8H]
    hf0, hb0 = _bidir_lstm_layer(g0, whh0f_ref[...], whh0b_ref[...],
                                 batch, H, t_total)

    # layer-0 output sequence, time-major [T*B, 2H]
    x1 = jnp.concatenate(
        [jnp.concatenate([hf0[t], hb0[t]], axis=-1) for t in range(t_total)],
        axis=0)

    # ---- layer 1 ----
    g1 = jnp.dot(x1, wih1_ref[...],
                 preferred_element_type=jnp.float32) + b1_ref[...]   # [T*B, 8H]
    hf1, hb1 = _bidir_lstm_layer(g1, whh1f_ref[...], whh1b_ref[...],
                                 batch, H, t_total)

    # forward() only consumes output[:, -1, :] = layer-1 output at t = T-1;
    # unused backward steps of layer 1 are dead code and removed by DCE.
    y = jnp.concatenate([hf1[t_total - 1], hb1[t_total - 1]], axis=-1)  # [B, 2H]

    # ---- linear head (Dropout(p=0.8) is an inference-mode identity) ----
    z = jnp.maximum(
        jnp.dot(y, wl1_ref[...], preferred_element_type=jnp.float32) + bl1_ref[...],
        0.0)
    z = jnp.dot(z, wl2_ref[...], preferred_element_type=jnp.float32) + bl2_ref[...]
    z = jnp.dot(z, wl3_ref[...], preferred_element_type=jnp.float32) + bl3_ref[...]

    # lane-dense store (unmasked vst); wrapper slices column 0.
    out_ref[...] = jnp.broadcast_to(z, (batch, LANE))


# ---------------------------------------------------------------------------
# Parameter initialisation (deterministic, PyTorch-layout tensors)
# ---------------------------------------------------------------------------
def init_params(key):
    params = {"conv": [], "lstm": [], "linear": []}
    keys = iter(jax.random.split(key, 64))

    def uni(k, shape, bound):
        return jax.random.uniform(k, shape, jnp.float32, -bound, bound)

    for cin, cout in _CONV_CHANNELS:
        bound = 1.0 / math.sqrt(cin * 3)
        params["conv"].append((uni(next(keys), (cout, cin, 3), bound),
                               uni(next(keys), (cout,), bound)))

    hidden = HID_DIM
    for layer in range(N_LAYERS):
        in_dim = L_INPUT_DIM if layer == 0 else 2 * hidden
        bound = 1.0 / math.sqrt(hidden)
        dirs = []
        for _ in range(2):  # forward, backward
            dirs.append((uni(next(keys), (4 * hidden, in_dim), bound),
                         uni(next(keys), (4 * hidden, hidden), bound),
                         uni(next(keys), (4 * hidden,), bound),
                         uni(next(keys), (4 * hidden,), bound)))
        params["lstm"].append(dirs)

    for fin, fout in [(2 * hidden, LIN1), (LIN1, LIN2), (LIN2, OUTPUT_DIM)]:
        bound = 1.0 / math.sqrt(fin)
        params["linear"].append((uni(next(keys), (fout, fin), bound),
                                 uni(next(keys), (fout,), bound)))
    return params


# ---------------------------------------------------------------------------
# Wrapper
# ---------------------------------------------------------------------------
def _compose_affine_conv(layers, c_in, l_in):
    """Compose a stack of VALID stride-1 Conv1d layers (no nonlinearity in
    between) into a single affine map on the channels-last-flattened input
    (feature j = l*c_in + c).  Returns (W [l_in*c_in, l_out*c_out], b [1, ...])."""
    n = l_in * c_in
    basis = jnp.eye(n, dtype=jnp.float32).reshape(n, l_in, c_in).transpose(0, 2, 1)
    probe = jnp.concatenate([basis, jnp.zeros((1, c_in, l_in), jnp.float32)], 0)
    y = probe
    for w, b in layers:
        y = jax.lax.conv_general_dilated(
            y, w, window_strides=(1,), padding="VALID",
            dimension_numbers=("NCH", "OIH", "NCH"))
        y = y + b[None, :, None]
    l_out = y.shape[2]
    c_out = y.shape[1]
    y_flat = y.transpose(0, 2, 1).reshape(n + 1, l_out * c_out)
    bias = y_flat[n]
    w_mat = y_flat[:n] - bias[None, :]
    return w_mat, bias.reshape(1, -1)


def seq2seq_forward(x, params):
    B, cin, T, L = x.shape
    assert cin == C_INPUT_DIM and T == N_STEPS and L == SEQ_LEN
    H = params["lstm"][0][0][1].shape[1]          # whh: [4H, H]

    # conv1∘conv2 -> [33, 224];  conv3∘conv4 -> [224, 3]
    wa, ba = _compose_affine_conv(params["conv"][0:2], C_INPUT_DIM, SEQ_LEN)
    wb, bb = _compose_affine_conv(params["conv"][2:4], 32, SEQ_LEN - 4)

    # time-major channels-last input: row = t*B + b, feature = l*C + c
    x_tm = jnp.transpose(x, (2, 0, 3, 1)).reshape(T * B, L * cin)

    def layer_args(layer):
        (wih_f, whh_f, bih_f, bhh_f), (wih_b, whh_b, bih_b, bhh_b) = layer
        wih_cat = jnp.concatenate([wih_f.T, wih_b.T], axis=1)          # [in, 8H]
        b_cat = jnp.concatenate([bih_f + bhh_f, bih_b + bhh_b]).reshape(1, -1)
        return [wih_cat, b_cat, whh_f.T, whh_b.T]

    lstm_args = layer_args(params["lstm"][0]) + layer_args(params["lstm"][1])

    lin_args = []
    for w, b in params["linear"]:
        lin_args += [w.T, b.reshape(1, -1)]

    args = [x_tm, wa, ba, wb, bb] + lstm_args + lin_args
    vmem = pl.BlockSpec(memory_space=pltpu.MemorySpace.VMEM)

    out = pl.pallas_call(
        functools.partial(seq2seq_kernel, batch=B, t_total=T, hidden=H),
        out_shape=jax.ShapeDtypeStruct((B, LANE), jnp.float32),
        in_specs=[vmem] * len(args),
        out_specs=vmem,
        compiler_params=pltpu.CompilerParams(
            vmem_limit_bytes=48 * 1024 * 1024),
    )(*args)

    return out[:, 0]      # torch .squeeze() on [B,1,1] -> [B]


# ---------------------------------------------------------------------------
# Pure-JAX reference (uses original PyTorch-layout weights) for validation
# ---------------------------------------------------------------------------
def reference_forward(x, params):
    B, cin, T, L = x.shape

    def conv1d(xn, w, b):
        y = jax.lax.conv_general_dilated(
            xn, w, window_strides=(1,), padding="VALID",
            dimension_numbers=("NCH", "OIH", "NCH"))
        return y + b[None, :, None]

    steps = []
    for t in range(T):
        y = x[:, :, t, :]
        y = conv1d(y, *params["conv"][0])
        y = conv1d(y, *params["conv"][1])
        y = jnp.maximum(y, 0.0)
        y = conv1d(y, *params["conv"][2])
        y = conv1d(y, *params["conv"][3])
        y = jnp.maximum(y, 0.0)
        steps.append(y[:, 0, :])                 # [B, 3]
    seq = jnp.stack(steps, axis=1)               # [B, T, 3]

    def lstm_dir(s, wih, whh, bih, bhh, reverse):
        H = whh.shape[1]
        h = jnp.zeros((s.shape[0], H), jnp.float32)
        c = jnp.zeros_like(h)
        hs = [None] * s.shape[1]
        order = range(s.shape[1] - 1, -1, -1) if reverse else range(s.shape[1])
        for t in order:
            g = s[:, t, :] @ wih.T + h @ whh.T + bih + bhh
            i = jax.nn.sigmoid(g[:, :H]); f = jax.nn.sigmoid(g[:, H:2 * H])
            gg = jnp.tanh(g[:, 2 * H:3 * H]); o = jax.nn.sigmoid(g[:, 3 * H:])
            c = f * c + i * gg
            h = o * jnp.tanh(c)
            hs[t] = h
        return jnp.stack(hs, axis=1)

    out = seq
    for layer in params["lstm"]:
        fwd = lstm_dir(out, *layer[0], reverse=False)
        bwd = lstm_dir(out, *layer[1], reverse=True)
        out = jnp.concatenate([fwd, bwd], axis=-1)
    y = out[:, -1, :]
    (w1, b1), (w2, b2), (w3, b3) = params["linear"]
    z = jnp.maximum(y @ w1.T + b1, 0.0)
    z = z @ w2.T + b2
    z = z @ w3.T + b3
    return z[:, 0]


if __name__ == "__main__":
    key = jax.random.PRNGKey(0)
    pkey, xkey = jax.random.split(key)
    params = init_params(pkey)
    x = jax.random.normal(xkey, (2, C_INPUT_DIM, N_STEPS, SEQ_LEN), jnp.float32)

    out = jax.block_until_ready(seq2seq_forward(x, params))
    ref = jax.block_until_ready(reference_forward(x, params))

    assert out.shape == (2,), out.shape
    if not jnp.allclose(out, ref, rtol=5e-3, atol=5e-3):
        raise SystemExit(f"MISMATCH: pallas={out} ref={ref}")
    print("KERNEL_OK")
</pallas_src>

<mosaic_0001>
module attributes {stable_mosaic.version = 11 : i64} {
  func.func @seq2seq_kernel(%arg0: memref<20x33xf32, #tpu.memory_space<vmem>>, %arg1: memref<33x224xf32, #tpu.memory_space<vmem>>, %arg2: memref<1x224xf32, #tpu.memory_space<vmem>>, %arg3: memref<224x3xf32, #tpu.memory_space<vmem>>, %arg4: memref<1x3xf32, #tpu.memory_space<vmem>>, %arg5: memref<3x1024xf32, #tpu.memory_space<vmem>>, %arg6: memref<1x1024xf32, #tpu.memory_space<vmem>>, %arg7: memref<128x512xf32, #tpu.memory_space<vmem>>, %arg8: memref<128x512xf32, #tpu.memory_space<vmem>>, %arg9: memref<256x1024xf32, #tpu.memory_space<vmem>>, %arg10: memref<1x1024xf32, #tpu.memory_space<vmem>>, %arg11: memref<128x512xf32, #tpu.memory_space<vmem>>, %arg12: memref<128x512xf32, #tpu.memory_space<vmem>>, %arg13: memref<256x512xf32, #tpu.memory_space<vmem>>, %arg14: memref<1x512xf32, #tpu.memory_space<vmem>>, %arg15: memref<512x128xf32, #tpu.memory_space<vmem>>, %arg16: memref<1x128xf32, #tpu.memory_space<vmem>>, %arg17: memref<128x1xf32, #tpu.memory_space<vmem>>, %arg18: memref<1x1xf32, #tpu.memory_space<vmem>>, %arg19: memref<2x128xf32, #tpu.memory_space<vmem>>) attributes {dimension_semantics = [], scalar_prefetch = 0 : i64, scratch_operands = 0 : i64, tpu.core_type = #tpu.core_type<tc>} {
    %c0 = arith.constant 0 : index
    %c0_0 = arith.constant 0 : index
    %0 = vector.load %arg0[%c0, %c0_0] : memref<20x33xf32, #tpu.memory_space<vmem>>, vector<20x33xf32>
    %c0_1 = arith.constant 0 : index
    %c0_2 = arith.constant 0 : index
    %1 = vector.load %arg1[%c0_1, %c0_2] : memref<33x224xf32, #tpu.memory_space<vmem>>, vector<33x224xf32>
    %cst = arith.constant dense<0.000000e+00> : vector<20x224xf32>
    %2 = tpu.matmul %0, %1, %cst {dimension_numbers = #tpu.dot_dimension_numbers<[1], [0], [0], [1], [0, 0, 1, 1], [], []>} : vector<20x33xf32>, vector<33x224xf32>, vector<20x224xf32> -> vector<20x224xf32>
    %c0_3 = arith.constant 0 : index
    %c0_4 = arith.constant 0 : index
    %3 = vector.load %arg2[%c0_3, %c0_4] : memref<1x224xf32, #tpu.memory_space<vmem>>, vector<1x224xf32>
    %4 = vector.broadcast %3 : vector<1x224xf32> to vector<20x224xf32>
    %5 = arith.addf %2, %4 : vector<20x224xf32>
    %cst_5 = arith.constant 0.000000e+00 : f32
    %6 = vector.broadcast %cst_5 : f32 to vector<20x224xf32>
    %7 = arith.maximumf %5, %6 : vector<20x224xf32>
    %c0_6 = arith.constant 0 : index
    %c0_7 = arith.constant 0 : index
    %8 = vector.load %arg3[%c0_6, %c0_7] : memref<224x3xf32, #tpu.memory_space<vmem>>, vector<224x3xf32>
    %cst_8 = arith.constant dense<0.000000e+00> : vector<20x3xf32>
    %9 = tpu.matmul %7, %8, %cst_8 {dimension_numbers = #tpu.dot_dimension_numbers<[1], [0], [0], [1], [0, 0, 1, 1], [], []>} : vector<20x224xf32>, vector<224x3xf32>, vector<20x3xf32> -> vector<20x3xf32>
    %c0_9 = arith.constant 0 : index
    %c0_10 = arith.constant 0 : index
    %10 = vector.load %arg4[%c0_9, %c0_10] : memref<1x3xf32, #tpu.memory_space<vmem>>, vector<1x3xf32>
    %11 = vector.broadcast %10 : vector<1x3xf32> to vector<20x3xf32>
    %12 = arith.addf %9, %11 : vector<20x3xf32>
    %cst_11 = arith.constant 0.000000e+00 : f32
    %13 = vector.broadcast %cst_11 : f32 to vector<20x3xf32>
    %14 = arith.maximumf %12, %13 : vector<20x3xf32>
    %c0_12 = arith.constant 0 : index
    %c0_13 = arith.constant 0 : index
    %15 = vector.load %arg5[%c0_12, %c0_13] : memref<3x1024xf32, #tpu.memory_space<vmem>>, vector<3x1024xf32>
    %cst_14 = arith.constant dense<0.000000e+00> : vector<20x1024xf32>
    %16 = tpu.matmul %14, %15, %cst_14 {dimension_numbers = #tpu.dot_dimension_numbers<[1], [0], [0], [1], [0, 0, 1, 1], [], []>} : vector<20x3xf32>, vector<3x1024xf32>, vector<20x1024xf32> -> vector<20x1024xf32>
    %c0_15 = arith.constant 0 : index
    %c0_16 = arith.constant 0 : index
    %17 = vector.load %arg6[%c0_15, %c0_16] : memref<1x1024xf32, #tpu.memory_space<vmem>>, vector<1x1024xf32>
    %18 = vector.broadcast %17 : vector<1x1024xf32> to vector<20x1024xf32>
    %19 = arith.addf %16, %18 : vector<20x1024xf32>
    %c0_17 = arith.constant 0 : index
    %c0_18 = arith.constant 0 : index
    %20 = vector.load %arg7[%c0_17, %c0_18] : memref<128x512xf32, #tpu.memory_space<vmem>>, vector<128x512xf32>
    %c0_19 = arith.constant 0 : index
    %c0_20 = arith.constant 0 : index
    %21 = vector.load %arg8[%c0_19, %c0_20] : memref<128x512xf32, #tpu.memory_space<vmem>>, vector<128x512xf32>
    %cst_21 = arith.constant 0.000000e+00 : f32
    %22 = vector.broadcast %cst_21 : f32 to vector<2x128xf32>
    %cst_22 = arith.constant 0.000000e+00 : f32
    %23 = vector.broadcast %cst_22 : f32 to vector<2x128xf32>
    %cst_23 = arith.constant 0.000000e+00 : f32
    %24 = vector.broadcast %cst_23 : f32 to vector<2x128xf32>
    %cst_24 = arith.constant 0.000000e+00 : f32
    %25 = vector.broadcast %cst_24 : f32 to vector<2x128xf32>
    %26 = vector.extract_strided_slice %19 {offsets = [0, 0], sizes = [2, 512], strides = [1, 1]} : vector<20x1024xf32> to vector<2x512xf32>
    %cst_25 = arith.constant dense<0.000000e+00> : vector<2x512xf32>
    %27 = tpu.matmul %22, %20, %cst_25 {dimension_numbers = #tpu.dot_dimension_numbers<[1], [0], [0], [1], [0, 0, 1, 1], [], []>} : vector<2x128xf32>, vector<128x512xf32>, vector<2x512xf32> -> vector<2x512xf32>
    %28 = arith.addf %26, %27 : vector<2x512xf32>
    %29 = vector.extract_strided_slice %19 {offsets = [18, 512], sizes = [2, 512], strides = [1, 1]} : vector<20x1024xf32> to vector<2x512xf32>
    %cst_26 = arith.constant dense<0.000000e+00> : vector<2x512xf32>
    %30 = tpu.matmul %24, %21, %cst_26 {dimension_numbers = #tpu.dot_dimension_numbers<[1], [0], [0], [1], [0, 0, 1, 1], [], []>} : vector<2x128xf32>, vector<128x512xf32>, vector<2x512xf32> -> vector<2x512xf32>
    %31 = arith.addf %29, %30 : vector<2x512xf32>
    %32 = vector.extract_strided_slice %28 {offsets = [0, 0], sizes = [2, 128], strides = [1, 1]} : vector<2x512xf32> to vector<2x128xf32>
    %33 = arith.negf %32 : vector<2x128xf32>
    %34 = math.exp %33 : vector<2x128xf32>
    %cst_27 = arith.constant 1.000000e+00 : f32
    %35 = vector.broadcast %cst_27 : f32 to vector<2x128xf32>
    %36 = arith.addf %35, %34 : vector<2x128xf32>
    %37 = arith.divf %35, %36 : vector<2x128xf32>
    %38 = vector.extract_strided_slice %28 {offsets = [0, 128], sizes = [2, 128], strides = [1, 1]} : vector<2x512xf32> to vector<2x128xf32>
    %39 = arith.negf %38 : vector<2x128xf32>
    %40 = math.exp %39 : vector<2x128xf32>
    %cst_28 = arith.constant 1.000000e+00 : f32
    %41 = vector.broadcast %cst_28 : f32 to vector<2x128xf32>
    %42 = arith.addf %41, %40 : vector<2x128xf32>
    %43 = arith.divf %41, %42 : vector<2x128xf32>
    %44 = vector.extract_strided_slice %28 {offsets = [0, 256], sizes = [2, 128], strides = [1, 1]} : vector<2x512xf32> to vector<2x128xf32>
    %45 = math.tanh %44 : vector<2x128xf32>
    %46 = vector.extract_strided_slice %28 {offsets = [0, 384], sizes = [2, 128], strides = [1, 1]} : vector<2x512xf32> to vector<2x128xf32>
    %47 = arith.negf %46 : vector<2x128xf32>
    %48 = math.exp %47 : vector<2x128xf32>
    %cst_29 = arith.constant 1.000000e+00 : f32
    %49 = vector.broadcast %cst_29 : f32 to vector<2x128xf32>
    %50 = arith.addf %49, %48 : vector<2x128xf32>
    %51 = arith.divf %49, %50 : vector<2x128xf32>
    %52 = arith.mulf %43, %23 : vector<2x128xf32>
    %53 = arith.mulf %37, %45 : vector<2x128xf32>
    %54 = arith.addf %52, %53 : vector<2x128xf32>
    %55 = math.tanh %54 : vector<2x128xf32>
    %56 = arith.mulf %51, %55 : vector<2x128xf32>
    %57 = vector.extract_strided_slice %31 {offsets = [0, 0], sizes = [2, 128], strides = [1, 1]} : vector<2x512xf32> to vector<2x128xf32>
    %58 = arith.negf %57 : vector<2x128xf32>
    %59 = math.exp %58 : vector<2x128xf32>
    %cst_30 = arith.constant 1.000000e+00 : f32
    %60 = vector.broadcast %cst_30 : f32 to vector<2x128xf32>
    %61 = arith.addf %60, %59 : vector<2x128xf32>
    %62 = arith.divf %60, %61 : vector<2x128xf32>
    %63 = vector.extract_strided_slice %31 {offsets = [0, 128], sizes = [2, 128], strides = [1, 1]} : vector<2x512xf32> to vector<2x128xf32>
    %64 = arith.negf %63 : vector<2x128xf32>
    %65 = math.exp %64 : vector<2x128xf32>
    %cst_31 = arith.constant 1.000000e+00 : f32
    %66 = vector.broadcast %cst_31 : f32 to vector<2x128xf32>
    %67 = arith.addf %66, %65 : vector<2x128xf32>
    %68 = arith.divf %66, %67 : vector<2x128xf32>
    %69 = vector.extract_strided_slice %31 {offsets = [0, 256], sizes = [2, 128], strides = [1, 1]} : vector<2x512xf32> to vector<2x128xf32>
    %70 = math.tanh %69 : vector<2x128xf32>
    %71 = vector.extract_strided_slice %31 {offsets = [0, 384], sizes = [2, 128], strides = [1, 1]} : vector<2x512xf32> to vector<2x128xf32>
    %72 = arith.negf %71 : vector<2x128xf32>
    %73 = math.exp %72 : vector<2x128xf32>
    %cst_32 = arith.constant 1.000000e+00 : f32
    %74 = vector.broadcast %cst_32 : f32 to vector<2x128xf32>
    %75 = arith.addf %74, %73 : vector<2x128xf32>
    %76 = arith.divf %74, %75 : vector<2x128xf32>
    %77 = arith.mulf %68, %25 : vector<2x128xf32>
    %78 = arith.mulf %62, %70 : vector<2x128xf32>
    %79 = arith.addf %77, %78 : vector<2x128xf32>
    %80 = math.tanh %79 : vector<2x128xf32>
    %81 = arith.mulf %76, %80 : vector<2x128xf32>
    %82 = vector.extract_strided_slice %19 {offsets = [2, 0], sizes = [2, 512], strides = [1, 1]} : vector<20x1024xf32> to vector<2x512xf32>
    %cst_33 = arith.constant dense<0.000000e+00> : vector<2x512xf32>
    %83 = tpu.matmul %56, %20, %cst_33 {dimension_numbers = #tpu.dot_dimension_numbers<[1], [0], [0], [1], [0, 0, 1, 1], [], []>} : vector<2x128xf32>, vector<128x512xf32>, vector<2x512xf32> -> vector<2x512xf32>
    %84 = arith.addf %82, %83 : vector<2x512xf32>
    %85 = vector.extract_strided_slice %19 {offsets = [16, 512], sizes = [2, 512], strides = [1, 1]} : vector<20x1024xf32> to vector<2x512xf32>
    %cst_34 = arith.constant dense<0.000000e+00> : vector<2x512xf32>
    %86 = tpu.matmul %81, %21, %cst_34 {dimension_numbers = #tpu.dot_dimension_numbers<[1], [0], [0], [1], [0, 0, 1, 1], [], []>} : vector<2x128xf32>, vector<128x512xf32>, vector<2x512xf32> -> vector<2x512xf32>
    %87 = arith.addf %85, %86 : vector<2x512xf32>
    %88 = vector.extract_strided_slice %84 {offsets = [0, 0], sizes = [2, 128], strides = [1, 1]} : vector<2x512xf32> to vector<2x128xf32>
    %89 = arith.negf %88 : vector<2x128xf32>
    %90 = math.exp %89 : vector<2x128xf32>
    %cst_35 = arith.constant 1.000000e+00 : f32
    %91 = vector.broadcast %cst_35 : f32 to vector<2x128xf32>
    %92 = arith.addf %91, %90 : vector<2x128xf32>
    %93 = arith.divf %91, %92 : vector<2x128xf32>
    %94 = vector.extract_strided_slice %84 {offsets = [0, 128], sizes = [2, 128], strides = [1, 1]} : vector<2x512xf32> to vector<2x128xf32>
    %95 = arith.negf %94 : vector<2x128xf32>
    %96 = math.exp %95 : vector<2x128xf32>
    %cst_36 = arith.constant 1.000000e+00 : f32
    %97 = vector.broadcast %cst_36 : f32 to vector<2x128xf32>
    %98 = arith.addf %97, %96 : vector<2x128xf32>
    %99 = arith.divf %97, %98 : vector<2x128xf32>
    %100 = vector.extract_strided_slice %84 {offsets = [0, 256], sizes = [2, 128], strides = [1, 1]} : vector<2x512xf32> to vector<2x128xf32>
    %101 = math.tanh %100 : vector<2x128xf32>
    %102 = vector.extract_strided_slice %84 {offsets = [0, 384], sizes = [2, 128], strides = [1, 1]} : vector<2x512xf32> to vector<2x128xf32>
    %103 = arith.negf %102 : vector<2x128xf32>
    %104 = math.exp %103 : vector<2x128xf32>
    %cst_37 = arith.constant 1.000000e+00 : f32
    %105 = vector.broadcast %cst_37 : f32 to vector<2x128xf32>
    %106 = arith.addf %105, %104 : vector<2x128xf32>
    %107 = arith.divf %105, %106 : vector<2x128xf32>
    %108 = arith.mulf %99, %54 : vector<2x128xf32>
    %109 = arith.mulf %93, %101 : vector<2x128xf32>
    %110 = arith.addf %108, %109 : vector<2x128xf32>
    %111 = math.tanh %110 : vector<2x128xf32>
    %112 = arith.mulf %107, %111 : vector<2x128xf32>
    %113 = vector.extract_strided_slice %87 {offsets = [0, 0], sizes = [2, 128], strides = [1, 1]} : vector<2x512xf32> to vector<2x128xf32>
    %114 = arith.negf %113 : vector<2x128xf32>
    %115 = math.exp %114 : vector<2x128xf32>
    %cst_38 = arith.constant 1.000000e+00 : f32
    %116 = vector.broadcast %cst_38 : f32 to vector<2x128xf32>
    %117 = arith.addf %116, %115 : vector<2x128xf32>
    %118 = arith.divf %116, %117 : vector<2x128xf32>
    %119 = vector.extract_strided_slice %87 {offsets = [0, 128], sizes = [2, 128], strides = [1, 1]} : vector<2x512xf32> to vector<2x128xf32>
    %120 = arith.negf %119 : vector<2x128xf32>
    %121 = math.exp %120 : vector<2x128xf32>
    %cst_39 = arith.constant 1.000000e+00 : f32
    %122 = vector.broadcast %cst_39 : f32 to vector<2x128xf32>
    %123 = arith.addf %122, %121 : vector<2x128xf32>
    %124 = arith.divf %122, %123 : vector<2x128xf32>
    %125 = vector.extract_strided_slice %87 {offsets = [0, 256], sizes = [2, 128], strides = [1, 1]} : vector<2x512xf32> to vector<2x128xf32>
    %126 = math.tanh %125 : vector<2x128xf32>
    %127 = vector.extract_strided_slice %87 {offsets = [0, 384], sizes = [2, 128], strides = [1, 1]} : vector<2x512xf32> to vector<2x128xf32>
    %128 = arith.negf %127 : vector<2x128xf32>
    %129 = math.exp %128 : vector<2x128xf32>
    %cst_40 = arith.constant 1.000000e+00 : f32
    %130 = vector.broadcast %cst_40 : f32 to vector<2x128xf32>
    %131 = arith.addf %130, %129 : vector<2x128xf32>
    %132 = arith.divf %130, %131 : vector<2x128xf32>
    %133 = arith.mulf %124, %79 : vector<2x128xf32>
    %134 = arith.mulf %118, %126 : vector<2x128xf32>
    %135 = arith.addf %133, %134 : vector<2x128xf32>
    %136 = math.tanh %135 : vector<2x128xf32>
    %137 = arith.mulf %132, %136 : vector<2x128xf32>
    %138 = vector.extract_strided_slice %19 {offsets = [4, 0], sizes = [2, 512], strides = [1, 1]} : vector<20x1024xf32> to vector<2x512xf32>
    %cst_41 = arith.constant dense<0.000000e+00> : vector<2x512xf32>
    %139 = tpu.matmul %112, %20, %cst_41 {dimension_numbers = #tpu.dot_dimension_numbers<[1], [0], [0], [1], [0, 0, 1, 1], [], []>} : vector<2x128xf32>, vector<128x512xf32>, vector<2x512xf32> -> vector<2x512xf32>
    %140 = arith.addf %138, %139 : vector<2x512xf32>
    %141 = vector.extract_strided_slice %19 {offsets = [14, 512], sizes = [2, 512], strides = [1, 1]} : vector<20x1024xf32> to vector<2x512xf32>
    %cst_42 = arith.constant dense<0.000000e+00> : vector<2x512xf32>
    %142 = tpu.matmul %137, %21, %cst_42 {dimension_numbers = #tpu.dot_dimension_numbers<[1], [0], [0], [1], [0, 0, 1, 1], [], []>} : vector<2x128xf32>, vector<128x512xf32>, vector<2x512xf32> -> vector<2x512xf32>
    %143 = arith.addf %141, %142 : vector<2x512xf32>
    %144 = vector.extract_strided_slice %140 {offsets = [0, 0], sizes = [2, 128], strides = [1, 1]} : vector<2x512xf32> to vector<2x128xf32>
    %145 = arith.negf %144 : vector<2x128xf32>
    %146 = math.exp %145 : vector<2x128xf32>
    %cst_43 = arith.constant 1.000000e+00 : f32
    %147 = vector.broadcast %cst_43 : f32 to vector<2x128xf32>
    %148 = arith.addf %147, %146 : vector<2x128xf32>
    %149 = arith.divf %147, %148 : vector<2x128xf32>
    %150 = vector.extract_strided_slice %140 {offsets = [0, 128], sizes = [2, 128], strides = [1, 1]} : vector<2x512xf32> to vector<2x128xf32>
    %151 = arith.negf %150 : vector<2x128xf32>
    %152 = math.exp %151 : vector<2x128xf32>
    %cst_44 = arith.constant 1.000000e+00 : f32
    %153 = vector.broadcast %cst_44 : f32 to vector<2x128xf32>
    %154 = arith.addf %153, %152 : vector<2x128xf32>
    %155 = arith.divf %153, %154 : vector<2x128xf32>
    %156 = vector.extract_strided_slice %140 {offsets = [0, 256], sizes = [2, 128], strides = [1, 1]} : vector<2x512xf32> to vector<2x128xf32>
    %157 = math.tanh %156 : vector<2x128xf32>
    %158 = vector.extract_strided_slice %140 {offsets = [0, 384], sizes = [2, 128], strides = [1, 1]} : vector<2x512xf32> to vector<2x128xf32>
    %159 = arith.negf %158 : vector<2x128xf32>
    %160 = math.exp %159 : vector<2x128xf32>
    %cst_45 = arith.constant 1.000000e+00 : f32
    %161 = vector.broadcast %cst_45 : f32 to vector<2x128xf32>
    %162 = arith.addf %161, %160 : vector<2x128xf32>
    %163 = arith.divf %161, %162 : vector<2x128xf32>
    %164 = arith.mulf %155, %110 : vector<2x128xf32>
    %165 = arith.mulf %149, %157 : vector<2x128xf32>
    %166 = arith.addf %164, %165 : vector<2x128xf32>
    %167 = math.tanh %166 : vector<2x128xf32>
    %168 = arith.mulf %163, %167 : vector<2x128xf32>
    %169 = vector.extract_strided_slice %143 {offsets = [0, 0], sizes = [2, 128], strides = [1, 1]} : vector<2x512xf32> to vector<2x128xf32>
    %170 = arith.negf %169 : vector<2x128xf32>
    %171 = math.exp %170 : vector<2x128xf32>
    %cst_46 = arith.constant 1.000000e+00 : f32
    %172 = vector.broadcast %cst_46 : f32 to vector<2x128xf32>
    %173 = arith.addf %172, %171 : vector<2x128xf32>
    %174 = arith.divf %172, %173 : vector<2x128xf32>
    %175 = vector.extract_strided_slice %143 {offsets = [0, 128], sizes = [2, 128], strides = [1, 1]} : vector<2x512xf32> to vector<2x128xf32>
    %176 = arith.negf %175 : vector<2x128xf32>
    %177 = math.exp %176 : vector<2x128xf32>
    %cst_47 = arith.constant 1.000000e+00 : f32
    %178 = vector.broadcast %cst_47 : f32 to vector<2x128xf32>
    %179 = arith.addf %178, %177 : vector<2x128xf32>
    %180 = arith.divf %178, %179 : vector<2x128xf32>
    %181 = vector.extract_strided_slice %143 {offsets = [0, 256], sizes = [2, 128], strides = [1, 1]} : vector<2x512xf32> to vector<2x128xf32>
    %182 = math.tanh %181 : vector<2x128xf32>
    %183 = vector.extract_strided_slice %143 {offsets = [0, 384], sizes = [2, 128], strides = [1, 1]} : vector<2x512xf32> to vector<2x128xf32>
    %184 = arith.negf %183 : vector<2x128xf32>
    %185 = math.exp %184 : vector<2x128xf32>
    %cst_48 = arith.constant 1.000000e+00 : f32
    %186 = vector.broadcast %cst_48 : f32 to vector<2x128xf32>
    %187 = arith.addf %186, %185 : vector<2x128xf32>
    %188 = arith.divf %186, %187 : vector<2x128xf32>
    %189 = arith.mulf %180, %135 : vector<2x128xf32>
    %190 = arith.mulf %174, %182 : vector<2x128xf32>
    %191 = arith.addf %189, %190 : vector<2x128xf32>
    %192 = math.tanh %191 : vector<2x128xf32>
    %193 = arith.mulf %188, %192 : vector<2x128xf32>
    %194 = vector.extract_strided_slice %19 {offsets = [6, 0], sizes = [2, 512], strides = [1, 1]} : vector<20x1024xf32> to vector<2x512xf32>
    %cst_49 = arith.constant dense<0.000000e+00> : vector<2x512xf32>
    %195 = tpu.matmul %168, %20, %cst_49 {dimension_numbers = #tpu.dot_dimension_numbers<[1], [0], [0], [1], [0, 0, 1, 1], [], []>} : vector<2x128xf32>, vector<128x512xf32>, vector<2x512xf32> -> vector<2x512xf32>
    %196 = arith.addf %194, %195 : vector<2x512xf32>
    %197 = vector.extract_strided_slice %19 {offsets = [12, 512], sizes = [2, 512], strides = [1, 1]} : vector<20x1024xf32> to vector<2x512xf32>
    %cst_50 = arith.constant dense<0.000000e+00> : vector<2x512xf32>
    %198 = tpu.matmul %193, %21, %cst_50 {dimension_numbers = #tpu.dot_dimension_numbers<[1], [0], [0], [1], [0, 0, 1, 1], [], []>} : vector<2x128xf32>, vector<128x512xf32>, vector<2x512xf32> -> vector<2x512xf32>
    %199 = arith.addf %197, %198 : vector<2x512xf32>
    %200 = vector.extract_strided_slice %196 {offsets = [0, 0], sizes = [2, 128], strides = [1, 1]} : vector<2x512xf32> to vector<2x128xf32>
    %201 = arith.negf %200 : vector<2x128xf32>
    %202 = math.exp %201 : vector<2x128xf32>
    %cst_51 = arith.constant 1.000000e+00 : f32
    %203 = vector.broadcast %cst_51 : f32 to vector<2x128xf32>
    %204 = arith.addf %203, %202 : vector<2x128xf32>
    %205 = arith.divf %203, %204 : vector<2x128xf32>
    %206 = vector.extract_strided_slice %196 {offsets = [0, 128], sizes = [2, 128], strides = [1, 1]} : vector<2x512xf32> to vector<2x128xf32>
    %207 = arith.negf %206 : vector<2x128xf32>
    %208 = math.exp %207 : vector<2x128xf32>
    %cst_52 = arith.constant 1.000000e+00 : f32
    %209 = vector.broadcast %cst_52 : f32 to vector<2x128xf32>
    %210 = arith.addf %209, %208 : vector<2x128xf32>
    %211 = arith.divf %209, %210 : vector<2x128xf32>
    %212 = vector.extract_strided_slice %196 {offsets = [0, 256], sizes = [2, 128], strides = [1, 1]} : vector<2x512xf32> to vector<2x128xf32>
    %213 = math.tanh %212 : vector<2x128xf32>
    %214 = vector.extract_strided_slice %196 {offsets = [0, 384], sizes = [2, 128], strides = [1, 1]} : vector<2x512xf32> to vector<2x128xf32>
    %215 = arith.negf %214 : vector<2x128xf32>
    %216 = math.exp %215 : vector<2x128xf32>
    %cst_53 = arith.constant 1.000000e+00 : f32
    %217 = vector.broadcast %cst_53 : f32 to vector<2x128xf32>
    %218 = arith.addf %217, %216 : vector<2x128xf32>
    %219 = arith.divf %217, %218 : vector<2x128xf32>
    %220 = arith.mulf %211, %166 : vector<2x128xf32>
    %221 = arith.mulf %205, %213 : vector<2x128xf32>
    %222 = arith.addf %220, %221 : vector<2x128xf32>
    %223 = math.tanh %222 : vector<2x128xf32>
    %224 = arith.mulf %219, %223 : vector<2x128xf32>
    %225 = vector.extract_strided_slice %199 {offsets = [0, 0], sizes = [2, 128], strides = [1, 1]} : vector<2x512xf32> to vector<2x128xf32>
    %226 = arith.negf %225 : vector<2x128xf32>
    %227 = math.exp %226 : vector<2x128xf32>
    %cst_54 = arith.constant 1.000000e+00 : f32
    %228 = vector.broadcast %cst_54 : f32 to vector<2x128xf32>
    %229 = arith.addf %228, %227 : vector<2x128xf32>
    %230 = arith.divf %228, %229 : vector<2x128xf32>
    %231 = vector.extract_strided_slice %199 {offsets = [0, 128], sizes = [2, 128], strides = [1, 1]} : vector<2x512xf32> to vector<2x128xf32>
    %232 = arith.negf %231 : vector<2x128xf32>
    %233 = math.exp %232 : vector<2x128xf32>
    %cst_55 = arith.constant 1.000000e+00 : f32
    %234 = vector.broadcast %cst_55 : f32 to vector<2x128xf32>
    %235 = arith.addf %234, %233 : vector<2x128xf32>
    %236 = arith.divf %234, %235 : vector<2x128xf32>
    %237 = vector.extract_strided_slice %199 {offsets = [0, 256], sizes = [2, 128], strides = [1, 1]} : vector<2x512xf32> to vector<2x128xf32>
    %238 = math.tanh %237 : vector<2x128xf32>
    %239 = vector.extract_strided_slice %199 {offsets = [0, 384], sizes = [2, 128], strides = [1, 1]} : vector<2x512xf32> to vector<2x128xf32>
    %240 = arith.negf %239 : vector<2x128xf32>
    %241 = math.exp %240 : vector<2x128xf32>
    %cst_56 = arith.constant 1.000000e+00 : f32
    %242 = vector.broadcast %cst_56 : f32 to vector<2x128xf32>
    %243 = arith.addf %242, %241 : vector<2x128xf32>
    %244 = arith.divf %242, %243 : vector<2x128xf32>
    %245 = arith.mulf %236, %191 : vector<2x128xf32>
    %246 = arith.mulf %230, %238 : vector<2x128xf32>
    %247 = arith.addf %245, %246 : vector<2x128xf32>
    %248 = math.tanh %247 : vector<2x128xf32>
    %249 = arith.mulf %244, %248 : vector<2x128xf32>
    %250 = vector.extract_strided_slice %19 {offsets = [8, 0], sizes = [2, 512], strides = [1, 1]} : vector<20x1024xf32> to vector<2x512xf32>
    %cst_57 = arith.constant dense<0.000000e+00> : vector<2x512xf32>
    %251 = tpu.matmul %224, %20, %cst_57 {dimension_numbers = #tpu.dot_dimension_numbers<[1], [0], [0], [1], [0, 0, 1, 1], [], []>} : vector<2x128xf32>, vector<128x512xf32>, vector<2x512xf32> -> vector<2x512xf32>
    %252 = arith.addf %250, %251 : vector<2x512xf32>
    %253 = vector.extract_strided_slice %19 {offsets = [10, 512], sizes = [2, 512], strides = [1, 1]} : vector<20x1024xf32> to vector<2x512xf32>
    %cst_58 = arith.constant dense<0.000000e+00> : vector<2x512xf32>
    %254 = tpu.matmul %249, %21, %cst_58 {dimension_numbers = #tpu.dot_dimension_numbers<[1], [0], [0], [1], [0, 0, 1, 1], [], []>} : vector<2x128xf32>, vector<128x512xf32>, vector<2x512xf32> -> vector<2x512xf32>
    %255 = arith.addf %253, %254 : vector<2x512xf32>
    %256 = vector.extract_strided_slice %252 {offsets = [0, 0], sizes = [2, 128], strides = [1, 1]} : vector<2x512xf32> to vector<2x128xf32>
    %257 = arith.negf %256 : vector<2x128xf32>
    %258 = math.exp %257 : vector<2x128xf32>
    %cst_59 = arith.constant 1.000000e+00 : f32
    %259 = vector.broadcast %cst_59 : f32 to vector<2x128xf32>
    %260 = arith.addf %259, %258 : vector<2x128xf32>
    %261 = arith.divf %259, %260 : vector<2x128xf32>
    %262 = vector.extract_strided_slice %252 {offsets = [0, 128], sizes = [2, 128], strides = [1, 1]} : vector<2x512xf32> to vector<2x128xf32>
    %263 = arith.negf %262 : vector<2x128xf32>
    %264 = math.exp %263 : vector<2x128xf32>
    %cst_60 = arith.constant 1.000000e+00 : f32
    %265 = vector.broadcast %cst_60 : f32 to vector<2x128xf32>
    %266 = arith.addf %265, %264 : vector<2x128xf32>
    %267 = arith.divf %265, %266 : vector<2x128xf32>
    %268 = vector.extract_strided_slice %252 {offsets = [0, 256], sizes = [2, 128], strides = [1, 1]} : vector<2x512xf32> to vector<2x128xf32>
    %269 = math.tanh %268 : vector<2x128xf32>
    %270 = vector.extract_strided_slice %252 {offsets = [0, 384], sizes = [2, 128], strides = [1, 1]} : vector<2x512xf32> to vector<2x128xf32>
    %271 = arith.negf %270 : vector<2x128xf32>
    %272 = math.exp %271 : vector<2x128xf32>
    %cst_61 = arith.constant 1.000000e+00 : f32
    %273 = vector.broadcast %cst_61 : f32 to vector<2x128xf32>
    %274 = arith.addf %273, %272 : vector<2x128xf32>
    %275 = arith.divf %273, %274 : vector<2x128xf32>
    %276 = arith.mulf %267, %222 : vector<2x128xf32>
    %277 = arith.mulf %261, %269 : vector<2x128xf32>
    %278 = arith.addf %276, %277 : vector<2x128xf32>
    %279 = math.tanh %278 : vector<2x128xf32>
    %280 = arith.mulf %275, %279 : vector<2x128xf32>
    %281 = vector.extract_strided_slice %255 {offsets = [0, 0], sizes = [2, 128], strides = [1, 1]} : vector<2x512xf32> to vector<2x128xf32>
    %282 = arith.negf %281 : vector<2x128xf32>
    %283 = math.exp %282 : vector<2x128xf32>
    %cst_62 = arith.constant 1.000000e+00 : f32
    %284 = vector.broadcast %cst_62 : f32 to vector<2x128xf32>
    %285 = arith.addf %284, %283 : vector<2x128xf32>
    %286 = arith.divf %284, %285 : vector<2x128xf32>
    %287 = vector.extract_strided_slice %255 {offsets = [0, 128], sizes = [2, 128], strides = [1, 1]} : vector<2x512xf32> to vector<2x128xf32>
    %288 = arith.negf %287 : vector<2x128xf32>
    %289 = math.exp %288 : vector<2x128xf32>
    %cst_63 = arith.constant 1.000000e+00 : f32
    %290 = vector.broadcast %cst_63 : f32 to vector<2x128xf32>
    %291 = arith.addf %290, %289 : vector<2x128xf32>
    %292 = arith.divf %290, %291 : vector<2x128xf32>
    %293 = vector.extract_strided_slice %255 {offsets = [0, 256], sizes = [2, 128], strides = [1, 1]} : vector<2x512xf32> to vector<2x128xf32>
    %294 = math.tanh %293 : vector<2x128xf32>
    %295 = vector.extract_strided_slice %255 {offsets = [0, 384], sizes = [2, 128], strides = [1, 1]} : vector<2x512xf32> to vector<2x128xf32>
    %296 = arith.negf %295 : vector<2x128xf32>
    %297 = math.exp %296 : vector<2x128xf32>
    %cst_64 = arith.constant 1.000000e+00 : f32
    %298 = vector.broadcast %cst_64 : f32 to vector<2x128xf32>
    %299 = arith.addf %298, %297 : vector<2x128xf32>
    %300 = arith.divf %298, %299 : vector<2x128xf32>
    %301 = arith.mulf %292, %247 : vector<2x128xf32>
    %302 = arith.mulf %286, %294 : vector<2x128xf32>
    %303 = arith.addf %301, %302 : vector<2x128xf32>
    %304 = math.tanh %303 : vector<2x128xf32>
    %305 = arith.mulf %300, %304 : vector<2x128xf32>
    %306 = vector.extract_strided_slice %19 {offsets = [10, 0], sizes = [2, 512], strides = [1, 1]} : vector<20x1024xf32> to vector<2x512xf32>
    %cst_65 = arith.constant dense<0.000000e+00> : vector<2x512xf32>
    %307 = tpu.matmul %280, %20, %cst_65 {dimension_numbers = #tpu.dot_dimension_numbers<[1], [0], [0], [1], [0, 0, 1, 1], [], []>} : vector<2x128xf32>, vector<128x512xf32>, vector<2x512xf32> -> vector<2x512xf32>
    %308 = arith.addf %306, %307 : vector<2x512xf32>
    %309 = vector.extract_strided_slice %19 {offsets = [8, 512], sizes = [2, 512], strides = [1, 1]} : vector<20x1024xf32> to vector<2x512xf32>
    %cst_66 = arith.constant dense<0.000000e+00> : vector<2x512xf32>
    %310 = tpu.matmul %305, %21, %cst_66 {dimension_numbers = #tpu.dot_dimension_numbers<[1], [0], [0], [1], [0, 0, 1, 1], [], []>} : vector<2x128xf32>, vector<128x512xf32>, vector<2x512xf32> -> vector<2x512xf32>
    %311 = arith.addf %309, %310 : vector<2x512xf32>
    %312 = vector.extract_strided_slice %308 {offsets = [0, 0], sizes = [2, 128], strides = [1, 1]} : vector<2x512xf32> to vector<2x128xf32>
    %313 = arith.negf %312 : vector<2x128xf32>
    %314 = math.exp %313 : vector<2x128xf32>
    %cst_67 = arith.constant 1.000000e+00 : f32
    %315 = vector.broadcast %cst_67 : f32 to vector<2x128xf32>
    %316 = arith.addf %315, %314 : vector<2x128xf32>
    %317 = arith.divf %315, %316 : vector<2x128xf32>
    %318 = vector.extract_strided_slice %308 {offsets = [0, 128], sizes = [2, 128], strides = [1, 1]} : vector<2x512xf32> to vector<2x128xf32>
    %319 = arith.negf %318 : vector<2x128xf32>
    %320 = math.exp %319 : vector<2x128xf32>
    %cst_68 = arith.constant 1.000000e+00 : f32
    %321 = vector.broadcast %cst_68 : f32 to vector<2x128xf32>
    %322 = arith.addf %321, %320 : vector<2x128xf32>
    %323 = arith.divf %321, %322 : vector<2x128xf32>
    %324 = vector.extract_strided_slice %308 {offsets = [0, 256], sizes = [2, 128], strides = [1, 1]} : vector<2x512xf32> to vector<2x128xf32>
    %325 = math.tanh %324 : vector<2x128xf32>
    %326 = vector.extract_strided_slice %308 {offsets = [0, 384], sizes = [2, 128], strides = [1, 1]} : vector<2x512xf32> to vector<2x128xf32>
    %327 = arith.negf %326 : vector<2x128xf32>
    %328 = math.exp %327 : vector<2x128xf32>
    %cst_69 = arith.constant 1.000000e+00 : f32
    %329 = vector.broadcast %cst_69 : f32 to vector<2x128xf32>
    %330 = arith.addf %329, %328 : vector<2x128xf32>
    %331 = arith.divf %329, %330 : vector<2x128xf32>
    %332 = arith.mulf %323, %278 : vector<2x128xf32>
    %333 = arith.mulf %317, %325 : vector<2x128xf32>
    %334 = arith.addf %332, %333 : vector<2x128xf32>
    %335 = math.tanh %334 : vector<2x128xf32>
    %336 = arith.mulf %331, %335 : vector<2x128xf32>
    %337 = vector.extract_strided_slice %311 {offsets = [0, 0], sizes = [2, 128], strides = [1, 1]} : vector<2x512xf32> to vector<2x128xf32>
    %338 = arith.negf %337 : vector<2x128xf32>
    %339 = math.exp %338 : vector<2x128xf32>
    %cst_70 = arith.constant 1.000000e+00 : f32
    %340 = vector.broadcast %cst_70 : f32 to vector<2x128xf32>
    %341 = arith.addf %340, %339 : vector<2x128xf32>
    %342 = arith.divf %340, %341 : vector<2x128xf32>
    %343 = vector.extract_strided_slice %311 {offsets = [0, 128], sizes = [2, 128], strides = [1, 1]} : vector<2x512xf32> to vector<2x128xf32>
    %344 = arith.negf %343 : vector<2x128xf32>
    %345 = math.exp %344 : vector<2x128xf32>
    %cst_71 = arith.constant 1.000000e+00 : f32
    %346 = vector.broadcast %cst_71 : f32 to vector<2x128xf32>
    %347 = arith.addf %346, %345 : vector<2x128xf32>
    %348 = arith.divf %346, %347 : vector<2x128xf32>
    %349 = vector.extract_strided_slice %311 {offsets = [0, 256], sizes = [2, 128], strides = [1, 1]} : vector<2x512xf32> to vector<2x128xf32>
    %350 = math.tanh %349 : vector<2x128xf32>
    %351 = vector.extract_strided_slice %311 {offsets = [0, 384], sizes = [2, 128], strides = [1, 1]} : vector<2x512xf32> to vector<2x128xf32>
    %352 = arith.negf %351 : vector<2x128xf32>
    %353 = math.exp %352 : vector<2x128xf32>
    %cst_72 = arith.constant 1.000000e+00 : f32
    %354 = vector.broadcast %cst_72 : f32 to vector<2x128xf32>
    %355 = arith.addf %354, %353 : vector<2x128xf32>
    %356 = arith.divf %354, %355 : vector<2x128xf32>
    %357 = arith.mulf %348, %303 : vector<2x128xf32>
    %358 = arith.mulf %342, %350 : vector<2x128xf32>
    %359 = arith.addf %357, %358 : vector<2x128xf32>
    %360 = math.tanh %359 : vector<2x128xf32>
    %361 = arith.mulf %356, %360 : vector<2x128xf32>
    %362 = vector.extract_strided_slice %19 {offsets = [12, 0], sizes = [2, 512], strides = [1, 1]} : vector<20x1024xf32> to vector<2x512xf32>
    %cst_73 = arith.constant dense<0.000000e+00> : vector<2x512xf32>
    %363 = tpu.matmul %336, %20, %cst_73 {dimension_numbers = #tpu.dot_dimension_numbers<[1], [0], [0], [1], [0, 0, 1, 1], [], []>} : vector<2x128xf32>, vector<128x512xf32>, vector<2x512xf32> -> vector<2x512xf32>
    %364 = arith.addf %362, %363 : vector<2x512xf32>
    %365 = vector.extract_strided_slice %19 {offsets = [6, 512], sizes = [2, 512], strides = [1, 1]} : vector<20x1024xf32> to vector<2x512xf32>
    %cst_74 = arith.constant dense<0.000000e+00> : vector<2x512xf32>
    %366 = tpu.matmul %361, %21, %cst_74 {dimension_numbers = #tpu.dot_dimension_numbers<[1], [0], [0], [1], [0, 0, 1, 1], [], []>} : vector<2x128xf32>, vector<128x512xf32>, vector<2x512xf32> -> vector<2x512xf32>
    %367 = arith.addf %365, %366 : vector<2x512xf32>
    %368 = vector.extract_strided_slice %364 {offsets = [0, 0], sizes = [2, 128], strides = [1, 1]} : vector<2x512xf32> to vector<2x128xf32>
    %369 = arith.negf %368 : vector<2x128xf32>
    %370 = math.exp %369 : vector<2x128xf32>
    %cst_75 = arith.constant 1.000000e+00 : f32
    %371 = vector.broadcast %cst_75 : f32 to vector<2x128xf32>
    %372 = arith.addf %371, %370 : vector<2x128xf32>
    %373 = arith.divf %371, %372 : vector<2x128xf32>
    %374 = vector.extract_strided_slice %364 {offsets = [0, 128], sizes = [2, 128], strides = [1, 1]} : vector<2x512xf32> to vector<2x128xf32>
    %375 = arith.negf %374 : vector<2x128xf32>
    %376 = math.exp %375 : vector<2x128xf32>
    %cst_76 = arith.constant 1.000000e+00 : f32
    %377 = vector.broadcast %cst_76 : f32 to vector<2x128xf32>
    %378 = arith.addf %377, %376 : vector<2x128xf32>
    %379 = arith.divf %377, %378 : vector<2x128xf32>
    %380 = vector.extract_strided_slice %364 {offsets = [0, 256], sizes = [2, 128], strides = [1, 1]} : vector<2x512xf32> to vector<2x128xf32>
    %381 = math.tanh %380 : vector<2x128xf32>
    %382 = vector.extract_strided_slice %364 {offsets = [0, 384], sizes = [2, 128], strides = [1, 1]} : vector<2x512xf32> to vector<2x128xf32>
    %383 = arith.negf %382 : vector<2x128xf32>
    %384 = math.exp %383 : vector<2x128xf32>
    %cst_77 = arith.constant 1.000000e+00 : f32
    %385 = vector.broadcast %cst_77 : f32 to vector<2x128xf32>
    %386 = arith.addf %385, %384 : vector<2x128xf32>
    %387 = arith.divf %385, %386 : vector<2x128xf32>
    %388 = arith.mulf %379, %334 : vector<2x128xf32>
    %389 = arith.mulf %373, %381 : vector<2x128xf32>
    %390 = arith.addf %388, %389 : vector<2x128xf32>
    %391 = math.tanh %390 : vector<2x128xf32>
    %392 = arith.mulf %387, %391 : vector<2x128xf32>
    %393 = vector.extract_strided_slice %367 {offsets = [0, 0], sizes = [2, 128], strides = [1, 1]} : vector<2x512xf32> to vector<2x128xf32>
    %394 = arith.negf %393 : vector<2x128xf32>
    %395 = math.exp %394 : vector<2x128xf32>
    %cst_78 = arith.constant 1.000000e+00 : f32
    %396 = vector.broadcast %cst_78 : f32 to vector<2x128xf32>
    %397 = arith.addf %396, %395 : vector<2x128xf32>
    %398 = arith.divf %396, %397 : vector<2x128xf32>
    %399 = vector.extract_strided_slice %367 {offsets = [0, 128], sizes = [2, 128], strides = [1, 1]} : vector<2x512xf32> to vector<2x128xf32>
    %400 = arith.negf %399 : vector<2x128xf32>
    %401 = math.exp %400 : vector<2x128xf32>
    %cst_79 = arith.constant 1.000000e+00 : f32
    %402 = vector.broadcast %cst_79 : f32 to vector<2x128xf32>
    %403 = arith.addf %402, %401 : vector<2x128xf32>
    %404 = arith.divf %402, %403 : vector<2x128xf32>
    %405 = vector.extract_strided_slice %367 {offsets = [0, 256], sizes = [2, 128], strides = [1, 1]} : vector<2x512xf32> to vector<2x128xf32>
    %406 = math.tanh %405 : vector<2x128xf32>
    %407 = vector.extract_strided_slice %367 {offsets = [0, 384], sizes = [2, 128], strides = [1, 1]} : vector<2x512xf32> to vector<2x128xf32>
    %408 = arith.negf %407 : vector<2x128xf32>
    %409 = math.exp %408 : vector<2x128xf32>
    %cst_80 = arith.constant 1.000000e+00 : f32
    %410 = vector.broadcast %cst_80 : f32 to vector<2x128xf32>
    %411 = arith.addf %410, %409 : vector<2x128xf32>
    %412 = arith.divf %410, %411 : vector<2x128xf32>
    %413 = arith.mulf %404, %359 : vector<2x128xf32>
    %414 = arith.mulf %398, %406 : vector<2x128xf32>
    %415 = arith.addf %413, %414 : vector<2x128xf32>
    %416 = math.tanh %415 : vector<2x128xf32>
    %417 = arith.mulf %412, %416 : vector<2x128xf32>
    %418 = vector.extract_strided_slice %19 {offsets = [14, 0], sizes = [2, 512], strides = [1, 1]} : vector<20x1024xf32> to vector<2x512xf32>
    %cst_81 = arith.constant dense<0.000000e+00> : vector<2x512xf32>
    %419 = tpu.matmul %392, %20, %cst_81 {dimension_numbers = #tpu.dot_dimension_numbers<[1], [0], [0], [1], [0, 0, 1, 1], [], []>} : vector<2x128xf32>, vector<128x512xf32>, vector<2x512xf32> -> vector<2x512xf32>
    %420 = arith.addf %418, %419 : vector<2x512xf32>
    %421 = vector.extract_strided_slice %19 {offsets = [4, 512], sizes = [2, 512], strides = [1, 1]} : vector<20x1024xf32> to vector<2x512xf32>
    %cst_82 = arith.constant dense<0.000000e+00> : vector<2x512xf32>
    %422 = tpu.matmul %417, %21, %cst_82 {dimension_numbers = #tpu.dot_dimension_numbers<[1], [0], [0], [1], [0, 0, 1, 1], [], []>} : vector<2x128xf32>, vector<128x512xf32>, vector<2x512xf32> -> vector<2x512xf32>
    %423 = arith.addf %421, %422 : vector<2x512xf32>
    %424 = vector.extract_strided_slice %420 {offsets = [0, 0], sizes = [2, 128], strides = [1, 1]} : vector<2x512xf32> to vector<2x128xf32>
    %425 = arith.negf %424 : vector<2x128xf32>
    %426 = math.exp %425 : vector<2x128xf32>
    %cst_83 = arith.constant 1.000000e+00 : f32
    %427 = vector.broadcast %cst_83 : f32 to vector<2x128xf32>
    %428 = arith.addf %427, %426 : vector<2x128xf32>
    %429 = arith.divf %427, %428 : vector<2x128xf32>
    %430 = vector.extract_strided_slice %420 {offsets = [0, 128], sizes = [2, 128], strides = [1, 1]} : vector<2x512xf32> to vector<2x128xf32>
    %431 = arith.negf %430 : vector<2x128xf32>
    %432 = math.exp %431 : vector<2x128xf32>
    %cst_84 = arith.constant 1.000000e+00 : f32
    %433 = vector.broadcast %cst_84 : f32 to vector<2x128xf32>
    %434 = arith.addf %433, %432 : vector<2x128xf32>
    %435 = arith.divf %433, %434 : vector<2x128xf32>
    %436 = vector.extract_strided_slice %420 {offsets = [0, 256], sizes = [2, 128], strides = [1, 1]} : vector<2x512xf32> to vector<2x128xf32>
    %437 = math.tanh %436 : vector<2x128xf32>
    %438 = vector.extract_strided_slice %420 {offsets = [0, 384], sizes = [2, 128], strides = [1, 1]} : vector<2x512xf32> to vector<2x128xf32>
    %439 = arith.negf %438 : vector<2x128xf32>
    %440 = math.exp %439 : vector<2x128xf32>
    %cst_85 = arith.constant 1.000000e+00 : f32
    %441 = vector.broadcast %cst_85 : f32 to vector<2x128xf32>
    %442 = arith.addf %441, %440 : vector<2x128xf32>
    %443 = arith.divf %441, %442 : vector<2x128xf32>
    %444 = arith.mulf %435, %390 : vector<2x128xf32>
    %445 = arith.mulf %429, %437 : vector<2x128xf32>
    %446 = arith.addf %444, %445 : vector<2x128xf32>
    %447 = math.tanh %446 : vector<2x128xf32>
    %448 = arith.mulf %443, %447 : vector<2x128xf32>
    %449 = vector.extract_strided_slice %423 {offsets = [0, 0], sizes = [2, 128], strides = [1, 1]} : vector<2x512xf32> to vector<2x128xf32>
    %450 = arith.negf %449 : vector<2x128xf32>
    %451 = math.exp %450 : vector<2x128xf32>
    %cst_86 = arith.constant 1.000000e+00 : f32
    %452 = vector.broadcast %cst_86 : f32 to vector<2x128xf32>
    %453 = arith.addf %452, %451 : vector<2x128xf32>
    %454 = arith.divf %452, %453 : vector<2x128xf32>
    %455 = vector.extract_strided_slice %423 {offsets = [0, 128], sizes = [2, 128], strides = [1, 1]} : vector<2x512xf32> to vector<2x128xf32>
    %456 = arith.negf %455 : vector<2x128xf32>
    %457 = math.exp %456 : vector<2x128xf32>
    %cst_87 = arith.constant 1.000000e+00 : f32
    %458 = vector.broadcast %cst_87 : f32 to vector<2x128xf32>
    %459 = arith.addf %458, %457 : vector<2x128xf32>
    %460 = arith.divf %458, %459 : vector<2x128xf32>
    %461 = vector.extract_strided_slice %423 {offsets = [0, 256], sizes = [2, 128], strides = [1, 1]} : vector<2x512xf32> to vector<2x128xf32>
    %462 = math.tanh %461 : vector<2x128xf32>
    %463 = vector.extract_strided_slice %423 {offsets = [0, 384], sizes = [2, 128], strides = [1, 1]} : vector<2x512xf32> to vector<2x128xf32>
    %464 = arith.negf %463 : vector<2x128xf32>
    %465 = math.exp %464 : vector<2x128xf32>
    %cst_88 = arith.constant 1.000000e+00 : f32
    %466 = vector.broadcast %cst_88 : f32 to vector<2x128xf32>
    %467 = arith.addf %466, %465 : vector<2x128xf32>
    %468 = arith.divf %466, %467 : vector<2x128xf32>
    %469 = arith.mulf %460, %415 : vector<2x128xf32>
    %470 = arith.mulf %454, %462 : vector<2x128xf32>
    %471 = arith.addf %469, %470 : vector<2x128xf32>
    %472 = math.tanh %471 : vector<2x128xf32>
    %473 = arith.mulf %468, %472 : vector<2x128xf32>
    %474 = vector.extract_strided_slice %19 {offsets = [16, 0], sizes = [2, 512], strides = [1, 1]} : vector<20x1024xf32> to vector<2x512xf32>
    %cst_89 = arith.constant dense<0.000000e+00> : vector<2x512xf32>
    %475 = tpu.matmul %448, %20, %cst_89 {dimension_numbers = #tpu.dot_dimension_numbers<[1], [0], [0], [1], [0, 0, 1, 1], [], []>} : vector<2x128xf32>, vector<128x512xf32>, vector<2x512xf32> -> vector<2x512xf32>
    %476 = arith.addf %474, %475 : vector<2x512xf32>
    %477 = vector.extract_strided_slice %19 {offsets = [2, 512], sizes = [2, 512], strides = [1, 1]} : vector<20x1024xf32> to vector<2x512xf32>
    %cst_90 = arith.constant dense<0.000000e+00> : vector<2x512xf32>
    %478 = tpu.matmul %473, %21, %cst_90 {dimension_numbers = #tpu.dot_dimension_numbers<[1], [0], [0], [1], [0, 0, 1, 1], [], []>} : vector<2x128xf32>, vector<128x512xf32>, vector<2x512xf32> -> vector<2x512xf32>
    %479 = arith.addf %477, %478 : vector<2x512xf32>
    %480 = vector.extract_strided_slice %476 {offsets = [0, 0], sizes = [2, 128], strides = [1, 1]} : vector<2x512xf32> to vector<2x128xf32>
    %481 = arith.negf %480 : vector<2x128xf32>
    %482 = math.exp %481 : vector<2x128xf32>
    %cst_91 = arith.constant 1.000000e+00 : f32
    %483 = vector.broadcast %cst_91 : f32 to vector<2x128xf32>
    %484 = arith.addf %483, %482 : vector<2x128xf32>
    %485 = arith.divf %483, %484 : vector<2x128xf32>
    %486 = vector.extract_strided_slice %476 {offsets = [0, 128], sizes = [2, 128], strides = [1, 1]} : vector<2x512xf32> to vector<2x128xf32>
    %487 = arith.negf %486 : vector<2x128xf32>
    %488 = math.exp %487 : vector<2x128xf32>
    %cst_92 = arith.constant 1.000000e+00 : f32
    %489 = vector.broadcast %cst_92 : f32 to vector<2x128xf32>
    %490 = arith.addf %489, %488 : vector<2x128xf32>
    %491 = arith.divf %489, %490 : vector<2x128xf32>
    %492 = vector.extract_strided_slice %476 {offsets = [0, 256], sizes = [2, 128], strides = [1, 1]} : vector<2x512xf32> to vector<2x128xf32>
    %493 = math.tanh %492 : vector<2x128xf32>
    %494 = vector.extract_strided_slice %476 {offsets = [0, 384], sizes = [2, 128], strides = [1, 1]} : vector<2x512xf32> to vector<2x128xf32>
    %495 = arith.negf %494 : vector<2x128xf32>
    %496 = math.exp %495 : vector<2x128xf32>
    %cst_93 = arith.constant 1.000000e+00 : f32
    %497 = vector.broadcast %cst_93 : f32 to vector<2x128xf32>
    %498 = arith.addf %497, %496 : vector<2x128xf32>
    %499 = arith.divf %497, %498 : vector<2x128xf32>
    %500 = arith.mulf %491, %446 : vector<2x128xf32>
    %501 = arith.mulf %485, %493 : vector<2x128xf32>
    %502 = arith.addf %500, %501 : vector<2x128xf32>
    %503 = math.tanh %502 : vector<2x128xf32>
    %504 = arith.mulf %499, %503 : vector<2x128xf32>
    %505 = vector.extract_strided_slice %479 {offsets = [0, 0], sizes = [2, 128], strides = [1, 1]} : vector<2x512xf32> to vector<2x128xf32>
    %506 = arith.negf %505 : vector<2x128xf32>
    %507 = math.exp %506 : vector<2x128xf32>
    %cst_94 = arith.constant 1.000000e+00 : f32
    %508 = vector.broadcast %cst_94 : f32 to vector<2x128xf32>
    %509 = arith.addf %508, %507 : vector<2x128xf32>
    %510 = arith.divf %508, %509 : vector<2x128xf32>
    %511 = vector.extract_strided_slice %479 {offsets = [0, 128], sizes = [2, 128], strides = [1, 1]} : vector<2x512xf32> to vector<2x128xf32>
    %512 = arith.negf %511 : vector<2x128xf32>
    %513 = math.exp %512 : vector<2x128xf32>
    %cst_95 = arith.constant 1.000000e+00 : f32
    %514 = vector.broadcast %cst_95 : f32 to vector<2x128xf32>
    %515 = arith.addf %514, %513 : vector<2x128xf32>
    %516 = arith.divf %514, %515 : vector<2x128xf32>
    %517 = vector.extract_strided_slice %479 {offsets = [0, 256], sizes = [2, 128], strides = [1, 1]} : vector<2x512xf32> to vector<2x128xf32>
    %518 = math.tanh %517 : vector<2x128xf32>
    %519 = vector.extract_strided_slice %479 {offsets = [0, 384], sizes = [2, 128], strides = [1, 1]} : vector<2x512xf32> to vector<2x128xf32>
    %520 = arith.negf %519 : vector<2x128xf32>
    %521 = math.exp %520 : vector<2x128xf32>
    %cst_96 = arith.constant 1.000000e+00 : f32
    %522 = vector.broadcast %cst_96 : f32 to vector<2x128xf32>
    %523 = arith.addf %522, %521 : vector<2x128xf32>
    %524 = arith.divf %522, %523 : vector<2x128xf32>
    %525 = arith.mulf %516, %471 : vector<2x128xf32>
    %526 = arith.mulf %510, %518 : vector<2x128xf32>
    %527 = arith.addf %525, %526 : vector<2x128xf32>
    %528 = math.tanh %527 : vector<2x128xf32>
    %529 = arith.mulf %524, %528 : vector<2x128xf32>
    %530 = vector.extract_strided_slice %19 {offsets = [18, 0], sizes = [2, 512], strides = [1, 1]} : vector<20x1024xf32> to vector<2x512xf32>
    %cst_97 = arith.constant dense<0.000000e+00> : vector<2x512xf32>
    %531 = tpu.matmul %504, %20, %cst_97 {dimension_numbers = #tpu.dot_dimension_numbers<[1], [0], [0], [1], [0, 0, 1, 1], [], []>} : vector<2x128xf32>, vector<128x512xf32>, vector<2x512xf32> -> vector<2x512xf32>
    %532 = arith.addf %530, %531 : vector<2x512xf32>
    %533 = vector.extract_strided_slice %19 {offsets = [0, 512], sizes = [2, 512], strides = [1, 1]} : vector<20x1024xf32> to vector<2x512xf32>
    %cst_98 = arith.constant dense<0.000000e+00> : vector<2x512xf32>
    %534 = tpu.matmul %529, %21, %cst_98 {dimension_numbers = #tpu.dot_dimension_numbers<[1], [0], [0], [1], [0, 0, 1, 1], [], []>} : vector<2x128xf32>, vector<128x512xf32>, vector<2x512xf32> -> vector<2x512xf32>
    %535 = arith.addf %533, %534 : vector<2x512xf32>
    %536 = vector.extract_strided_slice %532 {offsets = [0, 0], sizes = [2, 128], strides = [1, 1]} : vector<2x512xf32> to vector<2x128xf32>
    %537 = arith.negf %536 : vector<2x128xf32>
    %538 = math.exp %537 : vector<2x128xf32>
    %cst_99 = arith.constant 1.000000e+00 : f32
    %539 = vector.broadcast %cst_99 : f32 to vector<2x128xf32>
    %540 = arith.addf %539, %538 : vector<2x128xf32>
    %541 = arith.divf %539, %540 : vector<2x128xf32>
    %542 = vector.extract_strided_slice %532 {offsets = [0, 128], sizes = [2, 128], strides = [1, 1]} : vector<2x512xf32> to vector<2x128xf32>
    %543 = arith.negf %542 : vector<2x128xf32>
    %544 = math.exp %543 : vector<2x128xf32>
    %cst_100 = arith.constant 1.000000e+00 : f32
    %545 = vector.broadcast %cst_100 : f32 to vector<2x128xf32>
    %546 = arith.addf %545, %544 : vector<2x128xf32>
    %547 = arith.divf %545, %546 : vector<2x128xf32>
    %548 = vector.extract_strided_slice %532 {offsets = [0, 256], sizes = [2, 128], strides = [1, 1]} : vector<2x512xf32> to vector<2x128xf32>
    %549 = math.tanh %548 : vector<2x128xf32>
    %550 = vector.extract_strided_slice %532 {offsets = [0, 384], sizes = [2, 128], strides = [1, 1]} : vector<2x512xf32> to vector<2x128xf32>
    %551 = arith.negf %550 : vector<2x128xf32>
    %552 = math.exp %551 : vector<2x128xf32>
    %cst_101 = arith.constant 1.000000e+00 : f32
    %553 = vector.broadcast %cst_101 : f32 to vector<2x128xf32>
    %554 = arith.addf %553, %552 : vector<2x128xf32>
    %555 = arith.divf %553, %554 : vector<2x128xf32>
    %556 = arith.mulf %547, %502 : vector<2x128xf32>
    %557 = arith.mulf %541, %549 : vector<2x128xf32>
    %558 = arith.addf %556, %557 : vector<2x128xf32>
    %559 = math.tanh %558 : vector<2x128xf32>
    %560 = arith.mulf %555, %559 : vector<2x128xf32>
    %561 = vector.extract_strided_slice %535 {offsets = [0, 0], sizes = [2, 128], strides = [1, 1]} : vector<2x512xf32> to vector<2x128xf32>
    %562 = arith.negf %561 : vector<2x128xf32>
    %563 = math.exp %562 : vector<2x128xf32>
    %cst_102 = arith.constant 1.000000e+00 : f32
    %564 = vector.broadcast %cst_102 : f32 to vector<2x128xf32>
    %565 = arith.addf %564, %563 : vector<2x128xf32>
    %566 = arith.divf %564, %565 : vector<2x128xf32>
    %567 = vector.extract_strided_slice %535 {offsets = [0, 128], sizes = [2, 128], strides = [1, 1]} : vector<2x512xf32> to vector<2x128xf32>
    %568 = arith.negf %567 : vector<2x128xf32>
    %569 = math.exp %568 : vector<2x128xf32>
    %cst_103 = arith.constant 1.000000e+00 : f32
    %570 = vector.broadcast %cst_103 : f32 to vector<2x128xf32>
    %571 = arith.addf %570, %569 : vector<2x128xf32>
    %572 = arith.divf %570, %571 : vector<2x128xf32>
    %573 = vector.extract_strided_slice %535 {offsets = [0, 256], sizes = [2, 128], strides = [1, 1]} : vector<2x512xf32> to vector<2x128xf32>
    %574 = math.tanh %573 : vector<2x128xf32>
    %575 = vector.extract_strided_slice %535 {offsets = [0, 384], sizes = [2, 128], strides = [1, 1]} : vector<2x512xf32> to vector<2x128xf32>
    %576 = arith.negf %575 : vector<2x128xf32>
    %577 = math.exp %576 : vector<2x128xf32>
    %cst_104 = arith.constant 1.000000e+00 : f32
    %578 = vector.broadcast %cst_104 : f32 to vector<2x128xf32>
    %579 = arith.addf %578, %577 : vector<2x128xf32>
    %580 = arith.divf %578, %579 : vector<2x128xf32>
    %581 = arith.mulf %572, %527 : vector<2x128xf32>
    %582 = arith.mulf %566, %574 : vector<2x128xf32>
    %583 = arith.addf %581, %582 : vector<2x128xf32>
    %584 = math.tanh %583 : vector<2x128xf32>
    %585 = arith.mulf %580, %584 : vector<2x128xf32>
    %586 = tpu.concatenate %56, %585 in 1 : vector<2x128xf32>, vector<2x128xf32> -> vector<2x256xf32>
    %587 = tpu.concatenate %112, %529 in 1 : vector<2x128xf32>, vector<2x128xf32> -> vector<2x256xf32>
    %588 = tpu.concatenate %168, %473 in 1 : vector<2x128xf32>, vector<2x128xf32> -> vector<2x256xf32>
    %589 = tpu.concatenate %224, %417 in 1 : vector<2x128xf32>, vector<2x128xf32> -> vector<2x256xf32>
    %590 = tpu.concatenate %280, %361 in 1 : vector<2x128xf32>, vector<2x128xf32> -> vector<2x256xf32>
    %591 = tpu.concatenate %336, %305 in 1 : vector<2x128xf32>, vector<2x128xf32> -> vector<2x256xf32>
    %592 = tpu.concatenate %392, %249 in 1 : vector<2x128xf32>, vector<2x128xf32> -> vector<2x256xf32>
    %593 = tpu.concatenate %448, %193 in 1 : vector<2x128xf32>, vector<2x128xf32> -> vector<2x256xf32>
    %594 = tpu.concatenate %504, %137 in 1 : vector<2x128xf32>, vector<2x128xf32> -> vector<2x256xf32>
    %595 = tpu.concatenate %560, %81 in 1 : vector<2x128xf32>, vector<2x128xf32> -> vector<2x256xf32>
    %596 = tpu.concatenate %586, %587, %588, %589, %590, %591, %592, %593, %594, %595 in 0 : vector<2x256xf32>, vector<2x256xf32>, vector<2x256xf32>, vector<2x256xf32>, vector<2x256xf32>, vector<2x256xf32>, vector<2x256xf32>, vector<2x256xf32>, vector<2x256xf32>, vector<2x256xf32> -> vector<20x256xf32>
    %c0_105 = arith.constant 0 : index
    %c0_106 = arith.constant 0 : index
    %597 = vector.load %arg9[%c0_105, %c0_106] : memref<256x1024xf32, #tpu.memory_space<vmem>>, vector<256x1024xf32>
    %cst_107 = arith.constant dense<0.000000e+00> : vector<20x1024xf32>
    %598 = tpu.matmul %596, %597, %cst_107 {dimension_numbers = #tpu.dot_dimension_numbers<[1], [0], [0], [1], [0, 0, 1, 1], [], []>} : vector<20x256xf32>, vector<256x1024xf32>, vector<20x1024xf32> -> vector<20x1024xf32>
    %c0_108 = arith.constant 0 : index
    %c0_109 = arith.constant 0 : index
    %599 = vector.load %arg10[%c0_108, %c0_109] : memref<1x1024xf32, #tpu.memory_space<vmem>>, vector<1x1024xf32>
    %600 = vector.broadcast %599 : vector<1x1024xf32> to vector<20x1024xf32>
    %601 = arith.addf %598, %600 : vector<20x1024xf32>
    %c0_110 = arith.constant 0 : index
    %c0_111 = arith.constant 0 : index
    %602 = vector.load %arg11[%c0_110, %c0_111] : memref<128x512xf32, #tpu.memory_space<vmem>>, vector<128x512xf32>
    %c0_112 = arith.constant 0 : index
    %c0_113 = arith.constant 0 : index
    %603 = vector.load %arg12[%c0_112, %c0_113] : memref<128x512xf32, #tpu.memory_space<vmem>>, vector<128x512xf32>
    %cst_114 = arith.constant 0.000000e+00 : f32
    %604 = vector.broadcast %cst_114 : f32 to vector<2x128xf32>
    %cst_115 = arith.constant 0.000000e+00 : f32
    %605 = vector.broadcast %cst_115 : f32 to vector<2x128xf32>
    %cst_116 = arith.constant 0.000000e+00 : f32
    %606 = vector.broadcast %cst_116 : f32 to vector<2x128xf32>
    %cst_117 = arith.constant 0.000000e+00 : f32
    %607 = vector.broadcast %cst_117 : f32 to vector<2x128xf32>
    %608 = vector.extract_strided_slice %601 {offsets = [0, 0], sizes = [2, 512], strides = [1, 1]} : vector<20x1024xf32> to vector<2x512xf32>
    %cst_118 = arith.constant dense<0.000000e+00> : vector<2x512xf32>
    %609 = tpu.matmul %604, %602, %cst_118 {dimension_numbers = #tpu.dot_dimension_numbers<[1], [0], [0], [1], [0, 0, 1, 1], [], []>} : vector<2x128xf32>, vector<128x512xf32>, vector<2x512xf32> -> vector<2x512xf32>
    %610 = arith.addf %608, %609 : vector<2x512xf32>
    %611 = vector.extract_strided_slice %601 {offsets = [18, 512], sizes = [2, 512], strides = [1, 1]} : vector<20x1024xf32> to vector<2x512xf32>
    %cst_119 = arith.constant dense<0.000000e+00> : vector<2x512xf32>
    %612 = tpu.matmul %606, %603, %cst_119 {dimension_numbers = #tpu.dot_dimension_numbers<[1], [0], [0], [1], [0, 0, 1, 1], [], []>} : vector<2x128xf32>, vector<128x512xf32>, vector<2x512xf32> -> vector<2x512xf32>
    %613 = arith.addf %611, %612 : vector<2x512xf32>
    %614 = vector.extract_strided_slice %610 {offsets = [0, 0], sizes = [2, 128], strides = [1, 1]} : vector<2x512xf32> to vector<2x128xf32>
    %615 = arith.negf %614 : vector<2x128xf32>
    %616 = math.exp %615 : vector<2x128xf32>
    %cst_120 = arith.constant 1.000000e+00 : f32
    %617 = vector.broadcast %cst_120 : f32 to vector<2x128xf32>
    %618 = arith.addf %617, %616 : vector<2x128xf32>
    %619 = arith.divf %617, %618 : vector<2x128xf32>
    %620 = vector.extract_strided_slice %610 {offsets = [0, 128], sizes = [2, 128], strides = [1, 1]} : vector<2x512xf32> to vector<2x128xf32>
    %621 = arith.negf %620 : vector<2x128xf32>
    %622 = math.exp %621 : vector<2x128xf32>
    %cst_121 = arith.constant 1.000000e+00 : f32
    %623 = vector.broadcast %cst_121 : f32 to vector<2x128xf32>
    %624 = arith.addf %623, %622 : vector<2x128xf32>
    %625 = arith.divf %623, %624 : vector<2x128xf32>
    %626 = vector.extract_strided_slice %610 {offsets = [0, 256], sizes = [2, 128], strides = [1, 1]} : vector<2x512xf32> to vector<2x128xf32>
    %627 = math.tanh %626 : vector<2x128xf32>
    %628 = vector.extract_strided_slice %610 {offsets = [0, 384], sizes = [2, 128], strides = [1, 1]} : vector<2x512xf32> to vector<2x128xf32>
    %629 = arith.negf %628 : vector<2x128xf32>
    %630 = math.exp %629 : vector<2x128xf32>
    %cst_122 = arith.constant 1.000000e+00 : f32
    %631 = vector.broadcast %cst_122 : f32 to vector<2x128xf32>
    %632 = arith.addf %631, %630 : vector<2x128xf32>
    %633 = arith.divf %631, %632 : vector<2x128xf32>
    %634 = arith.mulf %625, %605 : vector<2x128xf32>
    %635 = arith.mulf %619, %627 : vector<2x128xf32>
    %636 = arith.addf %634, %635 : vector<2x128xf32>
    %637 = math.tanh %636 : vector<2x128xf32>
    %638 = arith.mulf %633, %637 : vector<2x128xf32>
    %639 = vector.extract_strided_slice %613 {offsets = [0, 0], sizes = [2, 128], strides = [1, 1]} : vector<2x512xf32> to vector<2x128xf32>
    %640 = arith.negf %639 : vector<2x128xf32>
    %641 = math.exp %640 : vector<2x128xf32>
    %cst_123 = arith.constant 1.000000e+00 : f32
    %642 = vector.broadcast %cst_123 : f32 to vector<2x128xf32>
    %643 = arith.addf %642, %641 : vector<2x128xf32>
    %644 = arith.divf %642, %643 : vector<2x128xf32>
    %645 = vector.extract_strided_slice %613 {offsets = [0, 128], sizes = [2, 128], strides = [1, 1]} : vector<2x512xf32> to vector<2x128xf32>
    %646 = arith.negf %645 : vector<2x128xf32>
    %647 = math.exp %646 : vector<2x128xf32>
    %cst_124 = arith.constant 1.000000e+00 : f32
    %648 = vector.broadcast %cst_124 : f32 to vector<2x128xf32>
    %649 = arith.addf %648, %647 : vector<2x128xf32>
    %650 = arith.divf %648, %649 : vector<2x128xf32>
    %651 = vector.extract_strided_slice %613 {offsets = [0, 256], sizes = [2, 128], strides = [1, 1]} : vector<2x512xf32> to vector<2x128xf32>
    %652 = math.tanh %651 : vector<2x128xf32>
    %653 = vector.extract_strided_slice %613 {offsets = [0, 384], sizes = [2, 128], strides = [1, 1]} : vector<2x512xf32> to vector<2x128xf32>
    %654 = arith.negf %653 : vector<2x128xf32>
    %655 = math.exp %654 : vector<2x128xf32>
    %cst_125 = arith.constant 1.000000e+00 : f32
    %656 = vector.broadcast %cst_125 : f32 to vector<2x128xf32>
    %657 = arith.addf %656, %655 : vector<2x128xf32>
    %658 = arith.divf %656, %657 : vector<2x128xf32>
    %659 = arith.mulf %650, %607 : vector<2x128xf32>
    %660 = arith.mulf %644, %652 : vector<2x128xf32>
    %661 = arith.addf %659, %660 : vector<2x128xf32>
    %662 = math.tanh %661 : vector<2x128xf32>
    %663 = arith.mulf %658, %662 : vector<2x128xf32>
    %664 = vector.extract_strided_slice %601 {offsets = [2, 0], sizes = [2, 512], strides = [1, 1]} : vector<20x1024xf32> to vector<2x512xf32>
    %cst_126 = arith.constant dense<0.000000e+00> : vector<2x512xf32>
    %665 = tpu.matmul %638, %602, %cst_126 {dimension_numbers = #tpu.dot_dimension_numbers<[1], [0], [0], [1], [0, 0, 1, 1], [], []>} : vector<2x128xf32>, vector<128x512xf32>, vector<2x512xf32> -> vector<2x512xf32>
    %666 = arith.addf %664, %665 : vector<2x512xf32>
    %667 = vector.extract_strided_slice %666 {offsets = [0, 0], sizes = [2, 128], strides = [1, 1]} : vector<2x512xf32> to vector<2x128xf32>
    %668 = arith.negf %667 : vector<2x128xf32>
    %669 = math.exp %668 : vector<2x128xf32>
    %cst_127 = arith.constant 1.000000e+00 : f32
    %670 = vector.broadcast %cst_127 : f32 to vector<2x128xf32>
    %671 = arith.addf %670, %669 : vector<2x128xf32>
    %672 = arith.divf %670, %671 : vector<2x128xf32>
    %673 = vector.extract_strided_slice %666 {offsets = [0, 128], sizes = [2, 128], strides = [1, 1]} : vector<2x512xf32> to vector<2x128xf32>
    %674 = arith.negf %673 : vector<2x128xf32>
    %675 = math.exp %674 : vector<2x128xf32>
    %cst_128 = arith.constant 1.000000e+00 : f32
    %676 = vector.broadcast %cst_128 : f32 to vector<2x128xf32>
    %677 = arith.addf %676, %675 : vector<2x128xf32>
    %678 = arith.divf %676, %677 : vector<2x128xf32>
    %679 = vector.extract_strided_slice %666 {offsets = [0, 256], sizes = [2, 128], strides = [1, 1]} : vector<2x512xf32> to vector<2x128xf32>
    %680 = math.tanh %679 : vector<2x128xf32>
    %681 = vector.extract_strided_slice %666 {offsets = [0, 384], sizes = [2, 128], strides = [1, 1]} : vector<2x512xf32> to vector<2x128xf32>
    %682 = arith.negf %681 : vector<2x128xf32>
    %683 = math.exp %682 : vector<2x128xf32>
    %cst_129 = arith.constant 1.000000e+00 : f32
    %684 = vector.broadcast %cst_129 : f32 to vector<2x128xf32>
    %685 = arith.addf %684, %683 : vector<2x128xf32>
    %686 = arith.divf %684, %685 : vector<2x128xf32>
    %687 = arith.mulf %678, %636 : vector<2x128xf32>
    %688 = arith.mulf %672, %680 : vector<2x128xf32>
    %689 = arith.addf %687, %688 : vector<2x128xf32>
    %690 = math.tanh %689 : vector<2x128xf32>
    %691 = arith.mulf %686, %690 : vector<2x128xf32>
    %692 = vector.extract_strided_slice %601 {offsets = [4, 0], sizes = [2, 512], strides = [1, 1]} : vector<20x1024xf32> to vector<2x512xf32>
    %cst_130 = arith.constant dense<0.000000e+00> : vector<2x512xf32>
    %693 = tpu.matmul %691, %602, %cst_130 {dimension_numbers = #tpu.dot_dimension_numbers<[1], [0], [0], [1], [0, 0, 1, 1], [], []>} : vector<2x128xf32>, vector<128x512xf32>, vector<2x512xf32> -> vector<2x512xf32>
    %694 = arith.addf %692, %693 : vector<2x512xf32>
    %695 = vector.extract_strided_slice %694 {offsets = [0, 0], sizes = [2, 128], strides = [1, 1]} : vector<2x512xf32> to vector<2x128xf32>
    %696 = arith.negf %695 : vector<2x128xf32>
    %697 = math.exp %696 : vector<2x128xf32>
    %cst_131 = arith.constant 1.000000e+00 : f32
    %698 = vector.broadcast %cst_131 : f32 to vector<2x128xf32>
    %699 = arith.addf %698, %697 : vector<2x128xf32>
    %700 = arith.divf %698, %699 : vector<2x128xf32>
    %701 = vector.extract_strided_slice %694 {offsets = [0, 128], sizes = [2, 128], strides = [1, 1]} : vector<2x512xf32> to vector<2x128xf32>
    %702 = arith.negf %701 : vector<2x128xf32>
    %703 = math.exp %702 : vector<2x128xf32>
    %cst_132 = arith.constant 1.000000e+00 : f32
    %704 = vector.broadcast %cst_132 : f32 to vector<2x128xf32>
    %705 = arith.addf %704, %703 : vector<2x128xf32>
    %706 = arith.divf %704, %705 : vector<2x128xf32>
    %707 = vector.extract_strided_slice %694 {offsets = [0, 256], sizes = [2, 128], strides = [1, 1]} : vector<2x512xf32> to vector<2x128xf32>
    %708 = math.tanh %707 : vector<2x128xf32>
    %709 = vector.extract_strided_slice %694 {offsets = [0, 384], sizes = [2, 128], strides = [1, 1]} : vector<2x512xf32> to vector<2x128xf32>
    %710 = arith.negf %709 : vector<2x128xf32>
    %711 = math.exp %710 : vector<2x128xf32>
    %cst_133 = arith.constant 1.000000e+00 : f32
    %712 = vector.broadcast %cst_133 : f32 to vector<2x128xf32>
    %713 = arith.addf %712, %711 : vector<2x128xf32>
    %714 = arith.divf %712, %713 : vector<2x128xf32>
    %715 = arith.mulf %706, %689 : vector<2x128xf32>
    %716 = arith.mulf %700, %708 : vector<2x128xf32>
    %717 = arith.addf %715, %716 : vector<2x128xf32>
    %718 = math.tanh %717 : vector<2x128xf32>
    %719 = arith.mulf %714, %718 : vector<2x128xf32>
    %720 = vector.extract_strided_slice %601 {offsets = [6, 0], sizes = [2, 512], strides = [1, 1]} : vector<20x1024xf32> to vector<2x512xf32>
    %cst_134 = arith.constant dense<0.000000e+00> : vector<2x512xf32>
    %721 = tpu.matmul %719, %602, %cst_134 {dimension_numbers = #tpu.dot_dimension_numbers<[1], [0], [0], [1], [0, 0, 1, 1], [], []>} : vector<2x128xf32>, vector<128x512xf32>, vector<2x512xf32> -> vector<2x512xf32>
    %722 = arith.addf %720, %721 : vector<2x512xf32>
    %723 = vector.extract_strided_slice %722 {offsets = [0, 0], sizes = [2, 128], strides = [1, 1]} : vector<2x512xf32> to vector<2x128xf32>
    %724 = arith.negf %723 : vector<2x128xf32>
    %725 = math.exp %724 : vector<2x128xf32>
    %cst_135 = arith.constant 1.000000e+00 : f32
    %726 = vector.broadcast %cst_135 : f32 to vector<2x128xf32>
    %727 = arith.addf %726, %725 : vector<2x128xf32>
    %728 = arith.divf %726, %727 : vector<2x128xf32>
    %729 = vector.extract_strided_slice %722 {offsets = [0, 128], sizes = [2, 128], strides = [1, 1]} : vector<2x512xf32> to vector<2x128xf32>
    %730 = arith.negf %729 : vector<2x128xf32>
    %731 = math.exp %730 : vector<2x128xf32>
    %cst_136 = arith.constant 1.000000e+00 : f32
    %732 = vector.broadcast %cst_136 : f32 to vector<2x128xf32>
    %733 = arith.addf %732, %731 : vector<2x128xf32>
    %734 = arith.divf %732, %733 : vector<2x128xf32>
    %735 = vector.extract_strided_slice %722 {offsets = [0, 256], sizes = [2, 128], strides = [1, 1]} : vector<2x512xf32> to vector<2x128xf32>
    %736 = math.tanh %735 : vector<2x128xf32>
    %737 = vector.extract_strided_slice %722 {offsets = [0, 384], sizes = [2, 128], strides = [1, 1]} : vector<2x512xf32> to vector<2x128xf32>
    %738 = arith.negf %737 : vector<2x128xf32>
    %739 = math.exp %738 : vector<2x128xf32>
    %cst_137 = arith.constant 1.000000e+00 : f32
    %740 = vector.broadcast %cst_137 : f32 to vector<2x128xf32>
    %741 = arith.addf %740, %739 : vector<2x128xf32>
    %742 = arith.divf %740, %741 : vector<2x128xf32>
    %743 = arith.mulf %734, %717 : vector<2x128xf32>
    %744 = arith.mulf %728, %736 : vector<2x128xf32>
    %745 = arith.addf %743, %744 : vector<2x128xf32>
    %746 = math.tanh %745 : vector<2x128xf32>
    %747 = arith.mulf %742, %746 : vector<2x128xf32>
    %748 = vector.extract_strided_slice %601 {offsets = [8, 0], sizes = [2, 512], strides = [1, 1]} : vector<20x1024xf32> to vector<2x512xf32>
    %cst_138 = arith.constant dense<0.000000e+00> : vector<2x512xf32>
    %749 = tpu.matmul %747, %602, %cst_138 {dimension_numbers = #tpu.dot_dimension_numbers<[1], [0], [0], [1], [0, 0, 1, 1], [], []>} : vector<2x128xf32>, vector<128x512xf32>, vector<2x512xf32> -> vector<2x512xf32>
    %750 = arith.addf %748, %749 : vector<2x512xf32>
    %751 = vector.extract_strided_slice %750 {offsets = [0, 0], sizes = [2, 128], strides = [1, 1]} : vector<2x512xf32> to vector<2x128xf32>
    %752 = arith.negf %751 : vector<2x128xf32>
    %753 = math.exp %752 : vector<2x128xf32>
    %cst_139 = arith.constant 1.000000e+00 : f32
    %754 = vector.broadcast %cst_139 : f32 to vector<2x128xf32>
    %755 = arith.addf %754, %753 : vector<2x128xf32>
    %756 = arith.divf %754, %755 : vector<2x128xf32>
    %757 = vector.extract_strided_slice %750 {offsets = [0, 128], sizes = [2, 128], strides = [1, 1]} : vector<2x512xf32> to vector<2x128xf32>
    %758 = arith.negf %757 : vector<2x128xf32>
    %759 = math.exp %758 : vector<2x128xf32>
    %cst_140 = arith.constant 1.000000e+00 : f32
    %760 = vector.broadcast %cst_140 : f32 to vector<2x128xf32>
    %761 = arith.addf %760, %759 : vector<2x128xf32>
    %762 = arith.divf %760, %761 : vector<2x128xf32>
    %763 = vector.extract_strided_slice %750 {offsets = [0, 256], sizes = [2, 128], strides = [1, 1]} : vector<2x512xf32> to vector<2x128xf32>
    %764 = math.tanh %763 : vector<2x128xf32>
    %765 = vector.extract_strided_slice %750 {offsets = [0, 384], sizes = [2, 128], strides = [1, 1]} : vector<2x512xf32> to vector<2x128xf32>
    %766 = arith.negf %765 : vector<2x128xf32>
    %767 = math.exp %766 : vector<2x128xf32>
    %cst_141 = arith.constant 1.000000e+00 : f32
    %768 = vector.broadcast %cst_141 : f32 to vector<2x128xf32>
    %769 = arith.addf %768, %767 : vector<2x128xf32>
    %770 = arith.divf %768, %769 : vector<2x128xf32>
    %771 = arith.mulf %762, %745 : vector<2x128xf32>
    %772 = arith.mulf %756, %764 : vector<2x128xf32>
    %773 = arith.addf %771, %772 : vector<2x128xf32>
    %774 = math.tanh %773 : vector<2x128xf32>
    %775 = arith.mulf %770, %774 : vector<2x128xf32>
    %776 = vector.extract_strided_slice %601 {offsets = [10, 0], sizes = [2, 512], strides = [1, 1]} : vector<20x1024xf32> to vector<2x512xf32>
    %cst_142 = arith.constant dense<0.000000e+00> : vector<2x512xf32>
    %777 = tpu.matmul %775, %602, %cst_142 {dimension_numbers = #tpu.dot_dimension_numbers<[1], [0], [0], [1], [0, 0, 1, 1], [], []>} : vector<2x128xf32>, vector<128x512xf32>, vector<2x512xf32> -> vector<2x512xf32>
    %778 = arith.addf %776, %777 : vector<2x512xf32>
    %779 = vector.extract_strided_slice %778 {offsets = [0, 0], sizes = [2, 128], strides = [1, 1]} : vector<2x512xf32> to vector<2x128xf32>
    %780 = arith.negf %779 : vector<2x128xf32>
    %781 = math.exp %780 : vector<2x128xf32>
    %cst_143 = arith.constant 1.000000e+00 : f32
    %782 = vector.broadcast %cst_143 : f32 to vector<2x128xf32>
    %783 = arith.addf %782, %781 : vector<2x128xf32>
    %784 = arith.divf %782, %783 : vector<2x128xf32>
    %785 = vector.extract_strided_slice %778 {offsets = [0, 128], sizes = [2, 128], strides = [1, 1]} : vector<2x512xf32> to vector<2x128xf32>
    %786 = arith.negf %785 : vector<2x128xf32>
    %787 = math.exp %786 : vector<2x128xf32>
    %cst_144 = arith.constant 1.000000e+00 : f32
    %788 = vector.broadcast %cst_144 : f32 to vector<2x128xf32>
    %789 = arith.addf %788, %787 : vector<2x128xf32>
    %790 = arith.divf %788, %789 : vector<2x128xf32>
    %791 = vector.extract_strided_slice %778 {offsets = [0, 256], sizes = [2, 128], strides = [1, 1]} : vector<2x512xf32> to vector<2x128xf32>
    %792 = math.tanh %791 : vector<2x128xf32>
    %793 = vector.extract_strided_slice %778 {offsets = [0, 384], sizes = [2, 128], strides = [1, 1]} : vector<2x512xf32> to vector<2x128xf32>
    %794 = arith.negf %793 : vector<2x128xf32>
    %795 = math.exp %794 : vector<2x128xf32>
    %cst_145 = arith.constant 1.000000e+00 : f32
    %796 = vector.broadcast %cst_145 : f32 to vector<2x128xf32>
    %797 = arith.addf %796, %795 : vector<2x128xf32>
    %798 = arith.divf %796, %797 : vector<2x128xf32>
    %799 = arith.mulf %790, %773 : vector<2x128xf32>
    %800 = arith.mulf %784, %792 : vector<2x128xf32>
    %801 = arith.addf %799, %800 : vector<2x128xf32>
    %802 = math.tanh %801 : vector<2x128xf32>
    %803 = arith.mulf %798, %802 : vector<2x128xf32>
    %804 = vector.extract_strided_slice %601 {offsets = [12, 0], sizes = [2, 512], strides = [1, 1]} : vector<20x1024xf32> to vector<2x512xf32>
    %cst_146 = arith.constant dense<0.000000e+00> : vector<2x512xf32>
    %805 = tpu.matmul %803, %602, %cst_146 {dimension_numbers = #tpu.dot_dimension_numbers<[1], [0], [0], [1], [0, 0, 1, 1], [], []>} : vector<2x128xf32>, vector<128x512xf32>, vector<2x512xf32> -> vector<2x512xf32>
    %806 = arith.addf %804, %805 : vector<2x512xf32>
    %807 = vector.extract_strided_slice %806 {offsets = [0, 0], sizes = [2, 128], strides = [1, 1]} : vector<2x512xf32> to vector<2x128xf32>
    %808 = arith.negf %807 : vector<2x128xf32>
    %809 = math.exp %808 : vector<2x128xf32>
    %cst_147 = arith.constant 1.000000e+00 : f32
    %810 = vector.broadcast %cst_147 : f32 to vector<2x128xf32>
    %811 = arith.addf %810, %809 : vector<2x128xf32>
    %812 = arith.divf %810, %811 : vector<2x128xf32>
    %813 = vector.extract_strided_slice %806 {offsets = [0, 128], sizes = [2, 128], strides = [1, 1]} : vector<2x512xf32> to vector<2x128xf32>
    %814 = arith.negf %813 : vector<2x128xf32>
    %815 = math.exp %814 : vector<2x128xf32>
    %cst_148 = arith.constant 1.000000e+00 : f32
    %816 = vector.broadcast %cst_148 : f32 to vector<2x128xf32>
    %817 = arith.addf %816, %815 : vector<2x128xf32>
    %818 = arith.divf %816, %817 : vector<2x128xf32>
    %819 = vector.extract_strided_slice %806 {offsets = [0, 256], sizes = [2, 128], strides = [1, 1]} : vector<2x512xf32> to vector<2x128xf32>
    %820 = math.tanh %819 : vector<2x128xf32>
    %821 = vector.extract_strided_slice %806 {offsets = [0, 384], sizes = [2, 128], strides = [1, 1]} : vector<2x512xf32> to vector<2x128xf32>
    %822 = arith.negf %821 : vector<2x128xf32>
    %823 = math.exp %822 : vector<2x128xf32>
    %cst_149 = arith.constant 1.000000e+00 : f32
    %824 = vector.broadcast %cst_149 : f32 to vector<2x128xf32>
    %825 = arith.addf %824, %823 : vector<2x128xf32>
    %826 = arith.divf %824, %825 : vector<2x128xf32>
    %827 = arith.mulf %818, %801 : vector<2x128xf32>
    %828 = arith.mulf %812, %820 : vector<2x128xf32>
    %829 = arith.addf %827, %828 : vector<2x128xf32>
    %830 = math.tanh %829 : vector<2x128xf32>
    %831 = arith.mulf %826, %830 : vector<2x128xf32>
    %832 = vector.extract_strided_slice %601 {offsets = [14, 0], sizes = [2, 512], strides = [1, 1]} : vector<20x1024xf32> to vector<2x512xf32>
    %cst_150 = arith.constant dense<0.000000e+00> : vector<2x512xf32>
    %833 = tpu.matmul %831, %602, %cst_150 {dimension_numbers = #tpu.dot_dimension_numbers<[1], [0], [0], [1], [0, 0, 1, 1], [], []>} : vector<2x128xf32>, vector<128x512xf32>, vector<2x512xf32> -> vector<2x512xf32>
    %834 = arith.addf %832, %833 : vector<2x512xf32>
    %835 = vector.extract_strided_slice %834 {offsets = [0, 0], sizes = [2, 128], strides = [1, 1]} : vector<2x512xf32> to vector<2x128xf32>
    %836 = arith.negf %835 : vector<2x128xf32>
    %837 = math.exp %836 : vector<2x128xf32>
    %cst_151 = arith.constant 1.000000e+00 : f32
    %838 = vector.broadcast %cst_151 : f32 to vector<2x128xf32>
    %839 = arith.addf %838, %837 : vector<2x128xf32>
    %840 = arith.divf %838, %839 : vector<2x128xf32>
    %841 = vector.extract_strided_slice %834 {offsets = [0, 128], sizes = [2, 128], strides = [1, 1]} : vector<2x512xf32> to vector<2x128xf32>
    %842 = arith.negf %841 : vector<2x128xf32>
    %843 = math.exp %842 : vector<2x128xf32>
    %cst_152 = arith.constant 1.000000e+00 : f32
    %844 = vector.broadcast %cst_152 : f32 to vector<2x128xf32>
    %845 = arith.addf %844, %843 : vector<2x128xf32>
    %846 = arith.divf %844, %845 : vector<2x128xf32>
    %847 = vector.extract_strided_slice %834 {offsets = [0, 256], sizes = [2, 128], strides = [1, 1]} : vector<2x512xf32> to vector<2x128xf32>
    %848 = math.tanh %847 : vector<2x128xf32>
    %849 = vector.extract_strided_slice %834 {offsets = [0, 384], sizes = [2, 128], strides = [1, 1]} : vector<2x512xf32> to vector<2x128xf32>
    %850 = arith.negf %849 : vector<2x128xf32>
    %851 = math.exp %850 : vector<2x128xf32>
    %cst_153 = arith.constant 1.000000e+00 : f32
    %852 = vector.broadcast %cst_153 : f32 to vector<2x128xf32>
    %853 = arith.addf %852, %851 : vector<2x128xf32>
    %854 = arith.divf %852, %853 : vector<2x128xf32>
    %855 = arith.mulf %846, %829 : vector<2x128xf32>
    %856 = arith.mulf %840, %848 : vector<2x128xf32>
    %857 = arith.addf %855, %856 : vector<2x128xf32>
    %858 = math.tanh %857 : vector<2x128xf32>
    %859 = arith.mulf %854, %858 : vector<2x128xf32>
    %860 = vector.extract_strided_slice %601 {offsets = [16, 0], sizes = [2, 512], strides = [1, 1]} : vector<20x1024xf32> to vector<2x512xf32>
    %cst_154 = arith.constant dense<0.000000e+00> : vector<2x512xf32>
    %861 = tpu.matmul %859, %602, %cst_154 {dimension_numbers = #tpu.dot_dimension_numbers<[1], [0], [0], [1], [0, 0, 1, 1], [], []>} : vector<2x128xf32>, vector<128x512xf32>, vector<2x512xf32> -> vector<2x512xf32>
    %862 = arith.addf %860, %861 : vector<2x512xf32>
    %863 = vector.extract_strided_slice %862 {offsets = [0, 0], sizes = [2, 128], strides = [1, 1]} : vector<2x512xf32> to vector<2x128xf32>
    %864 = arith.negf %863 : vector<2x128xf32>
    %865 = math.exp %864 : vector<2x128xf32>
    %cst_155 = arith.constant 1.000000e+00 : f32
    %866 = vector.broadcast %cst_155 : f32 to vector<2x128xf32>
    %867 = arith.addf %866, %865 : vector<2x128xf32>
    %868 = arith.divf %866, %867 : vector<2x128xf32>
    %869 = vector.extract_strided_slice %862 {offsets = [0, 128], sizes = [2, 128], strides = [1, 1]} : vector<2x512xf32> to vector<2x128xf32>
    %870 = arith.negf %869 : vector<2x128xf32>
    %871 = math.exp %870 : vector<2x128xf32>
    %cst_156 = arith.constant 1.000000e+00 : f32
    %872 = vector.broadcast %cst_156 : f32 to vector<2x128xf32>
    %873 = arith.addf %872, %871 : vector<2x128xf32>
    %874 = arith.divf %872, %873 : vector<2x128xf32>
    %875 = vector.extract_strided_slice %862 {offsets = [0, 256], sizes = [2, 128], strides = [1, 1]} : vector<2x512xf32> to vector<2x128xf32>
    %876 = math.tanh %875 : vector<2x128xf32>
    %877 = vector.extract_strided_slice %862 {offsets = [0, 384], sizes = [2, 128], strides = [1, 1]} : vector<2x512xf32> to vector<2x128xf32>
    %878 = arith.negf %877 : vector<2x128xf32>
    %879 = math.exp %878 : vector<2x128xf32>
    %cst_157 = arith.constant 1.000000e+00 : f32
    %880 = vector.broadcast %cst_157 : f32 to vector<2x128xf32>
    %881 = arith.addf %880, %879 : vector<2x128xf32>
    %882 = arith.divf %880, %881 : vector<2x128xf32>
    %883 = arith.mulf %874, %857 : vector<2x128xf32>
    %884 = arith.mulf %868, %876 : vector<2x128xf32>
    %885 = arith.addf %883, %884 : vector<2x128xf32>
    %886 = math.tanh %885 : vector<2x128xf32>
    %887 = arith.mulf %882, %886 : vector<2x128xf32>
    %888 = vector.extract_strided_slice %601 {offsets = [18, 0], sizes = [2, 512], strides = [1, 1]} : vector<20x1024xf32> to vector<2x512xf32>
    %cst_158 = arith.constant dense<0.000000e+00> : vector<2x512xf32>
    %889 = tpu.matmul %887, %602, %cst_158 {dimension_numbers = #tpu.dot_dimension_numbers<[1], [0], [0], [1], [0, 0, 1, 1], [], []>} : vector<2x128xf32>, vector<128x512xf32>, vector<2x512xf32> -> vector<2x512xf32>
    %890 = arith.addf %888, %889 : vector<2x512xf32>
    %891 = vector.extract_strided_slice %890 {offsets = [0, 0], sizes = [2, 128], strides = [1, 1]} : vector<2x512xf32> to vector<2x128xf32>
    %892 = arith.negf %891 : vector<2x128xf32>
    %893 = math.exp %892 : vector<2x128xf32>
    %cst_159 = arith.constant 1.000000e+00 : f32
    %894 = vector.broadcast %cst_159 : f32 to vector<2x128xf32>
    %895 = arith.addf %894, %893 : vector<2x128xf32>
    %896 = arith.divf %894, %895 : vector<2x128xf32>
    %897 = vector.extract_strided_slice %890 {offsets = [0, 128], sizes = [2, 128], strides = [1, 1]} : vector<2x512xf32> to vector<2x128xf32>
    %898 = arith.negf %897 : vector<2x128xf32>
    %899 = math.exp %898 : vector<2x128xf32>
    %cst_160 = arith.constant 1.000000e+00 : f32
    %900 = vector.broadcast %cst_160 : f32 to vector<2x128xf32>
    %901 = arith.addf %900, %899 : vector<2x128xf32>
    %902 = arith.divf %900, %901 : vector<2x128xf32>
    %903 = vector.extract_strided_slice %890 {offsets = [0, 256], sizes = [2, 128], strides = [1, 1]} : vector<2x512xf32> to vector<2x128xf32>
    %904 = math.tanh %903 : vector<2x128xf32>
    %905 = vector.extract_strided_slice %890 {offsets = [0, 384], sizes = [2, 128], strides = [1, 1]} : vector<2x512xf32> to vector<2x128xf32>
    %906 = arith.negf %905 : vector<2x128xf32>
    %907 = math.exp %906 : vector<2x128xf32>
    %cst_161 = arith.constant 1.000000e+00 : f32
    %908 = vector.broadcast %cst_161 : f32 to vector<2x128xf32>
    %909 = arith.addf %908, %907 : vector<2x128xf32>
    %910 = arith.divf %908, %909 : vector<2x128xf32>
    %911 = arith.mulf %902, %885 : vector<2x128xf32>
    %912 = arith.mulf %896, %904 : vector<2x128xf32>
    %913 = arith.addf %911, %912 : vector<2x128xf32>
    %914 = math.tanh %913 : vector<2x128xf32>
    %915 = arith.mulf %910, %914 : vector<2x128xf32>
    %916 = tpu.concatenate %915, %663 in 1 : vector<2x128xf32>, vector<2x128xf32> -> vector<2x256xf32>
    %c0_162 = arith.constant 0 : index
    %c0_163 = arith.constant 0 : index
    %917 = vector.load %arg13[%c0_162, %c0_163] : memref<256x512xf32, #tpu.memory_space<vmem>>, vector<256x512xf32>
    %cst_164 = arith.constant dense<0.000000e+00> : vector<2x512xf32>
    %918 = tpu.matmul %916, %917, %cst_164 {dimension_numbers = #tpu.dot_dimension_numbers<[1], [0], [0], [1], [0, 0, 1, 1], [], []>} : vector<2x256xf32>, vector<256x512xf32>, vector<2x512xf32> -> vector<2x512xf32>
    %c0_165 = arith.constant 0 : index
    %c0_166 = arith.constant 0 : index
    %919 = vector.load %arg14[%c0_165, %c0_166] : memref<1x512xf32, #tpu.memory_space<vmem>>, vector<1x512xf32>
    %920 = vector.broadcast %919 : vector<1x512xf32> to vector<2x512xf32>
    %921 = arith.addf %918, %920 : vector<2x512xf32>
    %cst_167 = arith.constant 0.000000e+00 : f32
    %922 = vector.broadcast %cst_167 : f32 to vector<2x512xf32>
    %923 = arith.maximumf %921, %922 : vector<2x512xf32>
    %c0_168 = arith.constant 0 : index
    %c0_169 = arith.constant 0 : index
    %924 = vector.load %arg15[%c0_168, %c0_169] : memref<512x128xf32, #tpu.memory_space<vmem>>, vector<512x128xf32>
    %cst_170 = arith.constant dense<0.000000e+00> : vector<2x128xf32>
    %925 = tpu.matmul %923, %924, %cst_170 {dimension_numbers = #tpu.dot_dimension_numbers<[1], [0], [0], [1], [0, 0, 1, 1], [], []>} : vector<2x512xf32>, vector<512x128xf32>, vector<2x128xf32> -> vector<2x128xf32>
    %c0_171 = arith.constant 0 : index
    %c0_172 = arith.constant 0 : index
    %926 = vector.load %arg16[%c0_171, %c0_172] : memref<1x128xf32, #tpu.memory_space<vmem>>, vector<1x128xf32>
    %927 = vector.broadcast %926 : vector<1x128xf32> to vector<2x128xf32>
    %928 = arith.addf %925, %927 : vector<2x128xf32>
    %c0_173 = arith.constant 0 : index
    %c0_174 = arith.constant 0 : index
    %929 = vector.load %arg17[%c0_173, %c0_174] : memref<128x1xf32, #tpu.memory_space<vmem>>, vector<128x1xf32>
    %cst_175 = arith.constant dense<0.000000e+00> : vector<2x1xf32>
    %930 = tpu.matmul %928, %929, %cst_175 {dimension_numbers = #tpu.dot_dimension_numbers<[1], [0], [0], [1], [0, 0, 1, 1], [], []>} : vector<2x128xf32>, vector<128x1xf32>, vector<2x1xf32> -> vector<2x1xf32>
    %c0_176 = arith.constant 0 : index
    %c0_177 = arith.constant 0 : index
    %931 = vector.load %arg18[%c0_176, %c0_177] : memref<1x1xf32, #tpu.memory_space<vmem>>, vector<1x1xf32>
    %932 = vector.broadcast %931 : vector<1x1xf32> to vector<2x1xf32>
    %933 = arith.addf %930, %932 : vector<2x1xf32>
    %934 = vector.shape_cast %933 : vector<2x1xf32> to vector<2x1xf32>
    %935 = vector.broadcast %934 : vector<2x1xf32> to vector<2x128xf32>
    %c0_178 = arith.constant 0 : index
    %c0_179 = arith.constant 0 : index
    %936 = vector.load %arg19[%c0_178, %c0_179] : memref<2x128xf32, #tpu.memory_space<vmem>>, vector<2x128xf32>
    tpu.vector_store %arg19[%c0_178, %c0_179], %935 {strides = array<i32>} : memref<2x128xf32, #tpu.memory_space<vmem>>, vector<2x128xf32>,
    return
  }
}

</mosaic_0001>

<llo_original>
// kernel: tpu_custom_call.1
$region0: #{tpu_custom_call.1}
  #allocation0 [shape = 'u32[]', space=smem, size = 0x4, offset = 0x4, fixed_abs, tag = 'smem constant byte address 0x4 - core index']
  #allocation1 [shape = 'u32[144,128]{1,0:T(1,128)}', space=vmem, size = 0x12000, scoped, tag = 'internal scratch']
  #allocation2 [shape = 'f32[1,1]{1,0:T(1,128)S(1)}', space=vmem, size = 0x200, scoped, tag = 'scoped memory for tpu_custom_call.1']
  %s0 = inlined_call_operand.vmem [shape: f32[20,33], index: 0, kind: input, shape index: {}]
  %s1 = inlined_call_operand.vmem [shape: f32[33,224], index: 1, kind: input, shape index: {}]
  %s2 = inlined_call_operand.vmem [shape: f32[1,224], index: 2, kind: input, shape index: {}]
  %s3 = inlined_call_operand.vmem [shape: f32[224,3], index: 3, kind: input, shape index: {}]
  %s4 = inlined_call_operand.vmem [shape: f32[1,3], index: 4, kind: input, shape index: {}]
  %s5 = inlined_call_operand.vmem [shape: f32[3,1024], index: 5, kind: input, shape index: {}]
  %s6 = inlined_call_operand.vmem [shape: f32[1,1024], index: 6, kind: input, shape index: {}]
  %s7 = inlined_call_operand.hbm [shape: f32[128,512], index: 7, kind: input, shape index: {}]
  %s8 = inlined_call_operand.hbm [shape: f32[128,512], index: 8, kind: input, shape index: {}]
  %s9 = inlined_call_operand.hbm [shape: f32[256,1024], index: 9, kind: input, shape index: {}]
  %s10 = inlined_call_operand.vmem [shape: f32[1,1024], index: 10, kind: input, shape index: {}]
  %s11 = inlined_call_operand.hbm [shape: f32[128,512], index: 11, kind: input, shape index: {}]
  %s12 = inlined_call_operand.hbm [shape: f32[128,512], index: 12, kind: input, shape index: {}]
  %s13 = inlined_call_operand.hbm [shape: f32[256,512], index: 13, kind: input, shape index: {}]
  %s14 = inlined_call_operand.vmem [shape: f32[1,512], index: 14, kind: input, shape index: {}]
  %s15 = inlined_call_operand.hbm [shape: f32[512,128], index: 15, kind: input, shape index: {}]
  %s16 = inlined_call_operand.vmem [shape: f32[1,128], index: 16, kind: input, shape index: {}]
  %s17 = inlined_call_operand.vmem [shape: f32[128,1], index: 17, kind: input, shape index: {}]
  %s18 = inlined_call_operand.<no memory space> [shape: f32[1,1], index: 18, kind: input, shape index: {}]
  %s19 = inlined_call_operand.hbm [shape: f32[2,128], index: 19, kind: output, shape index: {}]
  %s20 = sld [smem:[#allocation0]]
  $region114: #{tpu_custom_call.1} parent=0
    _
  %s22 = ssub.s32 1, %s20
  %s23 = scalar_select 0, %s22, %s20
  %v24 = vstv %s18
  %25 = vst [vmem:[#allocation2] sm:$0x1] %v24
  $region1: #{tpu_custom_call.1} parent=0
    #allocation3 [shape = 'u8[262144]{0}', space=vmem, size = 0x40000, scoped, tag = 'input window, operand 7, single buffered']
    #allocation4 [shape = 's32[1]{0}', space=sflag, size = 0x4, scoped, tag = 'scoped memory for tpu_custom_call.1']
    #allocation5 [shape = 's32[1]{0}', space=sflag, size = 0x4, scoped, tag = 'scoped memory for tpu_custom_call.1']
    #allocation6 [shape = 'u8[262144]{0}', space=vmem, size = 0x40000, scoped, tag = 'input window, operand 8, single buffered']
    #allocation7 [shape = 's32[1]{0}', space=sflag, size = 0x4, scoped, tag = 'scoped memory for tpu_custom_call.1']
    #allocation8 [shape = 'u8[1048576]{0}', space=vmem, size = 0x100000, scoped, tag = 'input window, operand 9, single buffered']
    #allocation9 [shape = 'u8[262144]{0}', space=vmem, size = 0x40000, scoped, tag = 'input window, operand 11, single buffered']
    #allocation10 [shape = 's32[1]{0}', space=sflag, size = 0x4, scoped, tag = 'scoped memory for tpu_custom_call.1']
    #allocation11 [shape = 'u8[262144]{0}', space=vmem, size = 0x40000, scoped, tag = 'input window, operand 12, single buffered']
    #allocation12 [shape = 'u8[524288]{0}', space=vmem, size = 0x80000, scoped, tag = 'input window, operand 13, single buffered']
    #allocation13 [shape = 's32[1]{0}', space=sflag, size = 0x4, scoped, tag = 'scoped memory for tpu_custom_call.1']
    #allocation14 [shape = 'u8[262144]{0}', space=vmem, size = 0x40000, scoped, tag = 'input window, operand 15, single buffered']
    #allocation15 [shape = 'u8[1024]{0}', space=vmem, size = 0x400, scoped, tag = 'output window, operand 0, single buffered']
    %26 = vsyncpa [#allocation4], 0
    %27 = vsyncpa [#allocation7], 0
    %28 = vsyncpa [#allocation10], 0
    %29 = vsyncpa [#allocation13], 0
    %30 = vsyncpa [#allocation5], 0
    // Predicated region
    $region2: #{tpu_custom_call.1} parent=1 // pred_check
      _
    $region3: #{tpu_custom_call.1} parent=1 // pred_check_branch
      %32 = sbr.rel (0) target = $region5
    $region4: #{tpu_custom_call.1} parent=1 // pred_region
      _
    $region5: #{tpu_custom_call.1} parent=1 // pred_fallthru
      _
    // Predicated region
    $region6: #{tpu_custom_call.1} parent=1 // pred_check
      _
    $region7: #{tpu_custom_call.1} parent=1 // pred_check_branch
      %34 = sbr.rel (0) target = $region9
    $region8: #{tpu_custom_call.1} parent=1 // pred_region
      _
    $region9: #{tpu_custom_call.1} parent=1 // pred_fallthru
      _
    // Predicated region
    $region10: #{tpu_custom_call.1} parent=1 // pred_check
      _
    $region11: #{tpu_custom_call.1} parent=1 // pred_check_branch
      %36 = sbr.rel (0) target = $region13
    $region12: #{tpu_custom_call.1} parent=1 // pred_region
      _
    $region13: #{tpu_custom_call.1} parent=1 // pred_fallthru
      _
    // Predicated region
    $region14: #{tpu_custom_call.1} parent=1 // pred_check
      _
    $region15: #{tpu_custom_call.1} parent=1 // pred_check_branch
      %38 = sbr.rel (0) target = $region17
    $region16: #{tpu_custom_call.1} parent=1 // pred_region
      _
    $region17: #{tpu_custom_call.1} parent=1 // pred_fallthru
      _
    // Predicated region
    $region18: #{tpu_custom_call.1} parent=1 // pred_check
      _
    $region19: #{tpu_custom_call.1} parent=1 // pred_check_branch
      %40 = sbr.rel (0) target = $region21
    $region20: #{tpu_custom_call.1} parent=1 // pred_region
      _
    $region21: #{tpu_custom_call.1} parent=1 // pred_fallthru
      _
    // Predicated region
    $region22: #{tpu_custom_call.1} parent=1 // pred_check
      _
    $region23: #{tpu_custom_call.1} parent=1 // pred_check_branch
      %42 = sbr.rel (0) target = $region25
    $region24: #{tpu_custom_call.1} parent=1 // pred_region
      _
    $region25: #{tpu_custom_call.1} parent=1 // pred_fallthru
      _
    // Predicated region
    $region26: #{tpu_custom_call.1} parent=1 // pred_check
      _
    $region27: #{tpu_custom_call.1} parent=1 // pred_check_branch
      %44 = sbr.rel (0) target = $region29
    $region28: #{tpu_custom_call.1} parent=1 // pred_region
      _
    $region29: #{tpu_custom_call.1} parent=1 // pred_fallthru
      _
    // Predicated region
    $region30: #{tpu_custom_call.1} parent=1 // pred_check
      _
    $region31: #{tpu_custom_call.1} parent=1 // pred_check_branch
      %46 = sbr.rel (0) target = $region33
    $region32: #{tpu_custom_call.1} parent=1 // pred_region
      %s48 = ssub.s32 8192, 8192
      %49 = vsyncadd [#allocation4], %s48
      %s50 = sshll.u32 [#allocation3], 4
      %s51 = int_to_ptr.vmem [resolvable:$true] %s50
      %56 = dma.hbm_to_vmem [thread:$0]  %s7, 8192, %s51, [#allocation4], 512, 512, 32
    $region33: #{tpu_custom_call.1} parent=1 // pred_fallthru
      _
    // Predicated region
    $region34: #{tpu_custom_call.1} parent=1 // pred_check
      _
    $region35: #{tpu_custom_call.1} parent=1 // pred_check_branch
      %58 = sbr.rel (0) target = $region37
    $region36: #{tpu_custom_call.1} parent=1 // pred_region
      %s60 = ssub.s32 8192, 8192
      %61 = vsyncadd [#allocation7], %s60
      %s62 = sshll.u32 [#allocation6], 4
      %s63 = int_to_ptr.vmem [resolvable:$true] %s62
      %68 = dma.hbm_to_vmem [thread:$0]  %s8, 8192, %s63, [#allocation7], 512, 512, 32
    $region37: #{tpu_custom_call.1} parent=1 // pred_fallthru
      _
    // Predicated region
    $region38: #{tpu_custom_call.1} parent=1 // pred_check
      _
    $region39: #{tpu_custom_call.1} parent=1 // pred_check_branch
      %70 = sbr.rel (0) target = $region41
    $region40: #{tpu_custom_call.1} parent=1 // pred_region
      %s72 = ssub.s32 32768, 32768
      %73 = vsyncadd [#allocation7], %s72
      %s74 = sshll.u32 [#allocation8], 4
      %s75 = int_to_ptr.vmem [resolvable:$true] %s74
      %80 = dma.hbm_to_vmem [thread:$0]  %s9, 32768, %s75, [#allocation7], 1024, 1024, 64
    $region41: #{tpu_custom_call.1} parent=1 // pred_fallthru
      _
    // Predicated region
    $region42: #{tpu_custom_call.1} parent=1 // pred_check
      _
    $region43: #{tpu_custom_call.1} parent=1 // pred_check_branch
      %82 = sbr.rel (0) target = $region45
    $region44: #{tpu_custom_call.1} parent=1 // pred_region
      _
    $region45: #{tpu_custom_call.1} parent=1 // pred_fallthru
      _
    // Predicated region
    $region46: #{tpu_custom_call.1} parent=1 // pred_check
      _
    $region47: #{tpu_custom_call.1} parent=1 // pred_check_branch
      %84 = sbr.rel (0) target = $region49
    $region48: #{tpu_custom_call.1} parent=1 // pred_region
      %s86 = ssub.s32 8192, 8192
      %87 = vsyncadd [#allocation10], %s86
      %s88 = sshll.u32 [#allocation9], 4
      %s89 = int_to_ptr.vmem [resolvable:$true] %s88
      %94 = dma.hbm_to_vmem [thread:$0]  %s11, 8192, %s89, [#allocation10], 512, 512, 32
    $region49: #{tpu_custom_call.1} parent=1 // pred_fallthru
      _
    // Predicated region
    $region50: #{tpu_custom_call.1} parent=1 // pred_check
      _
    $region51: #{tpu_custom_call.1} parent=1 // pred_check_branch
      %96 = sbr.rel (0) target = $region53
    $region52: #{tpu_custom_call.1} parent=1 // pred_region
      %s98 = ssub.s32 8192, 8192
      %99 = vsyncadd [#allocation10], %s98
      %s100 = sshll.u32 [#allocation11], 4
      %s101 = int_to_ptr.vmem [resolvable:$true] %s100
      %106 = dma.hbm_to_vmem [thread:$0]  %s12, 8192, %s101, [#allocation10], 512, 512, 32
    $region53: #{tpu_custom_call.1} parent=1 // pred_fallthru
      _
    // Predicated region
    $region54: #{tpu_custom_call.1} parent=1 // pred_check
      _
    $region55: #{tpu_custom_call.1} parent=1 // pred_check_branch
      %108 = sbr.rel (0) target = $region57
    $region56: #{tpu_custom_call.1} parent=1 // pred_region
      %s110 = ssub.s32 16384, 16384
      %111 = vsyncadd [#allocation13], %s110
      %s112 = sshll.u32 [#allocation12], 4
      %s113 = int_to_ptr.vmem [resolvable:$true] %s112
      %118 = dma.hbm_to_vmem [thread:$0]  %s13, 16384, %s113, [#allocation13], 512, 512, 32
    $region57: #{tpu_custom_call.1} parent=1 // pred_fallthru
      _
    // Predicated region
    $region58: #{tpu_custom_call.1} parent=1 // pred_check
      _
    $region59: #{tpu_custom_call.1} parent=1 // pred_check_branch
      %120 = sbr.rel (0) target = $region61
    $region60: #{tpu_custom_call.1} parent=1 // pred_region
      _
    $region61: #{tpu_custom_call.1} parent=1 // pred_fallthru
      _
    // Predicated region
    $region62: #{tpu_custom_call.1} parent=1 // pred_check
      _
    $region63: #{tpu_custom_call.1} parent=1 // pred_check_branch
      %122 = sbr.rel (0) target = $region65
    $region64: #{tpu_custom_call.1} parent=1 // pred_region
      %s124 = ssub.s32 8192, 8192
      %125 = vsyncadd [#allocation13], %s124
      %s126 = sshll.u32 [#allocation14], 4
      %s127 = int_to_ptr.vmem [resolvable:$true] %s126
      %132 = dma.hbm_to_vmem [thread:$0]  %s15, 8192, %s127, [#allocation13], 128, 128, 8
    $region65: #{tpu_custom_call.1} parent=1 // pred_fallthru
      _
    // Predicated region
    $region66: #{tpu_custom_call.1} parent=1 // pred_check
      _
    $region67: #{tpu_custom_call.1} parent=1 // pred_check_branch
      %134 = sbr.rel (0) target = $region69
    $region68: #{tpu_custom_call.1} parent=1 // pred_region
      _
    $region69: #{tpu_custom_call.1} parent=1 // pred_fallthru
      _
    // Predicated region
    $region70: #{tpu_custom_call.1} parent=1 // pred_check
      _
    $region71: #{tpu_custom_call.1} parent=1 // pred_check_branch
      %136 = sbr.rel (0) target = $region73
    $region72: #{tpu_custom_call.1} parent=1 // pred_region
      _
    $region73: #{tpu_custom_call.1} parent=1 // pred_fallthru
      _
    // Predicated region
    $region74: #{tpu_custom_call.1} parent=1 // pred_check
      _
    $region75: #{tpu_custom_call.1} parent=1 // pred_check_branch
      %138 = sbr.rel (0) target = $region77
    $region76: #{tpu_custom_call.1} parent=1 // pred_region
      _
    $region77: #{tpu_custom_call.1} parent=1 // pred_fallthru
      _
    // Predicated region
    $region78: #{tpu_custom_call.1} parent=1 // pred_check
      _
    $region79: #{tpu_custom_call.1} parent=1 // pred_check_branch
      %140 = sbr.rel (0) target = $region81
    $region80: #{tpu_custom_call.1} parent=1 // pred_region
      %141 = dma.done [#allocation4], 8192
    $region81: #{tpu_custom_call.1} parent=1 // pred_fallthru
      _
    // Predicated region
    $region82: #{tpu_custom_call.1} parent=1 // pred_check
      _
    $region83: #{tpu_custom_call.1} parent=1 // pred_check_branch
      %143 = sbr.rel (0) target = $region85
    $region84: #{tpu_custom_call.1} parent=1 // pred_region
      %144 = dma.done [#allocation7], 8192
    $region85: #{tpu_custom_call.1} parent=1 // pred_fallthru
      _
    // Predicated region
    $region86: #{tpu_custom_call.1} parent=1 // pred_check
      _
    $region87: #{tpu_custom_call.1} parent=1 // pred_check_branch
      %146 = sbr.rel (0) target = $region89
    $region88: #{tpu_custom_call.1} parent=1 // pred_region
      %147 = dma.done [#allocation7], 32768
    $region89: #{tpu_custom_call.1} parent=1 // pred_fallthru
      _
    // Predicated region
    $region90: #{tpu_custom_call.1} parent=1 // pred_check
      _
    $region91: #{tpu_custom_call.1} parent=1 // pred_check_branch
      %149 = sbr.rel (0) target = $region93
    $region92: #{tpu_custom_call.1} parent=1 // pred_region
      %150 = dma.done [#allocation10], 8192
    $region93: #{tpu_custom_call.1} parent=1 // pred_fallthru
      _
    // Predicated region
    $region94: #{tpu_custom_call.1} parent=1 // pred_check
      _
    $region95: #{tpu_custom_call.1} parent=1 // pred_check_branch
      %152 = sbr.rel (0) target = $region97
    $region96: #{tpu_custom_call.1} parent=1 // pred_region
      %153 = dma.done [#allocation10], 8192
    $region97: #{tpu_custom_call.1} parent=1 // pred_fallthru
      _
    // Predicated region
    $region98: #{tpu_custom_call.1} parent=1 // pred_check
      _
    $region99: #{tpu_custom_call.1} parent=1 // pred_check_branch
      %155 = sbr.rel (0) target = $region101
    $region100: #{tpu_custom_call.1} parent=1 // pred_region
      %156 = dma.done [#allocation13], 16384
    $region101: #{tpu_custom_call.1} parent=1 // pred_fallthru
      _
    // Predicated region
    $region102: #{tpu_custom_call.1} parent=1 // pred_check
      _
    $region103: #{tpu_custom_call.1} parent=1 // pred_check_branch
      %158 = sbr.rel (0) target = $region105
    $region104: #{tpu_custom_call.1} parent=1 // pred_region
      %159 = dma.done [#allocation13], 8192
    $region105: #{tpu_custom_call.1} parent=1 // pred_fallthru
      _
    %v160 = vld [vmem:[%s0] sm:$0xff]
    %v161 = vld [vmem:[%s0 + $0x8] sm:$0xff]
    %v162 = vld [vmem:[%s0 + $0x10] sm:$0xf]
    %v163 = vld [vmem:[%s1] sm:$0xff]
    %v164 = vld [vmem:[%s1 + $0x8] sm:$0xff]
    %v165 = vld [vmem:[%s1 + $0x10] sm:$0xff]
    %v166 = vld [vmem:[%s1 + $0x18] sm:$0xff]
    %v167 = vld [vmem:[%s1 + $0x20] sm:$0xff]
    %v168 = vld [vmem:[%s1 + $0x28] sm:$0xff]
    %v169 = vld [vmem:[%s1 + $0x30] sm:$0xff]
    %v170 = vld [vmem:[%s1 + $0x38] sm:$0xff]
    %v171 = vld [vmem:[%s1 + $0x40] sm:$0x1]
    %v172 = vld [vmem:[%s1 + $0x48] sm:$0x1]
    %v173 = vld [vmem:[%s2] sm:$0x3]
    %v175 = vlaneseq
    %v176 = vshrl.u32 %v175, 7
    %v177 = vsub.s32 0, %v176
    %v178 = vrot.slane %v173, %v177
    %v179 = vlaneseq
    %v180 = vshrl.u32 %v179, 7
    %v181 = vsub.s32 1, %v180
    %v182 = vrot.slane %v173, %v181
    %vm185 = vcmask 269312
    %v187 = vsel %vm185, %v160, 0
    %v190 = vsel %vm185, %v161, 0
    %v193 = vsel %vm185, %v162, 0
    %vm195 = vcmask 1040384
    %v197 = vsel %vm195, %v171, 0
    %v200 = vsel %vm195, %v172, 0
    %202 = vmatprep.subr.mxu0 0.0
    %203 = vmatpush1.msra.mxu0 0.0
    %204 = vmatprep.subr.mxu0 0.0
    %205 = vmatpush1.msra.mxu0 0.0
    %206 = vmatprep.subr.mxu0 0.0
    %207 = vmatpush1.msra.mxu0 0.0
    %208 = vmatprep.subr.mxu0 0.0
    %209 = vmatpush1.msra.mxu0 0.0
    %210 = vmatprep.subr.mxu0 0.0
    %211 = vmatpush1.msra.mxu0 0.0
    %212 = vmatprep.subr.mxu0 0.0
    %213 = vmatpush1.msra.mxu0 0.0
    %214 = vmatprep.subr.mxu0 0.0
    %215 = vmatpush1.msra.mxu0 0.0
    %216 = vmatprep.subr.mxu0 0.0
    %217 = vmatpush1.msra.mxu0 0.0
    %218 = vmatprep.subr.mxu0 0.0
    %219 = vmatpush1.msra.mxu0 0.0
    %220 = vmatprep.subr.mxu0 0.0
    %221 = vmatpush1.msra.mxu0 0.0
    %222 = vmatprep.subr.mxu0 0.0
    %223 = vmatpush1.msra.mxu0 0.0
    %224 = vmatprep.subr.mxu0 %v200
    %225 = vmatpush1.msra.mxu0 %v197
    %226 = vmatprep.subr.mxu0 %v170
    %227 = vmatpush1.msra.mxu0 %v169
    %228 = vmatprep.subr.mxu0 %v168
    %229 = vmatpush1.msra.mxu0 %v167
    %230 = vmatprep.subr.mxu0 %v166
    %231 = vmatpush1.msra.mxu0 %v165
    %232 = vmatprep.subr.mxu0 %v164
    %233 = vmatpush1.msra.mxu0 %v163
    %234 = vmatprep.subr.mxu0 0.0
    %235 = vmatpush2.msra.mxu0 0.0
    %236 = vmatprep.subr.mxu0 0.0
    %237 = vmatpush2.msra.mxu0 0.0
    %238 = vmatprep.subr.mxu0 0.0
    %239 = vmatpush2.msra.mxu0 0.0
    %240 = vmatprep.subr.mxu0 0.0
    %241 = vmatpush2.msra.mxu0 0.0
    %242 = vmatprep.subr.mxu0 0.0
    %243 = vmatpush2.msra.mxu0 0.0
    %244 = vmatprep.subr.mxu0 0.0
    %245 = vmatpush2.msra.mxu0 0.0
    %246 = vmatprep.subr.mxu0 0.0
    %247 = vmatpush2.msra.mxu0 0.0
    %248 = vmatprep.subr.mxu0 0.0
    %249 = vmatpush2.msra.mxu0 0.0
    %250 = vmatprep.subr.mxu0 0.0
    %251 = vmatpush2.msra.mxu0 0.0
    %252 = vmatprep.subr.mxu0 0.0
    %253 = vmatpush2.msra.mxu0 0.0
    %254 = vmatprep.subr.mxu0 0.0
    %255 = vmatpush2.msra.mxu0 0.0
    %256 = vmatprep.subr.mxu0 0.0
    %257 = vmatpush2.msra.mxu0 0.0
    %258 = vmatprep.subr.mxu0 0.0
    %259 = vmatpush2.msra.mxu0 0.0
    %260 = vmatprep.subr.mxu0 0.0
    %261 = vmatpush2.msra.mxu0 0.0
    %262 = vmatprep.subr.mxu0 0.0
    %263 = vmatpush2.msra.mxu0 0.0
    %264 = vmatprep.subr.mxu0 0.0
    %265 = vmatpush2.msra.mxu0 0.0
    %266 = vmatprep.mubr.f32.mxu0 0.0
    %267 = vmatmul.mubr.f32.gmra.mxu0 %v187
    %v268 = vpop.f32.mrf.mxu0
    %v269 = vadd.f32 %v178, %v268
    %v270 = vpop.f32.mrf.mxu0
    %v271 = vadd.f32 %v182, %v270
    %272 = vmatprep.mubr.f32.mxu0 0.0
    %273 = vmatmul.mubr.f32.gmra.mxu0 %v190
    %v274 = vpop.f32.mrf.mxu0
    %v275 = vadd.f32 %v178, %v274
    %v276 = vpop.f32.mrf.mxu0
    %v277 = vadd.f32 %v182, %v276
    %278 = vmatprep.mubr.f32.mxu0 0.0
    %279 = vmatmul.mubr.f32.gmra.mxu0 %v193
    %v280 = vpop.f32.mrf.mxu0
    %v281 = vadd.f32 %v178, %v280
    %v282 = vpop.f32.mrf.mxu0
    %v283 = vadd.f32 %v182, %v282
    %284 = vdwg.mxu0
    %v285 = vmax.f32 %v269, 0.0
    %v286 = vmax.f32 %v271, 0.0
    %v287 = vmax.f32 %v275, 0.0
    %v288 = vmax.f32 %v277, 0.0
    %v289 = vmax.f32 %v281, 0.0
    %v290 = vmax.f32 %v283, 0.0
    %v291 = vld [vmem:[%s3] sm:$0xff]
    %v292 = vld [vmem:[%s3 + $0x8] sm:$0xff]
    %v293 = vld [vmem:[%s3 + $0x10] sm:$0xff]
    %v294 = vld [vmem:[%s3 + $0x18] sm:$0xff]
    %v295 = vld [vmem:[%s3 + $0x20] sm:$0xff]
    %v296 = vld [vmem:[%s3 + $0x28] sm:$0xff]
    %v297 = vld [vmem:[%s3 + $0x30] sm:$0xff]
    %v298 = vld [vmem:[%s3 + $0x38] sm:$0xff]
    %v299 = vld [vmem:[%s3 + $0x40] sm:$0xff]
    %v300 = vld [vmem:[%s3 + $0x48] sm:$0xff]
    %v301 = vld [vmem:[%s3 + $0x50] sm:$0xff]
    %v302 = vld [vmem:[%s3 + $0x58] sm:$0xff]
    %v303 = vld [vmem:[%s3 + $0x60] sm:$0xff]
    %v304 = vld [vmem:[%s3 + $0x68] sm:$0xff]
    %v305 = vld [vmem:[%s3 + $0x70] sm:$0xff]
    %v306 = vld [vmem:[%s3 + $0x78] sm:$0xff]
    %v307 = vld [vmem:[%s3 + $0x80] sm:$0xff]
    %v308 = vld [vmem:[%s3 + $0x88] sm:$0xff]
    %v309 = vld [vmem:[%s3 + $0x90] sm:$0xff]
    %v310 = vld [vmem:[%s3 + $0x98] sm:$0xff]
    %v311 = vld [vmem:[%s3 + $0xa0] sm:$0xff]
    %v312 = vld [vmem:[%s3 + $0xa8] sm:$0xff]
    %v313 = vld [vmem:[%s3 + $0xb0] sm:$0xff]
    %v314 = vld [vmem:[%s3 + $0xb8] sm:$0xff]
    %v315 = vld [vmem:[%s3 + $0xc0] sm:$0xff]
    %v316 = vld [vmem:[%s3 + $0xc8] sm:$0xff]
    %v317 = vld [vmem:[%s3 + $0xd0] sm:$0xff]
    %v318 = vld [vmem:[%s3 + $0xd8] sm:$0xff]
    %v319 = vld [vmem:[%s4] sm:$0x1]
    %v321 = vlaneseq
    %v322 = vshrl.u32 %v321, 7
    %v323 = vsub.s32 0, %v322
    %v324 = vrot.slane %v319, %v323
    %vm326 = vcmask 785408
    %v328 = vsel %vm326, %v286, 0
    %v331 = vsel %vm326, %v288, 0
    %v334 = vsel %vm326, %v290, 0
    %336 = vmatprep.subr.mxu0 0.0
    %337 = vmatpush1.msra.mxu0 %v306
    %338 = vmatprep.subr.mxu0 0.0
    %339 = vmatpush1.msra.mxu0 %v305
    %340 = vmatprep.subr.mxu0 0.0
    %341 = vmatpush1.msra.mxu0 %v304
    %342 = vmatprep.subr.mxu0 0.0
    %343 = vmatpush1.msra.mxu0 %v303
    %344 = vmatprep.subr.mxu0 0.0
    %345 = vmatpush1.msra.mxu0 %v302
    %346 = vmatprep.subr.mxu0 0.0
    %347 = vmatpush1.msra.mxu0 %v301
    %348 = vmatprep.subr.mxu0 0.0
    %349 = vmatpush1.msra.mxu0 %v300
    %350 = vmatprep.subr.mxu0 0.0
    %351 = vmatpush1.msra.mxu0 %v299
    %352 = vmatprep.subr.mxu0 0.0
    %353 = vmatpush1.msra.mxu0 %v298
    %354 = vmatprep.subr.mxu0 0.0
    %355 = vmatpush1.msra.mxu0 %v297
    %356 = vmatprep.subr.mxu0 0.0
    %357 = vmatpush1.msra.mxu0 %v296
    %358 = vmatprep.subr.mxu0 0.0
    %359 = vmatpush1.msra.mxu0 %v295
    %360 = vmatprep.subr.mxu0 0.0
    %361 = vmatpush1.msra.mxu0 %v294
    %362 = vmatprep.subr.mxu0 0.0
    %363 = vmatpush1.msra.mxu0 %v293
    %364 = vmatprep.subr.mxu0 0.0
    %365 = vmatpush1.msra.mxu0 %v292
    %366 = vmatprep.subr.mxu0 0.0
    %367 = vmatpush1.msra.mxu0 %v291
    %368 = vmatprep.subr.mxu0 0.0
    %369 = vmatpush2.msra.mxu0 0.0
    %370 = vmatprep.subr.mxu0 0.0
    %371 = vmatpush2.msra.mxu0 0.0
    %372 = vmatprep.subr.mxu0 0.0
    %373 = vmatpush2.msra.mxu0 0.0
    %374 = vmatprep.subr.mxu0 0.0
    %375 = vmatpush2.msra.mxu0 0.0
    %376 = vmatprep.subr.mxu0 0.0
    %377 = vmatpush2.msra.mxu0 %v318
    %378 = vmatprep.subr.mxu0 0.0
    %379 = vmatpush2.msra.mxu0 %v317
    %380 = vmatprep.subr.mxu0 0.0
    %381 = vmatpush2.msra.mxu0 %v316
    %382 = vmatprep.subr.mxu0 0.0
    %383 = vmatpush2.msra.mxu0 %v315
    %384 = vmatprep.subr.mxu0 0.0
    %385 = vmatpush2.msra.mxu0 %v314
    %386 = vmatprep.subr.mxu0 0.0
    %387 = vmatpush2.msra.mxu0 %v313
    %388 = vmatprep.subr.mxu0 0.0
    %389 = vmatpush2.msra.mxu0 %v312
    %390 = vmatprep.subr.mxu0 0.0
    %391 = vmatpush2.msra.mxu0 %v311
    %392 = vmatprep.subr.mxu0 0.0
    %393 = vmatpush2.msra.mxu0 %v310
    %394 = vmatprep.subr.mxu0 0.0
    %395 = vmatpush2.msra.mxu0 %v309
    %396 = vmatprep.subr.mxu0 0.0
    %397 = vmatpush2.msra.mxu0 %v308
    %398 = vmatprep.subr.mxu0 0.0
    %399 = vmatpush2.msra.mxu0 %v307
    %400 = vmatprep.mubr.f32.mxu0 %v328
    %401 = vmatmul.mubr.f32.gmra.mxu0 %v285
    %v402 = vpop.f32.mrf.mxu0
    %v403 = vadd.f32 %v324, %v402
    %v404 = vpop.f32.mrf.mxu0
    %405 = vmatprep.mubr.f32.mxu0 %v331
    %406 = vmatmul.mubr.f32.gmra.mxu0 %v287
    %v407 = vpop.f32.mrf.mxu0
    %v408 = vadd.f32 %v324, %v407
    %v409 = vpop.f32.mrf.mxu0
    %410 = vmatprep.mubr.f32.mxu0 %v334
    %411 = vmatmul.mubr.f32.gmra.mxu0 %v289
    %v412 = vpop.f32.mrf.mxu0
    %v413 = vadd.f32 %v324, %v412
    %v414 = vpop.f32.mrf.mxu0
    %415 = vdwg.mxu0
    %v416 = vmax.f32 %v403, 0.0
    %v417 = vmax.f32 %v408, 0.0
    %v418 = vmax.f32 %v413, 0.0
    %v419 = vld [vmem:[%s5] sm:$0x77]
    %v420 = vld [vmem:[%s5 + $0x8] sm:$0x77]
    %v421 = vld [vmem:[%s5 + $0x10] sm:$0x77]
    %v422 = vld [vmem:[%s5 + $0x18] sm:$0x77]
    %v423 = vld [vmem:[%s6] sm:$0xff]
    %v425 = vlaneseq
    %v426 = vshrl.u32 %v425, 7
    %v427 = vsub.s32 0, %v426
    %v428 = vrot.slane %v423, %v427
    %v429 = vlaneseq
    %v430 = vshrl.u32 %v429, 7
    %v431 = vsub.s32 1, %v430
    %v432 = vrot.slane %v423, %v431
    %v433 = vlaneseq
    %v434 = vshrl.u32 %v433, 7
    %v435 = vsub.s32 2, %v434
    %v436 = vrot.slane %v423, %v435
    %v437 = vlaneseq
    %v438 = vshrl.u32 %v437, 7
    %v439 = vsub.s32 3, %v438
    %v440 = vrot.slane %v423, %v439
    %v441 = vlaneseq
    %v442 = vshrl.u32 %v441, 7
    %v443 = vsub.s32 4, %v442
    %v444 = vrot.slane %v423, %v443
    %v445 = vlaneseq
    %v446 = vshrl.u32 %v445, 7
    %v447 = vsub.s32 5, %v446
    %v448 = vrot.slane %v423, %v447
    %v449 = vlaneseq
    %v450 = vshrl.u32 %v449, 7
    %v451 = vsub.s32 6, %v450
    %v452 = vrot.slane %v423, %v451
    %v453 = vlaneseq
    %v454 = vshrl.u32 %v453, 7
    %v455 = vsub.s32 7, %v454
    %v456 = vrot.slane %v423, %v455
    %v469 = vcombine.high %v419, %v419
    %v470 = vcombine.high %v420, %v420
    %v471 = vcombine.high %v421, %v421
    %v472 = vcombine.high %v422, %v422
    %vm473 = vcmask 23552
    %v475 = vsel %vm473, %v416, 0
    %v478 = vsel %vm473, %v417, 0
    %v481 = vsel %vm473, %v418, 0
    %vm483 = vcmask 1042432
    %v484 = vsel %vm483, %v419, 0
    %v486 = vsel %vm483, %v469, 0
    %v488 = vsel %vm483, %v420, 0
    %v490 = vsel %vm483, %v470, 0
    %v492 = vsel %vm483, %v421, 0
    %v494 = vsel %vm483, %v471, 0
    %v496 = vsel %vm483, %v422, 0
    %v498 = vsel %vm483, %v472, 0
    %500 = vmatprep.subr.mxu0 0.0
    %501 = vmatpush1.msra.mxu0 0.0
    %502 = vmatprep.subr.mxu0 0.0
    %503 = vmatpush1.msra.mxu0 0.0
    %504 = vmatprep.subr.mxu0 0.0
    %505 = vmatpush1.msra.mxu0 0.0
    %506 = vmatprep.subr.mxu0 0.0
    %507 = vmatpush1.msra.mxu0 0.0
    %508 = vmatprep.subr.mxu0 0.0
    %509 = vmatpush1.msra.mxu0 0.0
    %510 = vmatprep.subr.mxu0 0.0
    %511 = vmatpush1.msra.mxu0 0.0
    %512 = vmatprep.subr.mxu0 0.0
    %513 = vmatpush1.msra.mxu0 0.0
    %514 = vmatprep.subr.mxu0 0.0
    %515 = vmatpush1.msra.mxu0 0.0
    %516 = vmatprep.subr.mxu0 0.0
    %517 = vmatpush1.msra.mxu0 0.0
    %518 = vmatprep.subr.mxu0 0.0
    %519 = vmatpush1.msra.mxu0 0.0
    %520 = vmatprep.subr.mxu0 0.0
    %521 = vmatpush1.msra.mxu0 0.0
    %522 = vmatprep.subr.mxu0 0.0
    %523 = vmatpush1.msra.mxu0 0.0
    %524 = vmatprep.subr.mxu0 0.0
    %525 = vmatpush1.msra.mxu0 0.0
    %526 = vmatprep.subr.mxu0 0.0
    %527 = vmatpush1.msra.mxu0 0.0
    %528 = vmatprep.subr.mxu0 0.0
    %529 = vmatpush1.msra.mxu0 0.0
    %530 = vmatprep.subr.mxu0 %v486
    %531 = vmatpush1.msra.mxu0 %v484
    %532 = vmatprep.subr.mxu0 0.0
    %533 = vmatpush2.msra.mxu0 0.0
    %534 = vmatprep.subr.mxu0 0.0
    %535 = vmatpush2.msra.mxu0 0.0
    %536 = vmatprep.subr.mxu0 0.0
    %537 = vmatpush2.msra.mxu0 0.0
    %538 = vmatprep.subr.mxu0 0.0
    %539 = vmatpush2.msra.mxu0 0.0
    %540 = vmatprep.subr.mxu0 0.0
    %541 = vmatpush2.msra.mxu0 0.0
    %542 = vmatprep.subr.mxu0 0.0
    %543 = vmatpush2.msra.mxu0 0.0
    %544 = vmatprep.subr.mxu0 0.0
    %545 = vmatpush2.msra.mxu0 0.0
    %546 = vmatprep.subr.mxu0 0.0
    %547 = vmatpush2.msra.mxu0 0.0
    %548 = vmatprep.subr.mxu0 0.0
    %549 = vmatpush2.msra.mxu0 0.0
    %550 = vmatprep.subr.mxu0 0.0
    %551 = vmatpush2.msra.mxu0 0.0
    %552 = vmatprep.subr.mxu0 0.0
    %553 = vmatpush2.msra.mxu0 0.0
    %554 = vmatprep.subr.mxu0 0.0
    %555 = vmatpush2.msra.mxu0 0.0
    %556 = vmatprep.subr.mxu0 0.0
    %557 = vmatpush2.msra.mxu0 0.0
    %558 = vmatprep.subr.mxu0 0.0
    %559 = vmatpush2.msra.mxu0 0.0
    %560 = vmatprep.subr.mxu0 0.0
    %561 = vmatpush2.msra.mxu0 0.0
    %562 = vmatprep.subr.mxu0 0.0
    %563 = vmatpush2.msra.mxu0 0.0
    %564 = vmatprep.mubr.f32.mxu0 0.0
    %565 = vmatmul.mubr.f32.gmra.mxu0 %v475
    %v566 = vpop.f32.mrf.mxu0
    %v567 = vadd.f32 %v428, %v566
    %v568 = vpop.f32.mrf.mxu0
    %v569 = vadd.f32 %v432, %v568
    %570 = vmatprep.mubr.f32.mxu0 0.0
    %571 = vmatmul.mubr.f32.gmra.mxu0 %v478
    %v572 = vpop.f32.mrf.mxu0
    %v573 = vadd.f32 %v428, %v572
    %v574 = vpop.f32.mrf.mxu0
    %v575 = vadd.f32 %v432, %v574
    %576 = vmatprep.mubr.f32.mxu0 0.0
    %577 = vmatmul.mubr.f32.gmra.mxu0 %v481
    %v578 = vpop.f32.mrf.mxu0
    %v579 = vadd.f32 %v428, %v578
    %v580 = vpop.f32.mrf.mxu0
    %v581 = vadd.f32 %v432, %v580
    %582 = vdwg.mxu0
    %583 = vmatprep.subr.mxu0 0.0
    %584 = vmatpush1.msra.mxu0 0.0
    %585 = vmatprep.subr.mxu0 0.0
    %586 = vmatpush1.msra.mxu0 0.0
    %587 = vmatprep.subr.mxu0 0.0
    %588 = vmatpush1.msra.mxu0 0.0
    %589 = vmatprep.subr.mxu0 0.0
    %590 = vmatpush1.msra.mxu0 0.0
    %591 = vmatprep.subr.mxu0 0.0
    %592 = vmatpush1.msra.mxu0 0.0
    %593 = vmatprep.subr.mxu0 0.0
    %594 = vmatpush1.msra.mxu0 0.0
    %595 = vmatprep.subr.mxu0 0.0
    %596 = vmatpush1.msra.mxu0 0.0
    %597 = vmatprep.subr.mxu0 0.0
    %598 = vmatpush1.msra.mxu0 0.0
    %599 = vmatprep.subr.mxu0 0.0
    %600 = vmatpush1.msra.mxu0 0.0
    %601 = vmatprep.subr.mxu0 0.0
    %602 = vmatpush1.msra.mxu0 0.0
    %603 = vmatprep.subr.mxu0 0.0
    %604 = vmatpush1.msra.mxu0 0.0
    %605 = vmatprep.subr.mxu0 0.0
    %606 = vmatpush1.msra.mxu0 0.0
    %607 = vmatprep.subr.mxu0 0.0
    %608 = vmatpush1.msra.mxu0 0.0
    %609 = vmatprep.subr.mxu0 0.0
    %610 = vmatpush1.msra.mxu0 0.0
    %611 = vmatprep.subr.mxu0 0.0
    %612 = vmatpush1.msra.mxu0 0.0
    %613 = vmatprep.subr.mxu0 %v490
    %614 = vmatpush1.msra.mxu0 %v488
    %615 = vmatprep.subr.mxu0 0.0
    %616 = vmatpush2.msra.mxu0 0.0
    %617 = vmatprep.subr.mxu0 0.0
    %618 = vmatpush2.msra.mxu0 0.0
    %619 = vmatprep.subr.mxu0 0.0
    %620 = vmatpush2.msra.mxu0 0.0
    %621 = vmatprep.subr.mxu0 0.0
    %622 = vmatpush2.msra.mxu0 0.0
    %623 = vmatprep.subr.mxu0 0.0
    %624 = vmatpush2.msra.mxu0 0.0
    %625 = vmatprep.subr.mxu0 0.0
    %626 = vmatpush2.msra.mxu0 0.0
    %627 = vmatprep.subr.mxu0 0.0
    %628 = vmatpush2.msra.mxu0 0.0
    %629 = vmatprep.subr.mxu0 0.0
    %630 = vmatpush2.msra.mxu0 0.0
    %631 = vmatprep.subr.mxu0 0.0
    %632 = vmatpush2.msra.mxu0 0.0
    %633 = vmatprep.subr.mxu0 0.0
    %634 = vmatpush2.msra.mxu0 0.0
    %635 = vmatprep.subr.mxu0 0.0
    %636 = vmatpush2.msra.mxu0 0.0
    %637 = vmatprep.subr.mxu0 0.0
    %638 = vmatpush2.msra.mxu0 0.0
    %639 = vmatprep.subr.mxu0 0.0
    %640 = vmatpush2.msra.mxu0 0.0
    %641 = vmatprep.subr.mxu0 0.0
    %642 = vmatpush2.msra.mxu0 0.0
    %643 = vmatprep.subr.mxu0 0.0
    %644 = vmatpush2.msra.mxu0 0.0
    %645 = vmatprep.subr.mxu0 0.0
    %646 = vmatpush2.msra.mxu0 0.0
    %647 = vmatprep.mubr.f32.mxu0 0.0
    %648 = vmatmul.mubr.f32.gmra.mxu0 %v475
    %v649 = vpop.f32.mrf.mxu0
    %v650 = vadd.f32 %v436, %v649
    %v651 = vpop.f32.mrf.mxu0
    %v652 = vadd.f32 %v440, %v651
    %653 = vmatprep.mubr.f32.mxu0 0.0
    %654 = vmatmul.mubr.f32.gmra.mxu0 %v478
    %v655 = vpop.f32.mrf.mxu0
    %v656 = vadd.f32 %v436, %v655
    %v657 = vpop.f32.mrf.mxu0
    %v658 = vadd.f32 %v440, %v657
    %659 = vmatprep.mubr.f32.mxu0 0.0
    %660 = vmatmul.mubr.f32.gmra.mxu0 %v481
    %v661 = vpop.f32.mrf.mxu0
    %v662 = vadd.f32 %v436, %v661
    %v663 = vpop.f32.mrf.mxu0
    %v664 = vadd.f32 %v440, %v663
    %665 = vdwg.mxu0
    %666 = vmatprep.subr.mxu0 0.0
    %667 = vmatpush1.msra.mxu0 0.0
    %668 = vmatprep.subr.mxu0 0.0
    %669 = vmatpush1.msra.mxu0 0.0
    %670 = vmatprep.subr.mxu0 0.0
    %671 = vmatpush1.msra.mxu0 0.0
    %672 = vmatprep.subr.mxu0 0.0
    %673 = vmatpush1.msra.mxu0 0.0
    %674 = vmatprep.subr.mxu0 0.0
    %675 = vmatpush1.msra.mxu0 0.0
    %676 = vmatprep.subr.mxu0 0.0
    %677 = vmatpush1.msra.mxu0 0.0
    %678 = vmatprep.subr.mxu0 0.0
    %679 = vmatpush1.msra.mxu0 0.0
    %680 = vmatprep.subr.mxu0 0.0
    %681 = vmatpush1.msra.mxu0 0.0
    %682 = vmatprep.subr.mxu0 0.0
    %683 = vmatpush1.msra.mxu0 0.0
    %684 = vmatprep.subr.mxu0 0.0
    %685 = vmatpush1.msra.mxu0 0.0
    %686 = vmatprep.subr.mxu0 0.0
    %687 = vmatpush1.msra.mxu0 0.0
    %688 = vmatprep.subr.mxu0 0.0
    %689 = vmatpush1.msra.mxu0 0.0
    %690 = vmatprep.subr.mxu0 0.0
    %691 = vmatpush1.msra.mxu0 0.0
    %692 = vmatprep.subr.mxu0 0.0
    %693 = vmatpush1.msra.mxu0 0.0
    %694 = vmatprep.subr.mxu0 0.0
    %695 = vmatpush1.msra.mxu0 0.0
    %696 = vmatprep.subr.mxu0 %v494
    %697 = vmatpush1.msra.mxu0 %v492
    %698 = vmatprep.subr.mxu0 0.0
    %699 = vmatpush2.msra.mxu0 0.0
    %700 = vmatprep.subr.mxu0 0.0
    %701 = vmatpush2.msra.mxu0 0.0
    %702 = vmatprep.subr.mxu0 0.0
    %703 = vmatpush2.msra.mxu0 0.0
    %704 = vmatprep.subr.mxu0 0.0
    %705 = vmatpush2.msra.mxu0 0.0
    %706 = vmatprep.subr.mxu0 0.0
    %707 = vmatpush2.msra.mxu0 0.0
    %708 = vmatprep.subr.mxu0 0.0
    %709 = vmatpush2.msra.mxu0 0.0
    %710 = vmatprep.subr.mxu0 0.0
    %711 = vmatpush2.msra.mxu0 0.0
    %712 = vmatprep.subr.mxu0 0.0
    %713 = vmatpush2.msra.mxu0 0.0
    %714 = vmatprep.subr.mxu0 0.0
    %715 = vmatpush2.msra.mxu0 0.0
    %716 = vmatprep.subr.mxu0 0.0
    %717 = vmatpush2.msra.mxu0 0.0
    %718 = vmatprep.subr.mxu0 0.0
    %719 = vmatpush2.msra.mxu0 0.0
    %720 = vmatprep.subr.mxu0 0.0
    %721 = vmatpush2.msra.mxu0 0.0
    %722 = vmatprep.subr.mxu0 0.0
    %723 = vmatpush2.msra.mxu0 0.0
    %724 = vmatprep.subr.mxu0 0.0
    %725 = vmatpush2.msra.mxu0 0.0
    %726 = vmatprep.subr.mxu0 0.0
    %727 = vmatpush2.msra.mxu0 0.0
    %728 = vmatprep.subr.mxu0 0.0
    %729 = vmatpush2.msra.mxu0 0.0
    %730 = vmatprep.mubr.f32.mxu0 0.0
    %731 = vmatmul.mubr.f32.gmra.mxu0 %v475
    %v732 = vpop.f32.mrf.mxu0
    %v733 = vadd.f32 %v444, %v732
    %v734 = vpop.f32.mrf.mxu0
    %v735 = vadd.f32 %v448, %v734
    %736 = vmatprep.mubr.f32.mxu0 0.0
    %737 = vmatmul.mubr.f32.gmra.mxu0 %v478
    %v738 = vpop.f32.mrf.mxu0
    %v739 = vadd.f32 %v444, %v738
    %v740 = vpop.f32.mrf.mxu0
    %v741 = vadd.f32 %v448, %v740
    %742 = vmatprep.mubr.f32.mxu0 0.0
    %743 = vmatmul.mubr.f32.gmra.mxu0 %v481
    %v744 = vpop.f32.mrf.mxu0
    %v745 = vadd.f32 %v444, %v744
    %v746 = vpop.f32.mrf.mxu0
    %v747 = vadd.f32 %v448, %v746
    %748 = vdwg.mxu0
    %749 = vmatprep.subr.mxu0 0.0
    %750 = vmatpush1.msra.mxu0 0.0
    %751 = vmatprep.subr.mxu0 0.0
    %752 = vmatpush1.msra.mxu0 0.0
    %753 = vmatprep.subr.mxu0 0.0
    %754 = vmatpush1.msra.mxu0 0.0
    %755 = vmatprep.subr.mxu0 0.0
    %756 = vmatpush1.msra.mxu0 0.0
    %757 = vmatprep.subr.mxu0 0.0
    %758 = vmatpush1.msra.mxu0 0.0
    %759 = vmatprep.subr.mxu0 0.0
    %760 = vmatpush1.msra.mxu0 0.0
    %761 = vmatprep.subr.mxu0 0.0
    %762 = vmatpush1.msra.mxu0 0.0
    %763 = vmatprep.subr.mxu0 0.0
    %764 = vmatpush1.msra.mxu0 0.0
    %765 = vmatprep.subr.mxu0 0.0
    %766 = vmatpush1.msra.mxu0 0.0
    %767 = vmatprep.subr.mxu0 0.0
    %768 = vmatpush1.msra.mxu0 0.0
    %769 = vmatprep.subr.mxu0 0.0
    %770 = vmatpush1.msra.mxu0 0.0
    %771 = vmatprep.subr.mxu0 0.0
    %772 = vmatpush1.msra.mxu0 0.0
    %773 = vmatprep.subr.mxu0 0.0
    %774 = vmatpush1.msra.mxu0 0.0
    %775 = vmatprep.subr.mxu0 0.0
    %776 = vmatpush1.msra.mxu0 0.0
    %777 = vmatprep.subr.mxu0 0.0
    %778 = vmatpush1.msra.mxu0 0.0
    %779 = vmatprep.subr.mxu0 %v498
    %780 = vmatpush1.msra.mxu0 %v496
    %781 = vmatprep.subr.mxu0 0.0
    %782 = vmatpush2.msra.mxu0 0.0
    %783 = vmatprep.subr.mxu0 0.0
    %784 = vmatpush2.msra.mxu0 0.0
    %785 = vmatprep.subr.mxu0 0.0
    %786 = vmatpush2.msra.mxu0 0.0
    %787 = vmatprep.subr.mxu0 0.0
    %788 = vmatpush2.msra.mxu0 0.0
    %789 = vmatprep.subr.mxu0 0.0
    %790 = vmatpush2.msra.mxu0 0.0
    %791 = vmatprep.subr.mxu0 0.0
    %792 = vmatpush2.msra.mxu0 0.0
    %793 = vmatprep.subr.mxu0 0.0
    %794 = vmatpush2.msra.mxu0 0.0
    %795 = vmatprep.subr.mxu0 0.0
    %796 = vmatpush2.msra.mxu0 0.0
    %797 = vmatprep.subr.mxu0 0.0
    %798 = vmatpush2.msra.mxu0 0.0
    %799 = vmatprep.subr.mxu0 0.0
    %800 = vmatpush2.msra.mxu0 0.0
    %801 = vmatprep.subr.mxu0 0.0
    %802 = vmatpush2.msra.mxu0 0.0
    %803 = vmatprep.subr.mxu0 0.0
    %804 = vmatpush2.msra.mxu0 0.0
    %805 = vmatprep.subr.mxu0 0.0
    %806 = vmatpush2.msra.mxu0 0.0
    %807 = vmatprep.subr.mxu0 0.0
    %808 = vmatpush2.msra.mxu0 0.0
    %809 = vmatprep.subr.mxu0 0.0
    %810 = vmatpush2.msra.mxu0 0.0
    %811 = vmatprep.subr.mxu0 0.0
    %812 = vmatpush2.msra.mxu0 0.0
    %813 = vmatprep.mubr.f32.mxu0 0.0
    %814 = vmatmul.mubr.f32.gmra.mxu0 %v475
    %v815 = vpop.f32.mrf.mxu0
    %v816 = vadd.f32 %v452, %v815
    %v817 = vpop.f32.mrf.mxu0
    %v818 = vadd.f32 %v456, %v817
    %819 = vmatprep.mubr.f32.mxu0 0.0
    %820 = vmatmul.mubr.f32.gmra.mxu0 %v478
    %v821 = vpop.f32.mrf.mxu0
    %v822 = vadd.f32 %v452, %v821
    %v823 = vpop.f32.mrf.mxu0
    %v824 = vadd.f32 %v456, %v823
    %825 = vmatprep.mubr.f32.mxu0 0.0
    %826 = vmatmul.mubr.f32.gmra.mxu0 %v481
    %v827 = vpop.f32.mrf.mxu0
    %v828 = vadd.f32 %v452, %v827
    %v829 = vpop.f32.mrf.mxu0
    %v830 = vadd.f32 %v456, %v829
    %831 = vdwg.mxu0
    %v832 = vld [vmem:[#allocation3] sm:$0xff]
    %v833 = vld [vmem:[#allocation3 + $0x8] sm:$0xff]
    %v834 = vld [vmem:[#allocation3 + $0x10] sm:$0xff]
    %v835 = vld [vmem:[#allocation3 + $0x18] sm:$0xff]
    %v836 = vld [vmem:[#allocation3 + $0x20] sm:$0xff]
    %v837 = vld [vmem:[#allocation3 + $0x28] sm:$0xff]
    %v838 = vld [vmem:[#allocation3 + $0x30] sm:$0xff]
    %v839 = vld [vmem:[#allocation3 + $0x38] sm:$0xff]
    %v840 = vld [vmem:[#allocation3 + $0x40] sm:$0xff]
    %v841 = vld [vmem:[#allocation3 + $0x48] sm:$0xff]
    %v842 = vld [vmem:[#allocation3 + $0x50] sm:$0xff]
    %v843 = vld [vmem:[#allocation3 + $0x58] sm:$0xff]
    %v844 = vld [vmem:[#allocation3 + $0x60] sm:$0xff]
    %v845 = vld [vmem:[#allocation3 + $0x68] sm:$0xff]
    %v846 = vld [vmem:[#allocation3 + $0x70] sm:$0xff]
    %v847 = vld [vmem:[#allocation3 + $0x78] sm:$0xff]
    %v848 = vld [vmem:[#allocation3 + $0x80] sm:$0xff]
    %v849 = vld [vmem:[#allocation3 + $0x88] sm:$0xff]
    %v850 = vld [vmem:[#allocation3 + $0x90] sm:$0xff]
    %v851 = vld [vmem:[#allocation3 + $0x98] sm:$0xff]
    %v852 = vld [vmem:[#allocation3 + $0xa0] sm:$0xff]
    %v853 = vld [vmem:[#allocation3 + $0xa8] sm:$0xff]
    %v854 = vld [vmem:[#allocation3 + $0xb0] sm:$0xff]
    %v855 = vld [vmem:[#allocation3 + $0xb8] sm:$0xff]
    %v856 = vld [vmem:[#allocation3 + $0xc0] sm:$0xff]
    %v857 = vld [vmem:[#allocation3 + $0xc8] sm:$0xff]
    %v858 = vld [vmem:[#allocation3 + $0xd0] sm:$0xff]
    %v859 = vld [vmem:[#allocation3 + $0xd8] sm:$0xff]
    %v860 = vld [vmem:[#allocation3 + $0xe0] sm:$0xff]
    %v861 = vld [vmem:[#allocation3 + $0xe8] sm:$0xff]
    %v862 = vld [vmem:[#allocation3 + $0xf0] sm:$0xff]
    %v863 = vld [vmem:[#allocation3 + $0xf8] sm:$0xff]
    %v864 = vld [vmem:[#allocation3 + $0x100] sm:$0xff]
    %v865 = vld [vmem:[#allocation3 + $0x108] sm:$0xff]
    %v866 = vld [vmem:[#allocation3 + $0x110] sm:$0xff]
    %v867 = vld [vmem:[#allocation3 + $0x118] sm:$0xff]
    %v868 = vld [vmem:[#allocation3 + $0x120] sm:$0xff]
    %v869 = vld [vmem:[#allocation3 + $0x128] sm:$0xff]
    %v870 = vld [vmem:[#allocation3 + $0x130] sm:$0xff]
    %v871 = vld [vmem:[#allocation3 + $0x138] sm:$0xff]
    %v872 = vld [vmem:[#allocation3 + $0x140] sm:$0xff]
    %v873 = vld [vmem:[#allocation3 + $0x148] sm:$0xff]
    %v874 = vld [vmem:[#allocation3 + $0x150] sm:$0xff]
    %v875 = vld [vmem:[#allocation3 + $0x158] sm:$0xff]
    %v876 = vld [vmem:[#allocation3 + $0x160] sm:$0xff]
    %v877 = vld [vmem:[#allocation3 + $0x168] sm:$0xff]
    %v878 = vld [vmem:[#allocation3 + $0x170] sm:$0xff]
    %v879 = vld [vmem:[#allocation3 + $0x178] sm:$0xff]
    %v880 = vld [vmem:[#allocation3 + $0x180] sm:$0xff]
    %v881 = vld [vmem:[#allocation3 + $0x188] sm:$0xff]
    %v882 = vld [vmem:[#allocation3 + $0x190] sm:$0xff]
    %v883 = vld [vmem:[#allocation3 + $0x198] sm:$0xff]
    %v884 = vld [vmem:[#allocation3 + $0x1a0] sm:$0xff]
    %v885 = vld [vmem:[#allocation3 + $0x1a8] sm:$0xff]
    %v886 = vld [vmem:[#allocation3 + $0x1b0] sm:$0xff]
    %v887 = vld [vmem:[#allocation3 + $0x1b8] sm:$0xff]
    %v888 = vld [vmem:[#allocation3 + $0x1c0] sm:$0xff]
    %v889 = vld [vmem:[#allocation3 + $0x1c8] sm:$0xff]
    %v890 = vld [vmem:[#allocation3 + $0x1d0] sm:$0xff]
    %v891 = vld [vmem:[#allocation3 + $0x1d8] sm:$0xff]
    %v892 = vld [vmem:[#allocation3 + $0x1e0] sm:$0xff]
    %v893 = vld [vmem:[#allocation3 + $0x1e8] sm:$0xff]
    %v894 = vld [vmem:[#allocation3 + $0x1f0] sm:$0xff]
    %v895 = vld [vmem:[#allocation3 + $0x1f8] sm:$0xff]
    %v896 = vld [vmem:[#allocation6] sm:$0xff]
    %v897 = vld [vmem:[#allocation6 + $0x8] sm:$0xff]
    %v898 = vld [vmem:[#allocation6 + $0x10] sm:$0xff]
    %v899 = vld [vmem:[#allocation6 + $0x18] sm:$0xff]
    %v900 = vld [vmem:[#allocation6 + $0x20] sm:$0xff]
    %v901 = vld [vmem:[#allocation6 + $0x28] sm:$0xff]
    %v902 = vld [vmem:[#allocation6 + $0x30] sm:$0xff]
    %v903 = vld [vmem:[#allocation6 + $0x38] sm:$0xff]
    %v904 = vld [vmem:[#allocation6 + $0x40] sm:$0xff]
    %v905 = vld [vmem:[#allocation6 + $0x48] sm:$0xff]
    %v906 = vld [vmem:[#allocation6 + $0x50] sm:$0xff]
    %v907 = vld [vmem:[#allocation6 + $0x58] sm:$0xff]
    %v908 = vld [vmem:[#allocation6 + $0x60] sm:$0xff]
    %v909 = vld [vmem:[#allocation6 + $0x68] sm:$0xff]
    %v910 = vld [vmem:[#allocation6 + $0x70] sm:$0xff]
    %v911 = vld [vmem:[#allocation6 + $0x78] sm:$0xff]
    %v912 = vld [vmem:[#allocation6 + $0x80] sm:$0xff]
    %v913 = vld [vmem:[#allocation6 + $0x88] sm:$0xff]
    %v914 = vld [vmem:[#allocation6 + $0x90] sm:$0xff]
    %v915 = vld [vmem:[#allocation6 + $0x98] sm:$0xff]
    %v916 = vld [vmem:[#allocation6 + $0xa0] sm:$0xff]
    %v917 = vld [vmem:[#allocation6 + $0xa8] sm:$0xff]
    %v918 = vld [vmem:[#allocation6 + $0xb0] sm:$0xff]
    %v919 = vld [vmem:[#allocation6 + $0xb8] sm:$0xff]
    %v920 = vld [vmem:[#allocation6 + $0xc0] sm:$0xff]
    %v921 = vld [vmem:[#allocation6 + $0xc8] sm:$0xff]
    %v922 = vld [vmem:[#allocation6 + $0xd0] sm:$0xff]
    %v923 = vld [vmem:[#allocation6 + $0xd8] sm:$0xff]
    %v924 = vld [vmem:[#allocation6 + $0xe0] sm:$0xff]
    %v925 = vld [vmem:[#allocation6 + $0xe8] sm:$0xff]
    %v926 = vld [vmem:[#allocation6 + $0xf0] sm:$0xff]
    %v927 = vld [vmem:[#allocation6 + $0xf8] sm:$0xff]
    %v928 = vld [vmem:[#allocation6 + $0x100] sm:$0xff]
    %v929 = vld [vmem:[#allocation6 + $0x108] sm:$0xff]
    %v930 = vld [vmem:[#allocation6 + $0x110] sm:$0xff]
    %v931 = vld [vmem:[#allocation6 + $0x118] sm:$0xff]
    %v932 = vld [vmem:[#allocation6 + $0x120] sm:$0xff]
    %v933 = vld [vmem:[#allocation6 + $0x128] sm:$0xff]
    %v934 = vld [vmem:[#allocation6 + $0x130] sm:$0xff]
    %v935 = vld [vmem:[#allocation6 + $0x138] sm:$0xff]
    %v936 = vld [vmem:[#allocation6 + $0x140] sm:$0xff]
    %v937 = vld [vmem:[#allocation6 + $0x148] sm:$0xff]
    %v938 = vld [vmem:[#allocation6 + $0x150] sm:$0xff]
    %v939 = vld [vmem:[#allocation6 + $0x158] sm:$0xff]
    %v940 = vld [vmem:[#allocation6 + $0x160] sm:$0xff]
    %v941 = vld [vmem:[#allocation6 + $0x168] sm:$0xff]
    %v942 = vld [vmem:[#allocation6 + $0x170] sm:$0xff]
    %v943 = vld [vmem:[#allocation6 + $0x178] sm:$0xff]
    %v944 = vld [vmem:[#allocation6 + $0x180] sm:$0xff]
    %v945 = vld [vmem:[#allocation6 + $0x188] sm:$0xff]
    %v946 = vld [vmem:[#allocation6 + $0x190] sm:$0xff]
    %v947 = vld [vmem:[#allocation6 + $0x198] sm:$0xff]
    %v948 = vld [vmem:[#allocation6 + $0x1a0] sm:$0xff]
    %v949 = vld [vmem:[#allocation6 + $0x1a8] sm:$0xff]
    %v950 = vld [vmem:[#allocation6 + $0x1b0] sm:$0xff]
    %v951 = vld [vmem:[#allocation6 + $0x1b8] sm:$0xff]
    %v952 = vld [vmem:[#allocation6 + $0x1c0] sm:$0xff]
    %v953 = vld [vmem:[#allocation6 + $0x1c8] sm:$0xff]
    %v954 = vld [vmem:[#allocation6 + $0x1d0] sm:$0xff]
    %v955 = vld [vmem:[#allocation6 + $0x1d8] sm:$0xff]
    %v956 = vld [vmem:[#allocation6 + $0x1e0] sm:$0xff]
    %v957 = vld [vmem:[#allocation6 + $0x1e8] sm:$0xff]
    %v958 = vld [vmem:[#allocation6 + $0x1f0] sm:$0xff]
    %v959 = vld [vmem:[#allocation6 + $0x1f8] sm:$0xff]
    %960 = vmatprep.subr.mxu0 %v893
    %961 = vmatpush1.msra.mxu0 %v892
    %962 = vmatprep.subr.mxu0 %v889
    %963 = vmatpush1.msra.mxu0 %v888
    %964 = vmatprep.subr.mxu0 %v885
    %965 = vmatpush1.msra.mxu0 %v884
    %966 = vmatprep.subr.mxu0 %v881
    %967 = vmatpush1.msra.mxu0 %v880
    %968 = vmatprep.subr.mxu0 %v877
    %969 = vmatpush1.msra.mxu0 %v876
    %970 = vmatprep.subr.mxu0 %v873
    %971 = vmatpush1.msra.mxu0 %v872
    %972 = vmatprep.subr.mxu0 %v869
    %973 = vmatpush1.msra.mxu0 %v868
    %974 = vmatprep.subr.mxu0 %v865
    %975 = vmatpush1.msra.mxu0 %v864
    %976 = vmatprep.subr.mxu0 %v861
    %977 = vmatpush1.msra.mxu0 %v860
    %978 = vmatprep.subr.mxu0 %v857
    %979 = vmatpush1.msra.mxu0 %v856
    %980 = vmatprep.subr.mxu0 %v853
    %981 = vmatpush1.msra.mxu0 %v852
    %982 = vmatprep.subr.mxu0 %v849
    %983 = vmatpush1.msra.mxu0 %v848
    %984 = vmatprep.subr.mxu0 %v845
    %985 = vmatpush1.msra.mxu0 %v844
    %986 = vmatprep.subr.mxu0 %v841
    %987 = vmatpush1.msra.mxu0 %v840
    %988 = vmatprep.subr.mxu0 %v837
    %989 = vmatpush1.msra.mxu0 %v836
    %990 = vmatprep.subr.mxu0 %v833
    %991 = vmatpush1.msra.mxu0 %v832
    %992 = vmatprep.subr.mxu0 0.0
    %993 = vmatpush2.msra.mxu0 0.0
    %994 = vmatprep.subr.mxu0 0.0
    %995 = vmatpush2.msra.mxu0 0.0
    %996 = vmatprep.subr.mxu0 0.0
    %997 = vmatpush2.msra.mxu0 0.0
    %998 = vmatprep.subr.mxu0 0.0
    %999 = vmatpush2.msra.mxu0 0.0
    %1000 = vmatprep.subr.mxu0 0.0
    %1001 = vmatpush2.msra.mxu0 0.0
    %1002 = vmatprep.subr.mxu0 0.0
    %1003 = vmatpush2.msra.mxu0 0.0
    %1004 = vmatprep.subr.mxu0 0.0
    %1005 = vmatpush2.msra.mxu0 0.0
    %1006 = vmatprep.subr.mxu0 0.0
    %1007 = vmatpush2.msra.mxu0 0.0
    %1008 = vmatprep.subr.mxu0 0.0
    %1009 = vmatpush2.msra.mxu0 0.0
    %1010 = vmatprep.subr.mxu0 0.0
    %1011 = vmatpush2.msra.mxu0 0.0
    %1012 = vmatprep.subr.mxu0 0.0
    %1013 = vmatpush2.msra.mxu0 0.0
    %1014 = vmatprep.subr.mxu0 0.0
    %1015 = vmatpush2.msra.mxu0 0.0
    %1016 = vmatprep.subr.mxu0 0.0
    %1017 = vmatpush2.msra.mxu0 0.0
    %1018 = vmatprep.subr.mxu0 0.0
    %1019 = vmatpush2.msra.mxu0 0.0
    %1020 = vmatprep.subr.mxu0 0.0
    %1021 = vmatpush2.msra.mxu0 0.0
    %1022 = vmatprep.subr.mxu0 0.0
    %1023 = vmatpush2.msra.mxu0 0.0
    %1024 = vmatprep.mubr.f32.mxu0 0.0
    %1025 = vmatmul.mubr.f32.gmra.mxu0 0.0
    %v1026 = vpop.f32.mrf.mxu0
    %v1027 = vadd.f32 0.0, %v1026
    %v1028 = vpop.f32.mrf.mxu0
    %v1029 = vadd.f32 0.0, %v1028
    %1030 = vdwg.mxu0
    %1031 = vmatprep.subr.mxu0 %v895
    %1032 = vmatpush1.msra.mxu0 %v894
    %1033 = vmatprep.subr.mxu0 %v891
    %1034 = vmatpush1.msra.mxu0 %v890
    %1035 = vmatprep.subr.mxu0 %v887
    %1036 = vmatpush1.msra.mxu0 %v886
    %1037 = vmatprep.subr.mxu0 %v883
    %1038 = vmatpush1.msra.mxu0 %v882
    %1039 = vmatprep.subr.mxu0 %v879
    %1040 = vmatpush1.msra.mxu0 %v878
    %1041 = vmatprep.subr.mxu0 %v875
    %1042 = vmatpush1.msra.mxu0 %v874
    %1043 = vmatprep.subr.mxu0 %v871
    %1044 = vmatpush1.msra.mxu0 %v870
    %1045 = vmatprep.subr.mxu0 %v867
    %1046 = vmatpush1.msra.mxu0 %v866
    %1047 = vmatprep.subr.mxu0 %v863
    %1048 = vmatpush1.msra.mxu0 %v862
    %1049 = vmatprep.subr.mxu0 %v859
    %1050 = vmatpush1.msra.mxu0 %v858
    %1051 = vmatprep.subr.mxu0 %v855
    %1052 = vmatpush1.msra.mxu0 %v854
    %1053 = vmatprep.subr.mxu0 %v851
    %1054 = vmatpush1.msra.mxu0 %v850
    %1055 = vmatprep.subr.mxu0 %v847
    %1056 = vmatpush1.msra.mxu0 %v846
    %1057 = vmatprep.subr.mxu0 %v843
    %1058 = vmatpush1.msra.mxu0 %v842
    %1059 = vmatprep.subr.mxu0 %v839
    %1060 = vmatpush1.msra.mxu0 %v838
    %1061 = vmatprep.subr.mxu0 %v835
    %1062 = vmatpush1.msra.mxu0 %v834
    %1063 = vmatprep.subr.mxu0 0.0
    %1064 = vmatpush2.msra.mxu0 0.0
    %1065 = vmatprep.subr.mxu0 0.0
    %1066 = vmatpush2.msra.mxu0 0.0
    %1067 = vmatprep.subr.mxu0 0.0
    %1068 = vmatpush2.msra.mxu0 0.0
    %1069 = vmatprep.subr.mxu0 0.0
    %1070 = vmatpush2.msra.mxu0 0.0
    %1071 = vmatprep.subr.mxu0 0.0
    %1072 = vmatpush2.msra.mxu0 0.0
    %1073 = vmatprep.subr.mxu0 0.0
    %1074 = vmatpush2.msra.mxu0 0.0
    %1075 = vmatprep.subr.mxu0 0.0
    %1076 = vmatpush2.msra.mxu0 0.0
    %1077 = vmatprep.subr.mxu0 0.0
    %1078 = vmatpush2.msra.mxu0 0.0
    %1079 = vmatprep.subr.mxu0 0.0
    %1080 = vmatpush2.msra.mxu0 0.0
    %1081 = vmatprep.subr.mxu0 0.0
    %1082 = vmatpush2.msra.mxu0 0.0
    %1083 = vmatprep.subr.mxu0 0.0
    %1084 = vmatpush2.msra.mxu0 0.0
    %1085 = vmatprep.subr.mxu0 0.0
    %1086 = vmatpush2.msra.mxu0 0.0
    %1087 = vmatprep.subr.mxu0 0.0
    %1088 = vmatpush2.msra.mxu0 0.0
    %1089 = vmatprep.subr.mxu0 0.0
    %1090 = vmatpush2.msra.mxu0 0.0
    %1091 = vmatprep.subr.mxu0 0.0
    %1092 = vmatpush2.msra.mxu0 0.0
    %1093 = vmatprep.subr.mxu0 0.0
    %1094 = vmatpush2.msra.mxu0 0.0
    %1095 = vmatprep.mubr.f32.mxu0 0.0
    %1096 = vmatmul.mubr.f32.gmra.mxu0 0.0
    %v1097 = vpop.f32.mrf.mxu0
    %v1098 = vadd.f32 0.0, %v1097
    %v1099 = vpop.f32.mrf.mxu0
    %v1100 = vadd.f32 0.0, %v1099
    %1101 = vdwg.mxu0
    %v1102 = vadd.f32 %v567, %v1027
    %v1103 = vadd.f32 %v569, %v1029
    %v1104 = vadd.f32 %v650, %v1098
    %v1105 = vadd.f32 %v652, %v1100
    %1106 = vmatprep.subr.mxu0 %v957
    %1107 = vmatpush1.msra.mxu0 %v956
    %1108 = vmatprep.subr.mxu0 %v953
    %1109 = vmatpush1.msra.mxu0 %v952
    %1110 = vmatprep.subr.mxu0 %v949
    %1111 = vmatpush1.msra.mxu0 %v948
    %1112 = vmatprep.subr.mxu0 %v945
    %1113 = vmatpush1.msra.mxu0 %v944
    %1114 = vmatprep.subr.mxu0 %v941
    %1115 = vmatpush1.msra.mxu0 %v940
    %1116 = vmatprep.subr.mxu0 %v937
    %1117 = vmatpush1.msra.mxu0 %v936
    %1118 = vmatprep.subr.mxu0 %v933
    %1119 = vmatpush1.msra.mxu0 %v932
    %1120 = vmatprep.subr.mxu0 %v929
    %1121 = vmatpush1.msra.mxu0 %v928
    %1122 = vmatprep.subr.mxu0 %v925
    %1123 = vmatpush1.msra.mxu0 %v924
    %1124 = vmatprep.subr.mxu0 %v921
    %1125 = vmatpush1.msra.mxu0 %v920
    %1126 = vmatprep.subr.mxu0 %v917
    %1127 = vmatpush1.msra.mxu0 %v916
    %1128 = vmatprep.subr.mxu0 %v913
    %1129 = vmatpush1.msra.mxu0 %v912
    %1130 = vmatprep.subr.mxu0 %v909
    %1131 = vmatpush1.msra.mxu0 %v908
    %1132 = vmatprep.subr.mxu0 %v905
    %1133 = vmatpush1.msra.mxu0 %v904
    %1134 = vmatprep.subr.mxu0 %v901
    %1135 = vmatpush1.msra.mxu0 %v900
    %1136 = vmatprep.subr.mxu0 %v897
    %1137 = vmatpush1.msra.mxu0 %v896
    %1138 = vmatprep.subr.mxu0 0.0
    %1139 = vmatpush2.msra.mxu0 0.0
    %1140 = vmatprep.subr.mxu0 0.0
    %1141 = vmatpush2.msra.mxu0 0.0
    %1142 = vmatprep.subr.mxu0 0.0
    %1143 = vmatpush2.msra.mxu0 0.0
    %1144 = vmatprep.subr.mxu0 0.0
    %1145 = vmatpush2.msra.mxu0 0.0
    %1146 = vmatprep.subr.mxu0 0.0
    %1147 = vmatpush2.msra.mxu0 0.0
    %1148 = vmatprep.subr.mxu0 0.0
    %1149 = vmatpush2.msra.mxu0 0.0
    %1150 = vmatprep.subr.mxu0 0.0
    %1151 = vmatpush2.msra.mxu0 0.0
    %1152 = vmatprep.subr.mxu0 0.0
    %1153 = vmatpush2.msra.mxu0 0.0
    %1154 = vmatprep.subr.mxu0 0.0
    %1155 = vmatpush2.msra.mxu0 0.0
    %1156 = vmatprep.subr.mxu0 0.0
    %1157 = vmatpush2.msra.mxu0 0.0
    %1158 = vmatprep.subr.mxu0 0.0
    %1159 = vmatpush2.msra.mxu0 0.0
    %1160 = vmatprep.subr.mxu0 0.0
    %1161 = vmatpush2.msra.mxu0 0.0
    %1162 = vmatprep.subr.mxu0 0.0
    %1163 = vmatpush2.msra.mxu0 0.0
    %1164 = vmatprep.subr.mxu0 0.0
    %1165 = vmatpush2.msra.mxu0 0.0
    %1166 = vmatprep.subr.mxu0 0.0
    %1167 = vmatpush2.msra.mxu0 0.0
    %1168 = vmatprep.subr.mxu0 0.0
    %1169 = vmatpush2.msra.mxu0 0.0
    %1170 = vmatprep.mubr.f32.mxu0 0.0
    %1171 = vmatmul.mubr.f32.gmra.mxu0 0.0
    %v1172 = vpop.f32.mrf.mxu0
    %v1173 = vadd.f32 0.0, %v1172
    %v1174 = vpop.f32.mrf.mxu0
    %v1175 = vadd.f32 0.0, %v1174
    %1176 = vdwg.mxu0
    %1177 = vmatprep.subr.mxu0 %v959
    %1178 = vmatpush1.msra.mxu0 %v958
    %1179 = vmatprep.subr.mxu0 %v955
    %1180 = vmatpush1.msra.mxu0 %v954
    %1181 = vmatprep.subr.mxu0 %v951
    %1182 = vmatpush1.msra.mxu0 %v950
    %1183 = vmatprep.subr.mxu0 %v947
    %1184 = vmatpush1.msra.mxu0 %v946
    %1185 = vmatprep.subr.mxu0 %v943
    %1186 = vmatpush1.msra.mxu0 %v942
    %1187 = vmatprep.subr.mxu0 %v939
    %1188 = vmatpush1.msra.mxu0 %v938
    %1189 = vmatprep.subr.mxu0 %v935
    %1190 = vmatpush1.msra.mxu0 %v934
    %1191 = vmatprep.subr.mxu0 %v931
    %1192 = vmatpush1.msra.mxu0 %v930
    %1193 = vmatprep.subr.mxu0 %v927
    %1194 = vmatpush1.msra.mxu0 %v926
    %1195 = vmatprep.subr.mxu0 %v923
    %1196 = vmatpush1.msra.mxu0 %v922
    %1197 = vmatprep.subr.mxu0 %v919
    %1198 = vmatpush1.msra.mxu0 %v918
    %1199 = vmatprep.subr.mxu0 %v915
    %1200 = vmatpush1.msra.mxu0 %v914
    %1201 = vmatprep.subr.mxu0 %v911
    %1202 = vmatpush1.msra.mxu0 %v910
    %1203 = vmatprep.subr.mxu0 %v907
    %1204 = vmatpush1.msra.mxu0 %v906
    %1205 = vmatprep.subr.mxu0 %v903
    %1206 = vmatpush1.msra.mxu0 %v902
    %1207 = vmatprep.subr.mxu0 %v899
    %1208 = vmatpush1.msra.mxu0 %v898
    %1209 = vmatprep.subr.mxu0 0.0
    %1210 = vmatpush2.msra.mxu0 0.0
    %1211 = vmatprep.subr.mxu0 0.0
    %1212 = vmatpush2.msra.mxu0 0.0
    %1213 = vmatprep.subr.mxu0 0.0
    %1214 = vmatpush2.msra.mxu0 0.0
    %1215 = vmatprep.subr.mxu0 0.0
    %1216 = vmatpush2.msra.mxu0 0.0
    %1217 = vmatprep.subr.mxu0 0.0
    %1218 = vmatpush2.msra.mxu0 0.0
    %1219 = vmatprep.subr.mxu0 0.0
    %1220 = vmatpush2.msra.mxu0 0.0
    %1221 = vmatprep.subr.mxu0 0.0
    %1222 = vmatpush2.msra.mxu0 0.0
    %1223 = vmatprep.subr.mxu0 0.0
    %1224 = vmatpush2.msra.mxu0 0.0
    %1225 = vmatprep.subr.mxu0 0.0
    %1226 = vmatpush2.msra.mxu0 0.0
    %1227 = vmatprep.subr.mxu0 0.0
    %1228 = vmatpush2.msra.mxu0 0.0
    %1229 = vmatprep.subr.mxu0 0.0
    %1230 = vmatpush2.msra.mxu0 0.0
    %1231 = vmatprep.subr.mxu0 0.0
    %1232 = vmatpush2.msra.mxu0 0.0
    %1233 = vmatprep.subr.mxu0 0.0
    %1234 = vmatpush2.msra.mxu0 0.0
    %1235 = vmatprep.subr.mxu0 0.0
    %1236 = vmatpush2.msra.mxu0 0.0
    %1237 = vmatprep.subr.mxu0 0.0
    %1238 = vmatpush2.msra.mxu0 0.0
    %1239 = vmatprep.subr.mxu0 0.0
    %1240 = vmatpush2.msra.mxu0 0.0
    %1241 = vmatprep.mubr.f32.mxu0 0.0
    %1242 = vmatmul.mubr.f32.gmra.mxu0 0.0
    %v1243 = vpop.f32.mrf.mxu0
    %v1244 = vadd.f32 0.0, %v1243
    %v1245 = vpop.f32.mrf.mxu0
    %v1246 = vadd.f32 0.0, %v1245
    %1247 = vdwg.mxu0
    %v1252 = vrot.slane %v1173, 6
    %v1253 = vrot.slane %v1175, 6
    %v1254 = vrot.slane %v1244, 6
    %v1255 = vrot.slane %v1246, 6
    %v1260 = vadd.f32 %v745, %v1252
    %v1261 = vadd.f32 %v747, %v1253
    %v1262 = vadd.f32 %v828, %v1254
    %v1263 = vadd.f32 %v830, %v1255
    %v1264 = vxor.u32 %v1102, 2147483648
    %v1265 = vmul.f32 %v1264, 1.442695
    %v1266 = vpow.pop %v1265
    %v1267 = vadd.f32 %v1266, 1.0
    %v1268 = vrcp.pop %v1267
    %v1269 = vmul.f32 1.0, %v1268
    %v1270 = vxor.u32 %v1103, 2147483648
    %v1271 = vmul.f32 %v1270, 1.442695
    %v1272 = vpow.pop %v1271
    %v1273 = vadd.f32 %v1272, 1.0
    %v1274 = vrcp.pop %v1273
    %v1275 = vmul.f32 1.0, %v1274
    %v1276 = vtanh.pop %v1104
    %v1277 = vxor.u32 %v1105, 2147483648
    %v1278 = vmul.f32 %v1277, 1.442695
    %v1279 = vpow.pop %v1278
    %v1280 = vadd.f32 %v1279, 1.0
    %v1281 = vrcp.pop %v1280
    %v1282 = vmul.f32 1.0, %v1281
    %v1283 = vmul.f32 %v1275, 0.0
    %v1284 = vmul.f32 %v1269, %v1276
    %v1285 = vadd.f32 %v1283, %v1284
    %v1286 = vtanh.pop %v1285
    %v1287 = vmul.f32 %v1282, %v1286
    %v1288 = vxor.u32 %v1260, 2147483648
    %v1289 = vmul.f32 %v1288, 1.442695
    %v1290 = vpow.pop %v1289
    %v1291 = vadd.f32 %v1290, 1.0
    %v1292 = vrcp.pop %v1291
    %v1293 = vmul.f32 1.0, %v1292
    %v1294 = vxor.u32 %v1261, 2147483648
    %v1295 = vmul.f32 %v1294, 1.442695
    %v1296 = vpow.pop %v1295
    %v1297 = vadd.f32 %v1296, 1.0
    %v1298 = vrcp.pop %v1297
    %v1299 = vmul.f32 1.0, %v1298
    %v1300 = vtanh.pop %v1262
    %v1301 = vxor.u32 %v1263, 2147483648
    %v1302 = vmul.f32 %v1301, 1.442695
    %v1303 = vpow.pop %v1302
    %v1304 = vadd.f32 %v1303, 1.0
    %v1305 = vrcp.pop %v1304
    %v1306 = vmul.f32 1.0, %v1305
    %v1307 = vmul.f32 %v1299, 0.0
    %v1308 = vmul.f32 %v1293, %v1300
    %v1309 = vadd.f32 %v1307, %v1308
    %v1310 = vtanh.pop %v1309
    %v1311 = vmul.f32 %v1306, %v1310
    %1312 = vmatprep.subr.mxu0 %v893
    %1313 = vmatpush1.msra.mxu0 %v892
    %1314 = vmatprep.subr.mxu0 %v889
    %1315 = vmatpush1.msra.mxu0 %v888
    %1316 = vmatprep.subr.mxu0 %v885
    %1317 = vmatpush1.msra.mxu0 %v884
    %1318 = vmatprep.subr.mxu0 %v881
    %1319 = vmatpush1.msra.mxu0 %v880
    %1320 = vmatprep.subr.mxu0 %v877
    %1321 = vmatpush1.msra.mxu0 %v876
    %1322 = vmatprep.subr.mxu0 %v873
    %1323 = vmatpush1.msra.mxu0 %v872
    %1324 = vmatprep.subr.mxu0 %v869
    %1325 = vmatpush1.msra.mxu0 %v868
    %1326 = vmatprep.subr.mxu0 %v865
    %1327 = vmatpush1.msra.mxu0 %v864
    %1328 = vmatprep.subr.mxu0 %v861
    %1329 = vmatpush1.msra.mxu0 %v860
    %1330 = vmatprep.subr.mxu0 %v857
    %1331 = vmatpush1.msra.mxu0 %v856
    %1332 = vmatprep.subr.mxu0 %v853
    %1333 = vmatpush1.msra.mxu0 %v852
    %1334 = vmatprep.subr.mxu0 %v849
    %1335 = vmatpush1.msra.mxu0 %v848
    %1336 = vmatprep.subr.mxu0 %v845
    %1337 = vmatpush1.msra.mxu0 %v844
    %1338 = vmatprep.subr.mxu0 %v841
    %1339 = vmatpush1.msra.mxu0 %v840
    %1340 = vmatprep.subr.mxu0 %v837
    %1341 = vmatpush1.msra.mxu0 %v836
    %1342 = vmatprep.subr.mxu0 %v833
    %1343 = vmatpush1.msra.mxu0 %v832
    %1344 = vmatprep.subr.mxu0 0.0
    %1345 = vmatpush2.msra.mxu0 0.0
    %1346 = vmatprep.subr.mxu0 0.0
    %1347 = vmatpush2.msra.mxu0 0.0
    %1348 = vmatprep.subr.mxu0 0.0
    %1349 = vmatpush2.msra.mxu0 0.0
    %1350 = vmatprep.subr.mxu0 0.0
    %1351 = vmatpush2.msra.mxu0 0.0
    %1352 = vmatprep.subr.mxu0 0.0
    %1353 = vmatpush2.msra.mxu0 0.0
    %1354 = vmatprep.subr.mxu0 0.0
    %1355 = vmatpush2.msra.mxu0 0.0
    %1356 = vmatprep.subr.mxu0 0.0
    %1357 = vmatpush2.msra.mxu0 0.0
    %1358 = vmatprep.subr.mxu0 0.0
    %1359 = vmatpush2.msra.mxu0 0.0
    %1360 = vmatprep.subr.mxu0 0.0
    %1361 = vmatpush2.msra.mxu0 0.0
    %1362 = vmatprep.subr.mxu0 0.0
    %1363 = vmatpush2.msra.mxu0 0.0
    %1364 = vmatprep.subr.mxu0 0.0
    %1365 = vmatpush2.msra.mxu0 0.0
    %1366 = vmatprep.subr.mxu0 0.0
    %1367 = vmatpush2.msra.mxu0 0.0
    %1368 = vmatprep.subr.mxu0 0.0
    %1369 = vmatpush2.msra.mxu0 0.0
    %1370 = vmatprep.subr.mxu0 0.0
    %1371 = vmatpush2.msra.mxu0 0.0
    %1372 = vmatprep.subr.mxu0 0.0
    %1373 = vmatpush2.msra.mxu0 0.0
    %1374 = vmatprep.subr.mxu0 0.0
    %1375 = vmatpush2.msra.mxu0 0.0
    %1376 = vmatprep.mubr.f32.mxu0 0.0
    %1377 = vmatmul.mubr.f32.gmra.mxu0 %v1287
    %v1378 = vpop.f32.mrf.mxu0
    %v1379 = vadd.f32 0.0, %v1378
    %v1380 = vpop.f32.mrf.mxu0
    %v1381 = vadd.f32 0.0, %v1380
    %1382 = vdwg.mxu0
    %1383 = vmatprep.subr.mxu0 %v895
    %1384 = vmatpush1.msra.mxu0 %v894
    %1385 = vmatprep.subr.mxu0 %v891
    %1386 = vmatpush1.msra.mxu0 %v890
    %1387 = vmatprep.subr.mxu0 %v887
    %1388 = vmatpush1.msra.mxu0 %v886
    %1389 = vmatprep.subr.mxu0 %v883
    %1390 = vmatpush1.msra.mxu0 %v882
    %1391 = vmatprep.subr.mxu0 %v879
    %1392 = vmatpush1.msra.mxu0 %v878
    %1393 = vmatprep.subr.mxu0 %v875
    %1394 = vmatpush1.msra.mxu0 %v874
    %1395 = vmatprep.subr.mxu0 %v871
    %1396 = vmatpush1.msra.mxu0 %v870
    %1397 = vmatprep.subr.mxu0 %v867
    %1398 = vmatpush1.msra.mxu0 %v866
    %1399 = vmatprep.subr.mxu0 %v863
    %1400 = vmatpush1.msra.mxu0 %v862
    %1401 = vmatprep.subr.mxu0 %v859
    %1402 = vmatpush1.msra.mxu0 %v858
    %1403 = vmatprep.subr.mxu0 %v855
    %1404 = vmatpush1.msra.mxu0 %v854
    %1405 = vmatprep.subr.mxu0 %v851
    %1406 = vmatpush1.msra.mxu0 %v850
    %1407 = vmatprep.subr.mxu0 %v847
    %1408 = vmatpush1.msra.mxu0 %v846
    %1409 = vmatprep.subr.mxu0 %v843
    %1410 = vmatpush1.msra.mxu0 %v842
    %1411 = vmatprep.subr.mxu0 %v839
    %1412 = vmatpush1.msra.mxu0 %v838
    %1413 = vmatprep.subr.mxu0 %v835
    %1414 = vmatpush1.msra.mxu0 %v834
    %1415 = vmatprep.subr.mxu0 0.0
    %1416 = vmatpush2.msra.mxu0 0.0
    %1417 = vmatprep.subr.mxu0 0.0
    %1418 = vmatpush2.msra.mxu0 0.0
    %1419 = vmatprep.subr.mxu0 0.0
    %1420 = vmatpush2.msra.mxu0 0.0
    %1421 = vmatprep.subr.mxu0 0.0
    %1422 = vmatpush2.msra.mxu0 0.0
    %1423 = vmatprep.subr.mxu0 0.0
    %1424 = vmatpush2.msra.mxu0 0.0
    %1425 = vmatprep.subr.mxu0 0.0
    %1426 = vmatpush2.msra.mxu0 0.0
    %1427 = vmatprep.subr.mxu0 0.0
    %1428 = vmatpush2.msra.mxu0 0.0
    %1429 = vmatprep.subr.mxu0 0.0
    %1430 = vmatpush2.msra.mxu0 0.0
    %1431 = vmatprep.subr.mxu0 0.0
    %1432 = vmatpush2.msra.mxu0 0.0
    %1433 = vmatprep.subr.mxu0 0.0
    %1434 = vmatpush2.msra.mxu0 0.0
    %1435 = vmatprep.subr.mxu0 0.0
    %1436 = vmatpush2.msra.mxu0 0.0
    %1437 = vmatprep.subr.mxu0 0.0
    %1438 = vmatpush2.msra.mxu0 0.0
    %1439 = vmatprep.subr.mxu0 0.0
    %1440 = vmatpush2.msra.mxu0 0.0
    %1441 = vmatprep.subr.mxu0 0.0
    %1442 = vmatpush2.msra.mxu0 0.0
    %1443 = vmatprep.subr.mxu0 0.0
    %1444 = vmatpush2.msra.mxu0 0.0
    %1445 = vmatprep.subr.mxu0 0.0
    %1446 = vmatpush2.msra.mxu0 0.0
    %1447 = vmatprep.mubr.f32.mxu0 0.0
    %1448 = vmatmul.mubr.f32.gmra.mxu0 %v1287
    %v1449 = vpop.f32.mrf.mxu0
    %v1450 = vadd.f32 0.0, %v1449
    %v1451 = vpop.f32.mrf.mxu0
    %v1452 = vadd.f32 0.0, %v1451
    %1453 = vdwg.mxu0
    %v1458 = vrot.slane %v1379, 6
    %v1459 = vrot.slane %v1381, 6
    %v1460 = vrot.slane %v1450, 6
    %v1461 = vrot.slane %v1452, 6
    %v1466 = vadd.f32 %v567, %v1458
    %v1467 = vadd.f32 %v569, %v1459
    %v1468 = vadd.f32 %v650, %v1460
    %v1469 = vadd.f32 %v652, %v1461
    %v1471 = vrot.slane %v1311, 2
    %1473 = vmatprep.subr.mxu0 %v957
    %1474 = vmatpush1.msra.mxu0 %v956
    %1475 = vmatprep.subr.mxu0 %v953
    %1476 = vmatpush1.msra.mxu0 %v952
    %1477 = vmatprep.subr.mxu0 %v949
    %1478 = vmatpush1.msra.mxu0 %v948
    %1479 = vmatprep.subr.mxu0 %v945
    %1480 = vmatpush1.msra.mxu0 %v944
    %1481 = vmatprep.subr.mxu0 %v941
    %1482 = vmatpush1.msra.mxu0 %v940
    %1483 = vmatprep.subr.mxu0 %v937
    %1484 = vmatpush1.msra.mxu0 %v936
    %1485 = vmatprep.subr.mxu0 %v933
    %1486 = vmatpush1.msra.mxu0 %v932
    %1487 = vmatprep.subr.mxu0 %v929
    %1488 = vmatpush1.msra.mxu0 %v928
    %1489 = vmatprep.subr.mxu0 %v925
    %1490 = vmatpush1.msra.mxu0 %v924
    %1491 = vmatprep.subr.mxu0 %v921
    %1492 = vmatpush1.msra.mxu0 %v920
    %1493 = vmatprep.subr.mxu0 %v917
    %1494 = vmatpush1.msra.mxu0 %v916
    %1495 = vmatprep.subr.mxu0 %v913
    %1496 = vmatpush1.msra.mxu0 %v912
    %1497 = vmatprep.subr.mxu0 %v909
    %1498 = vmatpush1.msra.mxu0 %v908
    %1499 = vmatprep.subr.mxu0 %v905
    %1500 = vmatpush1.msra.mxu0 %v904
    %1501 = vmatprep.subr.mxu0 %v901
    %1502 = vmatpush1.msra.mxu0 %v900
    %1503 = vmatprep.subr.mxu0 %v897
    %1504 = vmatpush1.msra.mxu0 %v896
    %1505 = vmatprep.subr.mxu0 0.0
    %1506 = vmatpush2.msra.mxu0 0.0
    %1507 = vmatprep.subr.mxu0 0.0
    %1508 = vmatpush2.msra.mxu0 0.0
    %1509 = vmatprep.subr.mxu0 0.0
    %1510 = vmatpush2.msra.mxu0 0.0
    %1511 = vmatprep.subr.mxu0 0.0
    %1512 = vmatpush2.msra.mxu0 0.0
    %1513 = vmatprep.subr.mxu0 0.0
    %1514 = vmatpush2.msra.mxu0 0.0
    %1515 = vmatprep.subr.mxu0 0.0
    %1516 = vmatpush2.msra.mxu0 0.0
    %1517 = vmatprep.subr.mxu0 0.0
    %1518 = vmatpush2.msra.mxu0 0.0
    %1519 = vmatprep.subr.mxu0 0.0
    %1520 = vmatpush2.msra.mxu0 0.0
    %1521 = vmatprep.subr.mxu0 0.0
    %1522 = vmatpush2.msra.mxu0 0.0
    %1523 = vmatprep.subr.mxu0 0.0
    %1524 = vmatpush2.msra.mxu0 0.0
    %1525 = vmatprep.subr.mxu0 0.0
    %1526 = vmatpush2.msra.mxu0 0.0
    %1527 = vmatprep.subr.mxu0 0.0
    %1528 = vmatpush2.msra.mxu0 0.0
    %1529 = vmatprep.subr.mxu0 0.0
    %1530 = vmatpush2.msra.mxu0 0.0
    %1531 = vmatprep.subr.mxu0 0.0
    %1532 = vmatpush2.msra.mxu0 0.0
    %1533 = vmatprep.subr.mxu0 0.0
    %1534 = vmatpush2.msra.mxu0 0.0
    %1535 = vmatprep.subr.mxu0 0.0
    %1536 = vmatpush2.msra.mxu0 0.0
    %1537 = vmatprep.mubr.f32.mxu0 0.0
    %1538 = vmatmul.mubr.f32.gmra.mxu0 %v1471
    %v1539 = vpop.f32.mrf.mxu0
    %v1540 = vadd.f32 0.0, %v1539
    %v1541 = vpop.f32.mrf.mxu0
    %v1542 = vadd.f32 0.0, %v1541
    %1543 = vdwg.mxu0
    %1544 = vmatprep.subr.mxu0 %v959
    %1545 = vmatpush1.msra.mxu0 %v958
    %1546 = vmatprep.subr.mxu0 %v955
    %1547 = vmatpush1.msra.mxu0 %v954
    %1548 = vmatprep.subr.mxu0 %v951
    %1549 = vmatpush1.msra.mxu0 %v950
    %1550 = vmatprep.subr.mxu0 %v947
    %1551 = vmatpush1.msra.mxu0 %v946
    %1552 = vmatprep.subr.mxu0 %v943
    %1553 = vmatpush1.msra.mxu0 %v942
    %1554 = vmatprep.subr.mxu0 %v939
    %1555 = vmatpush1.msra.mxu0 %v938
    %1556 = vmatprep.subr.mxu0 %v935
    %1557 = vmatpush1.msra.mxu0 %v934
    %1558 = vmatprep.subr.mxu0 %v931
    %1559 = vmatpush1.msra.mxu0 %v930
    %1560 = vmatprep.subr.mxu0 %v927
    %1561 = vmatpush1.msra.mxu0 %v926
    %1562 = vmatprep.subr.mxu0 %v923
    %1563 = vmatpush1.msra.mxu0 %v922
    %1564 = vmatprep.subr.mxu0 %v919
    %1565 = vmatpush1.msra.mxu0 %v918
    %1566 = vmatprep.subr.mxu0 %v915
    %1567 = vmatpush1.msra.mxu0 %v914
    %1568 = vmatprep.subr.mxu0 %v911
    %1569 = vmatpush1.msra.mxu0 %v910
    %1570 = vmatprep.subr.mxu0 %v907
    %1571 = vmatpush1.msra.mxu0 %v906
    %1572 = vmatprep.subr.mxu0 %v903
    %1573 = vmatpush1.msra.mxu0 %v902
    %1574 = vmatprep.subr.mxu0 %v899
    %1575 = vmatpush1.msra.mxu0 %v898
    %1576 = vmatprep.subr.mxu0 0.0
    %1577 = vmatpush2.msra.mxu0 0.0
    %1578 = vmatprep.subr.mxu0 0.0
    %1579 = vmatpush2.msra.mxu0 0.0
    %1580 = vmatprep.subr.mxu0 0.0
    %1581 = vmatpush2.msra.mxu0 0.0
    %1582 = vmatprep.subr.mxu0 0.0
    %1583 = vmatpush2.msra.mxu0 0.0
    %1584 = vmatprep.subr.mxu0 0.0
    %1585 = vmatpush2.msra.mxu0 0.0
    %1586 = vmatprep.subr.mxu0 0.0
    %1587 = vmatpush2.msra.mxu0 0.0
    %1588 = vmatprep.subr.mxu0 0.0
    %1589 = vmatpush2.msra.mxu0 0.0
    %1590 = vmatprep.subr.mxu0 0.0
    %1591 = vmatpush2.msra.mxu0 0.0
    %1592 = vmatprep.subr.mxu0 0.0
    %1593 = vmatpush2.msra.mxu0 0.0
    %1594 = vmatprep.subr.mxu0 0.0
    %1595 = vmatpush2.msra.mxu0 0.0
    %1596 = vmatprep.subr.mxu0 0.0
    %1597 = vmatpush2.msra.mxu0 0.0
    %1598 = vmatprep.subr.mxu0 0.0
    %1599 = vmatpush2.msra.mxu0 0.0
    %1600 = vmatprep.subr.mxu0 0.0
    %1601 = vmatpush2.msra.mxu0 0.0
    %1602 = vmatprep.subr.mxu0 0.0
    %1603 = vmatpush2.msra.mxu0 0.0
    %1604 = vmatprep.subr.mxu0 0.0
    %1605 = vmatpush2.msra.mxu0 0.0
    %1606 = vmatprep.subr.mxu0 0.0
    %1607 = vmatpush2.msra.mxu0 0.0
    %1608 = vmatprep.mubr.f32.mxu0 0.0
    %1609 = vmatmul.mubr.f32.gmra.mxu0 %v1471
    %v1610 = vpop.f32.mrf.mxu0
    %v1611 = vadd.f32 0.0, %v1610
    %v1612 = vpop.f32.mrf.mxu0
    %v1613 = vadd.f32 0.0, %v1612
    %1614 = vdwg.mxu0
    %v1615 = vadd.f32 %v745, %v1540
    %v1616 = vadd.f32 %v747, %v1542
    %v1617 = vadd.f32 %v828, %v1611
    %v1618 = vadd.f32 %v830, %v1613
    %v1619 = vxor.u32 %v1466, 2147483648
    %v1620 = vmul.f32 %v1619, 1.442695
    %v1621 = vpow.pop %v1620
    %v1622 = vadd.f32 %v1621, 1.0
    %v1623 = vrcp.pop %v1622
    %v1624 = vmul.f32 1.0, %v1623
    %v1625 = vxor.u32 %v1467, 2147483648
    %v1626 = vmul.f32 %v1625, 1.442695
    %v1627 = vpow.pop %v1626
    %v1628 = vadd.f32 %v1627, 1.0
    %v1629 = vrcp.pop %v1628
    %v1630 = vmul.f32 1.0, %v1629
    %v1631 = vtanh.pop %v1468
    %v1632 = vxor.u32 %v1469, 2147483648
    %v1633 = vmul.f32 %v1632, 1.442695
    %v1634 = vpow.pop %v1633
    %v1635 = vadd.f32 %v1634, 1.0
    %v1636 = vrcp.pop %v1635
    %v1637 = vmul.f32 1.0, %v1636
    %v1639 = vrot.slane %v1285, 6
    %v1641 = vmul.f32 %v1630, %v1639
    %v1642 = vmul.f32 %v1624, %v1631
    %v1643 = vadd.f32 %v1641, %v1642
    %v1644 = vtanh.pop %v1643
    %v1645 = vmul.f32 %v1637, %v1644
    %v1646 = vxor.u32 %v1615, 2147483648
    %v1647 = vmul.f32 %v1646, 1.442695
    %v1648 = vpow.pop %v1647
    %v1649 = vadd.f32 %v1648, 1.0
    %v1650 = vrcp.pop %v1649
    %v1651 = vmul.f32 1.0, %v1650
    %v1652 = vxor.u32 %v1616, 2147483648
    %v1653 = vmul.f32 %v1652, 1.442695
    %v1654 = vpow.pop %v1653
    %v1655 = vadd.f32 %v1654, 1.0
    %v1656 = vrcp.pop %v1655
    %v1657 = vmul.f32 1.0, %v1656
    %v1658 = vtanh.pop %v1617
    %v1659 = vxor.u32 %v1618, 2147483648
    %v1660 = vmul.f32 %v1659, 1.442695
    %v1661 = vpow.pop %v1660
    %v1662 = vadd.f32 %v1661, 1.0
    %v1663 = vrcp.pop %v1662
    %v1664 = vmul.f32 1.0, %v1663
    %v1666 = vrot.slane %v1309, 2
    %v1668 = vmul.f32 %v1657, %v1666
    %v1669 = vmul.f32 %v1651, %v1658
    %v1670 = vadd.f32 %v1668, %v1669
    %v1671 = vtanh.pop %v1670
    %v1672 = vmul.f32 %v1664, %v1671
    %v1674 = vrot.slane %v1645, 2
    %1676 = vmatprep.subr.mxu0 %v893
    %1677 = vmatpush1.msra.mxu0 %v892
    %1678 = vmatprep.subr.mxu0 %v889
    %1679 = vmatpush1.msra.mxu0 %v888
    %1680 = vmatprep.subr.mxu0 %v885
    %1681 = vmatpush1.msra.mxu0 %v884
    %1682 = vmatprep.subr.mxu0 %v881
    %1683 = vmatpush1.msra.mxu0 %v880
    %1684 = vmatprep.subr.mxu0 %v877
    %1685 = vmatpush1.msra.mxu0 %v876
    %1686 = vmatprep.subr.mxu0 %v873
    %1687 = vmatpush1.msra.mxu0 %v872
    %1688 = vmatprep.subr.mxu0 %v869
    %1689 = vmatpush1.msra.mxu0 %v868
    %1690 = vmatprep.subr.mxu0 %v865
    %1691 = vmatpush1.msra.mxu0 %v864
    %1692 = vmatprep.subr.mxu0 %v861
    %1693 = vmatpush1.msra.mxu0 %v860
    %1694 = vmatprep.subr.mxu0 %v857
    %1695 = vmatpush1.msra.mxu0 %v856
    %1696 = vmatprep.subr.mxu0 %v853
    %1697 = vmatpush1.msra.mxu0 %v852
    %1698 = vmatprep.subr.mxu0 %v849
    %1699 = vmatpush1.msra.mxu0 %v848
    %1700 = vmatprep.subr.mxu0 %v845
    %1701 = vmatpush1.msra.mxu0 %v844
    %1702 = vmatprep.subr.mxu0 %v841
    %1703 = vmatpush1.msra.mxu0 %v840
    %1704 = vmatprep.subr.mxu0 %v837
    %1705 = vmatpush1.msra.mxu0 %v836
    %1706 = vmatprep.subr.mxu0 %v833
    %1707 = vmatpush1.msra.mxu0 %v832
    %1708 = vmatprep.subr.mxu0 0.0
    %1709 = vmatpush2.msra.mxu0 0.0
    %1710 = vmatprep.subr.mxu0 0.0
    %1711 = vmatpush2.msra.mxu0 0.0
    %1712 = vmatprep.subr.mxu0 0.0
    %1713 = vmatpush2.msra.mxu0 0.0
    %1714 = vmatprep.subr.mxu0 0.0
    %1715 = vmatpush2.msra.mxu0 0.0
    %1716 = vmatprep.subr.mxu0 0.0
    %1717 = vmatpush2.msra.mxu0 0.0
    %1718 = vmatprep.subr.mxu0 0.0
    %1719 = vmatpush2.msra.mxu0 0.0
    %1720 = vmatprep.subr.mxu0 0.0
    %1721 = vmatpush2.msra.mxu0 0.0
    %1722 = vmatprep.subr.mxu0 0.0
    %1723 = vmatpush2.msra.mxu0 0.0
    %1724 = vmatprep.subr.mxu0 0.0
    %1725 = vmatpush2.msra.mxu0 0.0
    %1726 = vmatprep.subr.mxu0 0.0
    %1727 = vmatpush2.msra.mxu0 0.0
    %1728 = vmatprep.subr.mxu0 0.0
    %1729 = vmatpush2.msra.mxu0 0.0
    %1730 = vmatprep.subr.mxu0 0.0
    %1731 = vmatpush2.msra.mxu0 0.0
    %1732 = vmatprep.subr.mxu0 0.0
    %1733 = vmatpush2.msra.mxu0 0.0
    %1734 = vmatprep.subr.mxu0 0.0
    %1735 = vmatpush2.msra.mxu0 0.0
    %1736 = vmatprep.subr.mxu0 0.0
    %1737 = vmatpush2.msra.mxu0 0.0
    %1738 = vmatprep.subr.mxu0 0.0
    %1739 = vmatpush2.msra.mxu0 0.0
    %1740 = vmatprep.mubr.f32.mxu0 0.0
    %1741 = vmatmul.mubr.f32.gmra.mxu0 %v1674
    %v1742 = vpop.f32.mrf.mxu0
    %v1743 = vadd.f32 0.0, %v1742
    %v1744 = vpop.f32.mrf.mxu0
    %v1745 = vadd.f32 0.0, %v1744
    %1746 = vdwg.mxu0
    %1747 = vmatprep.subr.mxu0 %v895
    %1748 = vmatpush1.msra.mxu0 %v894
    %1749 = vmatprep.subr.mxu0 %v891
    %1750 = vmatpush1.msra.mxu0 %v890
    %1751 = vmatprep.subr.mxu0 %v887
    %1752 = vmatpush1.msra.mxu0 %v886
    %1753 = vmatprep.subr.mxu0 %v883
    %1754 = vmatpush1.msra.mxu0 %v882
    %1755 = vmatprep.subr.mxu0 %v879
    %1756 = vmatpush1.msra.mxu0 %v878
    %1757 = vmatprep.subr.mxu0 %v875
    %1758 = vmatpush1.msra.mxu0 %v874
    %1759 = vmatprep.subr.mxu0 %v871
    %1760 = vmatpush1.msra.mxu0 %v870
    %1761 = vmatprep.subr.mxu0 %v867
    %1762 = vmatpush1.msra.mxu0 %v866
    %1763 = vmatprep.subr.mxu0 %v863
    %1764 = vmatpush1.msra.mxu0 %v862
    %1765 = vmatprep.subr.mxu0 %v859
    %1766 = vmatpush1.msra.mxu0 %v858
    %1767 = vmatprep.subr.mxu0 %v855
    %1768 = vmatpush1.msra.mxu0 %v854
    %1769 = vmatprep.subr.mxu0 %v851
    %1770 = vmatpush1.msra.mxu0 %v850
    %1771 = vmatprep.subr.mxu0 %v847
    %1772 = vmatpush1.msra.mxu0 %v846
    %1773 = vmatprep.subr.mxu0 %v843
    %1774 = vmatpush1.msra.mxu0 %v842
    %1775 = vmatprep.subr.mxu0 %v839
    %1776 = vmatpush1.msra.mxu0 %v838
    %1777 = vmatprep.subr.mxu0 %v835
    %1778 = vmatpush1.msra.mxu0 %v834
    %1779 = vmatprep.subr.mxu0 0.0
    %1780 = vmatpush2.msra.mxu0 0.0
    %1781 = vmatprep.subr.mxu0 0.0
    %1782 = vmatpush2.msra.mxu0 0.0
    %1783 = vmatprep.subr.mxu0 0.0
    %1784 = vmatpush2.msra.mxu0 0.0
    %1785 = vmatprep.subr.mxu0 0.0
    %1786 = vmatpush2.msra.mxu0 0.0
    %1787 = vmatprep.subr.mxu0 0.0
    %1788 = vmatpush2.msra.mxu0 0.0
    %1789 = vmatprep.subr.mxu0 0.0
    %1790 = vmatpush2.msra.mxu0 0.0
    %1791 = vmatprep.subr.mxu0 0.0
    %1792 = vmatpush2.msra.mxu0 0.0
    %1793 = vmatprep.subr.mxu0 0.0
    %1794 = vmatpush2.msra.mxu0 0.0
    %1795 = vmatprep.subr.mxu0 0.0
    %1796 = vmatpush2.msra.mxu0 0.0
    %1797 = vmatprep.subr.mxu0 0.0
    %1798 = vmatpush2.msra.mxu0 0.0
    %1799 = vmatprep.subr.mxu0 0.0
    %1800 = vmatpush2.msra.mxu0 0.0
    %1801 = vmatprep.subr.mxu0 0.0
    %1802 = vmatpush2.msra.mxu0 0.0
    %1803 = vmatprep.subr.mxu0 0.0
    %1804 = vmatpush2.msra.mxu0 0.0
    %1805 = vmatprep.subr.mxu0 0.0
    %1806 = vmatpush2.msra.mxu0 0.0
    %1807 = vmatprep.subr.mxu0 0.0
    %1808 = vmatpush2.msra.mxu0 0.0
    %1809 = vmatprep.subr.mxu0 0.0
    %1810 = vmatpush2.msra.mxu0 0.0
    %1811 = vmatprep.mubr.f32.mxu0 0.0
    %1812 = vmatmul.mubr.f32.gmra.mxu0 %v1674
    %v1813 = vpop.f32.mrf.mxu0
    %v1814 = vadd.f32 0.0, %v1813
    %v1815 = vpop.f32.mrf.mxu0
    %v1816 = vadd.f32 0.0, %v1815
    %1817 = vdwg.mxu0
    %v1822 = vrot.slane %v1743, 4
    %v1823 = vrot.slane %v1745, 4
    %v1824 = vrot.slane %v1814, 4
    %v1825 = vrot.slane %v1816, 4
    %v1830 = vadd.f32 %v567, %v1822
    %v1831 = vadd.f32 %v569, %v1823
    %v1832 = vadd.f32 %v650, %v1824
    %v1833 = vadd.f32 %v652, %v1825
    %1834 = vmatprep.subr.mxu0 %v957
    %1835 = vmatpush1.msra.mxu0 %v956
    %1836 = vmatprep.subr.mxu0 %v953
    %1837 = vmatpush1.msra.mxu0 %v952
    %1838 = vmatprep.subr.mxu0 %v949
    %1839 = vmatpush1.msra.mxu0 %v948
    %1840 = vmatprep.subr.mxu0 %v945
    %1841 = vmatpush1.msra.mxu0 %v944
    %1842 = vmatprep.subr.mxu0 %v941
    %1843 = vmatpush1.msra.mxu0 %v940
    %1844 = vmatprep.subr.mxu0 %v937
    %1845 = vmatpush1.msra.mxu0 %v936
    %1846 = vmatprep.subr.mxu0 %v933
    %1847 = vmatpush1.msra.mxu0 %v932
    %1848 = vmatprep.subr.mxu0 %v929
    %1849 = vmatpush1.msra.mxu0 %v928
    %1850 = vmatprep.subr.mxu0 %v925
    %1851 = vmatpush1.msra.mxu0 %v924
    %1852 = vmatprep.subr.mxu0 %v921
    %1853 = vmatpush1.msra.mxu0 %v920
    %1854 = vmatprep.subr.mxu0 %v917
    %1855 = vmatpush1.msra.mxu0 %v916
    %1856 = vmatprep.subr.mxu0 %v913
    %1857 = vmatpush1.msra.mxu0 %v912
    %1858 = vmatprep.subr.mxu0 %v909
    %1859 = vmatpush1.msra.mxu0 %v908
    %1860 = vmatprep.subr.mxu0 %v905
    %1861 = vmatpush1.msra.mxu0 %v904
    %1862 = vmatprep.subr.mxu0 %v901
    %1863 = vmatpush1.msra.mxu0 %v900
    %1864 = vmatprep.subr.mxu0 %v897
    %1865 = vmatpush1.msra.mxu0 %v896
    %1866 = vmatprep.subr.mxu0 0.0
    %1867 = vmatpush2.msra.mxu0 0.0
    %1868 = vmatprep.subr.mxu0 0.0
    %1869 = vmatpush2.msra.mxu0 0.0
    %1870 = vmatprep.subr.mxu0 0.0
    %1871 = vmatpush2.msra.mxu0 0.0
    %1872 = vmatprep.subr.mxu0 0.0
    %1873 = vmatpush2.msra.mxu0 0.0
    %1874 = vmatprep.subr.mxu0 0.0
    %1875 = vmatpush2.msra.mxu0 0.0
    %1876 = vmatprep.subr.mxu0 0.0
    %1877 = vmatpush2.msra.mxu0 0.0
    %1878 = vmatprep.subr.mxu0 0.0
    %1879 = vmatpush2.msra.mxu0 0.0
    %1880 = vmatprep.subr.mxu0 0.0
    %1881 = vmatpush2.msra.mxu0 0.0
    %1882 = vmatprep.subr.mxu0 0.0
    %1883 = vmatpush2.msra.mxu0 0.0
    %1884 = vmatprep.subr.mxu0 0.0
    %1885 = vmatpush2.msra.mxu0 0.0
    %1886 = vmatprep.subr.mxu0 0.0
    %1887 = vmatpush2.msra.mxu0 0.0
    %1888 = vmatprep.subr.mxu0 0.0
    %1889 = vmatpush2.msra.mxu0 0.0
    %1890 = vmatprep.subr.mxu0 0.0
    %1891 = vmatpush2.msra.mxu0 0.0
    %1892 = vmatprep.subr.mxu0 0.0
    %1893 = vmatpush2.msra.mxu0 0.0
    %1894 = vmatprep.subr.mxu0 0.0
    %1895 = vmatpush2.msra.mxu0 0.0
    %1896 = vmatprep.subr.mxu0 0.0
    %1897 = vmatpush2.msra.mxu0 0.0
    %1898 = vmatprep.mubr.f32.mxu0 0.0
    %1899 = vmatmul.mubr.f32.gmra.mxu0 %v1672
    %v1900 = vpop.f32.mrf.mxu0
    %v1901 = vadd.f32 0.0, %v1900
    %v1902 = vpop.f32.mrf.mxu0
    %v1903 = vadd.f32 0.0, %v1902
    %1904 = vdwg.mxu0
    %1905 = vmatprep.subr.mxu0 %v959
    %1906 = vmatpush1.msra.mxu0 %v958
    %1907 = vmatprep.subr.mxu0 %v955
    %1908 = vmatpush1.msra.mxu0 %v954
    %1909 = vmatprep.subr.mxu0 %v951
    %1910 = vmatpush1.msra.mxu0 %v950
    %1911 = vmatprep.subr.mxu0 %v947
    %1912 = vmatpush1.msra.mxu0 %v946
    %1913 = vmatprep.subr.mxu0 %v943
    %1914 = vmatpush1.msra.mxu0 %v942
    %1915 = vmatprep.subr.mxu0 %v939
    %1916 = vmatpush1.msra.mxu0 %v938
    %1917 = vmatprep.subr.mxu0 %v935
    %1918 = vmatpush1.msra.mxu0 %v934
    %1919 = vmatprep.subr.mxu0 %v931
    %1920 = vmatpush1.msra.mxu0 %v930
    %1921 = vmatprep.subr.mxu0 %v927
    %1922 = vmatpush1.msra.mxu0 %v926
    %1923 = vmatprep.subr.mxu0 %v923
    %1924 = vmatpush1.msra.mxu0 %v922
    %1925 = vmatprep.subr.mxu0 %v919
    %1926 = vmatpush1.msra.mxu0 %v918
    %1927 = vmatprep.subr.mxu0 %v915
    %1928 = vmatpush1.msra.mxu0 %v914
    %1929 = vmatprep.subr.mxu0 %v911
    %1930 = vmatpush1.msra.mxu0 %v910
    %1931 = vmatprep.subr.mxu0 %v907
    %1932 = vmatpush1.msra.mxu0 %v906
    %1933 = vmatprep.subr.mxu0 %v903
    %1934 = vmatpush1.msra.mxu0 %v902
    %1935 = vmatprep.subr.mxu0 %v899
    %1936 = vmatpush1.msra.mxu0 %v898
    %1937 = vmatprep.subr.mxu0 0.0
    %1938 = vmatpush2.msra.mxu0 0.0
    %1939 = vmatprep.subr.mxu0 0.0
    %1940 = vmatpush2.msra.mxu0 0.0
    %1941 = vmatprep.subr.mxu0 0.0
    %1942 = vmatpush2.msra.mxu0 0.0
    %1943 = vmatprep.subr.mxu0 0.0
    %1944 = vmatpush2.msra.mxu0 0.0
    %1945 = vmatprep.subr.mxu0 0.0
    %1946 = vmatpush2.msra.mxu0 0.0
    %1947 = vmatprep.subr.mxu0 0.0
    %1948 = vmatpush2.msra.mxu0 0.0
    %1949 = vmatprep.subr.mxu0 0.0
    %1950 = vmatpush2.msra.mxu0 0.0
    %1951 = vmatprep.subr.mxu0 0.0
    %1952 = vmatpush2.msra.mxu0 0.0
    %1953 = vmatprep.subr.mxu0 0.0
    %1954 = vmatpush2.msra.mxu0 0.0
    %1955 = vmatprep.subr.mxu0 0.0
    %1956 = vmatpush2.msra.mxu0 0.0
    %1957 = vmatprep.subr.mxu0 0.0
    %1958 = vmatpush2.msra.mxu0 0.0
    %1959 = vmatprep.subr.mxu0 0.0
    %1960 = vmatpush2.msra.mxu0 0.0
    %1961 = vmatprep.subr.mxu0 0.0
    %1962 = vmatpush2.msra.mxu0 0.0
    %1963 = vmatprep.subr.mxu0 0.0
    %1964 = vmatpush2.msra.mxu0 0.0
    %1965 = vmatprep.subr.mxu0 0.0
    %1966 = vmatpush2.msra.mxu0 0.0
    %1967 = vmatprep.subr.mxu0 0.0
    %1968 = vmatpush2.msra.mxu0 0.0
    %1969 = vmatprep.mubr.f32.mxu0 0.0
    %1970 = vmatmul.mubr.f32.gmra.mxu0 %v1672
    %v1971 = vpop.f32.mrf.mxu0
    %v1972 = vadd.f32 0.0, %v1971
    %v1973 = vpop.f32.mrf.mxu0
    %v1974 = vadd.f32 0.0, %v1973
    %1975 = vdwg.mxu0
    %v1980 = vrot.slane %v1901, 2
    %v1981 = vrot.slane %v1903, 2
    %v1982 = vrot.slane %v1972, 2
    %v1983 = vrot.slane %v1974, 2
    %v1988 = vadd.f32 %v739, %v1980
    %v1989 = vadd.f32 %v741, %v1981
    %v1990 = vadd.f32 %v822, %v1982
    %v1991 = vadd.f32 %v824, %v1983
    %v1992 = vxor.u32 %v1830, 2147483648
    %v1993 = vmul.f32 %v1992, 1.442695
    %v1994 = vpow.pop %v1993
    %v1995 = vadd.f32 %v1994, 1.0
    %v1996 = vrcp.pop %v1995
    %v1997 = vmul.f32 1.0, %v1996
    %v1998 = vxor.u32 %v1831, 2147483648
    %v1999 = vmul.f32 %v1998, 1.442695
    %v2000 = vpow.pop %v1999
    %v2001 = vadd.f32 %v2000, 1.0
    %v2002 = vrcp.pop %v2001
    %v2003 = vmul.f32 1.0, %v2002
    %v2004 = vtanh.pop %v1832
    %v2005 = vxor.u32 %v1833, 2147483648
    %v2006 = vmul.f32 %v2005, 1.442695
    %v2007 = vpow.pop %v2006
    %v2008 = vadd.f32 %v2007, 1.0
    %v2009 = vrcp.pop %v2008
    %v2010 = vmul.f32 1.0, %v2009
    %v2012 = vrot.slane %v1643, 6
    %v2014 = vmul.f32 %v2003, %v2012
    %v2015 = vmul.f32 %v1997, %v2004
    %v2016 = vadd.f32 %v2014, %v2015
    %v2017 = vtanh.pop %v2016
    %v2018 = vmul.f32 %v2010, %v2017
    %v2019 = vxor.u32 %v1988, 2147483648
    %v2020 = vmul.f32 %v2019, 1.442695
    %v2021 = vpow.pop %v2020
    %v2022 = vadd.f32 %v2021, 1.0
    %v2023 = vrcp.pop %v2022
    %v2024 = vmul.f32 1.0, %v2023
    %v2025 = vxor.u32 %v1989, 2147483648
    %v2026 = vmul.f32 %v2025, 1.442695
    %v2027 = vpow.pop %v2026
    %v2028 = vadd.f32 %v2027, 1.0
    %v2029 = vrcp.pop %v2028
    %v2030 = vmul.f32 1.0, %v2029
    %v2031 = vtanh.pop %v1990
    %v2032 = vxor.u32 %v1991, 2147483648
    %v2033 = vmul.f32 %v2032, 1.442695
    %v2034 = vpow.pop %v2033
    %v2035 = vadd.f32 %v2034, 1.0
    %v2036 = vrcp.pop %v2035
    %v2037 = vmul.f32 1.0, %v2036
    %v2039 = vrot.slane %v1670, 2
    %v2041 = vmul.f32 %v2030, %v2039
    %v2042 = vmul.f32 %v2024, %v2031
    %v2043 = vadd.f32 %v2041, %v2042
    %v2044 = vtanh.pop %v2043
    %v2045 = vmul.f32 %v2037, %v2044
    %v2047 = vrot.slane %v2018, 4
    %2049 = vmatprep.subr.mxu0 %v893
    %2050 = vmatpush1.msra.mxu0 %v892
    %2051 = vmatprep.subr.mxu0 %v889
    %2052 = vmatpush1.msra.mxu0 %v888
    %2053 = vmatprep.subr.mxu0 %v885
    %2054 = vmatpush1.msra.mxu0 %v884
    %2055 = vmatprep.subr.mxu0 %v881
    %2056 = vmatpush1.msra.mxu0 %v880
    %2057 = vmatprep.subr.mxu0 %v877
    %2058 = vmatpush1.msra.mxu0 %v876
    %2059 = vmatprep.subr.mxu0 %v873
    %2060 = vmatpush1.msra.mxu0 %v872
    %2061 = vmatprep.subr.mxu0 %v869
    %2062 = vmatpush1.msra.mxu0 %v868
    %2063 = vmatprep.subr.mxu0 %v865
    %2064 = vmatpush1.msra.mxu0 %v864
    %2065 = vmatprep.subr.mxu0 %v861
    %2066 = vmatpush1.msra.mxu0 %v860
    %2067 = vmatprep.subr.mxu0 %v857
    %2068 = vmatpush1.msra.mxu0 %v856
    %2069 = vmatprep.subr.mxu0 %v853
    %2070 = vmatpush1.msra.mxu0 %v852
    %2071 = vmatprep.subr.mxu0 %v849
    %2072 = vmatpush1.msra.mxu0 %v848
    %2073 = vmatprep.subr.mxu0 %v845
    %2074 = vmatpush1.msra.mxu0 %v844
    %2075 = vmatprep.subr.mxu0 %v841
    %2076 = vmatpush1.msra.mxu0 %v840
    %2077 = vmatprep.subr.mxu0 %v837
    %2078 = vmatpush1.msra.mxu0 %v836
    %2079 = vmatprep.subr.mxu0 %v833
    %2080 = vmatpush1.msra.mxu0 %v832
    %2081 = vmatprep.subr.mxu0 0.0
    %2082 = vmatpush2.msra.mxu0 0.0
    %2083 = vmatprep.subr.mxu0 0.0
    %2084 = vmatpush2.msra.mxu0 0.0
    %2085 = vmatprep.subr.mxu0 0.0
    %2086 = vmatpush2.msra.mxu0 0.0
    %2087 = vmatprep.subr.mxu0 0.0
    %2088 = vmatpush2.msra.mxu0 0.0
    %2089 = vmatprep.subr.mxu0 0.0
    %2090 = vmatpush2.msra.mxu0 0.0
    %2091 = vmatprep.subr.mxu0 0.0
    %2092 = vmatpush2.msra.mxu0 0.0
    %2093 = vmatprep.subr.mxu0 0.0
    %2094 = vmatpush2.msra.mxu0 0.0
    %2095 = vmatprep.subr.mxu0 0.0
    %2096 = vmatpush2.msra.mxu0 0.0
    %2097 = vmatprep.subr.mxu0 0.0
    %2098 = vmatpush2.msra.mxu0 0.0
    %2099 = vmatprep.subr.mxu0 0.0
    %2100 = vmatpush2.msra.mxu0 0.0
    %2101 = vmatprep.subr.mxu0 0.0
    %2102 = vmatpush2.msra.mxu0 0.0
    %2103 = vmatprep.subr.mxu0 0.0
    %2104 = vmatpush2.msra.mxu0 0.0
    %2105 = vmatprep.subr.mxu0 0.0
    %2106 = vmatpush2.msra.mxu0 0.0
    %2107 = vmatprep.subr.mxu0 0.0
    %2108 = vmatpush2.msra.mxu0 0.0
    %2109 = vmatprep.subr.mxu0 0.0
    %2110 = vmatpush2.msra.mxu0 0.0
    %2111 = vmatprep.subr.mxu0 0.0
    %2112 = vmatpush2.msra.mxu0 0.0
    %2113 = vmatprep.mubr.f32.mxu0 0.0
    %2114 = vmatmul.mubr.f32.gmra.mxu0 %v2047
    %v2115 = vpop.f32.mrf.mxu0
    %v2116 = vadd.f32 0.0, %v2115
    %v2117 = vpop.f32.mrf.mxu0
    %v2118 = vadd.f32 0.0, %v2117
    %2119 = vdwg.mxu0
    %2120 = vmatprep.subr.mxu0 %v895
    %2121 = vmatpush1.msra.mxu0 %v894
    %2122 = vmatprep.subr.mxu0 %v891
    %2123 = vmatpush1.msra.mxu0 %v890
    %2124 = vmatprep.subr.mxu0 %v887
    %2125 = vmatpush1.msra.mxu0 %v886
    %2126 = vmatprep.subr.mxu0 %v883
    %2127 = vmatpush1.msra.mxu0 %v882
    %2128 = vmatprep.subr.mxu0 %v879
    %2129 = vmatpush1.msra.mxu0 %v878
    %2130 = vmatprep.subr.mxu0 %v875
    %2131 = vmatpush1.msra.mxu0 %v874
    %2132 = vmatprep.subr.mxu0 %v871
    %2133 = vmatpush1.msra.mxu0 %v870
    %2134 = vmatprep.subr.mxu0 %v867
    %2135 = vmatpush1.msra.mxu0 %v866
    %2136 = vmatprep.subr.mxu0 %v863
    %2137 = vmatpush1.msra.mxu0 %v862
    %2138 = vmatprep.subr.mxu0 %v859
    %2139 = vmatpush1.msra.mxu0 %v858
    %2140 = vmatprep.subr.mxu0 %v855
    %2141 = vmatpush1.msra.mxu0 %v854
    %2142 = vmatprep.subr.mxu0 %v851
    %2143 = vmatpush1.msra.mxu0 %v850
    %2144 = vmatprep.subr.mxu0 %v847
    %2145 = vmatpush1.msra.mxu0 %v846
    %2146 = vmatprep.subr.mxu0 %v843
    %2147 = vmatpush1.msra.mxu0 %v842
    %2148 = vmatprep.subr.mxu0 %v839
    %2149 = vmatpush1.msra.mxu0 %v838
    %2150 = vmatprep.subr.mxu0 %v835
    %2151 = vmatpush1.msra.mxu0 %v834
    %2152 = vmatprep.subr.mxu0 0.0
    %2153 = vmatpush2.msra.mxu0 0.0
    %2154 = vmatprep.subr.mxu0 0.0
    %2155 = vmatpush2.msra.mxu0 0.0
    %2156 = vmatprep.subr.mxu0 0.0
    %2157 = vmatpush2.msra.mxu0 0.0
    %2158 = vmatprep.subr.mxu0 0.0
    %2159 = vmatpush2.msra.mxu0 0.0
    %2160 = vmatprep.subr.mxu0 0.0
    %2161 = vmatpush2.msra.mxu0 0.0
    %2162 = vmatprep.subr.mxu0 0.0
    %2163 = vmatpush2.msra.mxu0 0.0
    %2164 = vmatprep.subr.mxu0 0.0
    %2165 = vmatpush2.msra.mxu0 0.0
    %2166 = vmatprep.subr.mxu0 0.0
    %2167 = vmatpush2.msra.mxu0 0.0
    %2168 = vmatprep.subr.mxu0 0.0
    %2169 = vmatpush2.msra.mxu0 0.0
    %2170 = vmatprep.subr.mxu0 0.0
    %2171 = vmatpush2.msra.mxu0 0.0
    %2172 = vmatprep.subr.mxu0 0.0
    %2173 = vmatpush2.msra.mxu0 0.0
    %2174 = vmatprep.subr.mxu0 0.0
    %2175 = vmatpush2.msra.mxu0 0.0
    %2176 = vmatprep.subr.mxu0 0.0
    %2177 = vmatpush2.msra.mxu0 0.0
    %2178 = vmatprep.subr.mxu0 0.0
    %2179 = vmatpush2.msra.mxu0 0.0
    %2180 = vmatprep.subr.mxu0 0.0
    %2181 = vmatpush2.msra.mxu0 0.0
    %2182 = vmatprep.subr.mxu0 0.0
    %2183 = vmatpush2.msra.mxu0 0.0
    %2184 = vmatprep.mubr.f32.mxu0 0.0
    %2185 = vmatmul.mubr.f32.gmra.mxu0 %v2047
    %v2186 = vpop.f32.mrf.mxu0
    %v2187 = vadd.f32 0.0, %v2186
    %v2188 = vpop.f32.mrf.mxu0
    %v2189 = vadd.f32 0.0, %v2188
    %2190 = vdwg.mxu0
    %v2195 = vrot.slane %v2116, 2
    %v2196 = vrot.slane %v2118, 2
    %v2197 = vrot.slane %v2187, 2
    %v2198 = vrot.slane %v2189, 2
    %v2203 = vadd.f32 %v567, %v2195
    %v2204 = vadd.f32 %v569, %v2196
    %v2205 = vadd.f32 %v650, %v2197
    %v2206 = vadd.f32 %v652, %v2198
    %v2208 = vrot.slane %v2045, 6
    %2210 = vmatprep.subr.mxu0 %v957
    %2211 = vmatpush1.msra.mxu0 %v956
    %2212 = vmatprep.subr.mxu0 %v953
    %2213 = vmatpush1.msra.mxu0 %v952
    %2214 = vmatprep.subr.mxu0 %v949
    %2215 = vmatpush1.msra.mxu0 %v948
    %2216 = vmatprep.subr.mxu0 %v945
    %2217 = vmatpush1.msra.mxu0 %v944
    %2218 = vmatprep.subr.mxu0 %v941
    %2219 = vmatpush1.msra.mxu0 %v940
    %2220 = vmatprep.subr.mxu0 %v937
    %2221 = vmatpush1.msra.mxu0 %v936
    %2222 = vmatprep.subr.mxu0 %v933
    %2223 = vmatpush1.msra.mxu0 %v932
    %2224 = vmatprep.subr.mxu0 %v929
    %2225 = vmatpush1.msra.mxu0 %v928
    %2226 = vmatprep.subr.mxu0 %v925
    %2227 = vmatpush1.msra.mxu0 %v924
    %2228 = vmatprep.subr.mxu0 %v921
    %2229 = vmatpush1.msra.mxu0 %v920
    %2230 = vmatprep.subr.mxu0 %v917
    %2231 = vmatpush1.msra.mxu0 %v916
    %2232 = vmatprep.subr.mxu0 %v913
    %2233 = vmatpush1.msra.mxu0 %v912
    %2234 = vmatprep.subr.mxu0 %v909
    %2235 = vmatpush1.msra.mxu0 %v908
    %2236 = vmatprep.subr.mxu0 %v905
    %2237 = vmatpush1.msra.mxu0 %v904
    %2238 = vmatprep.subr.mxu0 %v901
    %2239 = vmatpush1.msra.mxu0 %v900
    %2240 = vmatprep.subr.mxu0 %v897
    %2241 = vmatpush1.msra.mxu0 %v896
    %2242 = vmatprep.subr.mxu0 0.0
    %2243 = vmatpush2.msra.mxu0 0.0
    %2244 = vmatprep.subr.mxu0 0.0
    %2245 = vmatpush2.msra.mxu0 0.0
    %2246 = vmatprep.subr.mxu0 0.0
    %2247 = vmatpush2.msra.mxu0 0.0
    %2248 = vmatprep.subr.mxu0 0.0
    %2249 = vmatpush2.msra.mxu0 0.0
    %2250 = vmatprep.subr.mxu0 0.0
    %2251 = vmatpush2.msra.mxu0 0.0
    %2252 = vmatprep.subr.mxu0 0.0
    %2253 = vmatpush2.msra.mxu0 0.0
    %2254 = vmatprep.subr.mxu0 0.0
    %2255 = vmatpush2.msra.mxu0 0.0
    %2256 = vmatprep.subr.mxu0 0.0
    %2257 = vmatpush2.msra.mxu0 0.0
    %2258 = vmatprep.subr.mxu0 0.0
    %2259 = vmatpush2.msra.mxu0 0.0
    %2260 = vmatprep.subr.mxu0 0.0
    %2261 = vmatpush2.msra.mxu0 0.0
    %2262 = vmatprep.subr.mxu0 0.0
    %2263 = vmatpush2.msra.mxu0 0.0
    %2264 = vmatprep.subr.mxu0 0.0
    %2265 = vmatpush2.msra.mxu0 0.0
    %2266 = vmatprep.subr.mxu0 0.0
    %2267 = vmatpush2.msra.mxu0 0.0
    %2268 = vmatprep.subr.mxu0 0.0
    %2269 = vmatpush2.msra.mxu0 0.0
    %2270 = vmatprep.subr.mxu0 0.0
    %2271 = vmatpush2.msra.mxu0 0.0
    %2272 = vmatprep.subr.mxu0 0.0
    %2273 = vmatpush2.msra.mxu0 0.0
    %2274 = vmatprep.mubr.f32.mxu0 0.0
    %2275 = vmatmul.mubr.f32.gmra.mxu0 %v2208
    %v2276 = vpop.f32.mrf.mxu0
    %v2277 = vadd.f32 0.0, %v2276
    %v2278 = vpop.f32.mrf.mxu0
    %v2279 = vadd.f32 0.0, %v2278
    %2280 = vdwg.mxu0
    %2281 = vmatprep.subr.mxu0 %v959
    %2282 = vmatpush1.msra.mxu0 %v958
    %2283 = vmatprep.subr.mxu0 %v955
    %2284 = vmatpush1.msra.mxu0 %v954
    %2285 = vmatprep.subr.mxu0 %v951
    %2286 = vmatpush1.msra.mxu0 %v950
    %2287 = vmatprep.subr.mxu0 %v947
    %2288 = vmatpush1.msra.mxu0 %v946
    %2289 = vmatprep.subr.mxu0 %v943
    %2290 = vmatpush1.msra.mxu0 %v942
    %2291 = vmatprep.subr.mxu0 %v939
    %2292 = vmatpush1.msra.mxu0 %v938
    %2293 = vmatprep.subr.mxu0 %v935
    %2294 = vmatpush1.msra.mxu0 %v934
    %2295 = vmatprep.subr.mxu0 %v931
    %2296 = vmatpush1.msra.mxu0 %v930
    %2297 = vmatprep.subr.mxu0 %v927
    %2298 = vmatpush1.msra.mxu0 %v926
    %2299 = vmatprep.subr.mxu0 %v923
    %2300 = vmatpush1.msra.mxu0 %v922
    %2301 = vmatprep.subr.mxu0 %v919
    %2302 = vmatpush1.msra.mxu0 %v918
    %2303 = vmatprep.subr.mxu0 %v915
    %2304 = vmatpush1.msra.mxu0 %v914
    %2305 = vmatprep.subr.mxu0 %v911
    %2306 = vmatpush1.msra.mxu0 %v910
    %2307 = vmatprep.subr.mxu0 %v907
    %2308 = vmatpush1.msra.mxu0 %v906
    %2309 = vmatprep.subr.mxu0 %v903
    %2310 = vmatpush1.msra.mxu0 %v902
    %2311 = vmatprep.subr.mxu0 %v899
    %2312 = vmatpush1.msra.mxu0 %v898
    %2313 = vmatprep.subr.mxu0 0.0
    %2314 = vmatpush2.msra.mxu0 0.0
    %2315 = vmatprep.subr.mxu0 0.0
    %2316 = vmatpush2.msra.mxu0 0.0
    %2317 = vmatprep.subr.mxu0 0.0
    %2318 = vmatpush2.msra.mxu0 0.0
    %2319 = vmatprep.subr.mxu0 0.0
    %2320 = vmatpush2.msra.mxu0 0.0
    %2321 = vmatprep.subr.mxu0 0.0
    %2322 = vmatpush2.msra.mxu0 0.0
    %2323 = vmatprep.subr.mxu0 0.0
    %2324 = vmatpush2.msra.mxu0 0.0
    %2325 = vmatprep.subr.mxu0 0.0
    %2326 = vmatpush2.msra.mxu0 0.0
    %2327 = vmatprep.subr.mxu0 0.0
    %2328 = vmatpush2.msra.mxu0 0.0
    %2329 = vmatprep.subr.mxu0 0.0
    %2330 = vmatpush2.msra.mxu0 0.0
    %2331 = vmatprep.subr.mxu0 0.0
    %2332 = vmatpush2.msra.mxu0 0.0
    %2333 = vmatprep.subr.mxu0 0.0
    %2334 = vmatpush2.msra.mxu0 0.0
    %2335 = vmatprep.subr.mxu0 0.0
    %2336 = vmatpush2.msra.mxu0 0.0
    %2337 = vmatprep.subr.mxu0 0.0
    %2338 = vmatpush2.msra.mxu0 0.0
    %2339 = vmatprep.subr.mxu0 0.0
    %2340 = vmatpush2.msra.mxu0 0.0
    %2341 = vmatprep.subr.mxu0 0.0
    %2342 = vmatpush2.msra.mxu0 0.0
    %2343 = vmatprep.subr.mxu0 0.0
    %2344 = vmatpush2.msra.mxu0 0.0
    %2345 = vmatprep.mubr.f32.mxu0 0.0
    %2346 = vmatmul.mubr.f32.gmra.mxu0 %v2208
    %v2347 = vpop.f32.mrf.mxu0
    %v2348 = vadd.f32 0.0, %v2347
    %v2349 = vpop.f32.mrf.mxu0
    %v2350 = vadd.f32 0.0, %v2349
    %2351 = vdwg.mxu0
    %v2356 = vrot.slane %v2277, 4
    %v2357 = vrot.slane %v2279, 4
    %v2358 = vrot.slane %v2348, 4
    %v2359 = vrot.slane %v2350, 4
    %v2364 = vadd.f32 %v739, %v2356
    %v2365 = vadd.f32 %v741, %v2357
    %v2366 = vadd.f32 %v822, %v2358
    %v2367 = vadd.f32 %v824, %v2359
    %v2368 = vxor.u32 %v2203, 2147483648
    %v2369 = vmul.f32 %v2368, 1.442695
    %v2370 = vpow.pop %v2369
    %v2371 = vadd.f32 %v2370, 1.0
    %v2372 = vrcp.pop %v2371
    %v2373 = vmul.f32 1.0, %v2372
    %v2374 = vxor.u32 %v2204, 2147483648
    %v2375 = vmul.f32 %v2374, 1.442695
    %v2376 = vpow.pop %v2375
    %v2377 = vadd.f32 %v2376, 1.0
    %v2378 = vrcp.pop %v2377
    %v2379 = vmul.f32 1.0, %v2378
    %v2380 = vtanh.pop %v2205
    %v2381 = vxor.u32 %v2206, 2147483648
    %v2382 = vmul.f32 %v2381, 1.442695
    %v2383 = vpow.pop %v2382
    %v2384 = vadd.f32 %v2383, 1.0
    %v2385 = vrcp.pop %v2384
    %v2386 = vmul.f32 1.0, %v2385
    %v2388 = vrot.slane %v2016, 6
    %v2390 = vmul.f32 %v2379, %v2388
    %v2391 = vmul.f32 %v2373, %v2380
    %v2392 = vadd.f32 %v2390, %v2391
    %v2393 = vtanh.pop %v2392
    %v2394 = vmul.f32 %v2386, %v2393
    %v2395 = vxor.u32 %v2364, 2147483648
    %v2396 = vmul.f32 %v2395, 1.442695
    %v2397 = vpow.pop %v2396
    %v2398 = vadd.f32 %v2397, 1.0
    %v2399 = vrcp.pop %v2398
    %v2400 = vmul.f32 1.0, %v2399
    %v2401 = vxor.u32 %v2365, 2147483648
    %v2402 = vmul.f32 %v2401, 1.442695
    %v2403 = vpow.pop %v2402
    %v2404 = vadd.f32 %v2403, 1.0
    %v2405 = vrcp.pop %v2404
    %v2406 = vmul.f32 1.0, %v2405
    %v2407 = vtanh.pop %v2366
    %v2408 = vxor.u32 %v2367, 2147483648
    %v2409 = vmul.f32 %v2408, 1.442695
    %v2410 = vpow.pop %v2409
    %v2411 = vadd.f32 %v2410, 1.0
    %v2412 = vrcp.pop %v2411
    %v2413 = vmul.f32 1.0, %v2412
    %v2415 = vrot.slane %v2043, 2
    %v2417 = vmul.f32 %v2406, %v2415
    %v2418 = vmul.f32 %v2400, %v2407
    %v2419 = vadd.f32 %v2417, %v2418
    %v2420 = vtanh.pop %v2419
    %v2421 = vmul.f32 %v2413, %v2420
    %v2423 = vrot.slane %v2394, 6
    %2425 = vmatprep.subr.mxu0 %v893
    %2426 = vmatpush1.msra.mxu0 %v892
    %2427 = vmatprep.subr.mxu0 %v889
    %2428 = vmatpush1.msra.mxu0 %v888
    %2429 = vmatprep.subr.mxu0 %v885
    %2430 = vmatpush1.msra.mxu0 %v884
    %2431 = vmatprep.subr.mxu0 %v881
    %2432 = vmatpush1.msra.mxu0 %v880
    %2433 = vmatprep.subr.mxu0 %v877
    %2434 = vmatpush1.msra.mxu0 %v876
    %2435 = vmatprep.subr.mxu0 %v873
    %2436 = vmatpush1.msra.mxu0 %v872
    %2437 = vmatprep.subr.mxu0 %v869
    %2438 = vmatpush1.msra.mxu0 %v868
    %2439 = vmatprep.subr.mxu0 %v865
    %2440 = vmatpush1.msra.mxu0 %v864
    %2441 = vmatprep.subr.mxu0 %v861
    %2442 = vmatpush1.msra.mxu0 %v860
    %2443 = vmatprep.subr.mxu0 %v857
    %2444 = vmatpush1.msra.mxu0 %v856
    %2445 = vmatprep.subr.mxu0 %v853
    %2446 = vmatpush1.msra.mxu0 %v852
    %2447 = vmatprep.subr.mxu0 %v849
    %2448 = vmatpush1.msra.mxu0 %v848
    %2449 = vmatprep.subr.mxu0 %v845
    %2450 = vmatpush1.msra.mxu0 %v844
    %2451 = vmatprep.subr.mxu0 %v841
    %2452 = vmatpush1.msra.mxu0 %v840
    %2453 = vmatprep.subr.mxu0 %v837
    %2454 = vmatpush1.msra.mxu0 %v836
    %2455 = vmatprep.subr.mxu0 %v833
    %2456 = vmatpush1.msra.mxu0 %v832
    %2457 = vmatprep.subr.mxu0 0.0
    %2458 = vmatpush2.msra.mxu0 0.0
    %2459 = vmatprep.subr.mxu0 0.0
    %2460 = vmatpush2.msra.mxu0 0.0
    %2461 = vmatprep.subr.mxu0 0.0
    %2462 = vmatpush2.msra.mxu0 0.0
    %2463 = vmatprep.subr.mxu0 0.0
    %2464 = vmatpush2.msra.mxu0 0.0
    %2465 = vmatprep.subr.mxu0 0.0
    %2466 = vmatpush2.msra.mxu0 0.0
    %2467 = vmatprep.subr.mxu0 0.0
    %2468 = vmatpush2.msra.mxu0 0.0
    %2469 = vmatprep.subr.mxu0 0.0
    %2470 = vmatpush2.msra.mxu0 0.0
    %2471 = vmatprep.subr.mxu0 0.0
    %2472 = vmatpush2.msra.mxu0 0.0
    %2473 = vmatprep.subr.mxu0 0.0
    %2474 = vmatpush2.msra.mxu0 0.0
    %2475 = vmatprep.subr.mxu0 0.0
    %2476 = vmatpush2.msra.mxu0 0.0
    %2477 = vmatprep.subr.mxu0 0.0
    %2478 = vmatpush2.msra.mxu0 0.0
    %2479 = vmatprep.subr.mxu0 0.0
    %2480 = vmatpush2.msra.mxu0 0.0
    %2481 = vmatprep.subr.mxu0 0.0
    %2482 = vmatpush2.msra.mxu0 0.0
    %2483 = vmatprep.subr.mxu0 0.0
    %2484 = vmatpush2.msra.mxu0 0.0
    %2485 = vmatprep.subr.mxu0 0.0
    %2486 = vmatpush2.msra.mxu0 0.0
    %2487 = vmatprep.subr.mxu0 0.0
    %2488 = vmatpush2.msra.mxu0 0.0
    %2489 = vmatprep.mubr.f32.mxu0 0.0
    %2490 = vmatmul.mubr.f32.gmra.mxu0 %v2423
    %v2491 = vpop.f32.mrf.mxu0
    %v2492 = vadd.f32 0.0, %v2491
    %v2493 = vpop.f32.mrf.mxu0
    %v2494 = vadd.f32 0.0, %v2493
    %2495 = vdwg.mxu0
    %2496 = vmatprep.subr.mxu0 %v895
    %2497 = vmatpush1.msra.mxu0 %v894
    %2498 = vmatprep.subr.mxu0 %v891
    %2499 = vmatpush1.msra.mxu0 %v890
    %2500 = vmatprep.subr.mxu0 %v887
    %2501 = vmatpush1.msra.mxu0 %v886
    %2502 = vmatprep.subr.mxu0 %v883
    %2503 = vmatpush1.msra.mxu0 %v882
    %2504 = vmatprep.subr.mxu0 %v879
    %2505 = vmatpush1.msra.mxu0 %v878
    %2506 = vmatprep.subr.mxu0 %v875
    %2507 = vmatpush1.msra.mxu0 %v874
    %2508 = vmatprep.subr.mxu0 %v871
    %2509 = vmatpush1.msra.mxu0 %v870
    %2510 = vmatprep.subr.mxu0 %v867
    %2511 = vmatpush1.msra.mxu0 %v866
    %2512 = vmatprep.subr.mxu0 %v863
    %2513 = vmatpush1.msra.mxu0 %v862
    %2514 = vmatprep.subr.mxu0 %v859
    %2515 = vmatpush1.msra.mxu0 %v858
    %2516 = vmatprep.subr.mxu0 %v855
    %2517 = vmatpush1.msra.mxu0 %v854
    %2518 = vmatprep.subr.mxu0 %v851
    %2519 = vmatpush1.msra.mxu0 %v850
    %2520 = vmatprep.subr.mxu0 %v847
    %2521 = vmatpush1.msra.mxu0 %v846
    %2522 = vmatprep.subr.mxu0 %v843
    %2523 = vmatpush1.msra.mxu0 %v842
    %2524 = vmatprep.subr.mxu0 %v839
    %2525 = vmatpush1.msra.mxu0 %v838
    %2526 = vmatprep.subr.mxu0 %v835
    %2527 = vmatpush1.msra.mxu0 %v834
    %2528 = vmatprep.subr.mxu0 0.0
    %2529 = vmatpush2.msra.mxu0 0.0
    %2530 = vmatprep.subr.mxu0 0.0
    %2531 = vmatpush2.msra.mxu0 0.0
    %2532 = vmatprep.subr.mxu0 0.0
    %2533 = vmatpush2.msra.mxu0 0.0
    %2534 = vmatprep.subr.mxu0 0.0
    %2535 = vmatpush2.msra.mxu0 0.0
    %2536 = vmatprep.subr.mxu0 0.0
    %2537 = vmatpush2.msra.mxu0 0.0
    %2538 = vmatprep.subr.mxu0 0.0
    %2539 = vmatpush2.msra.mxu0 0.0
    %2540 = vmatprep.subr.mxu0 0.0
    %2541 = vmatpush2.msra.mxu0 0.0
    %2542 = vmatprep.subr.mxu0 0.0
    %2543 = vmatpush2.msra.mxu0 0.0
    %2544 = vmatprep.subr.mxu0 0.0
    %2545 = vmatpush2.msra.mxu0 0.0
    %2546 = vmatprep.subr.mxu0 0.0
    %2547 = vmatpush2.msra.mxu0 0.0
    %2548 = vmatprep.subr.mxu0 0.0
    %2549 = vmatpush2.msra.mxu0 0.0
    %2550 = vmatprep.subr.mxu0 0.0
    %2551 = vmatpush2.msra.mxu0 0.0
    %2552 = vmatprep.subr.mxu0 0.0
    %2553 = vmatpush2.msra.mxu0 0.0
    %2554 = vmatprep.subr.mxu0 0.0
    %2555 = vmatpush2.msra.mxu0 0.0
    %2556 = vmatprep.subr.mxu0 0.0
    %2557 = vmatpush2.msra.mxu0 0.0
    %2558 = vmatprep.subr.mxu0 0.0
    %2559 = vmatpush2.msra.mxu0 0.0
    %2560 = vmatprep.mubr.f32.mxu0 0.0
    %2561 = vmatmul.mubr.f32.gmra.mxu0 %v2423
    %v2562 = vpop.f32.mrf.mxu0
    %v2563 = vadd.f32 0.0, %v2562
    %v2564 = vpop.f32.mrf.mxu0
    %v2565 = vadd.f32 0.0, %v2564
    %2566 = vdwg.mxu0
    %v2567 = vadd.f32 %v573, %v2492
    %v2568 = vadd.f32 %v575, %v2494
    %v2569 = vadd.f32 %v656, %v2563
    %v2570 = vadd.f32 %v658, %v2565
    %v2572 = vrot.slane %v2421, 4
    %2574 = vmatprep.subr.mxu0 %v957
    %2575 = vmatpush1.msra.mxu0 %v956
    %2576 = vmatprep.subr.mxu0 %v953
    %2577 = vmatpush1.msra.mxu0 %v952
    %2578 = vmatprep.subr.mxu0 %v949
    %2579 = vmatpush1.msra.mxu0 %v948
    %2580 = vmatprep.subr.mxu0 %v945
    %2581 = vmatpush1.msra.mxu0 %v944
    %2582 = vmatprep.subr.mxu0 %v941
    %2583 = vmatpush1.msra.mxu0 %v940
    %2584 = vmatprep.subr.mxu0 %v937
    %2585 = vmatpush1.msra.mxu0 %v936
    %2586 = vmatprep.subr.mxu0 %v933
    %2587 = vmatpush1.msra.mxu0 %v932
    %2588 = vmatprep.subr.mxu0 %v929
    %2589 = vmatpush1.msra.mxu0 %v928
    %2590 = vmatprep.subr.mxu0 %v925
    %2591 = vmatpush1.msra.mxu0 %v924
    %2592 = vmatprep.subr.mxu0 %v921
    %2593 = vmatpush1.msra.mxu0 %v920
    %2594 = vmatprep.subr.mxu0 %v917
    %2595 = vmatpush1.msra.mxu0 %v916
    %2596 = vmatprep.subr.mxu0 %v913
    %2597 = vmatpush1.msra.mxu0 %v912
    %2598 = vmatprep.subr.mxu0 %v909
    %2599 = vmatpush1.msra.mxu0 %v908
    %2600 = vmatprep.subr.mxu0 %v905
    %2601 = vmatpush1.msra.mxu0 %v904
    %2602 = vmatprep.subr.mxu0 %v901
    %2603 = vmatpush1.msra.mxu0 %v900
    %2604 = vmatprep.subr.mxu0 %v897
    %2605 = vmatpush1.msra.mxu0 %v896
    %2606 = vmatprep.subr.mxu0 0.0
    %2607 = vmatpush2.msra.mxu0 0.0
    %2608 = vmatprep.subr.mxu0 0.0
    %2609 = vmatpush2.msra.mxu0 0.0
    %2610 = vmatprep.subr.mxu0 0.0
    %2611 = vmatpush2.msra.mxu0 0.0
    %2612 = vmatprep.subr.mxu0 0.0
    %2613 = vmatpush2.msra.mxu0 0.0
    %2614 = vmatprep.subr.mxu0 0.0
    %2615 = vmatpush2.msra.mxu0 0.0
    %2616 = vmatprep.subr.mxu0 0.0
    %2617 = vmatpush2.msra.mxu0 0.0
    %2618 = vmatprep.subr.mxu0 0.0
    %2619 = vmatpush2.msra.mxu0 0.0
    %2620 = vmatprep.subr.mxu0 0.0
    %2621 = vmatpush2.msra.mxu0 0.0
    %2622 = vmatprep.subr.mxu0 0.0
    %2623 = vmatpush2.msra.mxu0 0.0
    %2624 = vmatprep.subr.mxu0 0.0
    %2625 = vmatpush2.msra.mxu0 0.0
    %2626 = vmatprep.subr.mxu0 0.0
    %2627 = vmatpush2.msra.mxu0 0.0
    %2628 = vmatprep.subr.mxu0 0.0
    %2629 = vmatpush2.msra.mxu0 0.0
    %2630 = vmatprep.subr.mxu0 0.0
    %2631 = vmatpush2.msra.mxu0 0.0
    %2632 = vmatprep.subr.mxu0 0.0
    %2633 = vmatpush2.msra.mxu0 0.0
    %2634 = vmatprep.subr.mxu0 0.0
    %2635 = vmatpush2.msra.mxu0 0.0
    %2636 = vmatprep.subr.mxu0 0.0
    %2637 = vmatpush2.msra.mxu0 0.0
    %2638 = vmatprep.mubr.f32.mxu0 0.0
    %2639 = vmatmul.mubr.f32.gmra.mxu0 %v2572
    %v2640 = vpop.f32.mrf.mxu0
    %v2641 = vadd.f32 0.0, %v2640
    %v2642 = vpop.f32.mrf.mxu0
    %v2643 = vadd.f32 0.0, %v2642
    %2644 = vdwg.mxu0
    %2645 = vmatprep.subr.mxu0 %v959
    %2646 = vmatpush1.msra.mxu0 %v958
    %2647 = vmatprep.subr.mxu0 %v955
    %2648 = vmatpush1.msra.mxu0 %v954
    %2649 = vmatprep.subr.mxu0 %v951
    %2650 = vmatpush1.msra.mxu0 %v950
    %2651 = vmatprep.subr.mxu0 %v947
    %2652 = vmatpush1.msra.mxu0 %v946
    %2653 = vmatprep.subr.mxu0 %v943
    %2654 = vmatpush1.msra.mxu0 %v942
    %2655 = vmatprep.subr.mxu0 %v939
    %2656 = vmatpush1.msra.mxu0 %v938
    %2657 = vmatprep.subr.mxu0 %v935
    %2658 = vmatpush1.msra.mxu0 %v934
    %2659 = vmatprep.subr.mxu0 %v931
    %2660 = vmatpush1.msra.mxu0 %v930
    %2661 = vmatprep.subr.mxu0 %v927
    %2662 = vmatpush1.msra.mxu0 %v926
    %2663 = vmatprep.subr.mxu0 %v923
    %2664 = vmatpush1.msra.mxu0 %v922
    %2665 = vmatprep.subr.mxu0 %v919
    %2666 = vmatpush1.msra.mxu0 %v918
    %2667 = vmatprep.subr.mxu0 %v915
    %2668 = vmatpush1.msra.mxu0 %v914
    %2669 = vmatprep.subr.mxu0 %v911
    %2670 = vmatpush1.msra.mxu0 %v910
    %2671 = vmatprep.subr.mxu0 %v907
    %2672 = vmatpush1.msra.mxu0 %v906
    %2673 = vmatprep.subr.mxu0 %v903
    %2674 = vmatpush1.msra.mxu0 %v902
    %2675 = vmatprep.subr.mxu0 %v899
    %2676 = vmatpush1.msra.mxu0 %v898
    %2677 = vmatprep.subr.mxu0 0.0
    %2678 = vmatpush2.msra.mxu0 0.0
    %2679 = vmatprep.subr.mxu0 0.0
    %2680 = vmatpush2.msra.mxu0 0.0
    %2681 = vmatprep.subr.mxu0 0.0
    %2682 = vmatpush2.msra.mxu0 0.0
    %2683 = vmatprep.subr.mxu0 0.0
    %2684 = vmatpush2.msra.mxu0 0.0
    %2685 = vmatprep.subr.mxu0 0.0
    %2686 = vmatpush2.msra.mxu0 0.0
    %2687 = vmatprep.subr.mxu0 0.0
    %2688 = vmatpush2.msra.mxu0 0.0
    %2689 = vmatprep.subr.mxu0 0.0
    %2690 = vmatpush2.msra.mxu0 0.0
    %2691 = vmatprep.subr.mxu0 0.0
    %2692 = vmatpush2.msra.mxu0 0.0
    %2693 = vmatprep.subr.mxu0 0.0
    %2694 = vmatpush2.msra.mxu0 0.0
    %2695 = vmatprep.subr.mxu0 0.0
    %2696 = vmatpush2.msra.mxu0 0.0
    %2697 = vmatprep.subr.mxu0 0.0
    %2698 = vmatpush2.msra.mxu0 0.0
    %2699 = vmatprep.subr.mxu0 0.0
    %2700 = vmatpush2.msra.mxu0 0.0
    %2701 = vmatprep.subr.mxu0 0.0
    %2702 = vmatpush2.msra.mxu0 0.0
    %2703 = vmatprep.subr.mxu0 0.0
    %2704 = vmatpush2.msra.mxu0 0.0
    %2705 = vmatprep.subr.mxu0 0.0
    %2706 = vmatpush2.msra.mxu0 0.0
    %2707 = vmatprep.subr.mxu0 0.0
    %2708 = vmatpush2.msra.mxu0 0.0
    %2709 = vmatprep.mubr.f32.mxu0 0.0
    %2710 = vmatmul.mubr.f32.gmra.mxu0 %v2572
    %v2711 = vpop.f32.mrf.mxu0
    %v2712 = vadd.f32 0.0, %v2711
    %v2713 = vpop.f32.mrf.mxu0
    %v2714 = vadd.f32 0.0, %v2713
    %2715 = vdwg.mxu0
    %v2720 = vrot.slane %v2641, 6
    %v2721 = vrot.slane %v2643, 6
    %v2722 = vrot.slane %v2712, 6
    %v2723 = vrot.slane %v2714, 6
    %v2728 = vadd.f32 %v739, %v2720
    %v2729 = vadd.f32 %v741, %v2721
    %v2730 = vadd.f32 %v822, %v2722
    %v2731 = vadd.f32 %v824, %v2723
    %v2732 = vxor.u32 %v2567, 2147483648
    %v2733 = vmul.f32 %v2732, 1.442695
    %v2734 = vpow.pop %v2733
    %v2735 = vadd.f32 %v2734, 1.0
    %v2736 = vrcp.pop %v2735
    %v2737 = vmul.f32 1.0, %v2736
    %v2738 = vxor.u32 %v2568, 2147483648
    %v2739 = vmul.f32 %v2738, 1.442695
    %v2740 = vpow.pop %v2739
    %v2741 = vadd.f32 %v2740, 1.0
    %v2742 = vrcp.pop %v2741
    %v2743 = vmul.f32 1.0, %v2742
    %v2744 = vtanh.pop %v2569
    %v2745 = vxor.u32 %v2570, 2147483648
    %v2746 = vmul.f32 %v2745, 1.442695
    %v2747 = vpow.pop %v2746
    %v2748 = vadd.f32 %v2747, 1.0
    %v2749 = vrcp.pop %v2748
    %v2750 = vmul.f32 1.0, %v2749
    %v2752 = vrot.slane %v2392, 6
    %v2754 = vmul.f32 %v2743, %v2752
    %v2755 = vmul.f32 %v2737, %v2744
    %v2756 = vadd.f32 %v2754, %v2755
    %v2757 = vtanh.pop %v2756
    %v2758 = vmul.f32 %v2750, %v2757
    %v2759 = vxor.u32 %v2728, 2147483648
    %v2760 = vmul.f32 %v2759, 1.442695
    %v2761 = vpow.pop %v2760
    %v2762 = vadd.f32 %v2761, 1.0
    %v2763 = vrcp.pop %v2762
    %v2764 = vmul.f32 1.0, %v2763
    %v2765 = vxor.u32 %v2729, 2147483648
    %v2766 = vmul.f32 %v2765, 1.442695
    %v2767 = vpow.pop %v2766
    %v2768 = vadd.f32 %v2767, 1.0
    %v2769 = vrcp.pop %v2768
    %v2770 = vmul.f32 1.0, %v2769
    %v2771 = vtanh.pop %v2730
    %v2772 = vxor.u32 %v2731, 2147483648
    %v2773 = vmul.f32 %v2772, 1.442695
    %v2774 = vpow.pop %v2773
    %v2775 = vadd.f32 %v2774, 1.0
    %v2776 = vrcp.pop %v2775
    %v2777 = vmul.f32 1.0, %v2776
    %v2779 = vrot.slane %v2419, 2
    %v2781 = vmul.f32 %v2770, %v2779
    %v2782 = vmul.f32 %v2764, %v2771
    %v2783 = vadd.f32 %v2781, %v2782
    %v2784 = vtanh.pop %v2783
    %v2785 = vmul.f32 %v2777, %v2784
    %2786 = vmatprep.subr.mxu0 %v893
    %2787 = vmatpush1.msra.mxu0 %v892
    %2788 = vmatprep.subr.mxu0 %v889
    %2789 = vmatpush1.msra.mxu0 %v888
    %2790 = vmatprep.subr.mxu0 %v885
    %2791 = vmatpush1.msra.mxu0 %v884
    %2792 = vmatprep.subr.mxu0 %v881
    %2793 = vmatpush1.msra.mxu0 %v880
    %2794 = vmatprep.subr.mxu0 %v877
    %2795 = vmatpush1.msra.mxu0 %v876
    %2796 = vmatprep.subr.mxu0 %v873
    %2797 = vmatpush1.msra.mxu0 %v872
    %2798 = vmatprep.subr.mxu0 %v869
    %2799 = vmatpush1.msra.mxu0 %v868
    %2800 = vmatprep.subr.mxu0 %v865
    %2801 = vmatpush1.msra.mxu0 %v864
    %2802 = vmatprep.subr.mxu0 %v861
    %2803 = vmatpush1.msra.mxu0 %v860
    %2804 = vmatprep.subr.mxu0 %v857
    %2805 = vmatpush1.msra.mxu0 %v856
    %2806 = vmatprep.subr.mxu0 %v853
    %2807 = vmatpush1.msra.mxu0 %v852
    %2808 = vmatprep.subr.mxu0 %v849
    %2809 = vmatpush1.msra.mxu0 %v848
    %2810 = vmatprep.subr.mxu0 %v845
    %2811 = vmatpush1.msra.mxu0 %v844
    %2812 = vmatprep.subr.mxu0 %v841
    %2813 = vmatpush1.msra.mxu0 %v840
    %2814 = vmatprep.subr.mxu0 %v837
    %2815 = vmatpush1.msra.mxu0 %v836
    %2816 = vmatprep.subr.mxu0 %v833
    %2817 = vmatpush1.msra.mxu0 %v832
    %2818 = vmatprep.subr.mxu0 0.0
    %2819 = vmatpush2.msra.mxu0 0.0
    %2820 = vmatprep.subr.mxu0 0.0
    %2821 = vmatpush2.msra.mxu0 0.0
    %2822 = vmatprep.subr.mxu0 0.0
    %2823 = vmatpush2.msra.mxu0 0.0
    %2824 = vmatprep.subr.mxu0 0.0
    %2825 = vmatpush2.msra.mxu0 0.0
    %2826 = vmatprep.subr.mxu0 0.0
    %2827 = vmatpush2.msra.mxu0 0.0
    %2828 = vmatprep.subr.mxu0 0.0
    %2829 = vmatpush2.msra.mxu0 0.0
    %2830 = vmatprep.subr.mxu0 0.0
    %2831 = vmatpush2.msra.mxu0 0.0
    %2832 = vmatprep.subr.mxu0 0.0
    %2833 = vmatpush2.msra.mxu0 0.0
    %2834 = vmatprep.subr.mxu0 0.0
    %2835 = vmatpush2.msra.mxu0 0.0
    %2836 = vmatprep.subr.mxu0 0.0
    %2837 = vmatpush2.msra.mxu0 0.0
    %2838 = vmatprep.subr.mxu0 0.0
    %2839 = vmatpush2.msra.mxu0 0.0
    %2840 = vmatprep.subr.mxu0 0.0
    %2841 = vmatpush2.msra.mxu0 0.0
    %2842 = vmatprep.subr.mxu0 0.0
    %2843 = vmatpush2.msra.mxu0 0.0
    %2844 = vmatprep.subr.mxu0 0.0
    %2845 = vmatpush2.msra.mxu0 0.0
    %2846 = vmatprep.subr.mxu0 0.0
    %2847 = vmatpush2.msra.mxu0 0.0
    %2848 = vmatprep.subr.mxu0 0.0
    %2849 = vmatpush2.msra.mxu0 0.0
    %2850 = vmatprep.mubr.f32.mxu0 0.0
    %2851 = vmatmul.mubr.f32.gmra.mxu0 %v2758
    %v2852 = vpop.f32.mrf.mxu0
    %v2853 = vadd.f32 0.0, %v2852
    %v2854 = vpop.f32.mrf.mxu0
    %v2855 = vadd.f32 0.0, %v2854
    %2856 = vdwg.mxu0
    %2857 = vmatprep.subr.mxu0 %v895
    %2858 = vmatpush1.msra.mxu0 %v894
    %2859 = vmatprep.subr.mxu0 %v891
    %2860 = vmatpush1.msra.mxu0 %v890
    %2861 = vmatprep.subr.mxu0 %v887
    %2862 = vmatpush1.msra.mxu0 %v886
    %2863 = vmatprep.subr.mxu0 %v883
    %2864 = vmatpush1.msra.mxu0 %v882
    %2865 = vmatprep.subr.mxu0 %v879
    %2866 = vmatpush1.msra.mxu0 %v878
    %2867 = vmatprep.subr.mxu0 %v875
    %2868 = vmatpush1.msra.mxu0 %v874
    %2869 = vmatprep.subr.mxu0 %v871
    %2870 = vmatpush1.msra.mxu0 %v870
    %2871 = vmatprep.subr.mxu0 %v867
    %2872 = vmatpush1.msra.mxu0 %v866
    %2873 = vmatprep.subr.mxu0 %v863
    %2874 = vmatpush1.msra.mxu0 %v862
    %2875 = vmatprep.subr.mxu0 %v859
    %2876 = vmatpush1.msra.mxu0 %v858
    %2877 = vmatprep.subr.mxu0 %v855
    %2878 = vmatpush1.msra.mxu0 %v854
    %2879 = vmatprep.subr.mxu0 %v851
    %2880 = vmatpush1.msra.mxu0 %v850
    %2881 = vmatprep.subr.mxu0 %v847
    %2882 = vmatpush1.msra.mxu0 %v846
    %2883 = vmatprep.subr.mxu0 %v843
    %2884 = vmatpush1.msra.mxu0 %v842
    %2885 = vmatprep.subr.mxu0 %v839
    %2886 = vmatpush1.msra.mxu0 %v838
    %2887 = vmatprep.subr.mxu0 %v835
    %2888 = vmatpush1.msra.mxu0 %v834
    %2889 = vmatprep.subr.mxu0 0.0
    %2890 = vmatpush2.msra.mxu0 0.0
    %2891 = vmatprep.subr.mxu0 0.0
    %2892 = vmatpush2.msra.mxu0 0.0
    %2893 = vmatprep.subr.mxu0 0.0
    %2894 = vmatpush2.msra.mxu0 0.0
    %2895 = vmatprep.subr.mxu0 0.0
    %2896 = vmatpush2.msra.mxu0 0.0
    %2897 = vmatprep.subr.mxu0 0.0
    %2898 = vmatpush2.msra.mxu0 0.0
    %2899 = vmatprep.subr.mxu0 0.0
    %2900 = vmatpush2.msra.mxu0 0.0
    %2901 = vmatprep.subr.mxu0 0.0
    %2902 = vmatpush2.msra.mxu0 0.0
    %2903 = vmatprep.subr.mxu0 0.0
    %2904 = vmatpush2.msra.mxu0 0.0
    %2905 = vmatprep.subr.mxu0 0.0
    %2906 = vmatpush2.msra.mxu0 0.0
    %2907 = vmatprep.subr.mxu0 0.0
    %2908 = vmatpush2.msra.mxu0 0.0
    %2909 = vmatprep.subr.mxu0 0.0
    %2910 = vmatpush2.msra.mxu0 0.0
    %2911 = vmatprep.subr.mxu0 0.0
    %2912 = vmatpush2.msra.mxu0 0.0
    %2913 = vmatprep.subr.mxu0 0.0
    %2914 = vmatpush2.msra.mxu0 0.0
    %2915 = vmatprep.subr.mxu0 0.0
    %2916 = vmatpush2.msra.mxu0 0.0
    %2917 = vmatprep.subr.mxu0 0.0
    %2918 = vmatpush2.msra.mxu0 0.0
    %2919 = vmatprep.subr.mxu0 0.0
    %2920 = vmatpush2.msra.mxu0 0.0
    %2921 = vmatprep.mubr.f32.mxu0 0.0
    %2922 = vmatmul.mubr.f32.gmra.mxu0 %v2758
    %v2923 = vpop.f32.mrf.mxu0
    %v2924 = vadd.f32 0.0, %v2923
    %v2925 = vpop.f32.mrf.mxu0
    %v2926 = vadd.f32 0.0, %v2925
    %2927 = vdwg.mxu0
    %v2932 = vrot.slane %v2853, 6
    %v2933 = vrot.slane %v2855, 6
    %v2934 = vrot.slane %v2924, 6
    %v2935 = vrot.slane %v2926, 6
    %v2940 = vadd.f32 %v573, %v2932
    %v2941 = vadd.f32 %v575, %v2933
    %v2942 = vadd.f32 %v656, %v2934
    %v2943 = vadd.f32 %v658, %v2935
    %v2945 = vrot.slane %v2785, 2
    %2947 = vmatprep.subr.mxu0 %v957
    %2948 = vmatpush1.msra.mxu0 %v956
    %2949 = vmatprep.subr.mxu0 %v953
    %2950 = vmatpush1.msra.mxu0 %v952
    %2951 = vmatprep.subr.mxu0 %v949
    %2952 = vmatpush1.msra.mxu0 %v948
    %2953 = vmatprep.subr.mxu0 %v945
    %2954 = vmatpush1.msra.mxu0 %v944
    %2955 = vmatprep.subr.mxu0 %v941
    %2956 = vmatpush1.msra.mxu0 %v940
    %2957 = vmatprep.subr.mxu0 %v937
    %2958 = vmatpush1.msra.mxu0 %v936
    %2959 = vmatprep.subr.mxu0 %v933
    %2960 = vmatpush1.msra.mxu0 %v932
    %2961 = vmatprep.subr.mxu0 %v929
    %2962 = vmatpush1.msra.mxu0 %v928
    %2963 = vmatprep.subr.mxu0 %v925
    %2964 = vmatpush1.msra.mxu0 %v924
    %2965 = vmatprep.subr.mxu0 %v921
    %2966 = vmatpush1.msra.mxu0 %v920
    %2967 = vmatprep.subr.mxu0 %v917
    %2968 = vmatpush1.msra.mxu0 %v916
    %2969 = vmatprep.subr.mxu0 %v913
    %2970 = vmatpush1.msra.mxu0 %v912
    %2971 = vmatprep.subr.mxu0 %v909
    %2972 = vmatpush1.msra.mxu0 %v908
    %2973 = vmatprep.subr.mxu0 %v905
    %2974 = vmatpush1.msra.mxu0 %v904
    %2975 = vmatprep.subr.mxu0 %v901
    %2976 = vmatpush1.msra.mxu0 %v900
    %2977 = vmatprep.subr.mxu0 %v897
    %2978 = vmatpush1.msra.mxu0 %v896
    %2979 = vmatprep.subr.mxu0 0.0
    %2980 = vmatpush2.msra.mxu0 0.0
    %2981 = vmatprep.subr.mxu0 0.0
    %2982 = vmatpush2.msra.mxu0 0.0
    %2983 = vmatprep.subr.mxu0 0.0
    %2984 = vmatpush2.msra.mxu0 0.0
    %2985 = vmatprep.subr.mxu0 0.0
    %2986 = vmatpush2.msra.mxu0 0.0
    %2987 = vmatprep.subr.mxu0 0.0
    %2988 = vmatpush2.msra.mxu0 0.0
    %2989 = vmatprep.subr.mxu0 0.0
    %2990 = vmatpush2.msra.mxu0 0.0
    %2991 = vmatprep.subr.mxu0 0.0
    %2992 = vmatpush2.msra.mxu0 0.0
    %2993 = vmatprep.subr.mxu0 0.0
    %2994 = vmatpush2.msra.mxu0 0.0
    %2995 = vmatprep.subr.mxu0 0.0
    %2996 = vmatpush2.msra.mxu0 0.0
    %2997 = vmatprep.subr.mxu0 0.0
    %2998 = vmatpush2.msra.mxu0 0.0
    %2999 = vmatprep.subr.mxu0 0.0
    %3000 = vmatpush2.msra.mxu0 0.0
    %3001 = vmatprep.subr.mxu0 0.0
    %3002 = vmatpush2.msra.mxu0 0.0
    %3003 = vmatprep.subr.mxu0 0.0
    %3004 = vmatpush2.msra.mxu0 0.0
    %3005 = vmatprep.subr.mxu0 0.0
    %3006 = vmatpush2.msra.mxu0 0.0
    %3007 = vmatprep.subr.mxu0 0.0
    %3008 = vmatpush2.msra.mxu0 0.0
    %3009 = vmatprep.subr.mxu0 0.0
    %3010 = vmatpush2.msra.mxu0 0.0
    %3011 = vmatprep.mubr.f32.mxu0 0.0
    %3012 = vmatmul.mubr.f32.gmra.mxu0 %v2945
    %v3013 = vpop.f32.mrf.mxu0
    %v3014 = vadd.f32 0.0, %v3013
    %v3015 = vpop.f32.mrf.mxu0
    %v3016 = vadd.f32 0.0, %v3015
    %3017 = vdwg.mxu0
    %3018 = vmatprep.subr.mxu0 %v959
    %3019 = vmatpush1.msra.mxu0 %v958
    %3020 = vmatprep.subr.mxu0 %v955
    %3021 = vmatpush1.msra.mxu0 %v954
    %3022 = vmatprep.subr.mxu0 %v951
    %3023 = vmatpush1.msra.mxu0 %v950
    %3024 = vmatprep.subr.mxu0 %v947
    %3025 = vmatpush1.msra.mxu0 %v946
    %3026 = vmatprep.subr.mxu0 %v943
    %3027 = vmatpush1.msra.mxu0 %v942
    %3028 = vmatprep.subr.mxu0 %v939
    %3029 = vmatpush1.msra.mxu0 %v938
    %3030 = vmatprep.subr.mxu0 %v935
    %3031 = vmatpush1.msra.mxu0 %v934
    %3032 = vmatprep.subr.mxu0 %v931
    %3033 = vmatpush1.msra.mxu0 %v930
    %3034 = vmatprep.subr.mxu0 %v927
    %3035 = vmatpush1.msra.mxu0 %v926
    %3036 = vmatprep.subr.mxu0 %v923
    %3037 = vmatpush1.msra.mxu0 %v922
    %3038 = vmatprep.subr.mxu0 %v919
    %3039 = vmatpush1.msra.mxu0 %v918
    %3040 = vmatprep.subr.mxu0 %v915
    %3041 = vmatpush1.msra.mxu0 %v914
    %3042 = vmatprep.subr.mxu0 %v911
    %3043 = vmatpush1.msra.mxu0 %v910
    %3044 = vmatprep.subr.mxu0 %v907
    %3045 = vmatpush1.msra.mxu0 %v906
    %3046 = vmatprep.subr.mxu0 %v903
    %3047 = vmatpush1.msra.mxu0 %v902
    %3048 = vmatprep.subr.mxu0 %v899
    %3049 = vmatpush1.msra.mxu0 %v898
    %3050 = vmatprep.subr.mxu0 0.0
    %3051 = vmatpush2.msra.mxu0 0.0
    %3052 = vmatprep.subr.mxu0 0.0
    %3053 = vmatpush2.msra.mxu0 0.0
    %3054 = vmatprep.subr.mxu0 0.0
    %3055 = vmatpush2.msra.mxu0 0.0
    %3056 = vmatprep.subr.mxu0 0.0
    %3057 = vmatpush2.msra.mxu0 0.0
    %3058 = vmatprep.subr.mxu0 0.0
    %3059 = vmatpush2.msra.mxu0 0.0
    %3060 = vmatprep.subr.mxu0 0.0
    %3061 = vmatpush2.msra.mxu0 0.0
    %3062 = vmatprep.subr.mxu0 0.0
    %3063 = vmatpush2.msra.mxu0 0.0
    %3064 = vmatprep.subr.mxu0 0.0
    %3065 = vmatpush2.msra.mxu0 0.0
    %3066 = vmatprep.subr.mxu0 0.0
    %3067 = vmatpush2.msra.mxu0 0.0
    %3068 = vmatprep.subr.mxu0 0.0
    %3069 = vmatpush2.msra.mxu0 0.0
    %3070 = vmatprep.subr.mxu0 0.0
    %3071 = vmatpush2.msra.mxu0 0.0
    %3072 = vmatprep.subr.mxu0 0.0
    %3073 = vmatpush2.msra.mxu0 0.0
    %3074 = vmatprep.subr.mxu0 0.0
    %3075 = vmatpush2.msra.mxu0 0.0
    %3076 = vmatprep.subr.mxu0 0.0
    %3077 = vmatpush2.msra.mxu0 0.0
    %3078 = vmatprep.subr.mxu0 0.0
    %3079 = vmatpush2.msra.mxu0 0.0
    %3080 = vmatprep.subr.mxu0 0.0
    %3081 = vmatpush2.msra.mxu0 0.0
    %3082 = vmatprep.mubr.f32.mxu0 0.0
    %3083 = vmatmul.mubr.f32.gmra.mxu0 %v2945
    %v3084 = vpop.f32.mrf.mxu0
    %v3085 = vadd.f32 0.0, %v3084
    %v3086 = vpop.f32.mrf.mxu0
    %v3087 = vadd.f32 0.0, %v3086
    %3088 = vdwg.mxu0
    %v3089 = vadd.f32 %v739, %v3014
    %v3090 = vadd.f32 %v741, %v3016
    %v3091 = vadd.f32 %v822, %v3085
    %v3092 = vadd.f32 %v824, %v3087
    %v3093 = vxor.u32 %v2940, 2147483648
    %v3094 = vmul.f32 %v3093, 1.442695
    %v3095 = vpow.pop %v3094
    %v3096 = vadd.f32 %v3095, 1.0
    %v3097 = vrcp.pop %v3096
    %v3098 = vmul.f32 1.0, %v3097
    %v3099 = vxor.u32 %v2941, 2147483648
    %v3100 = vmul.f32 %v3099, 1.442695
    %v3101 = vpow.pop %v3100
    %v3102 = vadd.f32 %v3101, 1.0
    %v3103 = vrcp.pop %v3102
    %v3104 = vmul.f32 1.0, %v3103
    %v3105 = vtanh.pop %v2942
    %v3106 = vxor.u32 %v2943, 2147483648
    %v3107 = vmul.f32 %v3106, 1.442695
    %v3108 = vpow.pop %v3107
    %v3109 = vadd.f32 %v3108, 1.0
    %v3110 = vrcp.pop %v3109
    %v3111 = vmul.f32 1.0, %v3110
    %v3113 = vrot.slane %v2756, 6
    %v3115 = vmul.f32 %v3104, %v3113
    %v3116 = vmul.f32 %v3098, %v3105
    %v3117 = vadd.f32 %v3115, %v3116
    %v3118 = vtanh.pop %v3117
    %v3119 = vmul.f32 %v3111, %v3118
    %v3120 = vxor.u32 %v3089, 2147483648
    %v3121 = vmul.f32 %v3120, 1.442695
    %v3122 = vpow.pop %v3121
    %v3123 = vadd.f32 %v3122, 1.0
    %v3124 = vrcp.pop %v3123
    %v3125 = vmul.f32 1.0, %v3124
    %v3126 = vxor.u32 %v3090, 2147483648
    %v3127 = vmul.f32 %v3126, 1.442695
    %v3128 = vpow.pop %v3127
    %v3129 = vadd.f32 %v3128, 1.0
    %v3130 = vrcp.pop %v3129
    %v3131 = vmul.f32 1.0, %v3130
    %v3132 = vtanh.pop %v3091
    %v3133 = vxor.u32 %v3092, 2147483648
    %v3134 = vmul.f32 %v3133, 1.442695
    %v3135 = vpow.pop %v3134
    %v3136 = vadd.f32 %v3135, 1.0
    %v3137 = vrcp.pop %v3136
    %v3138 = vmul.f32 1.0, %v3137
    %v3140 = vrot.slane %v2783, 2
    %v3142 = vmul.f32 %v3131, %v3140
    %v3143 = vmul.f32 %v3125, %v3132
    %v3144 = vadd.f32 %v3142, %v3143
    %v3145 = vtanh.pop %v3144
    %v3146 = vmul.f32 %v3138, %v3145
    %v3148 = vrot.slane %v3119, 2
    %3150 = vmatprep.subr.mxu0 %v893
    %3151 = vmatpush1.msra.mxu0 %v892
    %3152 = vmatprep.subr.mxu0 %v889
    %3153 = vmatpush1.msra.mxu0 %v888
    %3154 = vmatprep.subr.mxu0 %v885
    %3155 = vmatpush1.msra.mxu0 %v884
    %3156 = vmatprep.subr.mxu0 %v881
    %3157 = vmatpush1.msra.mxu0 %v880
    %3158 = vmatprep.subr.mxu0 %v877
    %3159 = vmatpush1.msra.mxu0 %v876
    %3160 = vmatprep.subr.mxu0 %v873
    %3161 = vmatpush1.msra.mxu0 %v872
    %3162 = vmatprep.subr.mxu0 %v869
    %3163 = vmatpush1.msra.mxu0 %v868
    %3164 = vmatprep.subr.mxu0 %v865
    %3165 = vmatpush1.msra.mxu0 %v864
    %3166 = vmatprep.subr.mxu0 %v861
    %3167 = vmatpush1.msra.mxu0 %v860
    %3168 = vmatprep.subr.mxu0 %v857
    %3169 = vmatpush1.msra.mxu0 %v856
    %3170 = vmatprep.subr.mxu0 %v853
    %3171 = vmatpush1.msra.mxu0 %v852
    %3172 = vmatprep.subr.mxu0 %v849
    %3173 = vmatpush1.msra.mxu0 %v848
    %3174 = vmatprep.subr.mxu0 %v845
    %3175 = vmatpush1.msra.mxu0 %v844
    %3176 = vmatprep.subr.mxu0 %v841
    %3177 = vmatpush1.msra.mxu0 %v840
    %3178 = vmatprep.subr.mxu0 %v837
    %3179 = vmatpush1.msra.mxu0 %v836
    %3180 = vmatprep.subr.mxu0 %v833
    %3181 = vmatpush1.msra.mxu0 %v832
    %3182 = vmatprep.subr.mxu0 0.0
    %3183 = vmatpush2.msra.mxu0 0.0
    %3184 = vmatprep.subr.mxu0 0.0
    %3185 = vmatpush2.msra.mxu0 0.0
    %3186 = vmatprep.subr.mxu0 0.0
    %3187 = vmatpush2.msra.mxu0 0.0
    %3188 = vmatprep.subr.mxu0 0.0
    %3189 = vmatpush2.msra.mxu0 0.0
    %3190 = vmatprep.subr.mxu0 0.0
    %3191 = vmatpush2.msra.mxu0 0.0
    %3192 = vmatprep.subr.mxu0 0.0
    %3193 = vmatpush2.msra.mxu0 0.0
    %3194 = vmatprep.subr.mxu0 0.0
    %3195 = vmatpush2.msra.mxu0 0.0
    %3196 = vmatprep.subr.mxu0 0.0
    %3197 = vmatpush2.msra.mxu0 0.0
    %3198 = vmatprep.subr.mxu0 0.0
    %3199 = vmatpush2.msra.mxu0 0.0
    %3200 = vmatprep.subr.mxu0 0.0
    %3201 = vmatpush2.msra.mxu0 0.0
    %3202 = vmatprep.subr.mxu0 0.0
    %3203 = vmatpush2.msra.mxu0 0.0
    %3204 = vmatprep.subr.mxu0 0.0
    %3205 = vmatpush2.msra.mxu0 0.0
    %3206 = vmatprep.subr.mxu0 0.0
    %3207 = vmatpush2.msra.mxu0 0.0
    %3208 = vmatprep.subr.mxu0 0.0
    %3209 = vmatpush2.msra.mxu0 0.0
    %3210 = vmatprep.subr.mxu0 0.0
    %3211 = vmatpush2.msra.mxu0 0.0
    %3212 = vmatprep.subr.mxu0 0.0
    %3213 = vmatpush2.msra.mxu0 0.0
    %3214 = vmatprep.mubr.f32.mxu0 0.0
    %3215 = vmatmul.mubr.f32.gmra.mxu0 %v3148
    %v3216 = vpop.f32.mrf.mxu0
    %v3217 = vadd.f32 0.0, %v3216
    %v3218 = vpop.f32.mrf.mxu0
    %v3219 = vadd.f32 0.0, %v3218
    %3220 = vdwg.mxu0
    %3221 = vmatprep.subr.mxu0 %v895
    %3222 = vmatpush1.msra.mxu0 %v894
    %3223 = vmatprep.subr.mxu0 %v891
    %3224 = vmatpush1.msra.mxu0 %v890
    %3225 = vmatprep.subr.mxu0 %v887
    %3226 = vmatpush1.msra.mxu0 %v886
    %3227 = vmatprep.subr.mxu0 %v883
    %3228 = vmatpush1.msra.mxu0 %v882
    %3229 = vmatprep.subr.mxu0 %v879
    %3230 = vmatpush1.msra.mxu0 %v878
    %3231 = vmatprep.subr.mxu0 %v875
    %3232 = vmatpush1.msra.mxu0 %v874
    %3233 = vmatprep.subr.mxu0 %v871
    %3234 = vmatpush1.msra.mxu0 %v870
    %3235 = vmatprep.subr.mxu0 %v867
    %3236 = vmatpush1.msra.mxu0 %v866
    %3237 = vmatprep.subr.mxu0 %v863
    %3238 = vmatpush1.msra.mxu0 %v862
    %3239 = vmatprep.subr.mxu0 %v859
    %3240 = vmatpush1.msra.mxu0 %v858
    %3241 = vmatprep.subr.mxu0 %v855
    %3242 = vmatpush1.msra.mxu0 %v854
    %3243 = vmatprep.subr.mxu0 %v851
    %3244 = vmatpush1.msra.mxu0 %v850
    %3245 = vmatprep.subr.mxu0 %v847
    %3246 = vmatpush1.msra.mxu0 %v846
    %3247 = vmatprep.subr.mxu0 %v843
    %3248 = vmatpush1.msra.mxu0 %v842
    %3249 = vmatprep.subr.mxu0 %v839
    %3250 = vmatpush1.msra.mxu0 %v838
    %3251 = vmatprep.subr.mxu0 %v835
    %3252 = vmatpush1.msra.mxu0 %v834
    %3253 = vmatprep.subr.mxu0 0.0
    %3254 = vmatpush2.msra.mxu0 0.0
    %3255 = vmatprep.subr.mxu0 0.0
    %3256 = vmatpush2.msra.mxu0 0.0
    %3257 = vmatprep.subr.mxu0 0.0
    %3258 = vmatpush2.msra.mxu0 0.0
    %3259 = vmatprep.subr.mxu0 0.0
    %3260 = vmatpush2.msra.mxu0 0.0
    %3261 = vmatprep.subr.mxu0 0.0
    %3262 = vmatpush2.msra.mxu0 0.0
    %3263 = vmatprep.subr.mxu0 0.0
    %3264 = vmatpush2.msra.mxu0 0.0
    %3265 = vmatprep.subr.mxu0 0.0
    %3266 = vmatpush2.msra.mxu0 0.0
    %3267 = vmatprep.subr.mxu0 0.0
    %3268 = vmatpush2.msra.mxu0 0.0
    %3269 = vmatprep.subr.mxu0 0.0
    %3270 = vmatpush2.msra.mxu0 0.0
    %3271 = vmatprep.subr.mxu0 0.0
    %3272 = vmatpush2.msra.mxu0 0.0
    %3273 = vmatprep.subr.mxu0 0.0
    %3274 = vmatpush2.msra.mxu0 0.0
    %3275 = vmatprep.subr.mxu0 0.0
    %3276 = vmatpush2.msra.mxu0 0.0
    %3277 = vmatprep.subr.mxu0 0.0
    %3278 = vmatpush2.msra.mxu0 0.0
    %3279 = vmatprep.subr.mxu0 0.0
    %3280 = vmatpush2.msra.mxu0 0.0
    %3281 = vmatprep.subr.mxu0 0.0
    %3282 = vmatpush2.msra.mxu0 0.0
    %3283 = vmatprep.subr.mxu0 0.0
    %3284 = vmatpush2.msra.mxu0 0.0
    %3285 = vmatprep.mubr.f32.mxu0 0.0
    %3286 = vmatmul.mubr.f32.gmra.mxu0 %v3148
    %v3287 = vpop.f32.mrf.mxu0
    %v3288 = vadd.f32 0.0, %v3287
    %v3289 = vpop.f32.mrf.mxu0
    %v3290 = vadd.f32 0.0, %v3289
    %3291 = vdwg.mxu0
    %v3296 = vrot.slane %v3217, 4
    %v3297 = vrot.slane %v3219, 4
    %v3298 = vrot.slane %v3288, 4
    %v3299 = vrot.slane %v3290, 4
    %v3304 = vadd.f32 %v573, %v3296
    %v3305 = vadd.f32 %v575, %v3297
    %v3306 = vadd.f32 %v656, %v3298
    %v3307 = vadd.f32 %v658, %v3299
    %3308 = vmatprep.subr.mxu0 %v957
    %3309 = vmatpush1.msra.mxu0 %v956
    %3310 = vmatprep.subr.mxu0 %v953
    %3311 = vmatpush1.msra.mxu0 %v952
    %3312 = vmatprep.subr.mxu0 %v949
    %3313 = vmatpush1.msra.mxu0 %v948
    %3314 = vmatprep.subr.mxu0 %v945
    %3315 = vmatpush1.msra.mxu0 %v944
    %3316 = vmatprep.subr.mxu0 %v941
    %3317 = vmatpush1.msra.mxu0 %v940
    %3318 = vmatprep.subr.mxu0 %v937
    %3319 = vmatpush1.msra.mxu0 %v936
    %3320 = vmatprep.subr.mxu0 %v933
    %3321 = vmatpush1.msra.mxu0 %v932
    %3322 = vmatprep.subr.mxu0 %v929
    %3323 = vmatpush1.msra.mxu0 %v928
    %3324 = vmatprep.subr.mxu0 %v925
    %3325 = vmatpush1.msra.mxu0 %v924
    %3326 = vmatprep.subr.mxu0 %v921
    %3327 = vmatpush1.msra.mxu0 %v920
    %3328 = vmatprep.subr.mxu0 %v917
    %3329 = vmatpush1.msra.mxu0 %v916
    %3330 = vmatprep.subr.mxu0 %v913
    %3331 = vmatpush1.msra.mxu0 %v912
    %3332 = vmatprep.subr.mxu0 %v909
    %3333 = vmatpush1.msra.mxu0 %v908
    %3334 = vmatprep.subr.mxu0 %v905
    %3335 = vmatpush1.msra.mxu0 %v904
    %3336 = vmatprep.subr.mxu0 %v901
    %3337 = vmatpush1.msra.mxu0 %v900
    %3338 = vmatprep.subr.mxu0 %v897
    %3339 = vmatpush1.msra.mxu0 %v896
    %3340 = vmatprep.subr.mxu0 0.0
    %3341 = vmatpush2.msra.mxu0 0.0
    %3342 = vmatprep.subr.mxu0 0.0
    %3343 = vmatpush2.msra.mxu0 0.0
    %3344 = vmatprep.subr.mxu0 0.0
    %3345 = vmatpush2.msra.mxu0 0.0
    %3346 = vmatprep.subr.mxu0 0.0
    %3347 = vmatpush2.msra.mxu0 0.0
    %3348 = vmatprep.subr.mxu0 0.0
    %3349 = vmatpush2.msra.mxu0 0.0
    %3350 = vmatprep.subr.mxu0 0.0
    %3351 = vmatpush2.msra.mxu0 0.0
    %3352 = vmatprep.subr.mxu0 0.0
    %3353 = vmatpush2.msra.mxu0 0.0
    %3354 = vmatprep.subr.mxu0 0.0
    %3355 = vmatpush2.msra.mxu0 0.0
    %3356 = vmatprep.subr.mxu0 0.0
    %3357 = vmatpush2.msra.mxu0 0.0
    %3358 = vmatprep.subr.mxu0 0.0
    %3359 = vmatpush2.msra.mxu0 0.0
    %3360 = vmatprep.subr.mxu0 0.0
    %3361 = vmatpush2.msra.mxu0 0.0
    %3362 = vmatprep.subr.mxu0 0.0
    %3363 = vmatpush2.msra.mxu0 0.0
    %3364 = vmatprep.subr.mxu0 0.0
    %3365 = vmatpush2.msra.mxu0 0.0
    %3366 = vmatprep.subr.mxu0 0.0
    %3367 = vmatpush2.msra.mxu0 0.0
    %3368 = vmatprep.subr.mxu0 0.0
    %3369 = vmatpush2.msra.mxu0 0.0
    %3370 = vmatprep.subr.mxu0 0.0
    %3371 = vmatpush2.msra.mxu0 0.0
    %3372 = vmatprep.mubr.f32.mxu0 0.0
    %3373 = vmatmul.mubr.f32.gmra.mxu0 %v3146
    %v3374 = vpop.f32.mrf.mxu0
    %v3375 = vadd.f32 0.0, %v3374
    %v3376 = vpop.f32.mrf.mxu0
    %v3377 = vadd.f32 0.0, %v3376
    %3378 = vdwg.mxu0
    %3379 = vmatprep.subr.mxu0 %v959
    %3380 = vmatpush1.msra.mxu0 %v958
    %3381 = vmatprep.subr.mxu0 %v955
    %3382 = vmatpush1.msra.mxu0 %v954
    %3383 = vmatprep.subr.mxu0 %v951
    %3384 = vmatpush1.msra.mxu0 %v950
    %3385 = vmatprep.subr.mxu0 %v947
    %3386 = vmatpush1.msra.mxu0 %v946
    %3387 = vmatprep.subr.mxu0 %v943
    %3388 = vmatpush1.msra.mxu0 %v942
    %3389 = vmatprep.subr.mxu0 %v939
    %3390 = vmatpush1.msra.mxu0 %v938
    %3391 = vmatprep.subr.mxu0 %v935
    %3392 = vmatpush1.msra.mxu0 %v934
    %3393 = vmatprep.subr.mxu0 %v931
    %3394 = vmatpush1.msra.mxu0 %v930
    %3395 = vmatprep.subr.mxu0 %v927
    %3396 = vmatpush1.msra.mxu0 %v926
    %3397 = vmatprep.subr.mxu0 %v923
    %3398 = vmatpush1.msra.mxu0 %v922
    %3399 = vmatprep.subr.mxu0 %v919
    %3400 = vmatpush1.msra.mxu0 %v918
    %3401 = vmatprep.subr.mxu0 %v915
    %3402 = vmatpush1.msra.mxu0 %v914
    %3403 = vmatprep.subr.mxu0 %v911
    %3404 = vmatpush1.msra.mxu0 %v910
    %3405 = vmatprep.subr.mxu0 %v907
    %3406 = vmatpush1.msra.mxu0 %v906
    %3407 = vmatprep.subr.mxu0 %v903
    %3408 = vmatpush1.msra.mxu0 %v902
    %3409 = vmatprep.subr.mxu0 %v899
    %3410 = vmatpush1.msra.mxu0 %v898
    %3411 = vmatprep.subr.mxu0 0.0
    %3412 = vmatpush2.msra.mxu0 0.0
    %3413 = vmatprep.subr.mxu0 0.0
    %3414 = vmatpush2.msra.mxu0 0.0
    %3415 = vmatprep.subr.mxu0 0.0
    %3416 = vmatpush2.msra.mxu0 0.0
    %3417 = vmatprep.subr.mxu0 0.0
    %3418 = vmatpush2.msra.mxu0 0.0
    %3419 = vmatprep.subr.mxu0 0.0
    %3420 = vmatpush2.msra.mxu0 0.0
    %3421 = vmatprep.subr.mxu0 0.0
    %3422 = vmatpush2.msra.mxu0 0.0
    %3423 = vmatprep.subr.mxu0 0.0
    %3424 = vmatpush2.msra.mxu0 0.0
    %3425 = vmatprep.subr.mxu0 0.0
    %3426 = vmatpush2.msra.mxu0 0.0
    %3427 = vmatprep.subr.mxu0 0.0
    %3428 = vmatpush2.msra.mxu0 0.0
    %3429 = vmatprep.subr.mxu0 0.0
    %3430 = vmatpush2.msra.mxu0 0.0
    %3431 = vmatprep.subr.mxu0 0.0
    %3432 = vmatpush2.msra.mxu0 0.0
    %3433 = vmatprep.subr.mxu0 0.0
    %3434 = vmatpush2.msra.mxu0 0.0
    %3435 = vmatprep.subr.mxu0 0.0
    %3436 = vmatpush2.msra.mxu0 0.0
    %3437 = vmatprep.subr.mxu0 0.0
    %3438 = vmatpush2.msra.mxu0 0.0
    %3439 = vmatprep.subr.mxu0 0.0
    %3440 = vmatpush2.msra.mxu0 0.0
    %3441 = vmatprep.subr.mxu0 0.0
    %3442 = vmatpush2.msra.mxu0 0.0
    %3443 = vmatprep.mubr.f32.mxu0 0.0
    %3444 = vmatmul.mubr.f32.gmra.mxu0 %v3146
    %v3445 = vpop.f32.mrf.mxu0
    %v3446 = vadd.f32 0.0, %v3445
    %v3447 = vpop.f32.mrf.mxu0
    %v3448 = vadd.f32 0.0, %v3447
    %3449 = vdwg.mxu0
    %v3454 = vrot.slane %v3375, 2
    %v3455 = vrot.slane %v3377, 2
    %v3456 = vrot.slane %v3446, 2
    %v3457 = vrot.slane %v3448, 2
    %v3462 = vadd.f32 %v733, %v3454
    %v3463 = vadd.f32 %v735, %v3455
    %v3464 = vadd.f32 %v816, %v3456
    %v3465 = vadd.f32 %v818, %v3457
    %v3466 = vxor.u32 %v3304, 2147483648
    %v3467 = vmul.f32 %v3466, 1.442695
    %v3468 = vpow.pop %v3467
    %v3469 = vadd.f32 %v3468, 1.0
    %v3470 = vrcp.pop %v3469
    %v3471 = vmul.f32 1.0, %v3470
    %v3472 = vxor.u32 %v3305, 2147483648
    %v3473 = vmul.f32 %v3472, 1.442695
    %v3474 = vpow.pop %v3473
    %v3475 = vadd.f32 %v3474, 1.0
    %v3476 = vrcp.pop %v3475
    %v3477 = vmul.f32 1.0, %v3476
    %v3478 = vtanh.pop %v3306
    %v3479 = vxor.u32 %v3307, 2147483648
    %v3480 = vmul.f32 %v3479, 1.442695
    %v3481 = vpow.pop %v3480
    %v3482 = vadd.f32 %v3481, 1.0
    %v3483 = vrcp.pop %v3482
    %v3484 = vmul.f32 1.0, %v3483
    %v3486 = vrot.slane %v3117, 6
    %v3488 = vmul.f32 %v3477, %v3486
    %v3489 = vmul.f32 %v3471, %v3478
    %v3490 = vadd.f32 %v3488, %v3489
    %v3491 = vtanh.pop %v3490
    %v3492 = vmul.f32 %v3484, %v3491
    %v3493 = vxor.u32 %v3462, 2147483648
    %v3494 = vmul.f32 %v3493, 1.442695
    %v3495 = vpow.pop %v3494
    %v3496 = vadd.f32 %v3495, 1.0
    %v3497 = vrcp.pop %v3496
    %v3498 = vmul.f32 1.0, %v3497
    %v3499 = vxor.u32 %v3463, 2147483648
    %v3500 = vmul.f32 %v3499, 1.442695
    %v3501 = vpow.pop %v3500
    %v3502 = vadd.f32 %v3501, 1.0
    %v3503 = vrcp.pop %v3502
    %v3504 = vmul.f32 1.0, %v3503
    %v3505 = vtanh.pop %v3464
    %v3506 = vxor.u32 %v3465, 2147483648
    %v3507 = vmul.f32 %v3506, 1.442695
    %v3508 = vpow.pop %v3507
    %v3509 = vadd.f32 %v3508, 1.0
    %v3510 = vrcp.pop %v3509
    %v3511 = vmul.f32 1.0, %v3510
    %v3513 = vrot.slane %v3144, 2
    %v3515 = vmul.f32 %v3504, %v3513
    %v3516 = vmul.f32 %v3498, %v3505
    %v3517 = vadd.f32 %v3515, %v3516
    %v3518 = vtanh.pop %v3517
    %v3519 = vmul.f32 %v3511, %v3518
    %v3521 = vrot.slane %v3492, 4
    %3523 = vmatprep.subr.mxu0 %v893
    %3524 = vmatpush1.msra.mxu0 %v892
    %3525 = vmatprep.subr.mxu0 %v889
    %3526 = vmatpush1.msra.mxu0 %v888
    %3527 = vmatprep.subr.mxu0 %v885
    %3528 = vmatpush1.msra.mxu0 %v884
    %3529 = vmatprep.subr.mxu0 %v881
    %3530 = vmatpush1.msra.mxu0 %v880
    %3531 = vmatprep.subr.mxu0 %v877
    %3532 = vmatpush1.msra.mxu0 %v876
    %3533 = vmatprep.subr.mxu0 %v873
    %3534 = vmatpush1.msra.mxu0 %v872
    %3535 = vmatprep.subr.mxu0 %v869
    %3536 = vmatpush1.msra.mxu0 %v868
    %3537 = vmatprep.subr.mxu0 %v865
    %3538 = vmatpush1.msra.mxu0 %v864
    %3539 = vmatprep.subr.mxu0 %v861
    %3540 = vmatpush1.msra.mxu0 %v860
    %3541 = vmatprep.subr.mxu0 %v857
    %3542 = vmatpush1.msra.mxu0 %v856
    %3543 = vmatprep.subr.mxu0 %v853
    %3544 = vmatpush1.msra.mxu0 %v852
    %3545 = vmatprep.subr.mxu0 %v849
    %3546 = vmatpush1.msra.mxu0 %v848
    %3547 = vmatprep.subr.mxu0 %v845
    %3548 = vmatpush1.msra.mxu0 %v844
    %3549 = vmatprep.subr.mxu0 %v841
    %3550 = vmatpush1.msra.mxu0 %v840
    %3551 = vmatprep.subr.mxu0 %v837
    %3552 = vmatpush1.msra.mxu0 %v836
    %3553 = vmatprep.subr.mxu0 %v833
    %3554 = vmatpush1.msra.mxu0 %v832
    %3555 = vmatprep.subr.mxu0 0.0
    %3556 = vmatpush2.msra.mxu0 0.0
    %3557 = vmatprep.subr.mxu0 0.0
    %3558 = vmatpush2.msra.mxu0 0.0
    %3559 = vmatprep.subr.mxu0 0.0
    %3560 = vmatpush2.msra.mxu0 0.0
    %3561 = vmatprep.subr.mxu0 0.0
    %3562 = vmatpush2.msra.mxu0 0.0
    %3563 = vmatprep.subr.mxu0 0.0
    %3564 = vmatpush2.msra.mxu0 0.0
    %3565 = vmatprep.subr.mxu0 0.0
    %3566 = vmatpush2.msra.mxu0 0.0
    %3567 = vmatprep.subr.mxu0 0.0
    %3568 = vmatpush2.msra.mxu0 0.0
    %3569 = vmatprep.subr.mxu0 0.0
    %3570 = vmatpush2.msra.mxu0 0.0
    %3571 = vmatprep.subr.mxu0 0.0
    %3572 = vmatpush2.msra.mxu0 0.0
    %3573 = vmatprep.subr.mxu0 0.0
    %3574 = vmatpush2.msra.mxu0 0.0
    %3575 = vmatprep.subr.mxu0 0.0
    %3576 = vmatpush2.msra.mxu0 0.0
    %3577 = vmatprep.subr.mxu0 0.0
    %3578 = vmatpush2.msra.mxu0 0.0
    %3579 = vmatprep.subr.mxu0 0.0
    %3580 = vmatpush2.msra.mxu0 0.0
    %3581 = vmatprep.subr.mxu0 0.0
    %3582 = vmatpush2.msra.mxu0 0.0
    %3583 = vmatprep.subr.mxu0 0.0
    %3584 = vmatpush2.msra.mxu0 0.0
    %3585 = vmatprep.subr.mxu0 0.0
    %3586 = vmatpush2.msra.mxu0 0.0
    %3587 = vmatprep.mubr.f32.mxu0 0.0
    %3588 = vmatmul.mubr.f32.gmra.mxu0 %v3521
    %v3589 = vpop.f32.mrf.mxu0
    %v3590 = vadd.f32 0.0, %v3589
    %v3591 = vpop.f32.mrf.mxu0
    %v3592 = vadd.f32 0.0, %v3591
    %3593 = vdwg.mxu0
    %3594 = vmatprep.subr.mxu0 %v895
    %3595 = vmatpush1.msra.mxu0 %v894
    %3596 = vmatprep.subr.mxu0 %v891
    %3597 = vmatpush1.msra.mxu0 %v890
    %3598 = vmatprep.subr.mxu0 %v887
    %3599 = vmatpush1.msra.mxu0 %v886
    %3600 = vmatprep.subr.mxu0 %v883
    %3601 = vmatpush1.msra.mxu0 %v882
    %3602 = vmatprep.subr.mxu0 %v879
    %3603 = vmatpush1.msra.mxu0 %v878
    %3604 = vmatprep.subr.mxu0 %v875
    %3605 = vmatpush1.msra.mxu0 %v874
    %3606 = vmatprep.subr.mxu0 %v871
    %3607 = vmatpush1.msra.mxu0 %v870
    %3608 = vmatprep.subr.mxu0 %v867
    %3609 = vmatpush1.msra.mxu0 %v866
    %3610 = vmatprep.subr.mxu0 %v863
    %3611 = vmatpush1.msra.mxu0 %v862
    %3612 = vmatprep.subr.mxu0 %v859
    %3613 = vmatpush1.msra.mxu0 %v858
    %3614 = vmatprep.subr.mxu0 %v855
    %3615 = vmatpush1.msra.mxu0 %v854
    %3616 = vmatprep.subr.mxu0 %v851
    %3617 = vmatpush1.msra.mxu0 %v850
    %3618 = vmatprep.subr.mxu0 %v847
    %3619 = vmatpush1.msra.mxu0 %v846
    %3620 = vmatprep.subr.mxu0 %v843
    %3621 = vmatpush1.msra.mxu0 %v842
    %3622 = vmatprep.subr.mxu0 %v839
    %3623 = vmatpush1.msra.mxu0 %v838
    %3624 = vmatprep.subr.mxu0 %v835
    %3625 = vmatpush1.msra.mxu0 %v834
    %3626 = vmatprep.subr.mxu0 0.0
    %3627 = vmatpush2.msra.mxu0 0.0
    %3628 = vmatprep.subr.mxu0 0.0
    %3629 = vmatpush2.msra.mxu0 0.0
    %3630 = vmatprep.subr.mxu0 0.0
    %3631 = vmatpush2.msra.mxu0 0.0
    %3632 = vmatprep.subr.mxu0 0.0
    %3633 = vmatpush2.msra.mxu0 0.0
    %3634 = vmatprep.subr.mxu0 0.0
    %3635 = vmatpush2.msra.mxu0 0.0
    %3636 = vmatprep.subr.mxu0 0.0
    %3637 = vmatpush2.msra.mxu0 0.0
    %3638 = vmatprep.subr.mxu0 0.0
    %3639 = vmatpush2.msra.mxu0 0.0
    %3640 = vmatprep.subr.mxu0 0.0
    %3641 = vmatpush2.msra.mxu0 0.0
    %3642 = vmatprep.subr.mxu0 0.0
    %3643 = vmatpush2.msra.mxu0 0.0
    %3644 = vmatprep.subr.mxu0 0.0
    %3645 = vmatpush2.msra.mxu0 0.0
    %3646 = vmatprep.subr.mxu0 0.0
    %3647 = vmatpush2.msra.mxu0 0.0
    %3648 = vmatprep.subr.mxu0 0.0
    %3649 = vmatpush2.msra.mxu0 0.0
    %3650 = vmatprep.subr.mxu0 0.0
    %3651 = vmatpush2.msra.mxu0 0.0
    %3652 = vmatprep.subr.mxu0 0.0
    %3653 = vmatpush2.msra.mxu0 0.0
    %3654 = vmatprep.subr.mxu0 0.0
    %3655 = vmatpush2.msra.mxu0 0.0
    %3656 = vmatprep.subr.mxu0 0.0
    %3657 = vmatpush2.msra.mxu0 0.0
    %3658 = vmatprep.mubr.f32.mxu0 0.0
    %3659 = vmatmul.mubr.f32.gmra.mxu0 %v3521
    %v3660 = vpop.f32.mrf.mxu0
    %v3661 = vadd.f32 0.0, %v3660
    %v3662 = vpop.f32.mrf.mxu0
    %v3663 = vadd.f32 0.0, %v3662
    %3664 = vdwg.mxu0
    %v3669 = vrot.slane %v3590, 2
    %v3670 = vrot.slane %v3592, 2
    %v3671 = vrot.slane %v3661, 2
    %v3672 = vrot.slane %v3663, 2
    %v3677 = vadd.f32 %v573, %v3669
    %v3678 = vadd.f32 %v575, %v3670
    %v3679 = vadd.f32 %v656, %v3671
    %v3680 = vadd.f32 %v658, %v3672
    %v3682 = vrot.slane %v3519, 6
    %3684 = vmatprep.subr.mxu0 %v957
    %3685 = vmatpush1.msra.mxu0 %v956
    %3686 = vmatprep.subr.mxu0 %v953
    %3687 = vmatpush1.msra.mxu0 %v952
    %3688 = vmatprep.subr.mxu0 %v949
    %3689 = vmatpush1.msra.mxu0 %v948
    %3690 = vmatprep.subr.mxu0 %v945
    %3691 = vmatpush1.msra.mxu0 %v944
    %3692 = vmatprep.subr.mxu0 %v941
    %3693 = vmatpush1.msra.mxu0 %v940
    %3694 = vmatprep.subr.mxu0 %v937
    %3695 = vmatpush1.msra.mxu0 %v936
    %3696 = vmatprep.subr.mxu0 %v933
    %3697 = vmatpush1.msra.mxu0 %v932
    %3698 = vmatprep.subr.mxu0 %v929
    %3699 = vmatpush1.msra.mxu0 %v928
    %3700 = vmatprep.subr.mxu0 %v925
    %3701 = vmatpush1.msra.mxu0 %v924
    %3702 = vmatprep.subr.mxu0 %v921
    %3703 = vmatpush1.msra.mxu0 %v920
    %3704 = vmatprep.subr.mxu0 %v917
    %3705 = vmatpush1.msra.mxu0 %v916
    %3706 = vmatprep.subr.mxu0 %v913
    %3707 = vmatpush1.msra.mxu0 %v912
    %3708 = vmatprep.subr.mxu0 %v909
    %3709 = vmatpush1.msra.mxu0 %v908
    %3710 = vmatprep.subr.mxu0 %v905
    %3711 = vmatpush1.msra.mxu0 %v904
    %3712 = vmatprep.subr.mxu0 %v901
    %3713 = vmatpush1.msra.mxu0 %v900
    %3714 = vmatprep.subr.mxu0 %v897
    %3715 = vmatpush1.msra.mxu0 %v896
    %3716 = vmatprep.subr.mxu0 0.0
    %3717 = vmatpush2.msra.mxu0 0.0
    %3718 = vmatprep.subr.mxu0 0.0
    %3719 = vmatpush2.msra.mxu0 0.0
    %3720 = vmatprep.subr.mxu0 0.0
    %3721 = vmatpush2.msra.mxu0 0.0
    %3722 = vmatprep.subr.mxu0 0.0
    %3723 = vmatpush2.msra.mxu0 0.0
    %3724 = vmatprep.subr.mxu0 0.0
    %3725 = vmatpush2.msra.mxu0 0.0
    %3726 = vmatprep.subr.mxu0 0.0
    %3727 = vmatpush2.msra.mxu0 0.0
    %3728 = vmatprep.subr.mxu0 0.0
    %3729 = vmatpush2.msra.mxu0 0.0
    %3730 = vmatprep.subr.mxu0 0.0
    %3731 = vmatpush2.msra.mxu0 0.0
    %3732 = vmatprep.subr.mxu0 0.0
    %3733 = vmatpush2.msra.mxu0 0.0
    %3734 = vmatprep.subr.mxu0 0.0
    %3735 = vmatpush2.msra.mxu0 0.0
    %3736 = vmatprep.subr.mxu0 0.0
    %3737 = vmatpush2.msra.mxu0 0.0
    %3738 = vmatprep.subr.mxu0 0.0
    %3739 = vmatpush2.msra.mxu0 0.0
    %3740 = vmatprep.subr.mxu0 0.0
    %3741 = vmatpush2.msra.mxu0 0.0
    %3742 = vmatprep.subr.mxu0 0.0
    %3743 = vmatpush2.msra.mxu0 0.0
    %3744 = vmatprep.subr.mxu0 0.0
    %3745 = vmatpush2.msra.mxu0 0.0
    %3746 = vmatprep.subr.mxu0 0.0
    %3747 = vmatpush2.msra.mxu0 0.0
    %3748 = vmatprep.mubr.f32.mxu0 0.0
    %3749 = vmatmul.mubr.f32.gmra.mxu0 %v3682
    %v3750 = vpop.f32.mrf.mxu0
    %v3751 = vadd.f32 0.0, %v3750
    %v3752 = vpop.f32.mrf.mxu0
    %v3753 = vadd.f32 0.0, %v3752
    %3754 = vdwg.mxu0
    %3755 = vmatprep.subr.mxu0 %v959
    %3756 = vmatpush1.msra.mxu0 %v958
    %3757 = vmatprep.subr.mxu0 %v955
    %3758 = vmatpush1.msra.mxu0 %v954
    %3759 = vmatprep.subr.mxu0 %v951
    %3760 = vmatpush1.msra.mxu0 %v950
    %3761 = vmatprep.subr.mxu0 %v947
    %3762 = vmatpush1.msra.mxu0 %v946
    %3763 = vmatprep.subr.mxu0 %v943
    %3764 = vmatpush1.msra.mxu0 %v942
    %3765 = vmatprep.subr.mxu0 %v939
    %3766 = vmatpush1.msra.mxu0 %v938
    %3767 = vmatprep.subr.mxu0 %v935
    %3768 = vmatpush1.msra.mxu0 %v934
    %3769 = vmatprep.subr.mxu0 %v931
    %3770 = vmatpush1.msra.mxu0 %v930
    %3771 = vmatprep.subr.mxu0 %v927
    %3772 = vmatpush1.msra.mxu0 %v926
    %3773 = vmatprep.subr.mxu0 %v923
    %3774 = vmatpush1.msra.mxu0 %v922
    %3775 = vmatprep.subr.mxu0 %v919
    %3776 = vmatpush1.msra.mxu0 %v918
    %3777 = vmatprep.subr.mxu0 %v915
    %3778 = vmatpush1.msra.mxu0 %v914
    %3779 = vmatprep.subr.mxu0 %v911
    %3780 = vmatpush1.msra.mxu0 %v910
    %3781 = vmatprep.subr.mxu0 %v907
    %3782 = vmatpush1.msra.mxu0 %v906
    %3783 = vmatprep.subr.mxu0 %v903
    %3784 = vmatpush1.msra.mxu0 %v902
    %3785 = vmatprep.subr.mxu0 %v899
    %3786 = vmatpush1.msra.mxu0 %v898
    %3787 = vmatprep.subr.mxu0 0.0
    %3788 = vmatpush2.msra.mxu0 0.0
    %3789 = vmatprep.subr.mxu0 0.0
    %3790 = vmatpush2.msra.mxu0 0.0
    %3791 = vmatprep.subr.mxu0 0.0
    %3792 = vmatpush2.msra.mxu0 0.0
    %3793 = vmatprep.subr.mxu0 0.0
    %3794 = vmatpush2.msra.mxu0 0.0
    %3795 = vmatprep.subr.mxu0 0.0
    %3796 = vmatpush2.msra.mxu0 0.0
    %3797 = vmatprep.subr.mxu0 0.0
    %3798 = vmatpush2.msra.mxu0 0.0
    %3799 = vmatprep.subr.mxu0 0.0
    %3800 = vmatpush2.msra.mxu0 0.0
    %3801 = vmatprep.subr.mxu0 0.0
    %3802 = vmatpush2.msra.mxu0 0.0
    %3803 = vmatprep.subr.mxu0 0.0
    %3804 = vmatpush2.msra.mxu0 0.0
    %3805 = vmatprep.subr.mxu0 0.0
    %3806 = vmatpush2.msra.mxu0 0.0
    %3807 = vmatprep.subr.mxu0 0.0
    %3808 = vmatpush2.msra.mxu0 0.0
    %3809 = vmatprep.subr.mxu0 0.0
    %3810 = vmatpush2.msra.mxu0 0.0
    %3811 = vmatprep.subr.mxu0 0.0
    %3812 = vmatpush2.msra.mxu0 0.0
    %3813 = vmatprep.subr.mxu0 0.0
    %3814 = vmatpush2.msra.mxu0 0.0
    %3815 = vmatprep.subr.mxu0 0.0
    %3816 = vmatpush2.msra.mxu0 0.0
    %3817 = vmatprep.subr.mxu0 0.0
    %3818 = vmatpush2.msra.mxu0 0.0
    %3819 = vmatprep.mubr.f32.mxu0 0.0
    %3820 = vmatmul.mubr.f32.gmra.mxu0 %v3682
    %v3821 = vpop.f32.mrf.mxu0
    %v3822 = vadd.f32 0.0, %v3821
    %v3823 = vpop.f32.mrf.mxu0
    %v3824 = vadd.f32 0.0, %v3823
    %3825 = vdwg.mxu0
    %v3830 = vrot.slane %v3751, 4
    %v3831 = vrot.slane %v3753, 4
    %v3832 = vrot.slane %v3822, 4
    %v3833 = vrot.slane %v3824, 4
    %v3838 = vadd.f32 %v733, %v3830
    %v3839 = vadd.f32 %v735, %v3831
    %v3840 = vadd.f32 %v816, %v3832
    %v3841 = vadd.f32 %v818, %v3833
    %v3842 = vxor.u32 %v3677, 2147483648
    %v3843 = vmul.f32 %v3842, 1.442695
    %v3844 = vpow.pop %v3843
    %v3845 = vadd.f32 %v3844, 1.0
    %v3846 = vrcp.pop %v3845
    %v3847 = vmul.f32 1.0, %v3846
    %v3848 = vxor.u32 %v3678, 2147483648
    %v3849 = vmul.f32 %v3848, 1.442695
    %v3850 = vpow.pop %v3849
    %v3851 = vadd.f32 %v3850, 1.0
    %v3852 = vrcp.pop %v3851
    %v3853 = vmul.f32 1.0, %v3852
    %v3854 = vtanh.pop %v3679
    %v3855 = vxor.u32 %v3680, 2147483648
    %v3856 = vmul.f32 %v3855, 1.442695
    %v3857 = vpow.pop %v3856
    %v3858 = vadd.f32 %v3857, 1.0
    %v3859 = vrcp.pop %v3858
    %v3860 = vmul.f32 1.0, %v3859
    %v3862 = vrot.slane %v3490, 6
    %v3864 = vmul.f32 %v3853, %v3862
    %v3865 = vmul.f32 %v3847, %v3854
    %v3866 = vadd.f32 %v3864, %v3865
    %v3867 = vtanh.pop %v3866
    %v3868 = vmul.f32 %v3860, %v3867
    %v3869 = vxor.u32 %v3838, 2147483648
    %v3870 = vmul.f32 %v3869, 1.442695
    %v3871 = vpow.pop %v3870
    %v3872 = vadd.f32 %v3871, 1.0
    %v3873 = vrcp.pop %v3872
    %v3874 = vmul.f32 1.0, %v3873
    %v3875 = vxor.u32 %v3839, 2147483648
    %v3876 = vmul.f32 %v3875, 1.442695
    %v3877 = vpow.pop %v3876
    %v3878 = vadd.f32 %v3877, 1.0
    %v3879 = vrcp.pop %v3878
    %v3880 = vmul.f32 1.0, %v3879
    %v3881 = vtanh.pop %v3840
    %v3882 = vxor.u32 %v3841, 2147483648
    %v3883 = vmul.f32 %v3882, 1.442695
    %v3884 = vpow.pop %v3883
    %v3885 = vadd.f32 %v3884, 1.0
    %v3886 = vrcp.pop %v3885
    %v3887 = vmul.f32 1.0, %v3886
    %v3889 = vrot.slane %v3517, 2
    %v3891 = vmul.f32 %v3880, %v3889
    %v3892 = vmul.f32 %v3874, %v3881
    %v3893 = vadd.f32 %v3891, %v3892
    %v3894 = vtanh.pop %v3893
    %v3895 = vmul.f32 %v3887, %v3894
    %v3897 = vrot.slane %v3868, 6
    %3899 = vmatprep.subr.mxu0 %v893
    %3900 = vmatpush1.msra.mxu0 %v892
    %3901 = vmatprep.subr.mxu0 %v889
    %3902 = vmatpush1.msra.mxu0 %v888
    %3903 = vmatprep.subr.mxu0 %v885
    %3904 = vmatpush1.msra.mxu0 %v884
    %3905 = vmatprep.subr.mxu0 %v881
    %3906 = vmatpush1.msra.mxu0 %v880
    %3907 = vmatprep.subr.mxu0 %v877
    %3908 = vmatpush1.msra.mxu0 %v876
    %3909 = vmatprep.subr.mxu0 %v873
    %3910 = vmatpush1.msra.mxu0 %v872
    %3911 = vmatprep.subr.mxu0 %v869
    %3912 = vmatpush1.msra.mxu0 %v868
    %3913 = vmatprep.subr.mxu0 %v865
    %3914 = vmatpush1.msra.mxu0 %v864
    %3915 = vmatprep.subr.mxu0 %v861
    %3916 = vmatpush1.msra.mxu0 %v860
    %3917 = vmatprep.subr.mxu0 %v857
    %3918 = vmatpush1.msra.mxu0 %v856
    %3919 = vmatprep.subr.mxu0 %v853
    %3920 = vmatpush1.msra.mxu0 %v852
    %3921 = vmatprep.subr.mxu0 %v849
    %3922 = vmatpush1.msra.mxu0 %v848
    %3923 = vmatprep.subr.mxu0 %v845
    %3924 = vmatpush1.msra.mxu0 %v844
    %3925 = vmatprep.subr.mxu0 %v841
    %3926 = vmatpush1.msra.mxu0 %v840
    %3927 = vmatprep.subr.mxu0 %v837
    %3928 = vmatpush1.msra.mxu0 %v836
    %3929 = vmatprep.subr.mxu0 %v833
    %3930 = vmatpush1.msra.mxu0 %v832
    %3931 = vmatprep.subr.mxu0 0.0
    %3932 = vmatpush2.msra.mxu0 0.0
    %3933 = vmatprep.subr.mxu0 0.0
    %3934 = vmatpush2.msra.mxu0 0.0
    %3935 = vmatprep.subr.mxu0 0.0
    %3936 = vmatpush2.msra.mxu0 0.0
    %3937 = vmatprep.subr.mxu0 0.0
    %3938 = vmatpush2.msra.mxu0 0.0
    %3939 = vmatprep.subr.mxu0 0.0
    %3940 = vmatpush2.msra.mxu0 0.0
    %3941 = vmatprep.subr.mxu0 0.0
    %3942 = vmatpush2.msra.mxu0 0.0
    %3943 = vmatprep.subr.mxu0 0.0
    %3944 = vmatpush2.msra.mxu0 0.0
    %3945 = vmatprep.subr.mxu0 0.0
    %3946 = vmatpush2.msra.mxu0 0.0
    %3947 = vmatprep.subr.mxu0 0.0
    %3948 = vmatpush2.msra.mxu0 0.0
    %3949 = vmatprep.subr.mxu0 0.0
    %3950 = vmatpush2.msra.mxu0 0.0
    %3951 = vmatprep.subr.mxu0 0.0
    %3952 = vmatpush2.msra.mxu0 0.0
    %3953 = vmatprep.subr.mxu0 0.0
    %3954 = vmatpush2.msra.mxu0 0.0
    %3955 = vmatprep.subr.mxu0 0.0
    %3956 = vmatpush2.msra.mxu0 0.0
    %3957 = vmatprep.subr.mxu0 0.0
    %3958 = vmatpush2.msra.mxu0 0.0
    %3959 = vmatprep.subr.mxu0 0.0
    %3960 = vmatpush2.msra.mxu0 0.0
    %3961 = vmatprep.subr.mxu0 0.0
    %3962 = vmatpush2.msra.mxu0 0.0
    %3963 = vmatprep.mubr.f32.mxu0 0.0
    %3964 = vmatmul.mubr.f32.gmra.mxu0 %v3897
    %v3965 = vpop.f32.mrf.mxu0
    %v3966 = vadd.f32 0.0, %v3965
    %v3967 = vpop.f32.mrf.mxu0
    %v3968 = vadd.f32 0.0, %v3967
    %3969 = vdwg.mxu0
    %3970 = vmatprep.subr.mxu0 %v895
    %3971 = vmatpush1.msra.mxu0 %v894
    %3972 = vmatprep.subr.mxu0 %v891
    %3973 = vmatpush1.msra.mxu0 %v890
    %3974 = vmatprep.subr.mxu0 %v887
    %3975 = vmatpush1.msra.mxu0 %v886
    %3976 = vmatprep.subr.mxu0 %v883
    %3977 = vmatpush1.msra.mxu0 %v882
    %3978 = vmatprep.subr.mxu0 %v879
    %3979 = vmatpush1.msra.mxu0 %v878
    %3980 = vmatprep.subr.mxu0 %v875
    %3981 = vmatpush1.msra.mxu0 %v874
    %3982 = vmatprep.subr.mxu0 %v871
    %3983 = vmatpush1.msra.mxu0 %v870
    %3984 = vmatprep.subr.mxu0 %v867
    %3985 = vmatpush1.msra.mxu0 %v866
    %3986 = vmatprep.subr.mxu0 %v863
    %3987 = vmatpush1.msra.mxu0 %v862
    %3988 = vmatprep.subr.mxu0 %v859
    %3989 = vmatpush1.msra.mxu0 %v858
    %3990 = vmatprep.subr.mxu0 %v855
    %3991 = vmatpush1.msra.mxu0 %v854
    %3992 = vmatprep.subr.mxu0 %v851
    %3993 = vmatpush1.msra.mxu0 %v850
    %3994 = vmatprep.subr.mxu0 %v847
    %3995 = vmatpush1.msra.mxu0 %v846
    %3996 = vmatprep.subr.mxu0 %v843
    %3997 = vmatpush1.msra.mxu0 %v842
    %3998 = vmatprep.subr.mxu0 %v839
    %3999 = vmatpush1.msra.mxu0 %v838
    %4000 = vmatprep.subr.mxu0 %v835
    %4001 = vmatpush1.msra.mxu0 %v834
    %4002 = vmatprep.subr.mxu0 0.0
    %4003 = vmatpush2.msra.mxu0 0.0
    %4004 = vmatprep.subr.mxu0 0.0
    %4005 = vmatpush2.msra.mxu0 0.0
    %4006 = vmatprep.subr.mxu0 0.0
    %4007 = vmatpush2.msra.mxu0 0.0
    %4008 = vmatprep.subr.mxu0 0.0
    %4009 = vmatpush2.msra.mxu0 0.0
    %4010 = vmatprep.subr.mxu0 0.0
    %4011 = vmatpush2.msra.mxu0 0.0
    %4012 = vmatprep.subr.mxu0 0.0
    %4013 = vmatpush2.msra.mxu0 0.0
    %4014 = vmatprep.subr.mxu0 0.0
    %4015 = vmatpush2.msra.mxu0 0.0
    %4016 = vmatprep.subr.mxu0 0.0
    %4017 = vmatpush2.msra.mxu0 0.0
    %4018 = vmatprep.subr.mxu0 0.0
    %4019 = vmatpush2.msra.mxu0 0.0
    %4020 = vmatprep.subr.mxu0 0.0
    %4021 = vmatpush2.msra.mxu0 0.0
    %4022 = vmatprep.subr.mxu0 0.0
    %4023 = vmatpush2.msra.mxu0 0.0
    %4024 = vmatprep.subr.mxu0 0.0
    %4025 = vmatpush2.msra.mxu0 0.0
    %4026 = vmatprep.subr.mxu0 0.0
    %4027 = vmatpush2.msra.mxu0 0.0
    %4028 = vmatprep.subr.mxu0 0.0
    %4029 = vmatpush2.msra.mxu0 0.0
    %4030 = vmatprep.subr.mxu0 0.0
    %4031 = vmatpush2.msra.mxu0 0.0
    %4032 = vmatprep.subr.mxu0 0.0
    %4033 = vmatpush2.msra.mxu0 0.0
    %4034 = vmatprep.mubr.f32.mxu0 0.0
    %4035 = vmatmul.mubr.f32.gmra.mxu0 %v3897
    %v4036 = vpop.f32.mrf.mxu0
    %v4037 = vadd.f32 0.0, %v4036
    %v4038 = vpop.f32.mrf.mxu0
    %v4039 = vadd.f32 0.0, %v4038
    %4040 = vdwg.mxu0
    %v4041 = vadd.f32 %v579, %v3966
    %v4042 = vadd.f32 %v581, %v3968
    %v4043 = vadd.f32 %v662, %v4037
    %v4044 = vadd.f32 %v664, %v4039
    %v4046 = vrot.slane %v3895, 4
    %4048 = vmatprep.subr.mxu0 %v957
    %4049 = vmatpush1.msra.mxu0 %v956
    %4050 = vmatprep.subr.mxu0 %v953
    %4051 = vmatpush1.msra.mxu0 %v952
    %4052 = vmatprep.subr.mxu0 %v949
    %4053 = vmatpush1.msra.mxu0 %v948
    %4054 = vmatprep.subr.mxu0 %v945
    %4055 = vmatpush1.msra.mxu0 %v944
    %4056 = vmatprep.subr.mxu0 %v941
    %4057 = vmatpush1.msra.mxu0 %v940
    %4058 = vmatprep.subr.mxu0 %v937
    %4059 = vmatpush1.msra.mxu0 %v936
    %4060 = vmatprep.subr.mxu0 %v933
    %4061 = vmatpush1.msra.mxu0 %v932
    %4062 = vmatprep.subr.mxu0 %v929
    %4063 = vmatpush1.msra.mxu0 %v928
    %4064 = vmatprep.subr.mxu0 %v925
    %4065 = vmatpush1.msra.mxu0 %v924
    %4066 = vmatprep.subr.mxu0 %v921
    %4067 = vmatpush1.msra.mxu0 %v920
    %4068 = vmatprep.subr.mxu0 %v917
    %4069 = vmatpush1.msra.mxu0 %v916
    %4070 = vmatprep.subr.mxu0 %v913
    %4071 = vmatpush1.msra.mxu0 %v912
    %4072 = vmatprep.subr.mxu0 %v909
    %4073 = vmatpush1.msra.mxu0 %v908
    %4074 = vmatprep.subr.mxu0 %v905
    %4075 = vmatpush1.msra.mxu0 %v904
    %4076 = vmatprep.subr.mxu0 %v901
    %4077 = vmatpush1.msra.mxu0 %v900
    %4078 = vmatprep.subr.mxu0 %v897
    %4079 = vmatpush1.msra.mxu0 %v896
    %4080 = vmatprep.subr.mxu0 0.0
    %4081 = vmatpush2.msra.mxu0 0.0
    %4082 = vmatprep.subr.mxu0 0.0
    %4083 = vmatpush2.msra.mxu0 0.0
    %4084 = vmatprep.subr.mxu0 0.0
    %4085 = vmatpush2.msra.mxu0 0.0
    %4086 = vmatprep.subr.mxu0 0.0
    %4087 = vmatpush2.msra.mxu0 0.0
    %4088 = vmatprep.subr.mxu0 0.0
    %4089 = vmatpush2.msra.mxu0 0.0
    %4090 = vmatprep.subr.mxu0 0.0
    %4091 = vmatpush2.msra.mxu0 0.0
    %4092 = vmatprep.subr.mxu0 0.0
    %4093 = vmatpush2.msra.mxu0 0.0
    %4094 = vmatprep.subr.mxu0 0.0
    %4095 = vmatpush2.msra.mxu0 0.0
    %4096 = vmatprep.subr.mxu0 0.0
    %4097 = vmatpush2.msra.mxu0 0.0
    %4098 = vmatprep.subr.mxu0 0.0
    %4099 = vmatpush2.msra.mxu0 0.0
    %4100 = vmatprep.subr.mxu0 0.0
    %4101 = vmatpush2.msra.mxu0 0.0
    %4102 = vmatprep.subr.mxu0 0.0
    %4103 = vmatpush2.msra.mxu0 0.0
    %4104 = vmatprep.subr.mxu0 0.0
    %4105 = vmatpush2.msra.mxu0 0.0
    %4106 = vmatprep.subr.mxu0 0.0
    %4107 = vmatpush2.msra.mxu0 0.0
    %4108 = vmatprep.subr.mxu0 0.0
    %4109 = vmatpush2.msra.mxu0 0.0
    %4110 = vmatprep.subr.mxu0 0.0
    %4111 = vmatpush2.msra.mxu0 0.0
    %4112 = vmatprep.mubr.f32.mxu0 0.0
    %4113 = vmatmul.mubr.f32.gmra.mxu0 %v4046
    %v4114 = vpop.f32.mrf.mxu0
    %v4115 = vadd.f32 0.0, %v4114
    %v4116 = vpop.f32.mrf.mxu0
    %v4117 = vadd.f32 0.0, %v4116
    %4118 = vdwg.mxu0
    %4119 = vmatprep.subr.mxu0 %v959
    %4120 = vmatpush1.msra.mxu0 %v958
    %4121 = vmatprep.subr.mxu0 %v955
    %4122 = vmatpush1.msra.mxu0 %v954
    %4123 = vmatprep.subr.mxu0 %v951
    %4124 = vmatpush1.msra.mxu0 %v950
    %4125 = vmatprep.subr.mxu0 %v947
    %4126 = vmatpush1.msra.mxu0 %v946
    %4127 = vmatprep.subr.mxu0 %v943
    %4128 = vmatpush1.msra.mxu0 %v942
    %4129 = vmatprep.subr.mxu0 %v939
    %4130 = vmatpush1.msra.mxu0 %v938
    %4131 = vmatprep.subr.mxu0 %v935
    %4132 = vmatpush1.msra.mxu0 %v934
    %4133 = vmatprep.subr.mxu0 %v931
    %4134 = vmatpush1.msra.mxu0 %v930
    %4135 = vmatprep.subr.mxu0 %v927
    %4136 = vmatpush1.msra.mxu0 %v926
    %4137 = vmatprep.subr.mxu0 %v923
    %4138 = vmatpush1.msra.mxu0 %v922
    %4139 = vmatprep.subr.mxu0 %v919
    %4140 = vmatpush1.msra.mxu0 %v918
    %4141 = vmatprep.subr.mxu0 %v915
    %4142 = vmatpush1.msra.mxu0 %v914
    %4143 = vmatprep.subr.mxu0 %v911
    %4144 = vmatpush1.msra.mxu0 %v910
    %4145 = vmatprep.subr.mxu0 %v907
    %4146 = vmatpush1.msra.mxu0 %v906
    %4147 = vmatprep.subr.mxu0 %v903
    %4148 = vmatpush1.msra.mxu0 %v902
    %4149 = vmatprep.subr.mxu0 %v899
    %4150 = vmatpush1.msra.mxu0 %v898
    %4151 = vmatprep.subr.mxu0 0.0
    %4152 = vmatpush2.msra.mxu0 0.0
    %4153 = vmatprep.subr.mxu0 0.0
    %4154 = vmatpush2.msra.mxu0 0.0
    %4155 = vmatprep.subr.mxu0 0.0
    %4156 = vmatpush2.msra.mxu0 0.0
    %4157 = vmatprep.subr.mxu0 0.0
    %4158 = vmatpush2.msra.mxu0 0.0
    %4159 = vmatprep.subr.mxu0 0.0
    %4160 = vmatpush2.msra.mxu0 0.0
    %4161 = vmatprep.subr.mxu0 0.0
    %4162 = vmatpush2.msra.mxu0 0.0
    %4163 = vmatprep.subr.mxu0 0.0
    %4164 = vmatpush2.msra.mxu0 0.0
    %4165 = vmatprep.subr.mxu0 0.0
    %4166 = vmatpush2.msra.mxu0 0.0
    %4167 = vmatprep.subr.mxu0 0.0
    %4168 = vmatpush2.msra.mxu0 0.0
    %4169 = vmatprep.subr.mxu0 0.0
    %4170 = vmatpush2.msra.mxu0 0.0
    %4171 = vmatprep.subr.mxu0 0.0
    %4172 = vmatpush2.msra.mxu0 0.0
    %4173 = vmatprep.subr.mxu0 0.0
    %4174 = vmatpush2.msra.mxu0 0.0
    %4175 = vmatprep.subr.mxu0 0.0
    %4176 = vmatpush2.msra.mxu0 0.0
    %4177 = vmatprep.subr.mxu0 0.0
    %4178 = vmatpush2.msra.mxu0 0.0
    %4179 = vmatprep.subr.mxu0 0.0
    %4180 = vmatpush2.msra.mxu0 0.0
    %4181 = vmatprep.subr.mxu0 0.0
    %4182 = vmatpush2.msra.mxu0 0.0
    %4183 = vmatprep.mubr.f32.mxu0 0.0
    %4184 = vmatmul.mubr.f32.gmra.mxu0 %v4046
    %v4185 = vpop.f32.mrf.mxu0
    %v4186 = vadd.f32 0.0, %v4185
    %v4187 = vpop.f32.mrf.mxu0
    %v4188 = vadd.f32 0.0, %v4187
    %4189 = vdwg.mxu0
    %v4194 = vrot.slane %v4115, 6
    %v4195 = vrot.slane %v4117, 6
    %v4196 = vrot.slane %v4186, 6
    %v4197 = vrot.slane %v4188, 6
    %v4202 = vadd.f32 %v733, %v4194
    %v4203 = vadd.f32 %v735, %v4195
    %v4204 = vadd.f32 %v816, %v4196
    %v4205 = vadd.f32 %v818, %v4197
    %v4206 = vxor.u32 %v4041, 2147483648
    %v4207 = vmul.f32 %v4206, 1.442695
    %v4208 = vpow.pop %v4207
    %v4209 = vadd.f32 %v4208, 1.0
    %v4210 = vrcp.pop %v4209
    %v4211 = vmul.f32 1.0, %v4210
    %v4212 = vxor.u32 %v4042, 2147483648
    %v4213 = vmul.f32 %v4212, 1.442695
    %v4214 = vpow.pop %v4213
    %v4215 = vadd.f32 %v4214, 1.0
    %v4216 = vrcp.pop %v4215
    %v4217 = vmul.f32 1.0, %v4216
    %v4218 = vtanh.pop %v4043
    %v4219 = vxor.u32 %v4044, 2147483648
    %v4220 = vmul.f32 %v4219, 1.442695
    %v4221 = vpow.pop %v4220
    %v4222 = vadd.f32 %v4221, 1.0
    %v4223 = vrcp.pop %v4222
    %v4224 = vmul.f32 1.0, %v4223
    %v4226 = vrot.slane %v3866, 6
    %v4228 = vmul.f32 %v4217, %v4226
    %v4229 = vmul.f32 %v4211, %v4218
    %v4230 = vadd.f32 %v4228, %v4229
    %v4231 = vtanh.pop %v4230
    %v4232 = vmul.f32 %v4224, %v4231
    %v4233 = vxor.u32 %v4202, 2147483648
    %v4234 = vmul.f32 %v4233, 1.442695
    %v4235 = vpow.pop %v4234
    %v4236 = vadd.f32 %v4235, 1.0
    %v4237 = vrcp.pop %v4236
    %v4238 = vmul.f32 1.0, %v4237
    %v4239 = vxor.u32 %v4203, 2147483648
    %v4240 = vmul.f32 %v4239, 1.442695
    %v4241 = vpow.pop %v4240
    %v4242 = vadd.f32 %v4241, 1.0
    %v4243 = vrcp.pop %v4242
    %v4244 = vmul.f32 1.0, %v4243
    %v4245 = vtanh.pop %v4204
    %v4246 = vxor.u32 %v4205, 2147483648
    %v4247 = vmul.f32 %v4246, 1.442695
    %v4248 = vpow.pop %v4247
    %v4249 = vadd.f32 %v4248, 1.0
    %v4250 = vrcp.pop %v4249
    %v4251 = vmul.f32 1.0, %v4250
    %v4253 = vrot.slane %v3893, 2
    %v4255 = vmul.f32 %v4244, %v4253
    %v4256 = vmul.f32 %v4238, %v4245
    %v4257 = vadd.f32 %v4255, %v4256
    %v4258 = vtanh.pop %v4257
    %v4259 = vmul.f32 %v4251, %v4258
    %4260 = vmatprep.subr.mxu0 %v893
    %4261 = vmatpush1.msra.mxu0 %v892
    %4262 = vmatprep.subr.mxu0 %v889
    %4263 = vmatpush1.msra.mxu0 %v888
    %4264 = vmatprep.subr.mxu0 %v885
    %4265 = vmatpush1.msra.mxu0 %v884
    %4266 = vmatprep.subr.mxu0 %v881
    %4267 = vmatpush1.msra.mxu0 %v880
    %4268 = vmatprep.subr.mxu0 %v877
    %4269 = vmatpush1.msra.mxu0 %v876
    %4270 = vmatprep.subr.mxu0 %v873
    %4271 = vmatpush1.msra.mxu0 %v872
    %4272 = vmatprep.subr.mxu0 %v869
    %4273 = vmatpush1.msra.mxu0 %v868
    %4274 = vmatprep.subr.mxu0 %v865
    %4275 = vmatpush1.msra.mxu0 %v864
    %4276 = vmatprep.subr.mxu0 %v861
    %4277 = vmatpush1.msra.mxu0 %v860
    %4278 = vmatprep.subr.mxu0 %v857
    %4279 = vmatpush1.msra.mxu0 %v856
    %4280 = vmatprep.subr.mxu0 %v853
    %4281 = vmatpush1.msra.mxu0 %v852
    %4282 = vmatprep.subr.mxu0 %v849
    %4283 = vmatpush1.msra.mxu0 %v848
    %4284 = vmatprep.subr.mxu0 %v845
    %4285 = vmatpush1.msra.mxu0 %v844
    %4286 = vmatprep.subr.mxu0 %v841
    %4287 = vmatpush1.msra.mxu0 %v840
    %4288 = vmatprep.subr.mxu0 %v837
    %4289 = vmatpush1.msra.mxu0 %v836
    %4290 = vmatprep.subr.mxu0 %v833
    %4291 = vmatpush1.msra.mxu0 %v832
    %4292 = vmatprep.subr.mxu0 0.0
    %4293 = vmatpush2.msra.mxu0 0.0
    %4294 = vmatprep.subr.mxu0 0.0
    %4295 = vmatpush2.msra.mxu0 0.0
    %4296 = vmatprep.subr.mxu0 0.0
    %4297 = vmatpush2.msra.mxu0 0.0
    %4298 = vmatprep.subr.mxu0 0.0
    %4299 = vmatpush2.msra.mxu0 0.0
    %4300 = vmatprep.subr.mxu0 0.0
    %4301 = vmatpush2.msra.mxu0 0.0
    %4302 = vmatprep.subr.mxu0 0.0
    %4303 = vmatpush2.msra.mxu0 0.0
    %4304 = vmatprep.subr.mxu0 0.0
    %4305 = vmatpush2.msra.mxu0 0.0
    %4306 = vmatprep.subr.mxu0 0.0
    %4307 = vmatpush2.msra.mxu0 0.0
    %4308 = vmatprep.subr.mxu0 0.0
    %4309 = vmatpush2.msra.mxu0 0.0
    %4310 = vmatprep.subr.mxu0 0.0
    %4311 = vmatpush2.msra.mxu0 0.0
    %4312 = vmatprep.subr.mxu0 0.0
    %4313 = vmatpush2.msra.mxu0 0.0
    %4314 = vmatprep.subr.mxu0 0.0
    %4315 = vmatpush2.msra.mxu0 0.0
    %4316 = vmatprep.subr.mxu0 0.0
    %4317 = vmatpush2.msra.mxu0 0.0
    %4318 = vmatprep.subr.mxu0 0.0
    %4319 = vmatpush2.msra.mxu0 0.0
    %4320 = vmatprep.subr.mxu0 0.0
    %4321 = vmatpush2.msra.mxu0 0.0
    %4322 = vmatprep.subr.mxu0 0.0
    %4323 = vmatpush2.msra.mxu0 0.0
    %4324 = vmatprep.mubr.f32.mxu0 0.0
    %4325 = vmatmul.mubr.f32.gmra.mxu0 %v4232
    %v4326 = vpop.f32.mrf.mxu0
    %v4327 = vadd.f32 0.0, %v4326
    %v4328 = vpop.f32.mrf.mxu0
    %v4329 = vadd.f32 0.0, %v4328
    %4330 = vdwg.mxu0
    %4331 = vmatprep.subr.mxu0 %v895
    %4332 = vmatpush1.msra.mxu0 %v894
    %4333 = vmatprep.subr.mxu0 %v891
    %4334 = vmatpush1.msra.mxu0 %v890
    %4335 = vmatprep.subr.mxu0 %v887
    %4336 = vmatpush1.msra.mxu0 %v886
    %4337 = vmatprep.subr.mxu0 %v883
    %4338 = vmatpush1.msra.mxu0 %v882
    %4339 = vmatprep.subr.mxu0 %v879
    %4340 = vmatpush1.msra.mxu0 %v878
    %4341 = vmatprep.subr.mxu0 %v875
    %4342 = vmatpush1.msra.mxu0 %v874
    %4343 = vmatprep.subr.mxu0 %v871
    %4344 = vmatpush1.msra.mxu0 %v870
    %4345 = vmatprep.subr.mxu0 %v867
    %4346 = vmatpush1.msra.mxu0 %v866
    %4347 = vmatprep.subr.mxu0 %v863
    %4348 = vmatpush1.msra.mxu0 %v862
    %4349 = vmatprep.subr.mxu0 %v859
    %4350 = vmatpush1.msra.mxu0 %v858
    %4351 = vmatprep.subr.mxu0 %v855
    %4352 = vmatpush1.msra.mxu0 %v854
    %4353 = vmatprep.subr.mxu0 %v851
    %4354 = vmatpush1.msra.mxu0 %v850
    %4355 = vmatprep.subr.mxu0 %v847
    %4356 = vmatpush1.msra.mxu0 %v846
    %4357 = vmatprep.subr.mxu0 %v843
    %4358 = vmatpush1.msra.mxu0 %v842
    %4359 = vmatprep.subr.mxu0 %v839
    %4360 = vmatpush1.msra.mxu0 %v838
    %4361 = vmatprep.subr.mxu0 %v835
    %4362 = vmatpush1.msra.mxu0 %v834
    %4363 = vmatprep.subr.mxu0 0.0
    %4364 = vmatpush2.msra.mxu0 0.0
    %4365 = vmatprep.subr.mxu0 0.0
    %4366 = vmatpush2.msra.mxu0 0.0
    %4367 = vmatprep.subr.mxu0 0.0
    %4368 = vmatpush2.msra.mxu0 0.0
    %4369 = vmatprep.subr.mxu0 0.0
    %4370 = vmatpush2.msra.mxu0 0.0
    %4371 = vmatprep.subr.mxu0 0.0
    %4372 = vmatpush2.msra.mxu0 0.0
    %4373 = vmatprep.subr.mxu0 0.0
    %4374 = vmatpush2.msra.mxu0 0.0
    %4375 = vmatprep.subr.mxu0 0.0
    %4376 = vmatpush2.msra.mxu0 0.0
    %4377 = vmatprep.subr.mxu0 0.0
    %4378 = vmatpush2.msra.mxu0 0.0
    %4379 = vmatprep.subr.mxu0 0.0
    %4380 = vmatpush2.msra.mxu0 0.0
    %4381 = vmatprep.subr.mxu0 0.0
    %4382 = vmatpush2.msra.mxu0 0.0
    %4383 = vmatprep.subr.mxu0 0.0
    %4384 = vmatpush2.msra.mxu0 0.0
    %4385 = vmatprep.subr.mxu0 0.0
    %4386 = vmatpush2.msra.mxu0 0.0
    %4387 = vmatprep.subr.mxu0 0.0
    %4388 = vmatpush2.msra.mxu0 0.0
    %4389 = vmatprep.subr.mxu0 0.0
    %4390 = vmatpush2.msra.mxu0 0.0
    %4391 = vmatprep.subr.mxu0 0.0
    %4392 = vmatpush2.msra.mxu0 0.0
    %4393 = vmatprep.subr.mxu0 0.0
    %4394 = vmatpush2.msra.mxu0 0.0
    %4395 = vmatprep.mubr.f32.mxu0 0.0
    %4396 = vmatmul.mubr.f32.gmra.mxu0 %v4232
    %v4397 = vpop.f32.mrf.mxu0
    %v4398 = vadd.f32 0.0, %v4397
    %v4399 = vpop.f32.mrf.mxu0
    %v4400 = vadd.f32 0.0, %v4399
    %4401 = vdwg.mxu0
    %v4406 = vrot.slane %v4327, 6
    %v4407 = vrot.slane %v4329, 6
    %v4408 = vrot.slane %v4398, 6
    %v4409 = vrot.slane %v4400, 6
    %v4414 = vadd.f32 %v579, %v4406
    %v4415 = vadd.f32 %v581, %v4407
    %v4416 = vadd.f32 %v662, %v4408
    %v4417 = vadd.f32 %v664, %v4409
    %v4419 = vrot.slane %v4259, 2
    %4421 = vmatprep.subr.mxu0 %v957
    %4422 = vmatpush1.msra.mxu0 %v956
    %4423 = vmatprep.subr.mxu0 %v953
    %4424 = vmatpush1.msra.mxu0 %v952
    %4425 = vmatprep.subr.mxu0 %v949
    %4426 = vmatpush1.msra.mxu0 %v948
    %4427 = vmatprep.subr.mxu0 %v945
    %4428 = vmatpush1.msra.mxu0 %v944
    %4429 = vmatprep.subr.mxu0 %v941
    %4430 = vmatpush1.msra.mxu0 %v940
    %4431 = vmatprep.subr.mxu0 %v937
    %4432 = vmatpush1.msra.mxu0 %v936
    %4433 = vmatprep.subr.mxu0 %v933
    %4434 = vmatpush1.msra.mxu0 %v932
    %4435 = vmatprep.subr.mxu0 %v929
    %4436 = vmatpush1.msra.mxu0 %v928
    %4437 = vmatprep.subr.mxu0 %v925
    %4438 = vmatpush1.msra.mxu0 %v924
    %4439 = vmatprep.subr.mxu0 %v921
    %4440 = vmatpush1.msra.mxu0 %v920
    %4441 = vmatprep.subr.mxu0 %v917
    %4442 = vmatpush1.msra.mxu0 %v916
    %4443 = vmatprep.subr.mxu0 %v913
    %4444 = vmatpush1.msra.mxu0 %v912
    %4445 = vmatprep.subr.mxu0 %v909
    %4446 = vmatpush1.msra.mxu0 %v908
    %4447 = vmatprep.subr.mxu0 %v905
    %4448 = vmatpush1.msra.mxu0 %v904
    %4449 = vmatprep.subr.mxu0 %v901
    %4450 = vmatpush1.msra.mxu0 %v900
    %4451 = vmatprep.subr.mxu0 %v897
    %4452 = vmatpush1.msra.mxu0 %v896
    %4453 = vmatprep.subr.mxu0 0.0
    %4454 = vmatpush2.msra.mxu0 0.0
    %4455 = vmatprep.subr.mxu0 0.0
    %4456 = vmatpush2.msra.mxu0 0.0
    %4457 = vmatprep.subr.mxu0 0.0
    %4458 = vmatpush2.msra.mxu0 0.0
    %4459 = vmatprep.subr.mxu0 0.0
    %4460 = vmatpush2.msra.mxu0 0.0
    %4461 = vmatprep.subr.mxu0 0.0
    %4462 = vmatpush2.msra.mxu0 0.0
    %4463 = vmatprep.subr.mxu0 0.0
    %4464 = vmatpush2.msra.mxu0 0.0
    %4465 = vmatprep.subr.mxu0 0.0
    %4466 = vmatpush2.msra.mxu0 0.0
    %4467 = vmatprep.subr.mxu0 0.0
    %4468 = vmatpush2.msra.mxu0 0.0
    %4469 = vmatprep.subr.mxu0 0.0
    %4470 = vmatpush2.msra.mxu0 0.0
    %4471 = vmatprep.subr.mxu0 0.0
    %4472 = vmatpush2.msra.mxu0 0.0
    %4473 = vmatprep.subr.mxu0 0.0
    %4474 = vmatpush2.msra.mxu0 0.0
    %4475 = vmatprep.subr.mxu0 0.0
    %4476 = vmatpush2.msra.mxu0 0.0
    %4477 = vmatprep.subr.mxu0 0.0
    %4478 = vmatpush2.msra.mxu0 0.0
    %4479 = vmatprep.subr.mxu0 0.0
    %4480 = vmatpush2.msra.mxu0 0.0
    %4481 = vmatprep.subr.mxu0 0.0
    %4482 = vmatpush2.msra.mxu0 0.0
    %4483 = vmatprep.subr.mxu0 0.0
    %4484 = vmatpush2.msra.mxu0 0.0
    %4485 = vmatprep.mubr.f32.mxu0 0.0
    %4486 = vmatmul.mubr.f32.gmra.mxu0 %v4419
    %v4487 = vpop.f32.mrf.mxu0
    %v4488 = vadd.f32 0.0, %v4487
    %v4489 = vpop.f32.mrf.mxu0
    %v4490 = vadd.f32 0.0, %v4489
    %4491 = vdwg.mxu0
    %4492 = vmatprep.subr.mxu0 %v959
    %4493 = vmatpush1.msra.mxu0 %v958
    %4494 = vmatprep.subr.mxu0 %v955
    %4495 = vmatpush1.msra.mxu0 %v954
    %4496 = vmatprep.subr.mxu0 %v951
    %4497 = vmatpush1.msra.mxu0 %v950
    %4498 = vmatprep.subr.mxu0 %v947
    %4499 = vmatpush1.msra.mxu0 %v946
    %4500 = vmatprep.subr.mxu0 %v943
    %4501 = vmatpush1.msra.mxu0 %v942
    %4502 = vmatprep.subr.mxu0 %v939
    %4503 = vmatpush1.msra.mxu0 %v938
    %4504 = vmatprep.subr.mxu0 %v935
    %4505 = vmatpush1.msra.mxu0 %v934
    %4506 = vmatprep.subr.mxu0 %v931
    %4507 = vmatpush1.msra.mxu0 %v930
    %4508 = vmatprep.subr.mxu0 %v927
    %4509 = vmatpush1.msra.mxu0 %v926
    %4510 = vmatprep.subr.mxu0 %v923
    %4511 = vmatpush1.msra.mxu0 %v922
    %4512 = vmatprep.subr.mxu0 %v919
    %4513 = vmatpush1.msra.mxu0 %v918
    %4514 = vmatprep.subr.mxu0 %v915
    %4515 = vmatpush1.msra.mxu0 %v914
    %4516 = vmatprep.subr.mxu0 %v911
    %4517 = vmatpush1.msra.mxu0 %v910
    %4518 = vmatprep.subr.mxu0 %v907
    %4519 = vmatpush1.msra.mxu0 %v906
    %4520 = vmatprep.subr.mxu0 %v903
    %4521 = vmatpush1.msra.mxu0 %v902
    %4522 = vmatprep.subr.mxu0 %v899
    %4523 = vmatpush1.msra.mxu0 %v898
    %4524 = vmatprep.subr.mxu0 0.0
    %4525 = vmatpush2.msra.mxu0 0.0
    %4526 = vmatprep.subr.mxu0 0.0
    %4527 = vmatpush2.msra.mxu0 0.0
    %4528 = vmatprep.subr.mxu0 0.0
    %4529 = vmatpush2.msra.mxu0 0.0
    %4530 = vmatprep.subr.mxu0 0.0
    %4531 = vmatpush2.msra.mxu0 0.0
    %4532 = vmatprep.subr.mxu0 0.0
    %4533 = vmatpush2.msra.mxu0 0.0
    %4534 = vmatprep.subr.mxu0 0.0
    %4535 = vmatpush2.msra.mxu0 0.0
    %4536 = vmatprep.subr.mxu0 0.0
    %4537 = vmatpush2.msra.mxu0 0.0
    %4538 = vmatprep.subr.mxu0 0.0
    %4539 = vmatpush2.msra.mxu0 0.0
    %4540 = vmatprep.subr.mxu0 0.0
    %4541 = vmatpush2.msra.mxu0 0.0
    %4542 = vmatprep.subr.mxu0 0.0
    %4543 = vmatpush2.msra.mxu0 0.0
    %4544 = vmatprep.subr.mxu0 0.0
    %4545 = vmatpush2.msra.mxu0 0.0
    %4546 = vmatprep.subr.mxu0 0.0
    %4547 = vmatpush2.msra.mxu0 0.0
    %4548 = vmatprep.subr.mxu0 0.0
    %4549 = vmatpush2.msra.mxu0 0.0
    %4550 = vmatprep.subr.mxu0 0.0
    %4551 = vmatpush2.msra.mxu0 0.0
    %4552 = vmatprep.subr.mxu0 0.0
    %4553 = vmatpush2.msra.mxu0 0.0
    %4554 = vmatprep.subr.mxu0 0.0
    %4555 = vmatpush2.msra.mxu0 0.0
    %4556 = vmatprep.mubr.f32.mxu0 0.0
    %4557 = vmatmul.mubr.f32.gmra.mxu0 %v4419
    %v4558 = vpop.f32.mrf.mxu0
    %v4559 = vadd.f32 0.0, %v4558
    %v4560 = vpop.f32.mrf.mxu0
    %v4561 = vadd.f32 0.0, %v4560
    %4562 = vdwg.mxu0
    %v4563 = vadd.f32 %v733, %v4488
    %v4564 = vadd.f32 %v735, %v4490
    %v4565 = vadd.f32 %v816, %v4559
    %v4566 = vadd.f32 %v818, %v4561
    %v4567 = vxor.u32 %v4414, 2147483648
    %v4568 = vmul.f32 %v4567, 1.442695
    %v4569 = vpow.pop %v4568
    %v4570 = vadd.f32 %v4569, 1.0
    %v4571 = vrcp.pop %v4570
    %v4572 = vmul.f32 1.0, %v4571
    %v4573 = vxor.u32 %v4415, 2147483648
    %v4574 = vmul.f32 %v4573, 1.442695
    %v4575 = vpow.pop %v4574
    %v4576 = vadd.f32 %v4575, 1.0
    %v4577 = vrcp.pop %v4576
    %v4578 = vmul.f32 1.0, %v4577
    %v4579 = vtanh.pop %v4416
    %v4580 = vxor.u32 %v4417, 2147483648
    %v4581 = vmul.f32 %v4580, 1.442695
    %v4582 = vpow.pop %v4581
    %v4583 = vadd.f32 %v4582, 1.0
    %v4584 = vrcp.pop %v4583
    %v4585 = vmul.f32 1.0, %v4584
    %v4587 = vrot.slane %v4230, 6
    %v4589 = vmul.f32 %v4578, %v4587
    %v4590 = vmul.f32 %v4572, %v4579
    %v4591 = vadd.f32 %v4589, %v4590
    %v4592 = vtanh.pop %v4591
    %v4593 = vmul.f32 %v4585, %v4592
    %v4594 = vxor.u32 %v4563, 2147483648
    %v4595 = vmul.f32 %v4594, 1.442695
    %v4596 = vpow.pop %v4595
    %v4597 = vadd.f32 %v4596, 1.0
    %v4598 = vrcp.pop %v4597
    %v4599 = vmul.f32 1.0, %v4598
    %v4600 = vxor.u32 %v4564, 2147483648
    %v4601 = vmul.f32 %v4600, 1.442695
    %v4602 = vpow.pop %v4601
    %v4603 = vadd.f32 %v4602, 1.0
    %v4604 = vrcp.pop %v4603
    %v4605 = vmul.f32 1.0, %v4604
    %v4606 = vtanh.pop %v4565
    %v4607 = vxor.u32 %v4566, 2147483648
    %v4608 = vmul.f32 %v4607, 1.442695
    %v4609 = vpow.pop %v4608
    %v4610 = vadd.f32 %v4609, 1.0
    %v4611 = vrcp.pop %v4610
    %v4612 = vmul.f32 1.0, %v4611
    %v4614 = vrot.slane %v4257, 2
    %v4616 = vmul.f32 %v4605, %v4614
    %v4617 = vmul.f32 %v4599, %v4606
    %v4618 = vadd.f32 %v4616, %v4617
    %v4619 = vtanh.pop %v4618
    %v4620 = vmul.f32 %v4612, %v4619
    %vm4621 = vcmask 1041408
    %v4622 = vsel %vm4621, %v1287, %v1645
    %v4623 = vsel %vm4621, %v4620, %v4259
    %vm4624 = vcmask 1043456
    %v4625 = vsel %vm4624, %v4622, %v2018
    %v4626 = vsel %vm4624, %v4623, %v3895
    %vm4627 = vcmask 1045504
    %v4628 = vsel %vm4627, %v4625, %v2394
    %v4629 = vsel %vm4627, %v4626, %v3519
    %v4630 = vsel %vm4621, %v2758, %v3119
    %v4631 = vsel %vm4621, %v3146, %v2785
    %v4632 = vsel %vm4624, %v4630, %v3492
    %v4633 = vsel %vm4624, %v4631, %v2421
    %v4634 = vsel %vm4627, %v4632, %v3868
    %v4635 = vsel %vm4627, %v4633, %v2045
    %v4636 = vsel %vm4621, %v4232, %v4593
    %v4637 = vsel %vm4621, %v1672, %v1311
    %v4638 = vld [vmem:[#allocation8] sm:$0xff]
    %v4639 = vld [vmem:[#allocation8 + $0x8] sm:$0xff]
    %v4640 = vld [vmem:[#allocation8 + $0x10] sm:$0xff]
    %v4641 = vld [vmem:[#allocation8 + $0x18] sm:$0xff]
    %v4642 = vld [vmem:[#allocation8 + $0x20] sm:$0xff]
    %v4643 = vld [vmem:[#allocation8 + $0x28] sm:$0xff]
    %v4644 = vld [vmem:[#allocation8 + $0x30] sm:$0xff]
    %v4645 = vld [vmem:[#allocation8 + $0x38] sm:$0xff]
    %v4646 = vld [vmem:[#allocation8 + $0x40] sm:$0xff]
    %v4647 = vld [vmem:[#allocation8 + $0x48] sm:$0xff]
    %v4648 = vld [vmem:[#allocation8 + $0x50] sm:$0xff]
    %v4649 = vld [vmem:[#allocation8 + $0x58] sm:$0xff]
    %v4650 = vld [vmem:[#allocation8 + $0x60] sm:$0xff]
    %v4651 = vld [vmem:[#allocation8 + $0x68] sm:$0xff]
    %v4652 = vld [vmem:[#allocation8 + $0x70] sm:$0xff]
    %v4653 = vld [vmem:[#allocation8 + $0x78] sm:$0xff]
    %v4654 = vld [vmem:[#allocation8 + $0x80] sm:$0xff]
    %v4655 = vld [vmem:[#allocation8 + $0x88] sm:$0xff]
    %v4656 = vld [vmem:[#allocation8 + $0x90] sm:$0xff]
    %v4657 = vld [vmem:[#allocation8 + $0x98] sm:$0xff]
    %v4658 = vld [vmem:[#allocation8 + $0xa0] sm:$0xff]
    %v4659 = vld [vmem:[#allocation8 + $0xa8] sm:$0xff]
    %v4660 = vld [vmem:[#allocation8 + $0xb0] sm:$0xff]
    %v4661 = vld [vmem:[#allocation8 + $0xb8] sm:$0xff]
    %v4662 = vld [vmem:[#allocation8 + $0xc0] sm:$0xff]
    %v4663 = vld [vmem:[#allocation8 + $0xc8] sm:$0xff]
    %v4664 = vld [vmem:[#allocation8 + $0xd0] sm:$0xff]
    %v4665 = vld [vmem:[#allocation8 + $0xd8] sm:$0xff]
    %v4666 = vld [vmem:[#allocation8 + $0xe0] sm:$0xff]
    %v4667 = vld [vmem:[#allocation8 + $0xe8] sm:$0xff]
    %v4668 = vld [vmem:[#allocation8 + $0xf0] sm:$0xff]
    %v4669 = vld [vmem:[#allocation8 + $0xf8] sm:$0xff]
    %v4670 = vld [vmem:[#allocation8 + $0x100] sm:$0xff]
    %v4671 = vld [vmem:[#allocation8 + $0x108] sm:$0xff]
    %v4672 = vld [vmem:[#allocation8 + $0x110] sm:$0xff]
    %v4673 = vld [vmem:[#allocation8 + $0x118] sm:$0xff]
    %v4674 = vld [vmem:[#allocation8 + $0x120] sm:$0xff]
    %v4675 = vld [vmem:[#allocation8 + $0x128] sm:$0xff]
    %v4676 = vld [vmem:[#allocation8 + $0x130] sm:$0xff]
    %v4677 = vld [vmem:[#allocation8 + $0x138] sm:$0xff]
    %v4678 = vld [vmem:[#allocation8 + $0x140] sm:$0xff]
    %v4679 = vld [vmem:[#allocation8 + $0x148] sm:$0xff]
    %v4680 = vld [vmem:[#allocation8 + $0x150] sm:$0xff]
    %v4681 = vld [vmem:[#allocation8 + $0x158] sm:$0xff]
    %v4682 = vld [vmem:[#allocation8 + $0x160] sm:$0xff]
    %v4683 = vld [vmem:[#allocation8 + $0x168] sm:$0xff]
    %v4684 = vld [vmem:[#allocation8 + $0x170] sm:$0xff]
    %v4685 = vld [vmem:[#allocation8 + $0x178] sm:$0xff]
    %v4686 = vld [vmem:[#allocation8 + $0x180] sm:$0xff]
    %v4687 = vld [vmem:[#allocation8 + $0x188] sm:$0xff]
    %v4688 = vld [vmem:[#allocation8 + $0x190] sm:$0xff]
    %v4689 = vld [vmem:[#allocation8 + $0x198] sm:$0xff]
    %v4690 = vld [vmem:[#allocation8 + $0x1a0] sm:$0xff]
    %v4691 = vld [vmem:[#allocation8 + $0x1a8] sm:$0xff]
    %v4692 = vld [vmem:[#allocation8 + $0x1b0] sm:$0xff]
    %v4693 = vld [vmem:[#allocation8 + $0x1b8] sm:$0xff]
    %v4694 = vld [vmem:[#allocation8 + $0x1c0] sm:$0xff]
    %v4695 = vld [vmem:[#allocation8 + $0x1c8] sm:$0xff]
    %v4696 = vld [vmem:[#allocation8 + $0x1d0] sm:$0xff]
    %v4697 = vld [vmem:[#allocation8 + $0x1d8] sm:$0xff]
    %v4698 = vld [vmem:[#allocation8 + $0x1e0] sm:$0xff]
    %v4699 = vld [vmem:[#allocation8 + $0x1e8] sm:$0xff]
    %v4700 = vld [vmem:[#allocation8 + $0x1f0] sm:$0xff]
    %v4701 = vld [vmem:[#allocation8 + $0x1f8] sm:$0xff]
    %v4702 = vld [vmem:[#allocation8 + $0x200] sm:$0xff]
    %v4703 = vld [vmem:[#allocation8 + $0x208] sm:$0xff]
    %v4704 = vld [vmem:[#allocation8 + $0x210] sm:$0xff]
    %v4705 = vld [vmem:[#allocation8 + $0x218] sm:$0xff]
    %v4706 = vld [vmem:[#allocation8 + $0x220] sm:$0xff]
    %v4707 = vld [vmem:[#allocation8 + $0x228] sm:$0xff]
    %v4708 = vld [vmem:[#allocation8 + $0x230] sm:$0xff]
    %v4709 = vld [vmem:[#allocation8 + $0x238] sm:$0xff]
    %v4710 = vld [vmem:[#allocation8 + $0x240] sm:$0xff]
    %v4711 = vld [vmem:[#allocation8 + $0x248] sm:$0xff]
    %v4712 = vld [vmem:[#allocation8 + $0x250] sm:$0xff]
    %v4713 = vld [vmem:[#allocation8 + $0x258] sm:$0xff]
    %v4714 = vld [vmem:[#allocation8 + $0x260] sm:$0xff]
    %v4715 = vld [vmem:[#allocation8 + $0x268] sm:$0xff]
    %v4716 = vld [vmem:[#allocation8 + $0x270] sm:$0xff]
    %v4717 = vld [vmem:[#allocation8 + $0x278] sm:$0xff]
    %v4718 = vld [vmem:[#allocation8 + $0x280] sm:$0xff]
    %v4719 = vld [vmem:[#allocation8 + $0x288] sm:$0xff]
    %v4720 = vld [vmem:[#allocation8 + $0x290] sm:$0xff]
    %v4721 = vld [vmem:[#allocation8 + $0x298] sm:$0xff]
    %v4722 = vld [vmem:[#allocation8 + $0x2a0] sm:$0xff]
    %v4723 = vld [vmem:[#allocation8 + $0x2a8] sm:$0xff]
    %v4724 = vld [vmem:[#allocation8 + $0x2b0] sm:$0xff]
    %v4725 = vld [vmem:[#allocation8 + $0x2b8] sm:$0xff]
    %v4726 = vld [vmem:[#allocation8 + $0x2c0] sm:$0xff]
    %v4727 = vld [vmem:[#allocation8 + $0x2c8] sm:$0xff]
    %v4728 = vld [vmem:[#allocation8 + $0x2d0] sm:$0xff]
    %v4729 = vld [vmem:[#allocation8 + $0x2d8] sm:$0xff]
    %v4730 = vld [vmem:[#allocation8 + $0x2e0] sm:$0xff]
    %v4731 = vld [vmem:[#allocation8 + $0x2e8] sm:$0xff]
    %v4732 = vld [vmem:[#allocation8 + $0x2f0] sm:$0xff]
    %v4733 = vld [vmem:[#allocation8 + $0x2f8] sm:$0xff]
    %v4734 = vld [vmem:[#allocation8 + $0x300] sm:$0xff]
    %v4735 = vld [vmem:[#allocation8 + $0x308] sm:$0xff]
    %v4736 = vld [vmem:[#allocation8 + $0x310] sm:$0xff]
    %v4737 = vld [vmem:[#allocation8 + $0x318] sm:$0xff]
    %v4738 = vld [vmem:[#allocation8 + $0x320] sm:$0xff]
    %v4739 = vld [vmem:[#allocation8 + $0x328] sm:$0xff]
    %v4740 = vld [vmem:[#allocation8 + $0x330] sm:$0xff]
    %v4741 = vld [vmem:[#allocation8 + $0x338] sm:$0xff]
    %v4742 = vld [vmem:[#allocation8 + $0x340] sm:$0xff]
    %v4743 = vld [vmem:[#allocation8 + $0x348] sm:$0xff]
    %v4744 = vld [vmem:[#allocation8 + $0x350] sm:$0xff]
    %v4745 = vld [vmem:[#allocation8 + $0x358] sm:$0xff]
    %v4746 = vld [vmem:[#allocation8 + $0x360] sm:$0xff]
    %v4747 = vld [vmem:[#allocation8 + $0x368] sm:$0xff]
    %v4748 = vld [vmem:[#allocation8 + $0x370] sm:$0xff]
    %v4749 = vld [vmem:[#allocation8 + $0x378] sm:$0xff]
    %v4750 = vld [vmem:[#allocation8 + $0x380] sm:$0xff]
    %v4751 = vld [vmem:[#allocation8 + $0x388] sm:$0xff]
    %v4752 = vld [vmem:[#allocation8 + $0x390] sm:$0xff]
    %v4753 = vld [vmem:[#allocation8 + $0x398] sm:$0xff]
    %v4754 = vld [vmem:[#allocation8 + $0x3a0] sm:$0xff]
    %v4755 = vld [vmem:[#allocation8 + $0x3a8] sm:$0xff]
    %v4756 = vld [vmem:[#allocation8 + $0x3b0] sm:$0xff]
    %v4757 = vld [vmem:[#allocation8 + $0x3b8] sm:$0xff]
    %v4758 = vld [vmem:[#allocation8 + $0x3c0] sm:$0xff]
    %v4759 = vld [vmem:[#allocation8 + $0x3c8] sm:$0xff]
    %v4760 = vld [vmem:[#allocation8 + $0x3d0] sm:$0xff]
    %v4761 = vld [vmem:[#allocation8 + $0x3d8] sm:$0xff]
    %v4762 = vld [vmem:[#allocation8 + $0x3e0] sm:$0xff]
    %v4763 = vld [vmem:[#allocation8 + $0x3e8] sm:$0xff]
    %v4764 = vld [vmem:[#allocation8 + $0x3f0] sm:$0xff]
    %v4765 = vld [vmem:[#allocation8 + $0x3f8] sm:$0xff]
    %v4766 = vld [vmem:[#allocation8 + $0x400] sm:$0xff]
    %v4767 = vld [vmem:[#allocation8 + $0x408] sm:$0xff]
    %v4768 = vld [vmem:[#allocation8 + $0x410] sm:$0xff]
    %v4769 = vld [vmem:[#allocation8 + $0x418] sm:$0xff]
    %v4770 = vld [vmem:[#allocation8 + $0x420] sm:$0xff]
    %v4771 = vld [vmem:[#allocation8 + $0x428] sm:$0xff]
    %v4772 = vld [vmem:[#allocation8 + $0x430] sm:$0xff]
    %v4773 = vld [vmem:[#allocation8 + $0x438] sm:$0xff]
    %v4774 = vld [vmem:[#allocation8 + $0x440] sm:$0xff]
    %v4775 = vld [vmem:[#allocation8 + $0x448] sm:$0xff]
    %v4776 = vld [vmem:[#allocation8 + $0x450] sm:$0xff]
    %v4777 = vld [vmem:[#allocation8 + $0x458] sm:$0xff]
    %v4778 = vld [vmem:[#allocation8 + $0x460] sm:$0xff]
    %v4779 = vld [vmem:[#allocation8 + $0x468] sm:$0xff]
    %v4780 = vld [vmem:[#allocation8 + $0x470] sm:$0xff]
    %v4781 = vld [vmem:[#allocation8 + $0x478] sm:$0xff]
    %v4782 = vld [vmem:[#allocation8 + $0x480] sm:$0xff]
    %v4783 = vld [vmem:[#allocation8 + $0x488] sm:$0xff]
    %v4784 = vld [vmem:[#allocation8 + $0x490] sm:$0xff]
    %v4785 = vld [vmem:[#allocation8 + $0x498] sm:$0xff]
    %v4786 = vld [vmem:[#allocation8 + $0x4a0] sm:$0xff]
    %v4787 = vld [vmem:[#allocation8 + $0x4a8] sm:$0xff]
    %v4788 = vld [vmem:[#allocation8 + $0x4b0] sm:$0xff]
    %v4789 = vld [vmem:[#allocation8 + $0x4b8] sm:$0xff]
    %v4790 = vld [vmem:[#allocation8 + $0x4c0] sm:$0xff]
    %v4791 = vld [vmem:[#allocation8 + $0x4c8] sm:$0xff]
    %v4792 = vld [vmem:[#allocation8 + $0x4d0] sm:$0xff]
    %v4793 = vld [vmem:[#allocation8 + $0x4d8] sm:$0xff]
    %v4794 = vld [vmem:[#allocation8 + $0x4e0] sm:$0xff]
    %v4795 = vld [vmem:[#allocation8 + $0x4e8] sm:$0xff]
    %v4796 = vld [vmem:[#allocation8 + $0x4f0] sm:$0xff]
    %v4797 = vld [vmem:[#allocation8 + $0x4f8] sm:$0xff]
    %v4798 = vld [vmem:[#allocation8 + $0x500] sm:$0xff]
    %v4799 = vld [vmem:[#allocation8 + $0x508] sm:$0xff]
    %v4800 = vld [vmem:[#allocation8 + $0x510] sm:$0xff]
    %v4801 = vld [vmem:[#allocation8 + $0x518] sm:$0xff]
    %v4802 = vld [vmem:[#allocation8 + $0x520] sm:$0xff]
    %v4803 = vld [vmem:[#allocation8 + $0x528] sm:$0xff]
    %v4804 = vld [vmem:[#allocation8 + $0x530] sm:$0xff]
    %v4805 = vld [vmem:[#allocation8 + $0x538] sm:$0xff]
    %v4806 = vld [vmem:[#allocation8 + $0x540] sm:$0xff]
    %v4807 = vld [vmem:[#allocation8 + $0x548] sm:$0xff]
    %v4808 = vld [vmem:[#allocation8 + $0x550] sm:$0xff]
    %v4809 = vld [vmem:[#allocation8 + $0x558] sm:$0xff]
    %v4810 = vld [vmem:[#allocation8 + $0x560] sm:$0xff]
    %v4811 = vld [vmem:[#allocation8 + $0x568] sm:$0xff]
    %v4812 = vld [vmem:[#allocation8 + $0x570] sm:$0xff]
    %v4813 = vld [vmem:[#allocation8 + $0x578] sm:$0xff]
    %v4814 = vld [vmem:[#allocation8 + $0x580] sm:$0xff]
    %v4815 = vld [vmem:[#allocation8 + $0x588] sm:$0xff]
    %v4816 = vld [vmem:[#allocation8 + $0x590] sm:$0xff]
    %v4817 = vld [vmem:[#allocation8 + $0x598] sm:$0xff]
    %v4818 = vld [vmem:[#allocation8 + $0x5a0] sm:$0xff]
    %v4819 = vld [vmem:[#allocation8 + $0x5a8] sm:$0xff]
    %v4820 = vld [vmem:[#allocation8 + $0x5b0] sm:$0xff]
    %v4821 = vld [vmem:[#allocation8 + $0x5b8] sm:$0xff]
    %v4822 = vld [vmem:[#allocation8 + $0x5c0] sm:$0xff]
    %v4823 = vld [vmem:[#allocation8 + $0x5c8] sm:$0xff]
    %v4824 = vld [vmem:[#allocation8 + $0x5d0] sm:$0xff]
    %v4825 = vld [vmem:[#allocation8 + $0x5d8] sm:$0xff]
    %v4826 = vld [vmem:[#allocation8 + $0x5e0] sm:$0xff]
    %v4827 = vld [vmem:[#allocation8 + $0x5e8] sm:$0xff]
    %v4828 = vld [vmem:[#allocation8 + $0x5f0] sm:$0xff]
    %v4829 = vld [vmem:[#allocation8 + $0x5f8] sm:$0xff]
    %v4830 = vld [vmem:[#allocation8 + $0x600] sm:$0xff]
    %v4831 = vld [vmem:[#allocation8 + $0x608] sm:$0xff]
    %v4832 = vld [vmem:[#allocation8 + $0x610] sm:$0xff]
    %v4833 = vld [vmem:[#allocation8 + $0x618] sm:$0xff]
    %v4834 = vld [vmem:[#allocation8 + $0x620] sm:$0xff]
    %v4835 = vld [vmem:[#allocation8 + $0x628] sm:$0xff]
    %v4836 = vld [vmem:[#allocation8 + $0x630] sm:$0xff]
    %v4837 = vld [vmem:[#allocation8 + $0x638] sm:$0xff]
    %v4838 = vld [vmem:[#allocation8 + $0x640] sm:$0xff]
    %v4839 = vld [vmem:[#allocation8 + $0x648] sm:$0xff]
    %v4840 = vld [vmem:[#allocation8 + $0x650] sm:$0xff]
    %v4841 = vld [vmem:[#allocation8 + $0x658] sm:$0xff]
    %v4842 = vld [vmem:[#allocation8 + $0x660] sm:$0xff]
    %v4843 = vld [vmem:[#allocation8 + $0x668] sm:$0xff]
    %v4844 = vld [vmem:[#allocation8 + $0x670] sm:$0xff]
    %v4845 = vld [vmem:[#allocation8 + $0x678] sm:$0xff]
    %v4846 = vld [vmem:[#allocation8 + $0x680] sm:$0xff]
    %v4847 = vld [vmem:[#allocation8 + $0x688] sm:$0xff]
    %v4848 = vld [vmem:[#allocation8 + $0x690] sm:$0xff]
    %v4849 = vld [vmem:[#allocation8 + $0x698] sm:$0xff]
    %v4850 = vld [vmem:[#allocation8 + $0x6a0] sm:$0xff]
    %v4851 = vld [vmem:[#allocation8 + $0x6a8] sm:$0xff]
    %v4852 = vld [vmem:[#allocation8 + $0x6b0] sm:$0xff]
    %v4853 = vld [vmem:[#allocation8 + $0x6b8] sm:$0xff]
    %v4854 = vld [vmem:[#allocation8 + $0x6c0] sm:$0xff]
    %v4855 = vld [vmem:[#allocation8 + $0x6c8] sm:$0xff]
    %v4856 = vld [vmem:[#allocation8 + $0x6d0] sm:$0xff]
    %v4857 = vld [vmem:[#allocation8 + $0x6d8] sm:$0xff]
    %v4858 = vld [vmem:[#allocation8 + $0x6e0] sm:$0xff]
    %v4859 = vld [vmem:[#allocation8 + $0x6e8] sm:$0xff]
    %v4860 = vld [vmem:[#allocation8 + $0x6f0] sm:$0xff]
    %v4861 = vld [vmem:[#allocation8 + $0x6f8] sm:$0xff]
    %v4862 = vld [vmem:[#allocation8 + $0x700] sm:$0xff]
    %v4863 = vld [vmem:[#allocation8 + $0x708] sm:$0xff]
    %v4864 = vld [vmem:[#allocation8 + $0x710] sm:$0xff]
    %v4865 = vld [vmem:[#allocation8 + $0x718] sm:$0xff]
    %v4866 = vld [vmem:[#allocation8 + $0x720] sm:$0xff]
    %v4867 = vld [vmem:[#allocation8 + $0x728] sm:$0xff]
    %v4868 = vld [vmem:[#allocation8 + $0x730] sm:$0xff]
    %v4869 = vld [vmem:[#allocation8 + $0x738] sm:$0xff]
    %v4870 = vld [vmem:[#allocation8 + $0x740] sm:$0xff]
    %v4871 = vld [vmem:[#allocation8 + $0x748] sm:$0xff]
    %v4872 = vld [vmem:[#allocation8 + $0x750] sm:$0xff]
    %v4873 = vld [vmem:[#allocation8 + $0x758] sm:$0xff]
    %v4874 = vld [vmem:[#allocation8 + $0x760] sm:$0xff]
    %v4875 = vld [vmem:[#allocation8 + $0x768] sm:$0xff]
    %v4876 = vld [vmem:[#allocation8 + $0x770] sm:$0xff]
    %v4877 = vld [vmem:[#allocation8 + $0x778] sm:$0xff]
    %v4878 = vld [vmem:[#allocation8 + $0x780] sm:$0xff]
    %v4879 = vld [vmem:[#allocation8 + $0x788] sm:$0xff]
    %v4880 = vld [vmem:[#allocation8 + $0x790] sm:$0xff]
    %v4881 = vld [vmem:[#allocation8 + $0x798] sm:$0xff]
    %v4882 = vld [vmem:[#allocation8 + $0x7a0] sm:$0xff]
    %v4883 = vld [vmem:[#allocation8 + $0x7a8] sm:$0xff]
    %v4884 = vld [vmem:[#allocation8 + $0x7b0] sm:$0xff]
    %v4885 = vld [vmem:[#allocation8 + $0x7b8] sm:$0xff]
    %v4886 = vld [vmem:[#allocation8 + $0x7c0] sm:$0xff]
    %v4887 = vld [vmem:[#allocation8 + $0x7c8] sm:$0xff]
    %v4888 = vld [vmem:[#allocation8 + $0x7d0] sm:$0xff]
    %v4889 = vld [vmem:[#allocation8 + $0x7d8] sm:$0xff]
    %v4890 = vld [vmem:[#allocation8 + $0x7e0] sm:$0xff]
    %v4891 = vld [vmem:[#allocation8 + $0x7e8] sm:$0xff]
    %v4892 = vld [vmem:[#allocation8 + $0x7f0] sm:$0xff]
    %v4893 = vld [vmem:[#allocation8 + $0x7f8] sm:$0xff]
    %v4894 = vld [vmem:[%s10] sm:$0xff]
    %v4896 = vlaneseq
    %v4897 = vshrl.u32 %v4896, 7
    %v4898 = vsub.s32 0, %v4897
    %v4899 = vrot.slane %v4894, %v4898
    %v4900 = vlaneseq
    %v4901 = vshrl.u32 %v4900, 7
    %v4902 = vsub.s32 1, %v4901
    %v4903 = vrot.slane %v4894, %v4902
    %v4904 = vlaneseq
    %v4905 = vshrl.u32 %v4904, 7
    %v4906 = vsub.s32 2, %v4905
    %v4907 = vrot.slane %v4894, %v4906
    %v4908 = vlaneseq
    %v4909 = vshrl.u32 %v4908, 7
    %v4910 = vsub.s32 3, %v4909
    %v4911 = vrot.slane %v4894, %v4910
    %v4912 = vlaneseq
    %v4913 = vshrl.u32 %v4912, 7
    %v4914 = vsub.s32 4, %v4913
    %v4915 = vrot.slane %v4894, %v4914
    %v4916 = vlaneseq
    %v4917 = vshrl.u32 %v4916, 7
    %v4918 = vsub.s32 5, %v4917
    %v4919 = vrot.slane %v4894, %v4918
    %v4920 = vlaneseq
    %v4921 = vshrl.u32 %v4920, 7
    %v4922 = vsub.s32 6, %v4921
    %v4923 = vrot.slane %v4894, %v4922
    %v4924 = vlaneseq
    %v4925 = vshrl.u32 %v4924, 7
    %v4926 = vsub.s32 7, %v4925
    %v4927 = vrot.slane %v4894, %v4926
    %4936 = vmatprep.subr.mxu0 %v4759
    %4937 = vmatpush1.msra.mxu0 %v4758
    %4938 = vmatprep.subr.mxu0 %v4751
    %4939 = vmatpush1.msra.mxu0 %v4750
    %4940 = vmatprep.subr.mxu0 %v4743
    %4941 = vmatpush1.msra.mxu0 %v4742
    %4942 = vmatprep.subr.mxu0 %v4735
    %4943 = vmatpush1.msra.mxu0 %v4734
    %4944 = vmatprep.subr.mxu0 %v4727
    %4945 = vmatpush1.msra.mxu0 %v4726
    %4946 = vmatprep.subr.mxu0 %v4719
    %4947 = vmatpush1.msra.mxu0 %v4718
    %4948 = vmatprep.subr.mxu0 %v4711
    %4949 = vmatpush1.msra.mxu0 %v4710
    %4950 = vmatprep.subr.mxu0 %v4703
    %4951 = vmatpush1.msra.mxu0 %v4702
    %4952 = vmatprep.subr.mxu0 %v4695
    %4953 = vmatpush1.msra.mxu0 %v4694
    %4954 = vmatprep.subr.mxu0 %v4687
    %4955 = vmatpush1.msra.mxu0 %v4686
    %4956 = vmatprep.subr.mxu0 %v4679
    %4957 = vmatpush1.msra.mxu0 %v4678
    %4958 = vmatprep.subr.mxu0 %v4671
    %4959 = vmatpush1.msra.mxu0 %v4670
    %4960 = vmatprep.subr.mxu0 %v4663
    %4961 = vmatpush1.msra.mxu0 %v4662
    %4962 = vmatprep.subr.mxu0 %v4655
    %4963 = vmatpush1.msra.mxu0 %v4654
    %4964 = vmatprep.subr.mxu0 %v4647
    %4965 = vmatpush1.msra.mxu0 %v4646
    %4966 = vmatprep.subr.mxu0 %v4639
    %4967 = vmatpush1.msra.mxu0 %v4638
    %4968 = vmatprep.subr.mxu0 %v4887
    %4969 = vmatpush2.msra.mxu0 %v4886
    %4970 = vmatprep.subr.mxu0 %v4879
    %4971 = vmatpush2.msra.mxu0 %v4878
    %4972 = vmatprep.subr.mxu0 %v4871
    %4973 = vmatpush2.msra.mxu0 %v4870
    %4974 = vmatprep.subr.mxu0 %v4863
    %4975 = vmatpush2.msra.mxu0 %v4862
    %4976 = vmatprep.subr.mxu0 %v4855
    %4977 = vmatpush2.msra.mxu0 %v4854
    %4978 = vmatprep.subr.mxu0 %v4847
    %4979 = vmatpush2.msra.mxu0 %v4846
    %4980 = vmatprep.subr.mxu0 %v4839
    %4981 = vmatpush2.msra.mxu0 %v4838
    %4982 = vmatprep.subr.mxu0 %v4831
    %4983 = vmatpush2.msra.mxu0 %v4830
    %4984 = vmatprep.subr.mxu0 %v4823
    %4985 = vmatpush2.msra.mxu0 %v4822
    %4986 = vmatprep.subr.mxu0 %v4815
    %4987 = vmatpush2.msra.mxu0 %v4814
    %4988 = vmatprep.subr.mxu0 %v4807
    %4989 = vmatpush2.msra.mxu0 %v4806
    %4990 = vmatprep.subr.mxu0 %v4799
    %4991 = vmatpush2.msra.mxu0 %v4798
    %4992 = vmatprep.subr.mxu0 %v4791
    %4993 = vmatpush2.msra.mxu0 %v4790
    %4994 = vmatprep.subr.mxu0 %v4783
    %4995 = vmatpush2.msra.mxu0 %v4782
    %4996 = vmatprep.subr.mxu0 %v4775
    %4997 = vmatpush2.msra.mxu0 %v4774
    %4998 = vmatprep.subr.mxu0 %v4767
    %4999 = vmatpush2.msra.mxu0 %v4766
    %5000 = vmatprep.mubr.f32.mxu0 %v4629
    %5001 = vmatmul.mubr.f32.gmra.mxu0 %v4628
    %v5002 = vpop.f32.mrf.mxu0
    %v5003 = vadd.f32 %v4899, %v5002
    %v5004 = vpop.f32.mrf.mxu0
    %v5005 = vadd.f32 %v4903, %v5004
    %5006 = vmatprep.mubr.f32.mxu0 %v4635
    %5007 = vmatmul.mubr.f32.gmra.mxu0 %v4634
    %v5008 = vpop.f32.mrf.mxu0
    %v5009 = vadd.f32 %v4899, %v5008
    %v5010 = vpop.f32.mrf.mxu0
    %v5011 = vadd.f32 %v4903, %v5010
    %5012 = vmatprep.mubr.f32.mxu0 %v4637
    %5013 = vmatmul.mubr.f32.gmra.mxu0 %v4636
    %v5014 = vpop.f32.mrf.mxu0
    %v5015 = vadd.f32 %v4899, %v5014
    %v5016 = vpop.f32.mrf.mxu0
    %v5017 = vadd.f32 %v4903, %v5016
    %5018 = vdwg.mxu0
    %5019 = vmatprep.subr.mxu0 %v4761
    %5020 = vmatpush1.msra.mxu0 %v4760
    %5021 = vmatprep.subr.mxu0 %v4753
    %5022 = vmatpush1.msra.mxu0 %v4752
    %5023 = vmatprep.subr.mxu0 %v4745
    %5024 = vmatpush1.msra.mxu0 %v4744
    %5025 = vmatprep.subr.mxu0 %v4737
    %5026 = vmatpush1.msra.mxu0 %v4736
    %5027 = vmatprep.subr.mxu0 %v4729
    %5028 = vmatpush1.msra.mxu0 %v4728
    %5029 = vmatprep.subr.mxu0 %v4721
    %5030 = vmatpush1.msra.mxu0 %v4720
    %5031 = vmatprep.subr.mxu0 %v4713
    %5032 = vmatpush1.msra.mxu0 %v4712
    %5033 = vmatprep.subr.mxu0 %v4705
    %5034 = vmatpush1.msra.mxu0 %v4704
    %5035 = vmatprep.subr.mxu0 %v4697
    %5036 = vmatpush1.msra.mxu0 %v4696
    %5037 = vmatprep.subr.mxu0 %v4689
    %5038 = vmatpush1.msra.mxu0 %v4688
    %5039 = vmatprep.subr.mxu0 %v4681
    %5040 = vmatpush1.msra.mxu0 %v4680
    %5041 = vmatprep.subr.mxu0 %v4673
    %5042 = vmatpush1.msra.mxu0 %v4672
    %5043 = vmatprep.subr.mxu0 %v4665
    %5044 = vmatpush1.msra.mxu0 %v4664
    %5045 = vmatprep.subr.mxu0 %v4657
    %5046 = vmatpush1.msra.mxu0 %v4656
    %5047 = vmatprep.subr.mxu0 %v4649
    %5048 = vmatpush1.msra.mxu0 %v4648
    %5049 = vmatprep.subr.mxu0 %v4641
    %5050 = vmatpush1.msra.mxu0 %v4640
    %5051 = vmatprep.subr.mxu0 %v4889
    %5052 = vmatpush2.msra.mxu0 %v4888
    %5053 = vmatprep.subr.mxu0 %v4881
    %5054 = vmatpush2.msra.mxu0 %v4880
    %5055 = vmatprep.subr.mxu0 %v4873
    %5056 = vmatpush2.msra.mxu0 %v4872
    %5057 = vmatprep.subr.mxu0 %v4865
    %5058 = vmatpush2.msra.mxu0 %v4864
    %5059 = vmatprep.subr.mxu0 %v4857
    %5060 = vmatpush2.msra.mxu0 %v4856
    %5061 = vmatprep.subr.mxu0 %v4849
    %5062 = vmatpush2.msra.mxu0 %v4848
    %5063 = vmatprep.subr.mxu0 %v4841
    %5064 = vmatpush2.msra.mxu0 %v4840
    %5065 = vmatprep.subr.mxu0 %v4833
    %5066 = vmatpush2.msra.mxu0 %v4832
    %5067 = vmatprep.subr.mxu0 %v4825
    %5068 = vmatpush2.msra.mxu0 %v4824
    %5069 = vmatprep.subr.mxu0 %v4817
    %5070 = vmatpush2.msra.mxu0 %v4816
    %5071 = vmatprep.subr.mxu0 %v4809
    %5072 = vmatpush2.msra.mxu0 %v4808
    %5073 = vmatprep.subr.mxu0 %v4801
    %5074 = vmatpush2.msra.mxu0 %v4800
    %5075 = vmatprep.subr.mxu0 %v4793
    %5076 = vmatpush2.msra.mxu0 %v4792
    %5077 = vmatprep.subr.mxu0 %v4785
    %5078 = vmatpush2.msra.mxu0 %v4784
    %5079 = vmatprep.subr.mxu0 %v4777
    %5080 = vmatpush2.msra.mxu0 %v4776
    %5081 = vmatprep.subr.mxu0 %v4769
    %5082 = vmatpush2.msra.mxu0 %v4768
    %5083 = vmatprep.mubr.f32.mxu0 %v4629
    %5084 = vmatmul.mubr.f32.gmra.mxu0 %v4628
    %v5085 = vpop.f32.mrf.mxu0
    %v5086 = vadd.f32 %v4907, %v5085
    %v5087 = vpop.f32.mrf.mxu0
    %v5088 = vadd.f32 %v4911, %v5087
    %5089 = vmatprep.mubr.f32.mxu0 %v4635
    %5090 = vmatmul.mubr.f32.gmra.mxu0 %v4634
    %v5091 = vpop.f32.mrf.mxu0
    %v5092 = vadd.f32 %v4907, %v5091
    %v5093 = vpop.f32.mrf.mxu0
    %v5094 = vadd.f32 %v4911, %v5093
    %5095 = vmatprep.mubr.f32.mxu0 %v4637
    %5096 = vmatmul.mubr.f32.gmra.mxu0 %v4636
    %v5097 = vpop.f32.mrf.mxu0
    %v5098 = vadd.f32 %v4907, %v5097
    %v5099 = vpop.f32.mrf.mxu0
    %v5100 = vadd.f32 %v4911, %v5099
    %5101 = vdwg.mxu0
    %5102 = vmatprep.subr.mxu0 %v4763
    %5103 = vmatpush1.msra.mxu0 %v4762
    %5104 = vmatprep.subr.mxu0 %v4755
    %5105 = vmatpush1.msra.mxu0 %v4754
    %5106 = vmatprep.subr.mxu0 %v4747
    %5107 = vmatpush1.msra.mxu0 %v4746
    %5108 = vmatprep.subr.mxu0 %v4739
    %5109 = vmatpush1.msra.mxu0 %v4738
    %5110 = vmatprep.subr.mxu0 %v4731
    %5111 = vmatpush1.msra.mxu0 %v4730
    %5112 = vmatprep.subr.mxu0 %v4723
    %5113 = vmatpush1.msra.mxu0 %v4722
    %5114 = vmatprep.subr.mxu0 %v4715
    %5115 = vmatpush1.msra.mxu0 %v4714
    %5116 = vmatprep.subr.mxu0 %v4707
    %5117 = vmatpush1.msra.mxu0 %v4706
    %5118 = vmatprep.subr.mxu0 %v4699
    %5119 = vmatpush1.msra.mxu0 %v4698
    %5120 = vmatprep.subr.mxu0 %v4691
    %5121 = vmatpush1.msra.mxu0 %v4690
    %5122 = vmatprep.subr.mxu0 %v4683
    %5123 = vmatpush1.msra.mxu0 %v4682
    %5124 = vmatprep.subr.mxu0 %v4675
    %5125 = vmatpush1.msra.mxu0 %v4674
    %5126 = vmatprep.subr.mxu0 %v4667
    %5127 = vmatpush1.msra.mxu0 %v4666
    %5128 = vmatprep.subr.mxu0 %v4659
    %5129 = vmatpush1.msra.mxu0 %v4658
    %5130 = vmatprep.subr.mxu0 %v4651
    %5131 = vmatpush1.msra.mxu0 %v4650
    %5132 = vmatprep.subr.mxu0 %v4643
    %5133 = vmatpush1.msra.mxu0 %v4642
    %5134 = vmatprep.subr.mxu0 %v4891
    %5135 = vmatpush2.msra.mxu0 %v4890
    %5136 = vmatprep.subr.mxu0 %v4883
    %5137 = vmatpush2.msra.mxu0 %v4882
    %5138 = vmatprep.subr.mxu0 %v4875
    %5139 = vmatpush2.msra.mxu0 %v4874
    %5140 = vmatprep.subr.mxu0 %v4867
    %5141 = vmatpush2.msra.mxu0 %v4866
    %5142 = vmatprep.subr.mxu0 %v4859
    %5143 = vmatpush2.msra.mxu0 %v4858
    %5144 = vmatprep.subr.mxu0 %v4851
    %5145 = vmatpush2.msra.mxu0 %v4850
    %5146 = vmatprep.subr.mxu0 %v4843
    %5147 = vmatpush2.msra.mxu0 %v4842
    %5148 = vmatprep.subr.mxu0 %v4835
    %5149 = vmatpush2.msra.mxu0 %v4834
    %5150 = vmatprep.subr.mxu0 %v4827
    %5151 = vmatpush2.msra.mxu0 %v4826
    %5152 = vmatprep.subr.mxu0 %v4819
    %5153 = vmatpush2.msra.mxu0 %v4818
    %5154 = vmatprep.subr.mxu0 %v4811
    %5155 = vmatpush2.msra.mxu0 %v4810
    %5156 = vmatprep.subr.mxu0 %v4803
    %5157 = vmatpush2.msra.mxu0 %v4802
    %5158 = vmatprep.subr.mxu0 %v4795
    %5159 = vmatpush2.msra.mxu0 %v4794
    %5160 = vmatprep.subr.mxu0 %v4787
    %5161 = vmatpush2.msra.mxu0 %v4786
    %5162 = vmatprep.subr.mxu0 %v4779
    %5163 = vmatpush2.msra.mxu0 %v4778
    %5164 = vmatprep.subr.mxu0 %v4771
    %5165 = vmatpush2.msra.mxu0 %v4770
    %5166 = vmatprep.mubr.f32.mxu0 %v4629
    %5167 = vmatmul.mubr.f32.gmra.mxu0 %v4628
    %v5168 = vpop.f32.mrf.mxu0
    %v5169 = vpop.f32.mrf.mxu0
    %5170 = vmatprep.mubr.f32.mxu0 %v4635
    %5171 = vmatmul.mubr.f32.gmra.mxu0 %v4634
    %v5172 = vpop.f32.mrf.mxu0
    %v5173 = vpop.f32.mrf.mxu0
    %5174 = vmatprep.mubr.f32.mxu0 %v4637
    %5175 = vmatmul.mubr.f32.gmra.mxu0 %v4636
    %v5176 = vpop.f32.mrf.mxu0
    %v5177 = vadd.f32 %v4915, %v5176
    %v5178 = vpop.f32.mrf.mxu0
    %v5179 = vadd.f32 %v4919, %v5178
    %5180 = vdwg.mxu0
    %5181 = vmatprep.subr.mxu0 %v4765
    %5182 = vmatpush1.msra.mxu0 %v4764
    %5183 = vmatprep.subr.mxu0 %v4757
    %5184 = vmatpush1.msra.mxu0 %v4756
    %5185 = vmatprep.subr.mxu0 %v4749
    %5186 = vmatpush1.msra.mxu0 %v4748
    %5187 = vmatprep.subr.mxu0 %v4741
    %5188 = vmatpush1.msra.mxu0 %v4740
    %5189 = vmatprep.subr.mxu0 %v4733
    %5190 = vmatpush1.msra.mxu0 %v4732
    %5191 = vmatprep.subr.mxu0 %v4725
    %5192 = vmatpush1.msra.mxu0 %v4724
    %5193 = vmatprep.subr.mxu0 %v4717
    %5194 = vmatpush1.msra.mxu0 %v4716
    %5195 = vmatprep.subr.mxu0 %v4709
    %5196 = vmatpush1.msra.mxu0 %v4708
    %5197 = vmatprep.subr.mxu0 %v4701
    %5198 = vmatpush1.msra.mxu0 %v4700
    %5199 = vmatprep.subr.mxu0 %v4693
    %5200 = vmatpush1.msra.mxu0 %v4692
    %5201 = vmatprep.subr.mxu0 %v4685
    %5202 = vmatpush1.msra.mxu0 %v4684
    %5203 = vmatprep.subr.mxu0 %v4677
    %5204 = vmatpush1.msra.mxu0 %v4676
    %5205 = vmatprep.subr.mxu0 %v4669
    %5206 = vmatpush1.msra.mxu0 %v4668
    %5207 = vmatprep.subr.mxu0 %v4661
    %5208 = vmatpush1.msra.mxu0 %v4660
    %5209 = vmatprep.subr.mxu0 %v4653
    %5210 = vmatpush1.msra.mxu0 %v4652
    %5211 = vmatprep.subr.mxu0 %v4645
    %5212 = vmatpush1.msra.mxu0 %v4644
    %5213 = vmatprep.subr.mxu0 %v4893
    %5214 = vmatpush2.msra.mxu0 %v4892
    %5215 = vmatprep.subr.mxu0 %v4885
    %5216 = vmatpush2.msra.mxu0 %v4884
    %5217 = vmatprep.subr.mxu0 %v4877
    %5218 = vmatpush2.msra.mxu0 %v4876
    %5219 = vmatprep.subr.mxu0 %v4869
    %5220 = vmatpush2.msra.mxu0 %v4868
    %5221 = vmatprep.subr.mxu0 %v4861
    %5222 = vmatpush2.msra.mxu0 %v4860
    %5223 = vmatprep.subr.mxu0 %v4853
    %5224 = vmatpush2.msra.mxu0 %v4852
    %5225 = vmatprep.subr.mxu0 %v4845
    %5226 = vmatpush2.msra.mxu0 %v4844
    %5227 = vmatprep.subr.mxu0 %v4837
    %5228 = vmatpush2.msra.mxu0 %v4836
    %5229 = vmatprep.subr.mxu0 %v4829
    %5230 = vmatpush2.msra.mxu0 %v4828
    %5231 = vmatprep.subr.mxu0 %v4821
    %5232 = vmatpush2.msra.mxu0 %v4820
    %5233 = vmatprep.subr.mxu0 %v4813
    %5234 = vmatpush2.msra.mxu0 %v4812
    %5235 = vmatprep.subr.mxu0 %v4805
    %5236 = vmatpush2.msra.mxu0 %v4804
    %5237 = vmatprep.subr.mxu0 %v4797
    %5238 = vmatpush2.msra.mxu0 %v4796
    %5239 = vmatprep.subr.mxu0 %v4789
    %5240 = vmatpush2.msra.mxu0 %v4788
    %5241 = vmatprep.subr.mxu0 %v4781
    %5242 = vmatpush2.msra.mxu0 %v4780
    %5243 = vmatprep.subr.mxu0 %v4773
    %5244 = vmatpush2.msra.mxu0 %v4772
    %5245 = vmatprep.mubr.f32.mxu0 %v4629
    %5246 = vmatmul.mubr.f32.gmra.mxu0 %v4628
    %v5247 = vpop.f32.mrf.mxu0
    %v5248 = vpop.f32.mrf.mxu0
    %5249 = vmatprep.mubr.f32.mxu0 %v4635
    %5250 = vmatmul.mubr.f32.gmra.mxu0 %v4634
    %v5251 = vpop.f32.mrf.mxu0
    %v5252 = vpop.f32.mrf.mxu0
    %5253 = vmatprep.mubr.f32.mxu0 %v4637
    %5254 = vmatmul.mubr.f32.gmra.mxu0 %v4636
    %v5255 = vpop.f32.mrf.mxu0
    %v5256 = vadd.f32 %v4923, %v5255
    %v5257 = vpop.f32.mrf.mxu0
    %v5258 = vadd.f32 %v4927, %v5257
    %5259 = vdwg.mxu0
    %v5260 = vld [vmem:[#allocation9] sm:$0xff]
    %v5261 = vld [vmem:[#allocation9 + $0x8] sm:$0xff]
    %v5262 = vld [vmem:[#allocation9 + $0x10] sm:$0xff]
    %v5263 = vld [vmem:[#allocation9 + $0x18] sm:$0xff]
    %v5264 = vld [vmem:[#allocation9 + $0x20] sm:$0xff]
    %v5265 = vld [vmem:[#allocation9 + $0x28] sm:$0xff]
    %v5266 = vld [vmem:[#allocation9 + $0x30] sm:$0xff]
    %v5267 = vld [vmem:[#allocation9 + $0x38] sm:$0xff]
    %v5268 = vld [vmem:[#allocation9 + $0x40] sm:$0xff]
    %v5269 = vld [vmem:[#allocation9 + $0x48] sm:$0xff]
    %v5270 = vld [vmem:[#allocation9 + $0x50] sm:$0xff]
    %v5271 = vld [vmem:[#allocation9 + $0x58] sm:$0xff]
    %v5272 = vld [vmem:[#allocation9 + $0x60] sm:$0xff]
    %v5273 = vld [vmem:[#allocation9 + $0x68] sm:$0xff]
    %v5274 = vld [vmem:[#allocation9 + $0x70] sm:$0xff]
    %v5275 = vld [vmem:[#allocation9 + $0x78] sm:$0xff]
    %v5276 = vld [vmem:[#allocation9 + $0x80] sm:$0xff]
    %v5277 = vld [vmem:[#allocation9 + $0x88] sm:$0xff]
    %v5278 = vld [vmem:[#allocation9 + $0x90] sm:$0xff]
    %v5279 = vld [vmem:[#allocation9 + $0x98] sm:$0xff]
    %v5280 = vld [vmem:[#allocation9 + $0xa0] sm:$0xff]
    %v5281 = vld [vmem:[#allocation9 + $0xa8] sm:$0xff]
    %v5282 = vld [vmem:[#allocation9 + $0xb0] sm:$0xff]
    %v5283 = vld [vmem:[#allocation9 + $0xb8] sm:$0xff]
    %v5284 = vld [vmem:[#allocation9 + $0xc0] sm:$0xff]
    %v5285 = vld [vmem:[#allocation9 + $0xc8] sm:$0xff]
    %v5286 = vld [vmem:[#allocation9 + $0xd0] sm:$0xff]
    %v5287 = vld [vmem:[#allocation9 + $0xd8] sm:$0xff]
    %v5288 = vld [vmem:[#allocation9 + $0xe0] sm:$0xff]
    %v5289 = vld [vmem:[#allocation9 + $0xe8] sm:$0xff]
    %v5290 = vld [vmem:[#allocation9 + $0xf0] sm:$0xff]
    %v5291 = vld [vmem:[#allocation9 + $0xf8] sm:$0xff]
    %v5292 = vld [vmem:[#allocation9 + $0x100] sm:$0xff]
    %v5293 = vld [vmem:[#allocation9 + $0x108] sm:$0xff]
    %v5294 = vld [vmem:[#allocation9 + $0x110] sm:$0xff]
    %v5295 = vld [vmem:[#allocation9 + $0x118] sm:$0xff]
    %v5296 = vld [vmem:[#allocation9 + $0x120] sm:$0xff]
    %v5297 = vld [vmem:[#allocation9 + $0x128] sm:$0xff]
    %v5298 = vld [vmem:[#allocation9 + $0x130] sm:$0xff]
    %v5299 = vld [vmem:[#allocation9 + $0x138] sm:$0xff]
    %v5300 = vld [vmem:[#allocation9 + $0x140] sm:$0xff]
    %v5301 = vld [vmem:[#allocation9 + $0x148] sm:$0xff]
    %v5302 = vld [vmem:[#allocation9 + $0x150] sm:$0xff]
    %v5303 = vld [vmem:[#allocation9 + $0x158] sm:$0xff]
    %v5304 = vld [vmem:[#allocation9 + $0x160] sm:$0xff]
    %v5305 = vld [vmem:[#allocation9 + $0x168] sm:$0xff]
    %v5306 = vld [vmem:[#allocation9 + $0x170] sm:$0xff]
    %v5307 = vld [vmem:[#allocation9 + $0x178] sm:$0xff]
    %v5308 = vld [vmem:[#allocation9 + $0x180] sm:$0xff]
    %v5309 = vld [vmem:[#allocation9 + $0x188] sm:$0xff]
    %v5310 = vld [vmem:[#allocation9 + $0x190] sm:$0xff]
    %v5311 = vld [vmem:[#allocation9 + $0x198] sm:$0xff]
    %v5312 = vld [vmem:[#allocation9 + $0x1a0] sm:$0xff]
    %v5313 = vld [vmem:[#allocation9 + $0x1a8] sm:$0xff]
    %v5314 = vld [vmem:[#allocation9 + $0x1b0] sm:$0xff]
    %v5315 = vld [vmem:[#allocation9 + $0x1b8] sm:$0xff]
    %v5316 = vld [vmem:[#allocation9 + $0x1c0] sm:$0xff]
    %v5317 = vld [vmem:[#allocation9 + $0x1c8] sm:$0xff]
    %v5318 = vld [vmem:[#allocation9 + $0x1d0] sm:$0xff]
    %v5319 = vld [vmem:[#allocation9 + $0x1d8] sm:$0xff]
    %v5320 = vld [vmem:[#allocation9 + $0x1e0] sm:$0xff]
    %v5321 = vld [vmem:[#allocation9 + $0x1e8] sm:$0xff]
    %v5322 = vld [vmem:[#allocation9 + $0x1f0] sm:$0xff]
    %v5323 = vld [vmem:[#allocation9 + $0x1f8] sm:$0xff]
    %v5324 = vld [vmem:[#allocation11] sm:$0xff]
    %v5325 = vld [vmem:[#allocation11 + $0x8] sm:$0xff]
    %v5326 = vld [vmem:[#allocation11 + $0x10] sm:$0xff]
    %v5327 = vld [vmem:[#allocation11 + $0x18] sm:$0xff]
    %v5328 = vld [vmem:[#allocation11 + $0x20] sm:$0xff]
    %v5329 = vld [vmem:[#allocation11 + $0x28] sm:$0xff]
    %v5330 = vld [vmem:[#allocation11 + $0x30] sm:$0xff]
    %v5331 = vld [vmem:[#allocation11 + $0x38] sm:$0xff]
    %v5332 = vld [vmem:[#allocation11 + $0x40] sm:$0xff]
    %v5333 = vld [vmem:[#allocation11 + $0x48] sm:$0xff]
    %v5334 = vld [vmem:[#allocation11 + $0x50] sm:$0xff]
    %v5335 = vld [vmem:[#allocation11 + $0x58] sm:$0xff]
    %v5336 = vld [vmem:[#allocation11 + $0x60] sm:$0xff]
    %v5337 = vld [vmem:[#allocation11 + $0x68] sm:$0xff]
    %v5338 = vld [vmem:[#allocation11 + $0x70] sm:$0xff]
    %v5339 = vld [vmem:[#allocation11 + $0x78] sm:$0xff]
    %v5340 = vld [vmem:[#allocation11 + $0x80] sm:$0xff]
    %v5341 = vld [vmem:[#allocation11 + $0x88] sm:$0xff]
    %v5342 = vld [vmem:[#allocation11 + $0x90] sm:$0xff]
    %v5343 = vld [vmem:[#allocation11 + $0x98] sm:$0xff]
    %v5344 = vld [vmem:[#allocation11 + $0xa0] sm:$0xff]
    %v5345 = vld [vmem:[#allocation11 + $0xa8] sm:$0xff]
    %v5346 = vld [vmem:[#allocation11 + $0xb0] sm:$0xff]
    %v5347 = vld [vmem:[#allocation11 + $0xb8] sm:$0xff]
    %v5348 = vld [vmem:[#allocation11 + $0xc0] sm:$0xff]
    %v5349 = vld [vmem:[#allocation11 + $0xc8] sm:$0xff]
    %v5350 = vld [vmem:[#allocation11 + $0xd0] sm:$0xff]
    %v5351 = vld [vmem:[#allocation11 + $0xd8] sm:$0xff]
    %v5352 = vld [vmem:[#allocation11 + $0xe0] sm:$0xff]
    %v5353 = vld [vmem:[#allocation11 + $0xe8] sm:$0xff]
    %v5354 = vld [vmem:[#allocation11 + $0xf0] sm:$0xff]
    %v5355 = vld [vmem:[#allocation11 + $0xf8] sm:$0xff]
    %v5356 = vld [vmem:[#allocation11 + $0x100] sm:$0xff]
    %v5357 = vld [vmem:[#allocation11 + $0x108] sm:$0xff]
    %v5358 = vld [vmem:[#allocation11 + $0x110] sm:$0xff]
    %v5359 = vld [vmem:[#allocation11 + $0x118] sm:$0xff]
    %v5360 = vld [vmem:[#allocation11 + $0x120] sm:$0xff]
    %v5361 = vld [vmem:[#allocation11 + $0x128] sm:$0xff]
    %v5362 = vld [vmem:[#allocation11 + $0x130] sm:$0xff]
    %v5363 = vld [vmem:[#allocation11 + $0x138] sm:$0xff]
    %v5364 = vld [vmem:[#allocation11 + $0x140] sm:$0xff]
    %v5365 = vld [vmem:[#allocation11 + $0x148] sm:$0xff]
    %v5366 = vld [vmem:[#allocation11 + $0x150] sm:$0xff]
    %v5367 = vld [vmem:[#allocation11 + $0x158] sm:$0xff]
    %v5368 = vld [vmem:[#allocation11 + $0x160] sm:$0xff]
    %v5369 = vld [vmem:[#allocation11 + $0x168] sm:$0xff]
    %v5370 = vld [vmem:[#allocation11 + $0x170] sm:$0xff]
    %v5371 = vld [vmem:[#allocation11 + $0x178] sm:$0xff]
    %v5372 = vld [vmem:[#allocation11 + $0x180] sm:$0xff]
    %v5373 = vld [vmem:[#allocation11 + $0x188] sm:$0xff]
    %v5374 = vld [vmem:[#allocation11 + $0x190] sm:$0xff]
    %v5375 = vld [vmem:[#allocation11 + $0x198] sm:$0xff]
    %v5376 = vld [vmem:[#allocation11 + $0x1a0] sm:$0xff]
    %v5377 = vld [vmem:[#allocation11 + $0x1a8] sm:$0xff]
    %v5378 = vld [vmem:[#allocation11 + $0x1b0] sm:$0xff]
    %v5379 = vld [vmem:[#allocation11 + $0x1b8] sm:$0xff]
    %v5380 = vld [vmem:[#allocation11 + $0x1c0] sm:$0xff]
    %v5381 = vld [vmem:[#allocation11 + $0x1c8] sm:$0xff]
    %v5382 = vld [vmem:[#allocation11 + $0x1d0] sm:$0xff]
    %v5383 = vld [vmem:[#allocation11 + $0x1d8] sm:$0xff]
    %v5384 = vld [vmem:[#allocation11 + $0x1e0] sm:$0xff]
    %v5385 = vld [vmem:[#allocation11 + $0x1e8] sm:$0xff]
    %v5386 = vld [vmem:[#allocation11 + $0x1f0] sm:$0xff]
    %v5387 = vld [vmem:[#allocation11 + $0x1f8] sm:$0xff]
    %5388 = vmatprep.subr.mxu0 %v5321
    %5389 = vmatpush1.msra.mxu0 %v5320
    %5390 = vmatprep.subr.mxu0 %v5317
    %5391 = vmatpush1.msra.mxu0 %v5316
    %5392 = vmatprep.subr.mxu0 %v5313
    %5393 = vmatpush1.msra.mxu0 %v5312
    %5394 = vmatprep.subr.mxu0 %v5309
    %5395 = vmatpush1.msra.mxu0 %v5308
    %5396 = vmatprep.subr.mxu0 %v5305
    %5397 = vmatpush1.msra.mxu0 %v5304
    %5398 = vmatprep.subr.mxu0 %v5301
    %5399 = vmatpush1.msra.mxu0 %v5300
    %5400 = vmatprep.subr.mxu0 %v5297
    %5401 = vmatpush1.msra.mxu0 %v5296
    %5402 = vmatprep.subr.mxu0 %v5293
    %5403 = vmatpush1.msra.mxu0 %v5292
    %5404 = vmatprep.subr.mxu0 %v5289
    %5405 = vmatpush1.msra.mxu0 %v5288
    %5406 = vmatprep.subr.mxu0 %v5285
    %5407 = vmatpush1.msra.mxu0 %v5284
    %5408 = vmatprep.subr.mxu0 %v5281
    %5409 = vmatpush1.msra.mxu0 %v5280
    %5410 = vmatprep.subr.mxu0 %v5277
    %5411 = vmatpush1.msra.mxu0 %v5276
    %5412 = vmatprep.subr.mxu0 %v5273
    %5413 = vmatpush1.msra.mxu0 %v5272
    %5414 = vmatprep.subr.mxu0 %v5269
    %5415 = vmatpush1.msra.mxu0 %v5268
    %5416 = vmatprep.subr.mxu0 %v5265
    %5417 = vmatpush1.msra.mxu0 %v5264
    %5418 = vmatprep.subr.mxu0 %v5261
    %5419 = vmatpush1.msra.mxu0 %v5260
    %5420 = vmatprep.subr.mxu0 0.0
    %5421 = vmatpush2.msra.mxu0 0.0
    %5422 = vmatprep.subr.mxu0 0.0
    %5423 = vmatpush2.msra.mxu0 0.0
    %5424 = vmatprep.subr.mxu0 0.0
    %5425 = vmatpush2.msra.mxu0 0.0
    %5426 = vmatprep.subr.mxu0 0.0
    %5427 = vmatpush2.msra.mxu0 0.0
    %5428 = vmatprep.subr.mxu0 0.0
    %5429 = vmatpush2.msra.mxu0 0.0
    %5430 = vmatprep.subr.mxu0 0.0
    %5431 = vmatpush2.msra.mxu0 0.0
    %5432 = vmatprep.subr.mxu0 0.0
    %5433 = vmatpush2.msra.mxu0 0.0
    %5434 = vmatprep.subr.mxu0 0.0
    %5435 = vmatpush2.msra.mxu0 0.0
    %5436 = vmatprep.subr.mxu0 0.0
    %5437 = vmatpush2.msra.mxu0 0.0
    %5438 = vmatprep.subr.mxu0 0.0
    %5439 = vmatpush2.msra.mxu0 0.0
    %5440 = vmatprep.subr.mxu0 0.0
    %5441 = vmatpush2.msra.mxu0 0.0
    %5442 = vmatprep.subr.mxu0 0.0
    %5443 = vmatpush2.msra.mxu0 0.0
    %5444 = vmatprep.subr.mxu0 0.0
    %5445 = vmatpush2.msra.mxu0 0.0
    %5446 = vmatprep.subr.mxu0 0.0
    %5447 = vmatpush2.msra.mxu0 0.0
    %5448 = vmatprep.subr.mxu0 0.0
    %5449 = vmatpush2.msra.mxu0 0.0
    %5450 = vmatprep.subr.mxu0 0.0
    %5451 = vmatpush2.msra.mxu0 0.0
    %5452 = vmatprep.mubr.f32.mxu0 0.0
    %5453 = vmatmul.mubr.f32.gmra.mxu0 0.0
    %v5454 = vpop.f32.mrf.mxu0
    %v5455 = vadd.f32 0.0, %v5454
    %v5456 = vpop.f32.mrf.mxu0
    %v5457 = vadd.f32 0.0, %v5456
    %5458 = vdwg.mxu0
    %5459 = vmatprep.subr.mxu0 %v5323
    %5460 = vmatpush1.msra.mxu0 %v5322
    %5461 = vmatprep.subr.mxu0 %v5319
    %5462 = vmatpush1.msra.mxu0 %v5318
    %5463 = vmatprep.subr.mxu0 %v5315
    %5464 = vmatpush1.msra.mxu0 %v5314
    %5465 = vmatprep.subr.mxu0 %v5311
    %5466 = vmatpush1.msra.mxu0 %v5310
    %5467 = vmatprep.subr.mxu0 %v5307
    %5468 = vmatpush1.msra.mxu0 %v5306
    %5469 = vmatprep.subr.mxu0 %v5303
    %5470 = vmatpush1.msra.mxu0 %v5302
    %5471 = vmatprep.subr.mxu0 %v5299
    %5472 = vmatpush1.msra.mxu0 %v5298
    %5473 = vmatprep.subr.mxu0 %v5295
    %5474 = vmatpush1.msra.mxu0 %v5294
    %5475 = vmatprep.subr.mxu0 %v5291
    %5476 = vmatpush1.msra.mxu0 %v5290
    %5477 = vmatprep.subr.mxu0 %v5287
    %5478 = vmatpush1.msra.mxu0 %v5286
    %5479 = vmatprep.subr.mxu0 %v5283
    %5480 = vmatpush1.msra.mxu0 %v5282
    %5481 = vmatprep.subr.mxu0 %v5279
    %5482 = vmatpush1.msra.mxu0 %v5278
    %5483 = vmatprep.subr.mxu0 %v5275
    %5484 = vmatpush1.msra.mxu0 %v5274
    %5485 = vmatprep.subr.mxu0 %v5271
    %5486 = vmatpush1.msra.mxu0 %v5270
    %5487 = vmatprep.subr.mxu0 %v5267
    %5488 = vmatpush1.msra.mxu0 %v5266
    %5489 = vmatprep.subr.mxu0 %v5263
    %5490 = vmatpush1.msra.mxu0 %v5262
    %5491 = vmatprep.subr.mxu0 0.0
    %5492 = vmatpush2.msra.mxu0 0.0
    %5493 = vmatprep.subr.mxu0 0.0
    %5494 = vmatpush2.msra.mxu0 0.0
    %5495 = vmatprep.subr.mxu0 0.0
    %5496 = vmatpush2.msra.mxu0 0.0
    %5497 = vmatprep.subr.mxu0 0.0
    %5498 = vmatpush2.msra.mxu0 0.0
    %5499 = vmatprep.subr.mxu0 0.0
    %5500 = vmatpush2.msra.mxu0 0.0
    %5501 = vmatprep.subr.mxu0 0.0
    %5502 = vmatpush2.msra.mxu0 0.0
    %5503 = vmatprep.subr.mxu0 0.0
    %5504 = vmatpush2.msra.mxu0 0.0
    %5505 = vmatprep.subr.mxu0 0.0
    %5506 = vmatpush2.msra.mxu0 0.0
    %5507 = vmatprep.subr.mxu0 0.0
    %5508 = vmatpush2.msra.mxu0 0.0
    %5509 = vmatprep.subr.mxu0 0.0
    %5510 = vmatpush2.msra.mxu0 0.0
    %5511 = vmatprep.subr.mxu0 0.0
    %5512 = vmatpush2.msra.mxu0 0.0
    %5513 = vmatprep.subr.mxu0 0.0
    %5514 = vmatpush2.msra.mxu0 0.0
    %5515 = vmatprep.subr.mxu0 0.0
    %5516 = vmatpush2.msra.mxu0 0.0
    %5517 = vmatprep.subr.mxu0 0.0
    %5518 = vmatpush2.msra.mxu0 0.0
    %5519 = vmatprep.subr.mxu0 0.0
    %5520 = vmatpush2.msra.mxu0 0.0
    %5521 = vmatprep.subr.mxu0 0.0
    %5522 = vmatpush2.msra.mxu0 0.0
    %5523 = vmatprep.mubr.f32.mxu0 0.0
    %5524 = vmatmul.mubr.f32.gmra.mxu0 0.0
    %v5525 = vpop.f32.mrf.mxu0
    %v5526 = vadd.f32 0.0, %v5525
    %v5527 = vpop.f32.mrf.mxu0
    %v5528 = vadd.f32 0.0, %v5527
    %5529 = vdwg.mxu0
    %v5530 = vadd.f32 %v5003, %v5455
    %v5531 = vadd.f32 %v5005, %v5457
    %v5532 = vadd.f32 %v5086, %v5526
    %v5533 = vadd.f32 %v5088, %v5528
    %5534 = vmatprep.subr.mxu0 %v5385
    %5535 = vmatpush1.msra.mxu0 %v5384
    %5536 = vmatprep.subr.mxu0 %v5381
    %5537 = vmatpush1.msra.mxu0 %v5380
    %5538 = vmatprep.subr.mxu0 %v5377
    %5539 = vmatpush1.msra.mxu0 %v5376
    %5540 = vmatprep.subr.mxu0 %v5373
    %5541 = vmatpush1.msra.mxu0 %v5372
    %5542 = vmatprep.subr.mxu0 %v5369
    %5543 = vmatpush1.msra.mxu0 %v5368
    %5544 = vmatprep.subr.mxu0 %v5365
    %5545 = vmatpush1.msra.mxu0 %v5364
    %5546 = vmatprep.subr.mxu0 %v5361
    %5547 = vmatpush1.msra.mxu0 %v5360
    %5548 = vmatprep.subr.mxu0 %v5357
    %5549 = vmatpush1.msra.mxu0 %v5356
    %5550 = vmatprep.subr.mxu0 %v5353
    %5551 = vmatpush1.msra.mxu0 %v5352
    %5552 = vmatprep.subr.mxu0 %v5349
    %5553 = vmatpush1.msra.mxu0 %v5348
    %5554 = vmatprep.subr.mxu0 %v5345
    %5555 = vmatpush1.msra.mxu0 %v5344
    %5556 = vmatprep.subr.mxu0 %v5341
    %5557 = vmatpush1.msra.mxu0 %v5340
    %5558 = vmatprep.subr.mxu0 %v5337
    %5559 = vmatpush1.msra.mxu0 %v5336
    %5560 = vmatprep.subr.mxu0 %v5333
    %5561 = vmatpush1.msra.mxu0 %v5332
    %5562 = vmatprep.subr.mxu0 %v5329
    %5563 = vmatpush1.msra.mxu0 %v5328
    %5564 = vmatprep.subr.mxu0 %v5325
    %5565 = vmatpush1.msra.mxu0 %v5324
    %5566 = vmatprep.subr.mxu0 0.0
    %5567 = vmatpush2.msra.mxu0 0.0
    %5568 = vmatprep.subr.mxu0 0.0
    %5569 = vmatpush2.msra.mxu0 0.0
    %5570 = vmatprep.subr.mxu0 0.0
    %5571 = vmatpush2.msra.mxu0 0.0
    %5572 = vmatprep.subr.mxu0 0.0
    %5573 = vmatpush2.msra.mxu0 0.0
    %5574 = vmatprep.subr.mxu0 0.0
    %5575 = vmatpush2.msra.mxu0 0.0
    %5576 = vmatprep.subr.mxu0 0.0
    %5577 = vmatpush2.msra.mxu0 0.0
    %5578 = vmatprep.subr.mxu0 0.0
    %5579 = vmatpush2.msra.mxu0 0.0
    %5580 = vmatprep.subr.mxu0 0.0
    %5581 = vmatpush2.msra.mxu0 0.0
    %5582 = vmatprep.subr.mxu0 0.0
    %5583 = vmatpush2.msra.mxu0 0.0
    %5584 = vmatprep.subr.mxu0 0.0
    %5585 = vmatpush2.msra.mxu0 0.0
    %5586 = vmatprep.subr.mxu0 0.0
    %5587 = vmatpush2.msra.mxu0 0.0
    %5588 = vmatprep.subr.mxu0 0.0
    %5589 = vmatpush2.msra.mxu0 0.0
    %5590 = vmatprep.subr.mxu0 0.0
    %5591 = vmatpush2.msra.mxu0 0.0
    %5592 = vmatprep.subr.mxu0 0.0
    %5593 = vmatpush2.msra.mxu0 0.0
    %5594 = vmatprep.subr.mxu0 0.0
    %5595 = vmatpush2.msra.mxu0 0.0
    %5596 = vmatprep.subr.mxu0 0.0
    %5597 = vmatpush2.msra.mxu0 0.0
    %5598 = vmatprep.mubr.f32.mxu0 0.0
    %5599 = vmatmul.mubr.f32.gmra.mxu0 0.0
    %v5600 = vpop.f32.mrf.mxu0
    %v5601 = vadd.f32 0.0, %v5600
    %v5602 = vpop.f32.mrf.mxu0
    %v5603 = vadd.f32 0.0, %v5602
    %5604 = vdwg.mxu0
    %5605 = vmatprep.subr.mxu0 %v5387
    %5606 = vmatpush1.msra.mxu0 %v5386
    %5607 = vmatprep.subr.mxu0 %v5383
    %5608 = vmatpush1.msra.mxu0 %v5382
    %5609 = vmatprep.subr.mxu0 %v5379
    %5610 = vmatpush1.msra.mxu0 %v5378
    %5611 = vmatprep.subr.mxu0 %v5375
    %5612 = vmatpush1.msra.mxu0 %v5374
    %5613 = vmatprep.subr.mxu0 %v5371
    %5614 = vmatpush1.msra.mxu0 %v5370
    %5615 = vmatprep.subr.mxu0 %v5367
    %5616 = vmatpush1.msra.mxu0 %v5366
    %5617 = vmatprep.subr.mxu0 %v5363
    %5618 = vmatpush1.msra.mxu0 %v5362
    %5619 = vmatprep.subr.mxu0 %v5359
    %5620 = vmatpush1.msra.mxu0 %v5358
    %5621 = vmatprep.subr.mxu0 %v5355
    %5622 = vmatpush1.msra.mxu0 %v5354
    %5623 = vmatprep.subr.mxu0 %v5351
    %5624 = vmatpush1.msra.mxu0 %v5350
    %5625 = vmatprep.subr.mxu0 %v5347
    %5626 = vmatpush1.msra.mxu0 %v5346
    %5627 = vmatprep.subr.mxu0 %v5343
    %5628 = vmatpush1.msra.mxu0 %v5342
    %5629 = vmatprep.subr.mxu0 %v5339
    %5630 = vmatpush1.msra.mxu0 %v5338
    %5631 = vmatprep.subr.mxu0 %v5335
    %5632 = vmatpush1.msra.mxu0 %v5334
    %5633 = vmatprep.subr.mxu0 %v5331
    %5634 = vmatpush1.msra.mxu0 %v5330
    %5635 = vmatprep.subr.mxu0 %v5327
    %5636 = vmatpush1.msra.mxu0 %v5326
    %5637 = vmatprep.subr.mxu0 0.0
    %5638 = vmatpush2.msra.mxu0 0.0
    %5639 = vmatprep.subr.mxu0 0.0
    %5640 = vmatpush2.msra.mxu0 0.0
    %5641 = vmatprep.subr.mxu0 0.0
    %5642 = vmatpush2.msra.mxu0 0.0
    %5643 = vmatprep.subr.mxu0 0.0
    %5644 = vmatpush2.msra.mxu0 0.0
    %5645 = vmatprep.subr.mxu0 0.0
    %5646 = vmatpush2.msra.mxu0 0.0
    %5647 = vmatprep.subr.mxu0 0.0
    %5648 = vmatpush2.msra.mxu0 0.0
    %5649 = vmatprep.subr.mxu0 0.0
    %5650 = vmatpush2.msra.mxu0 0.0
    %5651 = vmatprep.subr.mxu0 0.0
    %5652 = vmatpush2.msra.mxu0 0.0
    %5653 = vmatprep.subr.mxu0 0.0
    %5654 = vmatpush2.msra.mxu0 0.0
    %5655 = vmatprep.subr.mxu0 0.0
    %5656 = vmatpush2.msra.mxu0 0.0
    %5657 = vmatprep.subr.mxu0 0.0
    %5658 = vmatpush2.msra.mxu0 0.0
    %5659 = vmatprep.subr.mxu0 0.0
    %5660 = vmatpush2.msra.mxu0 0.0
    %5661 = vmatprep.subr.mxu0 0.0
    %5662 = vmatpush2.msra.mxu0 0.0
    %5663 = vmatprep.subr.mxu0 0.0
    %5664 = vmatpush2.msra.mxu0 0.0
    %5665 = vmatprep.subr.mxu0 0.0
    %5666 = vmatpush2.msra.mxu0 0.0
    %5667 = vmatprep.subr.mxu0 0.0
    %5668 = vmatpush2.msra.mxu0 0.0
    %5669 = vmatprep.mubr.f32.mxu0 0.0
    %5670 = vmatmul.mubr.f32.gmra.mxu0 0.0
    %v5671 = vpop.f32.mrf.mxu0
    %v5672 = vadd.f32 0.0, %v5671
    %v5673 = vpop.f32.mrf.mxu0
    %v5674 = vadd.f32 0.0, %v5673
    %5675 = vdwg.mxu0
    %v5680 = vrot.slane %v5601, 6
    %v5681 = vrot.slane %v5603, 6
    %v5682 = vrot.slane %v5672, 6
    %v5683 = vrot.slane %v5674, 6
    %v5688 = vadd.f32 %v5177, %v5680
    %v5689 = vadd.f32 %v5179, %v5681
    %v5690 = vadd.f32 %v5256, %v5682
    %v5691 = vadd.f32 %v5258, %v5683
    %v5692 = vxor.u32 %v5530, 2147483648
    %v5693 = vmul.f32 %v5692, 1.442695
    %v5694 = vpow.pop %v5693
    %v5695 = vadd.f32 %v5694, 1.0
    %v5696 = vrcp.pop %v5695
    %v5697 = vmul.f32 1.0, %v5696
    %v5698 = vxor.u32 %v5531, 2147483648
    %v5699 = vmul.f32 %v5698, 1.442695
    %v5700 = vpow.pop %v5699
    %v5701 = vadd.f32 %v5700, 1.0
    %v5702 = vrcp.pop %v5701
    %v5703 = vmul.f32 1.0, %v5702
    %v5704 = vtanh.pop %v5532
    %v5705 = vxor.u32 %v5533, 2147483648
    %v5706 = vmul.f32 %v5705, 1.442695
    %v5707 = vpow.pop %v5706
    %v5708 = vadd.f32 %v5707, 1.0
    %v5709 = vrcp.pop %v5708
    %v5710 = vmul.f32 1.0, %v5709
    %v5711 = vmul.f32 %v5703, 0.0
    %v5712 = vmul.f32 %v5697, %v5704
    %v5713 = vadd.f32 %v5711, %v5712
    %v5714 = vtanh.pop %v5713
    %v5715 = vmul.f32 %v5710, %v5714
    %v5716 = vxor.u32 %v5688, 2147483648
    %v5717 = vmul.f32 %v5716, 1.442695
    %v5718 = vpow.pop %v5717
    %v5719 = vadd.f32 %v5718, 1.0
    %v5720 = vrcp.pop %v5719
    %v5721 = vmul.f32 1.0, %v5720
    %v5722 = vxor.u32 %v5689, 2147483648
    %v5723 = vmul.f32 %v5722, 1.442695
    %v5724 = vpow.pop %v5723
    %v5725 = vadd.f32 %v5724, 1.0
    %v5726 = vrcp.pop %v5725
    %v5727 = vmul.f32 1.0, %v5726
    %v5728 = vtanh.pop %v5690
    %v5729 = vxor.u32 %v5691, 2147483648
    %v5730 = vmul.f32 %v5729, 1.442695
    %v5731 = vpow.pop %v5730
    %v5732 = vadd.f32 %v5731, 1.0
    %v5733 = vrcp.pop %v5732
    %v5734 = vmul.f32 1.0, %v5733
    %v5735 = vmul.f32 %v5727, 0.0
    %v5736 = vmul.f32 %v5721, %v5728
    %v5737 = vadd.f32 %v5735, %v5736
    %v5738 = vtanh.pop %v5737
    %v5739 = vmul.f32 %v5734, %v5738
    %5740 = vmatprep.subr.mxu0 %v5321
    %5741 = vmatpush1.msra.mxu0 %v5320
    %5742 = vmatprep.subr.mxu0 %v5317
    %5743 = vmatpush1.msra.mxu0 %v5316
    %5744 = vmatprep.subr.mxu0 %v5313
    %5745 = vmatpush1.msra.mxu0 %v5312
    %5746 = vmatprep.subr.mxu0 %v5309
    %5747 = vmatpush1.msra.mxu0 %v5308
    %5748 = vmatprep.subr.mxu0 %v5305
    %5749 = vmatpush1.msra.mxu0 %v5304
    %5750 = vmatprep.subr.mxu0 %v5301
    %5751 = vmatpush1.msra.mxu0 %v5300
    %5752 = vmatprep.subr.mxu0 %v5297
    %5753 = vmatpush1.msra.mxu0 %v5296
    %5754 = vmatprep.subr.mxu0 %v5293
    %5755 = vmatpush1.msra.mxu0 %v5292
    %5756 = vmatprep.subr.mxu0 %v5289
    %5757 = vmatpush1.msra.mxu0 %v5288
    %5758 = vmatprep.subr.mxu0 %v5285
    %5759 = vmatpush1.msra.mxu0 %v5284
    %5760 = vmatprep.subr.mxu0 %v5281
    %5761 = vmatpush1.msra.mxu0 %v5280
    %5762 = vmatprep.subr.mxu0 %v5277
    %5763 = vmatpush1.msra.mxu0 %v5276
    %5764 = vmatprep.subr.mxu0 %v5273
    %5765 = vmatpush1.msra.mxu0 %v5272
    %5766 = vmatprep.subr.mxu0 %v5269
    %5767 = vmatpush1.msra.mxu0 %v5268
    %5768 = vmatprep.subr.mxu0 %v5265
    %5769 = vmatpush1.msra.mxu0 %v5264
    %5770 = vmatprep.subr.mxu0 %v5261
    %5771 = vmatpush1.msra.mxu0 %v5260
    %5772 = vmatprep.subr.mxu0 0.0
    %5773 = vmatpush2.msra.mxu0 0.0
    %5774 = vmatprep.subr.mxu0 0.0
    %5775 = vmatpush2.msra.mxu0 0.0
    %5776 = vmatprep.subr.mxu0 0.0
    %5777 = vmatpush2.msra.mxu0 0.0
    %5778 = vmatprep.subr.mxu0 0.0
    %5779 = vmatpush2.msra.mxu0 0.0
    %5780 = vmatprep.subr.mxu0 0.0
    %5781 = vmatpush2.msra.mxu0 0.0
    %5782 = vmatprep.subr.mxu0 0.0
    %5783 = vmatpush2.msra.mxu0 0.0
    %5784 = vmatprep.subr.mxu0 0.0
    %5785 = vmatpush2.msra.mxu0 0.0
    %5786 = vmatprep.subr.mxu0 0.0
    %5787 = vmatpush2.msra.mxu0 0.0
    %5788 = vmatprep.subr.mxu0 0.0
    %5789 = vmatpush2.msra.mxu0 0.0
    %5790 = vmatprep.subr.mxu0 0.0
    %5791 = vmatpush2.msra.mxu0 0.0
    %5792 = vmatprep.subr.mxu0 0.0
    %5793 = vmatpush2.msra.mxu0 0.0
    %5794 = vmatprep.subr.mxu0 0.0
    %5795 = vmatpush2.msra.mxu0 0.0
    %5796 = vmatprep.subr.mxu0 0.0
    %5797 = vmatpush2.msra.mxu0 0.0
    %5798 = vmatprep.subr.mxu0 0.0
    %5799 = vmatpush2.msra.mxu0 0.0
    %5800 = vmatprep.subr.mxu0 0.0
    %5801 = vmatpush2.msra.mxu0 0.0
    %5802 = vmatprep.subr.mxu0 0.0
    %5803 = vmatpush2.msra.mxu0 0.0
    %5804 = vmatprep.mubr.f32.mxu0 0.0
    %5805 = vmatmul.mubr.f32.gmra.mxu0 %v5715
    %v5806 = vpop.f32.mrf.mxu0
    %v5807 = vadd.f32 0.0, %v5806
    %v5808 = vpop.f32.mrf.mxu0
    %v5809 = vadd.f32 0.0, %v5808
    %5810 = vdwg.mxu0
    %5811 = vmatprep.subr.mxu0 %v5323
    %5812 = vmatpush1.msra.mxu0 %v5322
    %5813 = vmatprep.subr.mxu0 %v5319
    %5814 = vmatpush1.msra.mxu0 %v5318
    %5815 = vmatprep.subr.mxu0 %v5315
    %5816 = vmatpush1.msra.mxu0 %v5314
    %5817 = vmatprep.subr.mxu0 %v5311
    %5818 = vmatpush1.msra.mxu0 %v5310
    %5819 = vmatprep.subr.mxu0 %v5307
    %5820 = vmatpush1.msra.mxu0 %v5306
    %5821 = vmatprep.subr.mxu0 %v5303
    %5822 = vmatpush1.msra.mxu0 %v5302
    %5823 = vmatprep.subr.mxu0 %v5299
    %5824 = vmatpush1.msra.mxu0 %v5298
    %5825 = vmatprep.subr.mxu0 %v5295
    %5826 = vmatpush1.msra.mxu0 %v5294
    %5827 = vmatprep.subr.mxu0 %v5291
    %5828 = vmatpush1.msra.mxu0 %v5290
    %5829 = vmatprep.subr.mxu0 %v5287
    %5830 = vmatpush1.msra.mxu0 %v5286
    %5831 = vmatprep.subr.mxu0 %v5283
    %5832 = vmatpush1.msra.mxu0 %v5282
    %5833 = vmatprep.subr.mxu0 %v5279
    %5834 = vmatpush1.msra.mxu0 %v5278
    %5835 = vmatprep.subr.mxu0 %v5275
    %5836 = vmatpush1.msra.mxu0 %v5274
    %5837 = vmatprep.subr.mxu0 %v5271
    %5838 = vmatpush1.msra.mxu0 %v5270
    %5839 = vmatprep.subr.mxu0 %v5267
    %5840 = vmatpush1.msra.mxu0 %v5266
    %5841 = vmatprep.subr.mxu0 %v5263
    %5842 = vmatpush1.msra.mxu0 %v5262
    %5843 = vmatprep.subr.mxu0 0.0
    %5844 = vmatpush2.msra.mxu0 0.0
    %5845 = vmatprep.subr.mxu0 0.0
    %5846 = vmatpush2.msra.mxu0 0.0
    %5847 = vmatprep.subr.mxu0 0.0
    %5848 = vmatpush2.msra.mxu0 0.0
    %5849 = vmatprep.subr.mxu0 0.0
    %5850 = vmatpush2.msra.mxu0 0.0
    %5851 = vmatprep.subr.mxu0 0.0
    %5852 = vmatpush2.msra.mxu0 0.0
    %5853 = vmatprep.subr.mxu0 0.0
    %5854 = vmatpush2.msra.mxu0 0.0
    %5855 = vmatprep.subr.mxu0 0.0
    %5856 = vmatpush2.msra.mxu0 0.0
    %5857 = vmatprep.subr.mxu0 0.0
    %5858 = vmatpush2.msra.mxu0 0.0
    %5859 = vmatprep.subr.mxu0 0.0
    %5860 = vmatpush2.msra.mxu0 0.0
    %5861 = vmatprep.subr.mxu0 0.0
    %5862 = vmatpush2.msra.mxu0 0.0
    %5863 = vmatprep.subr.mxu0 0.0
    %5864 = vmatpush2.msra.mxu0 0.0
    %5865 = vmatprep.subr.mxu0 0.0
    %5866 = vmatpush2.msra.mxu0 0.0
    %5867 = vmatprep.subr.mxu0 0.0
    %5868 = vmatpush2.msra.mxu0 0.0
    %5869 = vmatprep.subr.mxu0 0.0
    %5870 = vmatpush2.msra.mxu0 0.0
    %5871 = vmatprep.subr.mxu0 0.0
    %5872 = vmatpush2.msra.mxu0 0.0
    %5873 = vmatprep.subr.mxu0 0.0
    %5874 = vmatpush2.msra.mxu0 0.0
    %5875 = vmatprep.mubr.f32.mxu0 0.0
    %5876 = vmatmul.mubr.f32.gmra.mxu0 %v5715
    %v5877 = vpop.f32.mrf.mxu0
    %v5878 = vadd.f32 0.0, %v5877
    %v5879 = vpop.f32.mrf.mxu0
    %v5880 = vadd.f32 0.0, %v5879
    %5881 = vdwg.mxu0
    %v5886 = vrot.slane %v5807, 6
    %v5887 = vrot.slane %v5809, 6
    %v5888 = vrot.slane %v5878, 6
    %v5889 = vrot.slane %v5880, 6
    %v5894 = vadd.f32 %v5003, %v5886
    %v5895 = vadd.f32 %v5005, %v5887
    %v5896 = vadd.f32 %v5086, %v5888
    %v5897 = vadd.f32 %v5088, %v5889
    %v5898 = vxor.u32 %v5894, 2147483648
    %v5899 = vmul.f32 %v5898, 1.442695
    %v5900 = vpow.pop %v5899
    %v5901 = vadd.f32 %v5900, 1.0
    %v5902 = vrcp.pop %v5901
    %v5903 = vmul.f32 1.0, %v5902
    %v5904 = vxor.u32 %v5895, 2147483648
    %v5905 = vmul.f32 %v5904, 1.442695
    %v5906 = vpow.pop %v5905
    %v5907 = vadd.f32 %v5906, 1.0
    %v5908 = vrcp.pop %v5907
    %v5909 = vmul.f32 1.0, %v5908
    %v5910 = vtanh.pop %v5896
    %v5911 = vxor.u32 %v5897, 2147483648
    %v5912 = vmul.f32 %v5911, 1.442695
    %v5913 = vpow.pop %v5912
    %v5914 = vadd.f32 %v5913, 1.0
    %v5915 = vrcp.pop %v5914
    %v5916 = vmul.f32 1.0, %v5915
    %v5918 = vrot.slane %v5713, 6
    %v5920 = vmul.f32 %v5909, %v5918
    %v5921 = vmul.f32 %v5903, %v5910
    %v5922 = vadd.f32 %v5920, %v5921
    %v5923 = vtanh.pop %v5922
    %v5924 = vmul.f32 %v5916, %v5923
    %v5926 = vrot.slane %v5924, 2
    %5928 = vmatprep.subr.mxu0 %v5321
    %5929 = vmatpush1.msra.mxu0 %v5320
    %5930 = vmatprep.subr.mxu0 %v5317
    %5931 = vmatpush1.msra.mxu0 %v5316
    %5932 = vmatprep.subr.mxu0 %v5313
    %5933 = vmatpush1.msra.mxu0 %v5312
    %5934 = vmatprep.subr.mxu0 %v5309
    %5935 = vmatpush1.msra.mxu0 %v5308
    %5936 = vmatprep.subr.mxu0 %v5305
    %5937 = vmatpush1.msra.mxu0 %v5304
    %5938 = vmatprep.subr.mxu0 %v5301
    %5939 = vmatpush1.msra.mxu0 %v5300
    %5940 = vmatprep.subr.mxu0 %v5297
    %5941 = vmatpush1.msra.mxu0 %v5296
    %5942 = vmatprep.subr.mxu0 %v5293
    %5943 = vmatpush1.msra.mxu0 %v5292
    %5944 = vmatprep.subr.mxu0 %v5289
    %5945 = vmatpush1.msra.mxu0 %v5288
    %5946 = vmatprep.subr.mxu0 %v5285
    %5947 = vmatpush1.msra.mxu0 %v5284
    %5948 = vmatprep.subr.mxu0 %v5281
    %5949 = vmatpush1.msra.mxu0 %v5280
    %5950 = vmatprep.subr.mxu0 %v5277
    %5951 = vmatpush1.msra.mxu0 %v5276
    %5952 = vmatprep.subr.mxu0 %v5273
    %5953 = vmatpush1.msra.mxu0 %v5272
    %5954 = vmatprep.subr.mxu0 %v5269
    %5955 = vmatpush1.msra.mxu0 %v5268
    %5956 = vmatprep.subr.mxu0 %v5265
    %5957 = vmatpush1.msra.mxu0 %v5264
    %5958 = vmatprep.subr.mxu0 %v5261
    %5959 = vmatpush1.msra.mxu0 %v5260
    %5960 = vmatprep.subr.mxu0 0.0
    %5961 = vmatpush2.msra.mxu0 0.0
    %5962 = vmatprep.subr.mxu0 0.0
    %5963 = vmatpush2.msra.mxu0 0.0
    %5964 = vmatprep.subr.mxu0 0.0
    %5965 = vmatpush2.msra.mxu0 0.0
    %5966 = vmatprep.subr.mxu0 0.0
    %5967 = vmatpush2.msra.mxu0 0.0
    %5968 = vmatprep.subr.mxu0 0.0
    %5969 = vmatpush2.msra.mxu0 0.0
    %5970 = vmatprep.subr.mxu0 0.0
    %5971 = vmatpush2.msra.mxu0 0.0
    %5972 = vmatprep.subr.mxu0 0.0
    %5973 = vmatpush2.msra.mxu0 0.0
    %5974 = vmatprep.subr.mxu0 0.0
    %5975 = vmatpush2.msra.mxu0 0.0
    %5976 = vmatprep.subr.mxu0 0.0
    %5977 = vmatpush2.msra.mxu0 0.0
    %5978 = vmatprep.subr.mxu0 0.0
    %5979 = vmatpush2.msra.mxu0 0.0
    %5980 = vmatprep.subr.mxu0 0.0
    %5981 = vmatpush2.msra.mxu0 0.0
    %5982 = vmatprep.subr.mxu0 0.0
    %5983 = vmatpush2.msra.mxu0 0.0
    %5984 = vmatprep.subr.mxu0 0.0
    %5985 = vmatpush2.msra.mxu0 0.0
    %5986 = vmatprep.subr.mxu0 0.0
    %5987 = vmatpush2.msra.mxu0 0.0
    %5988 = vmatprep.subr.mxu0 0.0
    %5989 = vmatpush2.msra.mxu0 0.0
    %5990 = vmatprep.subr.mxu0 0.0
    %5991 = vmatpush2.msra.mxu0 0.0
    %5992 = vmatprep.mubr.f32.mxu0 0.0
    %5993 = vmatmul.mubr.f32.gmra.mxu0 %v5926
    %v5994 = vpop.f32.mrf.mxu0
    %v5995 = vadd.f32 0.0, %v5994
    %v5996 = vpop.f32.mrf.mxu0
    %v5997 = vadd.f32 0.0, %v5996
    %5998 = vdwg.mxu0
    %5999 = vmatprep.subr.mxu0 %v5323
    %6000 = vmatpush1.msra.mxu0 %v5322
    %6001 = vmatprep.subr.mxu0 %v5319
    %6002 = vmatpush1.msra.mxu0 %v5318
    %6003 = vmatprep.subr.mxu0 %v5315
    %6004 = vmatpush1.msra.mxu0 %v5314
    %6005 = vmatprep.subr.mxu0 %v5311
    %6006 = vmatpush1.msra.mxu0 %v5310
    %6007 = vmatprep.subr.mxu0 %v5307
    %6008 = vmatpush1.msra.mxu0 %v5306
    %6009 = vmatprep.subr.mxu0 %v5303
    %6010 = vmatpush1.msra.mxu0 %v5302
    %6011 = vmatprep.subr.mxu0 %v5299
    %6012 = vmatpush1.msra.mxu0 %v5298
    %6013 = vmatprep.subr.mxu0 %v5295
    %6014 = vmatpush1.msra.mxu0 %v5294
    %6015 = vmatprep.subr.mxu0 %v5291
    %6016 = vmatpush1.msra.mxu0 %v5290
    %6017 = vmatprep.subr.mxu0 %v5287
    %6018 = vmatpush1.msra.mxu0 %v5286
    %6019 = vmatprep.subr.mxu0 %v5283
    %6020 = vmatpush1.msra.mxu0 %v5282
    %6021 = vmatprep.subr.mxu0 %v5279
    %6022 = vmatpush1.msra.mxu0 %v5278
    %6023 = vmatprep.subr.mxu0 %v5275
    %6024 = vmatpush1.msra.mxu0 %v5274
    %6025 = vmatprep.subr.mxu0 %v5271
    %6026 = vmatpush1.msra.mxu0 %v5270
    %6027 = vmatprep.subr.mxu0 %v5267
    %6028 = vmatpush1.msra.mxu0 %v5266
    %6029 = vmatprep.subr.mxu0 %v5263
    %6030 = vmatpush1.msra.mxu0 %v5262
    %6031 = vmatprep.subr.mxu0 0.0
    %6032 = vmatpush2.msra.mxu0 0.0
    %6033 = vmatprep.subr.mxu0 0.0
    %6034 = vmatpush2.msra.mxu0 0.0
    %6035 = vmatprep.subr.mxu0 0.0
    %6036 = vmatpush2.msra.mxu0 0.0
    %6037 = vmatprep.subr.mxu0 0.0
    %6038 = vmatpush2.msra.mxu0 0.0
    %6039 = vmatprep.subr.mxu0 0.0
    %6040 = vmatpush2.msra.mxu0 0.0
    %6041 = vmatprep.subr.mxu0 0.0
    %6042 = vmatpush2.msra.mxu0 0.0
    %6043 = vmatprep.subr.mxu0 0.0
    %6044 = vmatpush2.msra.mxu0 0.0
    %6045 = vmatprep.subr.mxu0 0.0
    %6046 = vmatpush2.msra.mxu0 0.0
    %6047 = vmatprep.subr.mxu0 0.0
    %6048 = vmatpush2.msra.mxu0 0.0
    %6049 = vmatprep.subr.mxu0 0.0
    %6050 = vmatpush2.msra.mxu0 0.0
    %6051 = vmatprep.subr.mxu0 0.0
    %6052 = vmatpush2.msra.mxu0 0.0
    %6053 = vmatprep.subr.mxu0 0.0
    %6054 = vmatpush2.msra.mxu0 0.0
    %6055 = vmatprep.subr.mxu0 0.0
    %6056 = vmatpush2.msra.mxu0 0.0
    %6057 = vmatprep.subr.mxu0 0.0
    %6058 = vmatpush2.msra.mxu0 0.0
    %6059 = vmatprep.subr.mxu0 0.0
    %6060 = vmatpush2.msra.mxu0 0.0
    %6061 = vmatprep.subr.mxu0 0.0
    %6062 = vmatpush2.msra.mxu0 0.0
    %6063 = vmatprep.mubr.f32.mxu0 0.0
    %6064 = vmatmul.mubr.f32.gmra.mxu0 %v5926
    %v6065 = vpop.f32.mrf.mxu0
    %v6066 = vadd.f32 0.0, %v6065
    %v6067 = vpop.f32.mrf.mxu0
    %v6068 = vadd.f32 0.0, %v6067
    %6069 = vdwg.mxu0
    %v6074 = vrot.slane %v5995, 4
    %v6075 = vrot.slane %v5997, 4
    %v6076 = vrot.slane %v6066, 4
    %v6077 = vrot.slane %v6068, 4
    %v6082 = vadd.f32 %v5003, %v6074
    %v6083 = vadd.f32 %v5005, %v6075
    %v6084 = vadd.f32 %v5086, %v6076
    %v6085 = vadd.f32 %v5088, %v6077
    %v6086 = vxor.u32 %v6082, 2147483648
    %v6087 = vmul.f32 %v6086, 1.442695
    %v6088 = vpow.pop %v6087
    %v6089 = vadd.f32 %v6088, 1.0
    %v6090 = vrcp.pop %v6089
    %v6091 = vmul.f32 1.0, %v6090
    %v6092 = vxor.u32 %v6083, 2147483648
    %v6093 = vmul.f32 %v6092, 1.442695
    %v6094 = vpow.pop %v6093
    %v6095 = vadd.f32 %v6094, 1.0
    %v6096 = vrcp.pop %v6095
    %v6097 = vmul.f32 1.0, %v6096
    %v6098 = vtanh.pop %v6084
    %v6099 = vxor.u32 %v6085, 2147483648
    %v6100 = vmul.f32 %v6099, 1.442695
    %v6101 = vpow.pop %v6100
    %v6102 = vadd.f32 %v6101, 1.0
    %v6103 = vrcp.pop %v6102
    %v6104 = vmul.f32 1.0, %v6103
    %v6106 = vrot.slane %v5922, 6
    %v6108 = vmul.f32 %v6097, %v6106
    %v6109 = vmul.f32 %v6091, %v6098
    %v6110 = vadd.f32 %v6108, %v6109
    %v6111 = vtanh.pop %v6110
    %v6112 = vmul.f32 %v6104, %v6111
    %v6114 = vrot.slane %v6112, 4
    %6116 = vmatprep.subr.mxu0 %v5321
    %6117 = vmatpush1.msra.mxu0 %v5320
    %6118 = vmatprep.subr.mxu0 %v5317
    %6119 = vmatpush1.msra.mxu0 %v5316
    %6120 = vmatprep.subr.mxu0 %v5313
    %6121 = vmatpush1.msra.mxu0 %v5312
    %6122 = vmatprep.subr.mxu0 %v5309
    %6123 = vmatpush1.msra.mxu0 %v5308
    %6124 = vmatprep.subr.mxu0 %v5305
    %6125 = vmatpush1.msra.mxu0 %v5304
    %6126 = vmatprep.subr.mxu0 %v5301
    %6127 = vmatpush1.msra.mxu0 %v5300
    %6128 = vmatprep.subr.mxu0 %v5297
    %6129 = vmatpush1.msra.mxu0 %v5296
    %6130 = vmatprep.subr.mxu0 %v5293
    %6131 = vmatpush1.msra.mxu0 %v5292
    %6132 = vmatprep.subr.mxu0 %v5289
    %6133 = vmatpush1.msra.mxu0 %v5288
    %6134 = vmatprep.subr.mxu0 %v5285
    %6135 = vmatpush1.msra.mxu0 %v5284
    %6136 = vmatprep.subr.mxu0 %v5281
    %6137 = vmatpush1.msra.mxu0 %v5280
    %6138 = vmatprep.subr.mxu0 %v5277
    %6139 = vmatpush1.msra.mxu0 %v5276
    %6140 = vmatprep.subr.mxu0 %v5273
    %6141 = vmatpush1.msra.mxu0 %v5272
    %6142 = vmatprep.subr.mxu0 %v5269
    %6143 = vmatpush1.msra.mxu0 %v5268
    %6144 = vmatprep.subr.mxu0 %v5265
    %6145 = vmatpush1.msra.mxu0 %v5264
    %6146 = vmatprep.subr.mxu0 %v5261
    %6147 = vmatpush1.msra.mxu0 %v5260
    %6148 = vmatprep.subr.mxu0 0.0
    %6149 = vmatpush2.msra.mxu0 0.0
    %6150 = vmatprep.subr.mxu0 0.0
    %6151 = vmatpush2.msra.mxu0 0.0
    %6152 = vmatprep.subr.mxu0 0.0
    %6153 = vmatpush2.msra.mxu0 0.0
    %6154 = vmatprep.subr.mxu0 0.0
    %6155 = vmatpush2.msra.mxu0 0.0
    %6156 = vmatprep.subr.mxu0 0.0
    %6157 = vmatpush2.msra.mxu0 0.0
    %6158 = vmatprep.subr.mxu0 0.0
    %6159 = vmatpush2.msra.mxu0 0.0
    %6160 = vmatprep.subr.mxu0 0.0
    %6161 = vmatpush2.msra.mxu0 0.0
    %6162 = vmatprep.subr.mxu0 0.0
    %6163 = vmatpush2.msra.mxu0 0.0
    %6164 = vmatprep.subr.mxu0 0.0
    %6165 = vmatpush2.msra.mxu0 0.0
    %6166 = vmatprep.subr.mxu0 0.0
    %6167 = vmatpush2.msra.mxu0 0.0
    %6168 = vmatprep.subr.mxu0 0.0
    %6169 = vmatpush2.msra.mxu0 0.0
    %6170 = vmatprep.subr.mxu0 0.0
    %6171 = vmatpush2.msra.mxu0 0.0
    %6172 = vmatprep.subr.mxu0 0.0
    %6173 = vmatpush2.msra.mxu0 0.0
    %6174 = vmatprep.subr.mxu0 0.0
    %6175 = vmatpush2.msra.mxu0 0.0
    %6176 = vmatprep.subr.mxu0 0.0
    %6177 = vmatpush2.msra.mxu0 0.0
    %6178 = vmatprep.subr.mxu0 0.0
    %6179 = vmatpush2.msra.mxu0 0.0
    %6180 = vmatprep.mubr.f32.mxu0 0.0
    %6181 = vmatmul.mubr.f32.gmra.mxu0 %v6114
    %v6182 = vpop.f32.mrf.mxu0
    %v6183 = vadd.f32 0.0, %v6182
    %v6184 = vpop.f32.mrf.mxu0
    %v6185 = vadd.f32 0.0, %v6184
    %6186 = vdwg.mxu0
    %6187 = vmatprep.subr.mxu0 %v5323
    %6188 = vmatpush1.msra.mxu0 %v5322
    %6189 = vmatprep.subr.mxu0 %v5319
    %6190 = vmatpush1.msra.mxu0 %v5318
    %6191 = vmatprep.subr.mxu0 %v5315
    %6192 = vmatpush1.msra.mxu0 %v5314
    %6193 = vmatprep.subr.mxu0 %v5311
    %6194 = vmatpush1.msra.mxu0 %v5310
    %6195 = vmatprep.subr.mxu0 %v5307
    %6196 = vmatpush1.msra.mxu0 %v5306
    %6197 = vmatprep.subr.mxu0 %v5303
    %6198 = vmatpush1.msra.mxu0 %v5302
    %6199 = vmatprep.subr.mxu0 %v5299
    %6200 = vmatpush1.msra.mxu0 %v5298
    %6201 = vmatprep.subr.mxu0 %v5295
    %6202 = vmatpush1.msra.mxu0 %v5294
    %6203 = vmatprep.subr.mxu0 %v5291
    %6204 = vmatpush1.msra.mxu0 %v5290
    %6205 = vmatprep.subr.mxu0 %v5287
    %6206 = vmatpush1.msra.mxu0 %v5286
    %6207 = vmatprep.subr.mxu0 %v5283
    %6208 = vmatpush1.msra.mxu0 %v5282
    %6209 = vmatprep.subr.mxu0 %v5279
    %6210 = vmatpush1.msra.mxu0 %v5278
    %6211 = vmatprep.subr.mxu0 %v5275
    %6212 = vmatpush1.msra.mxu0 %v5274
    %6213 = vmatprep.subr.mxu0 %v5271
    %6214 = vmatpush1.msra.mxu0 %v5270
    %6215 = vmatprep.subr.mxu0 %v5267
    %6216 = vmatpush1.msra.mxu0 %v5266
    %6217 = vmatprep.subr.mxu0 %v5263
    %6218 = vmatpush1.msra.mxu0 %v5262
    %6219 = vmatprep.subr.mxu0 0.0
    %6220 = vmatpush2.msra.mxu0 0.0
    %6221 = vmatprep.subr.mxu0 0.0
    %6222 = vmatpush2.msra.mxu0 0.0
    %6223 = vmatprep.subr.mxu0 0.0
    %6224 = vmatpush2.msra.mxu0 0.0
    %6225 = vmatprep.subr.mxu0 0.0
    %6226 = vmatpush2.msra.mxu0 0.0
    %6227 = vmatprep.subr.mxu0 0.0
    %6228 = vmatpush2.msra.mxu0 0.0
    %6229 = vmatprep.subr.mxu0 0.0
    %6230 = vmatpush2.msra.mxu0 0.0
    %6231 = vmatprep.subr.mxu0 0.0
    %6232 = vmatpush2.msra.mxu0 0.0
    %6233 = vmatprep.subr.mxu0 0.0
    %6234 = vmatpush2.msra.mxu0 0.0
    %6235 = vmatprep.subr.mxu0 0.0
    %6236 = vmatpush2.msra.mxu0 0.0
    %6237 = vmatprep.subr.mxu0 0.0
    %6238 = vmatpush2.msra.mxu0 0.0
    %6239 = vmatprep.subr.mxu0 0.0
    %6240 = vmatpush2.msra.mxu0 0.0
    %6241 = vmatprep.subr.mxu0 0.0
    %6242 = vmatpush2.msra.mxu0 0.0
    %6243 = vmatprep.subr.mxu0 0.0
    %6244 = vmatpush2.msra.mxu0 0.0
    %6245 = vmatprep.subr.mxu0 0.0
    %6246 = vmatpush2.msra.mxu0 0.0
    %6247 = vmatprep.subr.mxu0 0.0
    %6248 = vmatpush2.msra.mxu0 0.0
    %6249 = vmatprep.subr.mxu0 0.0
    %6250 = vmatpush2.msra.mxu0 0.0
    %6251 = vmatprep.mubr.f32.mxu0 0.0
    %6252 = vmatmul.mubr.f32.gmra.mxu0 %v6114
    %v6253 = vpop.f32.mrf.mxu0
    %v6254 = vadd.f32 0.0, %v6253
    %v6255 = vpop.f32.mrf.mxu0
    %v6256 = vadd.f32 0.0, %v6255
    %6257 = vdwg.mxu0
    %v6262 = vrot.slane %v6183, 2
    %v6263 = vrot.slane %v6185, 2
    %v6264 = vrot.slane %v6254, 2
    %v6265 = vrot.slane %v6256, 2
    %v6270 = vadd.f32 %v5003, %v6262
    %v6271 = vadd.f32 %v5005, %v6263
    %v6272 = vadd.f32 %v5086, %v6264
    %v6273 = vadd.f32 %v5088, %v6265
    %v6274 = vxor.u32 %v6270, 2147483648
    %v6275 = vmul.f32 %v6274, 1.442695
    %v6276 = vpow.pop %v6275
    %v6277 = vadd.f32 %v6276, 1.0
    %v6278 = vrcp.pop %v6277
    %v6279 = vmul.f32 1.0, %v6278
    %v6280 = vxor.u32 %v6271, 2147483648
    %v6281 = vmul.f32 %v6280, 1.442695
    %v6282 = vpow.pop %v6281
    %v6283 = vadd.f32 %v6282, 1.0
    %v6284 = vrcp.pop %v6283
    %v6285 = vmul.f32 1.0, %v6284
    %v6286 = vtanh.pop %v6272
    %v6287 = vxor.u32 %v6273, 2147483648
    %v6288 = vmul.f32 %v6287, 1.442695
    %v6289 = vpow.pop %v6288
    %v6290 = vadd.f32 %v6289, 1.0
    %v6291 = vrcp.pop %v6290
    %v6292 = vmul.f32 1.0, %v6291
    %v6294 = vrot.slane %v6110, 6
    %v6296 = vmul.f32 %v6285, %v6294
    %v6297 = vmul.f32 %v6279, %v6286
    %v6298 = vadd.f32 %v6296, %v6297
    %v6299 = vtanh.pop %v6298
    %v6300 = vmul.f32 %v6292, %v6299
    %v6302 = vrot.slane %v6300, 6
    %6304 = vmatprep.subr.mxu0 %v5321
    %6305 = vmatpush1.msra.mxu0 %v5320
    %6306 = vmatprep.subr.mxu0 %v5317
    %6307 = vmatpush1.msra.mxu0 %v5316
    %6308 = vmatprep.subr.mxu0 %v5313
    %6309 = vmatpush1.msra.mxu0 %v5312
    %6310 = vmatprep.subr.mxu0 %v5309
    %6311 = vmatpush1.msra.mxu0 %v5308
    %6312 = vmatprep.subr.mxu0 %v5305
    %6313 = vmatpush1.msra.mxu0 %v5304
    %6314 = vmatprep.subr.mxu0 %v5301
    %6315 = vmatpush1.msra.mxu0 %v5300
    %6316 = vmatprep.subr.mxu0 %v5297
    %6317 = vmatpush1.msra.mxu0 %v5296
    %6318 = vmatprep.subr.mxu0 %v5293
    %6319 = vmatpush1.msra.mxu0 %v5292
    %6320 = vmatprep.subr.mxu0 %v5289
    %6321 = vmatpush1.msra.mxu0 %v5288
    %6322 = vmatprep.subr.mxu0 %v5285
    %6323 = vmatpush1.msra.mxu0 %v5284
    %6324 = vmatprep.subr.mxu0 %v5281
    %6325 = vmatpush1.msra.mxu0 %v5280
    %6326 = vmatprep.subr.mxu0 %v5277
    %6327 = vmatpush1.msra.mxu0 %v5276
    %6328 = vmatprep.subr.mxu0 %v5273
    %6329 = vmatpush1.msra.mxu0 %v5272
    %6330 = vmatprep.subr.mxu0 %v5269
    %6331 = vmatpush1.msra.mxu0 %v5268
    %6332 = vmatprep.subr.mxu0 %v5265
    %6333 = vmatpush1.msra.mxu0 %v5264
    %6334 = vmatprep.subr.mxu0 %v5261
    %6335 = vmatpush1.msra.mxu0 %v5260
    %6336 = vmatprep.subr.mxu0 0.0
    %6337 = vmatpush2.msra.mxu0 0.0
    %6338 = vmatprep.subr.mxu0 0.0
    %6339 = vmatpush2.msra.mxu0 0.0
    %6340 = vmatprep.subr.mxu0 0.0
    %6341 = vmatpush2.msra.mxu0 0.0
    %6342 = vmatprep.subr.mxu0 0.0
    %6343 = vmatpush2.msra.mxu0 0.0
    %6344 = vmatprep.subr.mxu0 0.0
    %6345 = vmatpush2.msra.mxu0 0.0
    %6346 = vmatprep.subr.mxu0 0.0
    %6347 = vmatpush2.msra.mxu0 0.0
    %6348 = vmatprep.subr.mxu0 0.0
    %6349 = vmatpush2.msra.mxu0 0.0
    %6350 = vmatprep.subr.mxu0 0.0
    %6351 = vmatpush2.msra.mxu0 0.0
    %6352 = vmatprep.subr.mxu0 0.0
    %6353 = vmatpush2.msra.mxu0 0.0
    %6354 = vmatprep.subr.mxu0 0.0
    %6355 = vmatpush2.msra.mxu0 0.0
    %6356 = vmatprep.subr.mxu0 0.0
    %6357 = vmatpush2.msra.mxu0 0.0
    %6358 = vmatprep.subr.mxu0 0.0
    %6359 = vmatpush2.msra.mxu0 0.0
    %6360 = vmatprep.subr.mxu0 0.0
    %6361 = vmatpush2.msra.mxu0 0.0
    %6362 = vmatprep.subr.mxu0 0.0
    %6363 = vmatpush2.msra.mxu0 0.0
    %6364 = vmatprep.subr.mxu0 0.0
    %6365 = vmatpush2.msra.mxu0 0.0
    %6366 = vmatprep.subr.mxu0 0.0
    %6367 = vmatpush2.msra.mxu0 0.0
    %6368 = vmatprep.mubr.f32.mxu0 0.0
    %6369 = vmatmul.mubr.f32.gmra.mxu0 %v6302
    %v6370 = vpop.f32.mrf.mxu0
    %v6371 = vadd.f32 0.0, %v6370
    %v6372 = vpop.f32.mrf.mxu0
    %v6373 = vadd.f32 0.0, %v6372
    %6374 = vdwg.mxu0
    %6375 = vmatprep.subr.mxu0 %v5323
    %6376 = vmatpush1.msra.mxu0 %v5322
    %6377 = vmatprep.subr.mxu0 %v5319
    %6378 = vmatpush1.msra.mxu0 %v5318
    %6379 = vmatprep.subr.mxu0 %v5315
    %6380 = vmatpush1.msra.mxu0 %v5314
    %6381 = vmatprep.subr.mxu0 %v5311
    %6382 = vmatpush1.msra.mxu0 %v5310
    %6383 = vmatprep.subr.mxu0 %v5307
    %6384 = vmatpush1.msra.mxu0 %v5306
    %6385 = vmatprep.subr.mxu0 %v5303
    %6386 = vmatpush1.msra.mxu0 %v5302
    %6387 = vmatprep.subr.mxu0 %v5299
    %6388 = vmatpush1.msra.mxu0 %v5298
    %6389 = vmatprep.subr.mxu0 %v5295
    %6390 = vmatpush1.msra.mxu0 %v5294
    %6391 = vmatprep.subr.mxu0 %v5291
    %6392 = vmatpush1.msra.mxu0 %v5290
    %6393 = vmatprep.subr.mxu0 %v5287
    %6394 = vmatpush1.msra.mxu0 %v5286
    %6395 = vmatprep.subr.mxu0 %v5283
    %6396 = vmatpush1.msra.mxu0 %v5282
    %6397 = vmatprep.subr.mxu0 %v5279
    %6398 = vmatpush1.msra.mxu0 %v5278
    %6399 = vmatprep.subr.mxu0 %v5275
    %6400 = vmatpush1.msra.mxu0 %v5274
    %6401 = vmatprep.subr.mxu0 %v5271
    %6402 = vmatpush1.msra.mxu0 %v5270
    %6403 = vmatprep.subr.mxu0 %v5267
    %6404 = vmatpush1.msra.mxu0 %v5266
    %6405 = vmatprep.subr.mxu0 %v5263
    %6406 = vmatpush1.msra.mxu0 %v5262
    %6407 = vmatprep.subr.mxu0 0.0
    %6408 = vmatpush2.msra.mxu0 0.0
    %6409 = vmatprep.subr.mxu0 0.0
    %6410 = vmatpush2.msra.mxu0 0.0
    %6411 = vmatprep.subr.mxu0 0.0
    %6412 = vmatpush2.msra.mxu0 0.0
    %6413 = vmatprep.subr.mxu0 0.0
    %6414 = vmatpush2.msra.mxu0 0.0
    %6415 = vmatprep.subr.mxu0 0.0
    %6416 = vmatpush2.msra.mxu0 0.0
    %6417 = vmatprep.subr.mxu0 0.0
    %6418 = vmatpush2.msra.mxu0 0.0
    %6419 = vmatprep.subr.mxu0 0.0
    %6420 = vmatpush2.msra.mxu0 0.0
    %6421 = vmatprep.subr.mxu0 0.0
    %6422 = vmatpush2.msra.mxu0 0.0
    %6423 = vmatprep.subr.mxu0 0.0
    %6424 = vmatpush2.msra.mxu0 0.0
    %6425 = vmatprep.subr.mxu0 0.0
    %6426 = vmatpush2.msra.mxu0 0.0
    %6427 = vmatprep.subr.mxu0 0.0
    %6428 = vmatpush2.msra.mxu0 0.0
    %6429 = vmatprep.subr.mxu0 0.0
    %6430 = vmatpush2.msra.mxu0 0.0
    %6431 = vmatprep.subr.mxu0 0.0
    %6432 = vmatpush2.msra.mxu0 0.0
    %6433 = vmatprep.subr.mxu0 0.0
    %6434 = vmatpush2.msra.mxu0 0.0
    %6435 = vmatprep.subr.mxu0 0.0
    %6436 = vmatpush2.msra.mxu0 0.0
    %6437 = vmatprep.subr.mxu0 0.0
    %6438 = vmatpush2.msra.mxu0 0.0
    %6439 = vmatprep.mubr.f32.mxu0 0.0
    %6440 = vmatmul.mubr.f32.gmra.mxu0 %v6302
    %v6441 = vpop.f32.mrf.mxu0
    %v6442 = vadd.f32 0.0, %v6441
    %v6443 = vpop.f32.mrf.mxu0
    %v6444 = vadd.f32 0.0, %v6443
    %6445 = vdwg.mxu0
    %v6446 = vadd.f32 %v5009, %v6371
    %v6447 = vadd.f32 %v5011, %v6373
    %v6448 = vadd.f32 %v5092, %v6442
    %v6449 = vadd.f32 %v5094, %v6444
    %v6450 = vxor.u32 %v6446, 2147483648
    %v6451 = vmul.f32 %v6450, 1.442695
    %v6452 = vpow.pop %v6451
    %v6453 = vadd.f32 %v6452, 1.0
    %v6454 = vrcp.pop %v6453
    %v6455 = vmul.f32 1.0, %v6454
    %v6456 = vxor.u32 %v6447, 2147483648
    %v6457 = vmul.f32 %v6456, 1.442695
    %v6458 = vpow.pop %v6457
    %v6459 = vadd.f32 %v6458, 1.0
    %v6460 = vrcp.pop %v6459
    %v6461 = vmul.f32 1.0, %v6460
    %v6462 = vtanh.pop %v6448
    %v6463 = vxor.u32 %v6449, 2147483648
    %v6464 = vmul.f32 %v6463, 1.442695
    %v6465 = vpow.pop %v6464
    %v6466 = vadd.f32 %v6465, 1.0
    %v6467 = vrcp.pop %v6466
    %v6468 = vmul.f32 1.0, %v6467
    %v6470 = vrot.slane %v6298, 6
    %v6472 = vmul.f32 %v6461, %v6470
    %v6473 = vmul.f32 %v6455, %v6462
    %v6474 = vadd.f32 %v6472, %v6473
    %v6475 = vtanh.pop %v6474
    %v6476 = vmul.f32 %v6468, %v6475
    %6477 = vmatprep.subr.mxu0 %v5321
    %6478 = vmatpush1.msra.mxu0 %v5320
    %6479 = vmatprep.subr.mxu0 %v5317
    %6480 = vmatpush1.msra.mxu0 %v5316
    %6481 = vmatprep.subr.mxu0 %v5313
    %6482 = vmatpush1.msra.mxu0 %v5312
    %6483 = vmatprep.subr.mxu0 %v5309
    %6484 = vmatpush1.msra.mxu0 %v5308
    %6485 = vmatprep.subr.mxu0 %v5305
    %6486 = vmatpush1.msra.mxu0 %v5304
    %6487 = vmatprep.subr.mxu0 %v5301
    %6488 = vmatpush1.msra.mxu0 %v5300
    %6489 = vmatprep.subr.mxu0 %v5297
    %6490 = vmatpush1.msra.mxu0 %v5296
    %6491 = vmatprep.subr.mxu0 %v5293
    %6492 = vmatpush1.msra.mxu0 %v5292
    %6493 = vmatprep.subr.mxu0 %v5289
    %6494 = vmatpush1.msra.mxu0 %v5288
    %6495 = vmatprep.subr.mxu0 %v5285
    %6496 = vmatpush1.msra.mxu0 %v5284
    %6497 = vmatprep.subr.mxu0 %v5281
    %6498 = vmatpush1.msra.mxu0 %v5280
    %6499 = vmatprep.subr.mxu0 %v5277
    %6500 = vmatpush1.msra.mxu0 %v5276
    %6501 = vmatprep.subr.mxu0 %v5273
    %6502 = vmatpush1.msra.mxu0 %v5272
    %6503 = vmatprep.subr.mxu0 %v5269
    %6504 = vmatpush1.msra.mxu0 %v5268
    %6505 = vmatprep.subr.mxu0 %v5265
    %6506 = vmatpush1.msra.mxu0 %v5264
    %6507 = vmatprep.subr.mxu0 %v5261
    %6508 = vmatpush1.msra.mxu0 %v5260
    %6509 = vmatprep.subr.mxu0 0.0
    %6510 = vmatpush2.msra.mxu0 0.0
    %6511 = vmatprep.subr.mxu0 0.0
    %6512 = vmatpush2.msra.mxu0 0.0
    %6513 = vmatprep.subr.mxu0 0.0
    %6514 = vmatpush2.msra.mxu0 0.0
    %6515 = vmatprep.subr.mxu0 0.0
    %6516 = vmatpush2.msra.mxu0 0.0
    %6517 = vmatprep.subr.mxu0 0.0
    %6518 = vmatpush2.msra.mxu0 0.0
    %6519 = vmatprep.subr.mxu0 0.0
    %6520 = vmatpush2.msra.mxu0 0.0
    %6521 = vmatprep.subr.mxu0 0.0
    %6522 = vmatpush2.msra.mxu0 0.0
    %6523 = vmatprep.subr.mxu0 0.0
    %6524 = vmatpush2.msra.mxu0 0.0
    %6525 = vmatprep.subr.mxu0 0.0
    %6526 = vmatpush2.msra.mxu0 0.0
    %6527 = vmatprep.subr.mxu0 0.0
    %6528 = vmatpush2.msra.mxu0 0.0
    %6529 = vmatprep.subr.mxu0 0.0
    %6530 = vmatpush2.msra.mxu0 0.0
    %6531 = vmatprep.subr.mxu0 0.0
    %6532 = vmatpush2.msra.mxu0 0.0
    %6533 = vmatprep.subr.mxu0 0.0
    %6534 = vmatpush2.msra.mxu0 0.0
    %6535 = vmatprep.subr.mxu0 0.0
    %6536 = vmatpush2.msra.mxu0 0.0
    %6537 = vmatprep.subr.mxu0 0.0
    %6538 = vmatpush2.msra.mxu0 0.0
    %6539 = vmatprep.subr.mxu0 0.0
    %6540 = vmatpush2.msra.mxu0 0.0
    %6541 = vmatprep.mubr.f32.mxu0 0.0
    %6542 = vmatmul.mubr.f32.gmra.mxu0 %v6476
    %v6543 = vpop.f32.mrf.mxu0
    %v6544 = vadd.f32 0.0, %v6543
    %v6545 = vpop.f32.mrf.mxu0
    %v6546 = vadd.f32 0.0, %v6545
    %6547 = vdwg.mxu0
    %6548 = vmatprep.subr.mxu0 %v5323
    %6549 = vmatpush1.msra.mxu0 %v5322
    %6550 = vmatprep.subr.mxu0 %v5319
    %6551 = vmatpush1.msra.mxu0 %v5318
    %6552 = vmatprep.subr.mxu0 %v5315
    %6553 = vmatpush1.msra.mxu0 %v5314
    %6554 = vmatprep.subr.mxu0 %v5311
    %6555 = vmatpush1.msra.mxu0 %v5310
    %6556 = vmatprep.subr.mxu0 %v5307
    %6557 = vmatpush1.msra.mxu0 %v5306
    %6558 = vmatprep.subr.mxu0 %v5303
    %6559 = vmatpush1.msra.mxu0 %v5302
    %6560 = vmatprep.subr.mxu0 %v5299
    %6561 = vmatpush1.msra.mxu0 %v5298
    %6562 = vmatprep.subr.mxu0 %v5295
    %6563 = vmatpush1.msra.mxu0 %v5294
    %6564 = vmatprep.subr.mxu0 %v5291
    %6565 = vmatpush1.msra.mxu0 %v5290
    %6566 = vmatprep.subr.mxu0 %v5287
    %6567 = vmatpush1.msra.mxu0 %v5286
    %6568 = vmatprep.subr.mxu0 %v5283
    %6569 = vmatpush1.msra.mxu0 %v5282
    %6570 = vmatprep.subr.mxu0 %v5279
    %6571 = vmatpush1.msra.mxu0 %v5278
    %6572 = vmatprep.subr.mxu0 %v5275
    %6573 = vmatpush1.msra.mxu0 %v5274
    %6574 = vmatprep.subr.mxu0 %v5271
    %6575 = vmatpush1.msra.mxu0 %v5270
    %6576 = vmatprep.subr.mxu0 %v5267
    %6577 = vmatpush1.msra.mxu0 %v5266
    %6578 = vmatprep.subr.mxu0 %v5263
    %6579 = vmatpush1.msra.mxu0 %v5262
    %6580 = vmatprep.subr.mxu0 0.0
    %6581 = vmatpush2.msra.mxu0 0.0
    %6582 = vmatprep.subr.mxu0 0.0
    %6583 = vmatpush2.msra.mxu0 0.0
    %6584 = vmatprep.subr.mxu0 0.0
    %6585 = vmatpush2.msra.mxu0 0.0
    %6586 = vmatprep.subr.mxu0 0.0
    %6587 = vmatpush2.msra.mxu0 0.0
    %6588 = vmatprep.subr.mxu0 0.0
    %6589 = vmatpush2.msra.mxu0 0.0
    %6590 = vmatprep.subr.mxu0 0.0
    %6591 = vmatpush2.msra.mxu0 0.0
    %6592 = vmatprep.subr.mxu0 0.0
    %6593 = vmatpush2.msra.mxu0 0.0
    %6594 = vmatprep.subr.mxu0 0.0
    %6595 = vmatpush2.msra.mxu0 0.0
    %6596 = vmatprep.subr.mxu0 0.0
    %6597 = vmatpush2.msra.mxu0 0.0
    %6598 = vmatprep.subr.mxu0 0.0
    %6599 = vmatpush2.msra.mxu0 0.0
    %6600 = vmatprep.subr.mxu0 0.0
    %6601 = vmatpush2.msra.mxu0 0.0
    %6602 = vmatprep.subr.mxu0 0.0
    %6603 = vmatpush2.msra.mxu0 0.0
    %6604 = vmatprep.subr.mxu0 0.0
    %6605 = vmatpush2.msra.mxu0 0.0
    %6606 = vmatprep.subr.mxu0 0.0
    %6607 = vmatpush2.msra.mxu0 0.0
    %6608 = vmatprep.subr.mxu0 0.0
    %6609 = vmatpush2.msra.mxu0 0.0
    %6610 = vmatprep.subr.mxu0 0.0
    %6611 = vmatpush2.msra.mxu0 0.0
    %6612 = vmatprep.mubr.f32.mxu0 0.0
    %6613 = vmatmul.mubr.f32.gmra.mxu0 %v6476
    %v6614 = vpop.f32.mrf.mxu0
    %v6615 = vadd.f32 0.0, %v6614
    %v6616 = vpop.f32.mrf.mxu0
    %v6617 = vadd.f32 0.0, %v6616
    %6618 = vdwg.mxu0
    %v6623 = vrot.slane %v6544, 6
    %v6624 = vrot.slane %v6546, 6
    %v6625 = vrot.slane %v6615, 6
    %v6626 = vrot.slane %v6617, 6
    %v6631 = vadd.f32 %v5009, %v6623
    %v6632 = vadd.f32 %v5011, %v6624
    %v6633 = vadd.f32 %v5092, %v6625
    %v6634 = vadd.f32 %v5094, %v6626
    %v6635 = vxor.u32 %v6631, 2147483648
    %v6636 = vmul.f32 %v6635, 1.442695
    %v6637 = vpow.pop %v6636
    %v6638 = vadd.f32 %v6637, 1.0
    %v6639 = vrcp.pop %v6638
    %v6640 = vmul.f32 1.0, %v6639
    %v6641 = vxor.u32 %v6632, 2147483648
    %v6642 = vmul.f32 %v6641, 1.442695
    %v6643 = vpow.pop %v6642
    %v6644 = vadd.f32 %v6643, 1.0
    %v6645 = vrcp.pop %v6644
    %v6646 = vmul.f32 1.0, %v6645
    %v6647 = vtanh.pop %v6633
    %v6648 = vxor.u32 %v6634, 2147483648
    %v6649 = vmul.f32 %v6648, 1.442695
    %v6650 = vpow.pop %v6649
    %v6651 = vadd.f32 %v6650, 1.0
    %v6652 = vrcp.pop %v6651
    %v6653 = vmul.f32 1.0, %v6652
    %v6655 = vrot.slane %v6474, 6
    %v6657 = vmul.f32 %v6646, %v6655
    %v6658 = vmul.f32 %v6640, %v6647
    %v6659 = vadd.f32 %v6657, %v6658
    %v6660 = vtanh.pop %v6659
    %v6661 = vmul.f32 %v6653, %v6660
    %v6663 = vrot.slane %v6661, 2
    %6665 = vmatprep.subr.mxu0 %v5321
    %6666 = vmatpush1.msra.mxu0 %v5320
    %6667 = vmatprep.subr.mxu0 %v5317
    %6668 = vmatpush1.msra.mxu0 %v5316
    %6669 = vmatprep.subr.mxu0 %v5313
    %6670 = vmatpush1.msra.mxu0 %v5312
    %6671 = vmatprep.subr.mxu0 %v5309
    %6672 = vmatpush1.msra.mxu0 %v5308
    %6673 = vmatprep.subr.mxu0 %v5305
    %6674 = vmatpush1.msra.mxu0 %v5304
    %6675 = vmatprep.subr.mxu0 %v5301
    %6676 = vmatpush1.msra.mxu0 %v5300
    %6677 = vmatprep.subr.mxu0 %v5297
    %6678 = vmatpush1.msra.mxu0 %v5296
    %6679 = vmatprep.subr.mxu0 %v5293
    %6680 = vmatpush1.msra.mxu0 %v5292
    %6681 = vmatprep.subr.mxu0 %v5289
    %6682 = vmatpush1.msra.mxu0 %v5288
    %6683 = vmatprep.subr.mxu0 %v5285
    %6684 = vmatpush1.msra.mxu0 %v5284
    %6685 = vmatprep.subr.mxu0 %v5281
    %6686 = vmatpush1.msra.mxu0 %v5280
    %6687 = vmatprep.subr.mxu0 %v5277
    %6688 = vmatpush1.msra.mxu0 %v5276
    %6689 = vmatprep.subr.mxu0 %v5273
    %6690 = vmatpush1.msra.mxu0 %v5272
    %6691 = vmatprep.subr.mxu0 %v5269
    %6692 = vmatpush1.msra.mxu0 %v5268
    %6693 = vmatprep.subr.mxu0 %v5265
    %6694 = vmatpush1.msra.mxu0 %v5264
    %6695 = vmatprep.subr.mxu0 %v5261
    %6696 = vmatpush1.msra.mxu0 %v5260
    %6697 = vmatprep.subr.mxu0 0.0
    %6698 = vmatpush2.msra.mxu0 0.0
    %6699 = vmatprep.subr.mxu0 0.0
    %6700 = vmatpush2.msra.mxu0 0.0
    %6701 = vmatprep.subr.mxu0 0.0
    %6702 = vmatpush2.msra.mxu0 0.0
    %6703 = vmatprep.subr.mxu0 0.0
    %6704 = vmatpush2.msra.mxu0 0.0
    %6705 = vmatprep.subr.mxu0 0.0
    %6706 = vmatpush2.msra.mxu0 0.0
    %6707 = vmatprep.subr.mxu0 0.0
    %6708 = vmatpush2.msra.mxu0 0.0
    %6709 = vmatprep.subr.mxu0 0.0
    %6710 = vmatpush2.msra.mxu0 0.0
    %6711 = vmatprep.subr.mxu0 0.0
    %6712 = vmatpush2.msra.mxu0 0.0
    %6713 = vmatprep.subr.mxu0 0.0
    %6714 = vmatpush2.msra.mxu0 0.0
    %6715 = vmatprep.subr.mxu0 0.0
    %6716 = vmatpush2.msra.mxu0 0.0
    %6717 = vmatprep.subr.mxu0 0.0
    %6718 = vmatpush2.msra.mxu0 0.0
    %6719 = vmatprep.subr.mxu0 0.0
    %6720 = vmatpush2.msra.mxu0 0.0
    %6721 = vmatprep.subr.mxu0 0.0
    %6722 = vmatpush2.msra.mxu0 0.0
    %6723 = vmatprep.subr.mxu0 0.0
    %6724 = vmatpush2.msra.mxu0 0.0
    %6725 = vmatprep.subr.mxu0 0.0
    %6726 = vmatpush2.msra.mxu0 0.0
    %6727 = vmatprep.subr.mxu0 0.0
    %6728 = vmatpush2.msra.mxu0 0.0
    %6729 = vmatprep.mubr.f32.mxu0 0.0
    %6730 = vmatmul.mubr.f32.gmra.mxu0 %v6663
    %v6731 = vpop.f32.mrf.mxu0
    %v6732 = vadd.f32 0.0, %v6731
    %v6733 = vpop.f32.mrf.mxu0
    %v6734 = vadd.f32 0.0, %v6733
    %6735 = vdwg.mxu0
    %6736 = vmatprep.subr.mxu0 %v5323
    %6737 = vmatpush1.msra.mxu0 %v5322
    %6738 = vmatprep.subr.mxu0 %v5319
    %6739 = vmatpush1.msra.mxu0 %v5318
    %6740 = vmatprep.subr.mxu0 %v5315
    %6741 = vmatpush1.msra.mxu0 %v5314
    %6742 = vmatprep.subr.mxu0 %v5311
    %6743 = vmatpush1.msra.mxu0 %v5310
    %6744 = vmatprep.subr.mxu0 %v5307
    %6745 = vmatpush1.msra.mxu0 %v5306
    %6746 = vmatprep.subr.mxu0 %v5303
    %6747 = vmatpush1.msra.mxu0 %v5302
    %6748 = vmatprep.subr.mxu0 %v5299
    %6749 = vmatpush1.msra.mxu0 %v5298
    %6750 = vmatprep.subr.mxu0 %v5295
    %6751 = vmatpush1.msra.mxu0 %v5294
    %6752 = vmatprep.subr.mxu0 %v5291
    %6753 = vmatpush1.msra.mxu0 %v5290
    %6754 = vmatprep.subr.mxu0 %v5287
    %6755 = vmatpush1.msra.mxu0 %v5286
    %6756 = vmatprep.subr.mxu0 %v5283
    %6757 = vmatpush1.msra.mxu0 %v5282
    %6758 = vmatprep.subr.mxu0 %v5279
    %6759 = vmatpush1.msra.mxu0 %v5278
    %6760 = vmatprep.subr.mxu0 %v5275
    %6761 = vmatpush1.msra.mxu0 %v5274
    %6762 = vmatprep.subr.mxu0 %v5271
    %6763 = vmatpush1.msra.mxu0 %v5270
    %6764 = vmatprep.subr.mxu0 %v5267
    %6765 = vmatpush1.msra.mxu0 %v5266
    %6766 = vmatprep.subr.mxu0 %v5263
    %6767 = vmatpush1.msra.mxu0 %v5262
    %6768 = vmatprep.subr.mxu0 0.0
    %6769 = vmatpush2.msra.mxu0 0.0
    %6770 = vmatprep.subr.mxu0 0.0
    %6771 = vmatpush2.msra.mxu0 0.0
    %6772 = vmatprep.subr.mxu0 0.0
    %6773 = vmatpush2.msra.mxu0 0.0
    %6774 = vmatprep.subr.mxu0 0.0
    %6775 = vmatpush2.msra.mxu0 0.0
    %6776 = vmatprep.subr.mxu0 0.0
    %6777 = vmatpush2.msra.mxu0 0.0
    %6778 = vmatprep.subr.mxu0 0.0
    %6779 = vmatpush2.msra.mxu0 0.0
    %6780 = vmatprep.subr.mxu0 0.0
    %6781 = vmatpush2.msra.mxu0 0.0
    %6782 = vmatprep.subr.mxu0 0.0
    %6783 = vmatpush2.msra.mxu0 0.0
    %6784 = vmatprep.subr.mxu0 0.0
    %6785 = vmatpush2.msra.mxu0 0.0
    %6786 = vmatprep.subr.mxu0 0.0
    %6787 = vmatpush2.msra.mxu0 0.0
    %6788 = vmatprep.subr.mxu0 0.0
    %6789 = vmatpush2.msra.mxu0 0.0
    %6790 = vmatprep.subr.mxu0 0.0
    %6791 = vmatpush2.msra.mxu0 0.0
    %6792 = vmatprep.subr.mxu0 0.0
    %6793 = vmatpush2.msra.mxu0 0.0
    %6794 = vmatprep.subr.mxu0 0.0
    %6795 = vmatpush2.msra.mxu0 0.0
    %6796 = vmatprep.subr.mxu0 0.0
    %6797 = vmatpush2.msra.mxu0 0.0
    %6798 = vmatprep.subr.mxu0 0.0
    %6799 = vmatpush2.msra.mxu0 0.0
    %6800 = vmatprep.mubr.f32.mxu0 0.0
    %6801 = vmatmul.mubr.f32.gmra.mxu0 %v6663
    %v6802 = vpop.f32.mrf.mxu0
    %v6803 = vadd.f32 0.0, %v6802
    %v6804 = vpop.f32.mrf.mxu0
    %v6805 = vadd.f32 0.0, %v6804
    %6806 = vdwg.mxu0
    %v6811 = vrot.slane %v6732, 4
    %v6812 = vrot.slane %v6734, 4
    %v6813 = vrot.slane %v6803, 4
    %v6814 = vrot.slane %v6805, 4
    %v6819 = vadd.f32 %v5009, %v6811
    %v6820 = vadd.f32 %v5011, %v6812
    %v6821 = vadd.f32 %v5092, %v6813
    %v6822 = vadd.f32 %v5094, %v6814
    %v6823 = vxor.u32 %v6819, 2147483648
    %v6824 = vmul.f32 %v6823, 1.442695
    %v6825 = vpow.pop %v6824
    %v6826 = vadd.f32 %v6825, 1.0
    %v6827 = vrcp.pop %v6826
    %v6828 = vmul.f32 1.0, %v6827
    %v6829 = vxor.u32 %v6820, 2147483648
    %v6830 = vmul.f32 %v6829, 1.442695
    %v6831 = vpow.pop %v6830
    %v6832 = vadd.f32 %v6831, 1.0
    %v6833 = vrcp.pop %v6832
    %v6834 = vmul.f32 1.0, %v6833
    %v6835 = vtanh.pop %v6821
    %v6836 = vxor.u32 %v6822, 2147483648
    %v6837 = vmul.f32 %v6836, 1.442695
    %v6838 = vpow.pop %v6837
    %v6839 = vadd.f32 %v6838, 1.0
    %v6840 = vrcp.pop %v6839
    %v6841 = vmul.f32 1.0, %v6840
    %v6843 = vrot.slane %v6659, 6
    %v6845 = vmul.f32 %v6834, %v6843
    %v6846 = vmul.f32 %v6828, %v6835
    %v6847 = vadd.f32 %v6845, %v6846
    %v6848 = vtanh.pop %v6847
    %v6849 = vmul.f32 %v6841, %v6848
    %v6851 = vrot.slane %v6849, 4
    %6853 = vmatprep.subr.mxu0 %v5321
    %6854 = vmatpush1.msra.mxu0 %v5320
    %6855 = vmatprep.subr.mxu0 %v5317
    %6856 = vmatpush1.msra.mxu0 %v5316
    %6857 = vmatprep.subr.mxu0 %v5313
    %6858 = vmatpush1.msra.mxu0 %v5312
    %6859 = vmatprep.subr.mxu0 %v5309
    %6860 = vmatpush1.msra.mxu0 %v5308
    %6861 = vmatprep.subr.mxu0 %v5305
    %6862 = vmatpush1.msra.mxu0 %v5304
    %6863 = vmatprep.subr.mxu0 %v5301
    %6864 = vmatpush1.msra.mxu0 %v5300
    %6865 = vmatprep.subr.mxu0 %v5297
    %6866 = vmatpush1.msra.mxu0 %v5296
    %6867 = vmatprep.subr.mxu0 %v5293
    %6868 = vmatpush1.msra.mxu0 %v5292
    %6869 = vmatprep.subr.mxu0 %v5289
    %6870 = vmatpush1.msra.mxu0 %v5288
    %6871 = vmatprep.subr.mxu0 %v5285
    %6872 = vmatpush1.msra.mxu0 %v5284
    %6873 = vmatprep.subr.mxu0 %v5281
    %6874 = vmatpush1.msra.mxu0 %v5280
    %6875 = vmatprep.subr.mxu0 %v5277
    %6876 = vmatpush1.msra.mxu0 %v5276
    %6877 = vmatprep.subr.mxu0 %v5273
    %6878 = vmatpush1.msra.mxu0 %v5272
    %6879 = vmatprep.subr.mxu0 %v5269
    %6880 = vmatpush1.msra.mxu0 %v5268
    %6881 = vmatprep.subr.mxu0 %v5265
    %6882 = vmatpush1.msra.mxu0 %v5264
    %6883 = vmatprep.subr.mxu0 %v5261
    %6884 = vmatpush1.msra.mxu0 %v5260
    %6885 = vmatprep.subr.mxu0 0.0
    %6886 = vmatpush2.msra.mxu0 0.0
    %6887 = vmatprep.subr.mxu0 0.0
    %6888 = vmatpush2.msra.mxu0 0.0
    %6889 = vmatprep.subr.mxu0 0.0
    %6890 = vmatpush2.msra.mxu0 0.0
    %6891 = vmatprep.subr.mxu0 0.0
    %6892 = vmatpush2.msra.mxu0 0.0
    %6893 = vmatprep.subr.mxu0 0.0
    %6894 = vmatpush2.msra.mxu0 0.0
    %6895 = vmatprep.subr.mxu0 0.0
    %6896 = vmatpush2.msra.mxu0 0.0
    %6897 = vmatprep.subr.mxu0 0.0
    %6898 = vmatpush2.msra.mxu0 0.0
    %6899 = vmatprep.subr.mxu0 0.0
    %6900 = vmatpush2.msra.mxu0 0.0
    %6901 = vmatprep.subr.mxu0 0.0
    %6902 = vmatpush2.msra.mxu0 0.0
    %6903 = vmatprep.subr.mxu0 0.0
    %6904 = vmatpush2.msra.mxu0 0.0
    %6905 = vmatprep.subr.mxu0 0.0
    %6906 = vmatpush2.msra.mxu0 0.0
    %6907 = vmatprep.subr.mxu0 0.0
    %6908 = vmatpush2.msra.mxu0 0.0
    %6909 = vmatprep.subr.mxu0 0.0
    %6910 = vmatpush2.msra.mxu0 0.0
    %6911 = vmatprep.subr.mxu0 0.0
    %6912 = vmatpush2.msra.mxu0 0.0
    %6913 = vmatprep.subr.mxu0 0.0
    %6914 = vmatpush2.msra.mxu0 0.0
    %6915 = vmatprep.subr.mxu0 0.0
    %6916 = vmatpush2.msra.mxu0 0.0
    %6917 = vmatprep.mubr.f32.mxu0 0.0
    %6918 = vmatmul.mubr.f32.gmra.mxu0 %v6851
    %v6919 = vpop.f32.mrf.mxu0
    %v6920 = vadd.f32 0.0, %v6919
    %v6921 = vpop.f32.mrf.mxu0
    %v6922 = vadd.f32 0.0, %v6921
    %6923 = vdwg.mxu0
    %6924 = vmatprep.subr.mxu0 %v5323
    %6925 = vmatpush1.msra.mxu0 %v5322
    %6926 = vmatprep.subr.mxu0 %v5319
    %6927 = vmatpush1.msra.mxu0 %v5318
    %6928 = vmatprep.subr.mxu0 %v5315
    %6929 = vmatpush1.msra.mxu0 %v5314
    %6930 = vmatprep.subr.mxu0 %v5311
    %6931 = vmatpush1.msra.mxu0 %v5310
    %6932 = vmatprep.subr.mxu0 %v5307
    %6933 = vmatpush1.msra.mxu0 %v5306
    %6934 = vmatprep.subr.mxu0 %v5303
    %6935 = vmatpush1.msra.mxu0 %v5302
    %6936 = vmatprep.subr.mxu0 %v5299
    %6937 = vmatpush1.msra.mxu0 %v5298
    %6938 = vmatprep.subr.mxu0 %v5295
    %6939 = vmatpush1.msra.mxu0 %v5294
    %6940 = vmatprep.subr.mxu0 %v5291
    %6941 = vmatpush1.msra.mxu0 %v5290
    %6942 = vmatprep.subr.mxu0 %v5287
    %6943 = vmatpush1.msra.mxu0 %v5286
    %6944 = vmatprep.subr.mxu0 %v5283
    %6945 = vmatpush1.msra.mxu0 %v5282
    %6946 = vmatprep.subr.mxu0 %v5279
    %6947 = vmatpush1.msra.mxu0 %v5278
    %6948 = vmatprep.subr.mxu0 %v5275
    %6949 = vmatpush1.msra.mxu0 %v5274
    %6950 = vmatprep.subr.mxu0 %v5271
    %6951 = vmatpush1.msra.mxu0 %v5270
    %6952 = vmatprep.subr.mxu0 %v5267
    %6953 = vmatpush1.msra.mxu0 %v5266
    %6954 = vmatprep.subr.mxu0 %v5263
    %6955 = vmatpush1.msra.mxu0 %v5262
    %6956 = vmatprep.subr.mxu0 0.0
    %6957 = vmatpush2.msra.mxu0 0.0
    %6958 = vmatprep.subr.mxu0 0.0
    %6959 = vmatpush2.msra.mxu0 0.0
    %6960 = vmatprep.subr.mxu0 0.0
    %6961 = vmatpush2.msra.mxu0 0.0
    %6962 = vmatprep.subr.mxu0 0.0
    %6963 = vmatpush2.msra.mxu0 0.0
    %6964 = vmatprep.subr.mxu0 0.0
    %6965 = vmatpush2.msra.mxu0 0.0
    %6966 = vmatprep.subr.mxu0 0.0
    %6967 = vmatpush2.msra.mxu0 0.0
    %6968 = vmatprep.subr.mxu0 0.0
    %6969 = vmatpush2.msra.mxu0 0.0
    %6970 = vmatprep.subr.mxu0 0.0
    %6971 = vmatpush2.msra.mxu0 0.0
    %6972 = vmatprep.subr.mxu0 0.0
    %6973 = vmatpush2.msra.mxu0 0.0
    %6974 = vmatprep.subr.mxu0 0.0
    %6975 = vmatpush2.msra.mxu0 0.0
    %6976 = vmatprep.subr.mxu0 0.0
    %6977 = vmatpush2.msra.mxu0 0.0
    %6978 = vmatprep.subr.mxu0 0.0
    %6979 = vmatpush2.msra.mxu0 0.0
    %6980 = vmatprep.subr.mxu0 0.0
    %6981 = vmatpush2.msra.mxu0 0.0
    %6982 = vmatprep.subr.mxu0 0.0
    %6983 = vmatpush2.msra.mxu0 0.0
    %6984 = vmatprep.subr.mxu0 0.0
    %6985 = vmatpush2.msra.mxu0 0.0
    %6986 = vmatprep.subr.mxu0 0.0
    %6987 = vmatpush2.msra.mxu0 0.0
    %6988 = vmatprep.mubr.f32.mxu0 0.0
    %6989 = vmatmul.mubr.f32.gmra.mxu0 %v6851
    %v6990 = vpop.f32.mrf.mxu0
    %v6991 = vadd.f32 0.0, %v6990
    %v6992 = vpop.f32.mrf.mxu0
    %v6993 = vadd.f32 0.0, %v6992
    %6994 = vdwg.mxu0
    %v6999 = vrot.slane %v6920, 2
    %v7000 = vrot.slane %v6922, 2
    %v7001 = vrot.slane %v6991, 2
    %v7002 = vrot.slane %v6993, 2
    %v7007 = vadd.f32 %v5009, %v6999
    %v7008 = vadd.f32 %v5011, %v7000
    %v7009 = vadd.f32 %v5092, %v7001
    %v7010 = vadd.f32 %v5094, %v7002
    %v7011 = vxor.u32 %v7007, 2147483648
    %v7012 = vmul.f32 %v7011, 1.442695
    %v7013 = vpow.pop %v7012
    %v7014 = vadd.f32 %v7013, 1.0
    %v7015 = vrcp.pop %v7014
    %v7016 = vmul.f32 1.0, %v7015
    %v7017 = vxor.u32 %v7008, 2147483648
    %v7018 = vmul.f32 %v7017, 1.442695
    %v7019 = vpow.pop %v7018
    %v7020 = vadd.f32 %v7019, 1.0
    %v7021 = vrcp.pop %v7020
    %v7022 = vmul.f32 1.0, %v7021
    %v7023 = vtanh.pop %v7009
    %v7024 = vxor.u32 %v7010, 2147483648
    %v7025 = vmul.f32 %v7024, 1.442695
    %v7026 = vpow.pop %v7025
    %v7027 = vadd.f32 %v7026, 1.0
    %v7028 = vrcp.pop %v7027
    %v7029 = vmul.f32 1.0, %v7028
    %v7031 = vrot.slane %v6847, 6
    %v7033 = vmul.f32 %v7022, %v7031
    %v7034 = vmul.f32 %v7016, %v7023
    %v7035 = vadd.f32 %v7033, %v7034
    %v7036 = vtanh.pop %v7035
    %v7037 = vmul.f32 %v7029, %v7036
    %v7039 = vrot.slane %v7037, 6
    %7041 = vmatprep.subr.mxu0 %v5321
    %7042 = vmatpush1.msra.mxu0 %v5320
    %7043 = vmatprep.subr.mxu0 %v5317
    %7044 = vmatpush1.msra.mxu0 %v5316
    %7045 = vmatprep.subr.mxu0 %v5313
    %7046 = vmatpush1.msra.mxu0 %v5312
    %7047 = vmatprep.subr.mxu0 %v5309
    %7048 = vmatpush1.msra.mxu0 %v5308
    %7049 = vmatprep.subr.mxu0 %v5305
    %7050 = vmatpush1.msra.mxu0 %v5304
    %7051 = vmatprep.subr.mxu0 %v5301
    %7052 = vmatpush1.msra.mxu0 %v5300
    %7053 = vmatprep.subr.mxu0 %v5297
    %7054 = vmatpush1.msra.mxu0 %v5296
    %7055 = vmatprep.subr.mxu0 %v5293
    %7056 = vmatpush1.msra.mxu0 %v5292
    %7057 = vmatprep.subr.mxu0 %v5289
    %7058 = vmatpush1.msra.mxu0 %v5288
    %7059 = vmatprep.subr.mxu0 %v5285
    %7060 = vmatpush1.msra.mxu0 %v5284
    %7061 = vmatprep.subr.mxu0 %v5281
    %7062 = vmatpush1.msra.mxu0 %v5280
    %7063 = vmatprep.subr.mxu0 %v5277
    %7064 = vmatpush1.msra.mxu0 %v5276
    %7065 = vmatprep.subr.mxu0 %v5273
    %7066 = vmatpush1.msra.mxu0 %v5272
    %7067 = vmatprep.subr.mxu0 %v5269
    %7068 = vmatpush1.msra.mxu0 %v5268
    %7069 = vmatprep.subr.mxu0 %v5265
    %7070 = vmatpush1.msra.mxu0 %v5264
    %7071 = vmatprep.subr.mxu0 %v5261
    %7072 = vmatpush1.msra.mxu0 %v5260
    %7073 = vmatprep.subr.mxu0 0.0
    %7074 = vmatpush2.msra.mxu0 0.0
    %7075 = vmatprep.subr.mxu0 0.0
    %7076 = vmatpush2.msra.mxu0 0.0
    %7077 = vmatprep.subr.mxu0 0.0
    %7078 = vmatpush2.msra.mxu0 0.0
    %7079 = vmatprep.subr.mxu0 0.0
    %7080 = vmatpush2.msra.mxu0 0.0
    %7081 = vmatprep.subr.mxu0 0.0
    %7082 = vmatpush2.msra.mxu0 0.0
    %7083 = vmatprep.subr.mxu0 0.0
    %7084 = vmatpush2.msra.mxu0 0.0
    %7085 = vmatprep.subr.mxu0 0.0
    %7086 = vmatpush2.msra.mxu0 0.0
    %7087 = vmatprep.subr.mxu0 0.0
    %7088 = vmatpush2.msra.mxu0 0.0
    %7089 = vmatprep.subr.mxu0 0.0
    %7090 = vmatpush2.msra.mxu0 0.0
    %7091 = vmatprep.subr.mxu0 0.0
    %7092 = vmatpush2.msra.mxu0 0.0
    %7093 = vmatprep.subr.mxu0 0.0
    %7094 = vmatpush2.msra.mxu0 0.0
    %7095 = vmatprep.subr.mxu0 0.0
    %7096 = vmatpush2.msra.mxu0 0.0
    %7097 = vmatprep.subr.mxu0 0.0
    %7098 = vmatpush2.msra.mxu0 0.0
    %7099 = vmatprep.subr.mxu0 0.0
    %7100 = vmatpush2.msra.mxu0 0.0
    %7101 = vmatprep.subr.mxu0 0.0
    %7102 = vmatpush2.msra.mxu0 0.0
    %7103 = vmatprep.subr.mxu0 0.0
    %7104 = vmatpush2.msra.mxu0 0.0
    %7105 = vmatprep.mubr.f32.mxu0 0.0
    %7106 = vmatmul.mubr.f32.gmra.mxu0 %v7039
    %v7107 = vpop.f32.mrf.mxu0
    %v7108 = vadd.f32 0.0, %v7107
    %v7109 = vpop.f32.mrf.mxu0
    %v7110 = vadd.f32 0.0, %v7109
    %7111 = vdwg.mxu0
    %7112 = vmatprep.subr.mxu0 %v5323
    %7113 = vmatpush1.msra.mxu0 %v5322
    %7114 = vmatprep.subr.mxu0 %v5319
    %7115 = vmatpush1.msra.mxu0 %v5318
    %7116 = vmatprep.subr.mxu0 %v5315
    %7117 = vmatpush1.msra.mxu0 %v5314
    %7118 = vmatprep.subr.mxu0 %v5311
    %7119 = vmatpush1.msra.mxu0 %v5310
    %7120 = vmatprep.subr.mxu0 %v5307
    %7121 = vmatpush1.msra.mxu0 %v5306
    %7122 = vmatprep.subr.mxu0 %v5303
    %7123 = vmatpush1.msra.mxu0 %v5302
    %7124 = vmatprep.subr.mxu0 %v5299
    %7125 = vmatpush1.msra.mxu0 %v5298
    %7126 = vmatprep.subr.mxu0 %v5295
    %7127 = vmatpush1.msra.mxu0 %v5294
    %7128 = vmatprep.subr.mxu0 %v5291
    %7129 = vmatpush1.msra.mxu0 %v5290
    %7130 = vmatprep.subr.mxu0 %v5287
    %7131 = vmatpush1.msra.mxu0 %v5286
    %7132 = vmatprep.subr.mxu0 %v5283
    %7133 = vmatpush1.msra.mxu0 %v5282
    %7134 = vmatprep.subr.mxu0 %v5279
    %7135 = vmatpush1.msra.mxu0 %v5278
    %7136 = vmatprep.subr.mxu0 %v5275
    %7137 = vmatpush1.msra.mxu0 %v5274
    %7138 = vmatprep.subr.mxu0 %v5271
    %7139 = vmatpush1.msra.mxu0 %v5270
    %7140 = vmatprep.subr.mxu0 %v5267
    %7141 = vmatpush1.msra.mxu0 %v5266
    %7142 = vmatprep.subr.mxu0 %v5263
    %7143 = vmatpush1.msra.mxu0 %v5262
    %7144 = vmatprep.subr.mxu0 0.0
    %7145 = vmatpush2.msra.mxu0 0.0
    %7146 = vmatprep.subr.mxu0 0.0
    %7147 = vmatpush2.msra.mxu0 0.0
    %7148 = vmatprep.subr.mxu0 0.0
    %7149 = vmatpush2.msra.mxu0 0.0
    %7150 = vmatprep.subr.mxu0 0.0
    %7151 = vmatpush2.msra.mxu0 0.0
    %7152 = vmatprep.subr.mxu0 0.0
    %7153 = vmatpush2.msra.mxu0 0.0
    %7154 = vmatprep.subr.mxu0 0.0
    %7155 = vmatpush2.msra.mxu0 0.0
    %7156 = vmatprep.subr.mxu0 0.0
    %7157 = vmatpush2.msra.mxu0 0.0
    %7158 = vmatprep.subr.mxu0 0.0
    %7159 = vmatpush2.msra.mxu0 0.0
    %7160 = vmatprep.subr.mxu0 0.0
    %7161 = vmatpush2.msra.mxu0 0.0
    %7162 = vmatprep.subr.mxu0 0.0
    %7163 = vmatpush2.msra.mxu0 0.0
    %7164 = vmatprep.subr.mxu0 0.0
    %7165 = vmatpush2.msra.mxu0 0.0
    %7166 = vmatprep.subr.mxu0 0.0
    %7167 = vmatpush2.msra.mxu0 0.0
    %7168 = vmatprep.subr.mxu0 0.0
    %7169 = vmatpush2.msra.mxu0 0.0
    %7170 = vmatprep.subr.mxu0 0.0
    %7171 = vmatpush2.msra.mxu0 0.0
    %7172 = vmatprep.subr.mxu0 0.0
    %7173 = vmatpush2.msra.mxu0 0.0
    %7174 = vmatprep.subr.mxu0 0.0
    %7175 = vmatpush2.msra.mxu0 0.0
    %7176 = vmatprep.mubr.f32.mxu0 0.0
    %7177 = vmatmul.mubr.f32.gmra.mxu0 %v7039
    %v7178 = vpop.f32.mrf.mxu0
    %v7179 = vadd.f32 0.0, %v7178
    %v7180 = vpop.f32.mrf.mxu0
    %v7181 = vadd.f32 0.0, %v7180
    %7182 = vdwg.mxu0
    %v7183 = vadd.f32 %v5015, %v7108
    %v7184 = vadd.f32 %v5017, %v7110
    %v7185 = vadd.f32 %v5098, %v7179
    %v7186 = vadd.f32 %v5100, %v7181
    %v7187 = vxor.u32 %v7183, 2147483648
    %v7188 = vmul.f32 %v7187, 1.442695
    %v7189 = vpow.pop %v7188
    %v7190 = vadd.f32 %v7189, 1.0
    %v7191 = vrcp.pop %v7190
    %v7192 = vmul.f32 1.0, %v7191
    %v7193 = vxor.u32 %v7184, 2147483648
    %v7194 = vmul.f32 %v7193, 1.442695
    %v7195 = vpow.pop %v7194
    %v7196 = vadd.f32 %v7195, 1.0
    %v7197 = vrcp.pop %v7196
    %v7198 = vmul.f32 1.0, %v7197
    %v7199 = vtanh.pop %v7185
    %v7200 = vxor.u32 %v7186, 2147483648
    %v7201 = vmul.f32 %v7200, 1.442695
    %v7202 = vpow.pop %v7201
    %v7203 = vadd.f32 %v7202, 1.0
    %v7204 = vrcp.pop %v7203
    %v7205 = vmul.f32 1.0, %v7204
    %v7207 = vrot.slane %v7035, 6
    %v7209 = vmul.f32 %v7198, %v7207
    %v7210 = vmul.f32 %v7192, %v7199
    %v7211 = vadd.f32 %v7209, %v7210
    %v7212 = vtanh.pop %v7211
    %v7213 = vmul.f32 %v7205, %v7212
    %7214 = vmatprep.subr.mxu0 %v5321
    %7215 = vmatpush1.msra.mxu0 %v5320
    %7216 = vmatprep.subr.mxu0 %v5317
    %7217 = vmatpush1.msra.mxu0 %v5316
    %7218 = vmatprep.subr.mxu0 %v5313
    %7219 = vmatpush1.msra.mxu0 %v5312
    %7220 = vmatprep.subr.mxu0 %v5309
    %7221 = vmatpush1.msra.mxu0 %v5308
    %7222 = vmatprep.subr.mxu0 %v5305
    %7223 = vmatpush1.msra.mxu0 %v5304
    %7224 = vmatprep.subr.mxu0 %v5301
    %7225 = vmatpush1.msra.mxu0 %v5300
    %7226 = vmatprep.subr.mxu0 %v5297
    %7227 = vmatpush1.msra.mxu0 %v5296
    %7228 = vmatprep.subr.mxu0 %v5293
    %7229 = vmatpush1.msra.mxu0 %v5292
    %7230 = vmatprep.subr.mxu0 %v5289
    %7231 = vmatpush1.msra.mxu0 %v5288
    %7232 = vmatprep.subr.mxu0 %v5285
    %7233 = vmatpush1.msra.mxu0 %v5284
    %7234 = vmatprep.subr.mxu0 %v5281
    %7235 = vmatpush1.msra.mxu0 %v5280
    %7236 = vmatprep.subr.mxu0 %v5277
    %7237 = vmatpush1.msra.mxu0 %v5276
    %7238 = vmatprep.subr.mxu0 %v5273
    %7239 = vmatpush1.msra.mxu0 %v5272
    %7240 = vmatprep.subr.mxu0 %v5269
    %7241 = vmatpush1.msra.mxu0 %v5268
    %7242 = vmatprep.subr.mxu0 %v5265
    %7243 = vmatpush1.msra.mxu0 %v5264
    %7244 = vmatprep.subr.mxu0 %v5261
    %7245 = vmatpush1.msra.mxu0 %v5260
    %7246 = vmatprep.subr.mxu0 0.0
    %7247 = vmatpush2.msra.mxu0 0.0
    %7248 = vmatprep.subr.mxu0 0.0
    %7249 = vmatpush2.msra.mxu0 0.0
    %7250 = vmatprep.subr.mxu0 0.0
    %7251 = vmatpush2.msra.mxu0 0.0
    %7252 = vmatprep.subr.mxu0 0.0
    %7253 = vmatpush2.msra.mxu0 0.0
    %7254 = vmatprep.subr.mxu0 0.0
    %7255 = vmatpush2.msra.mxu0 0.0
    %7256 = vmatprep.subr.mxu0 0.0
    %7257 = vmatpush2.msra.mxu0 0.0
    %7258 = vmatprep.subr.mxu0 0.0
    %7259 = vmatpush2.msra.mxu0 0.0
    %7260 = vmatprep.subr.mxu0 0.0
    %7261 = vmatpush2.msra.mxu0 0.0
    %7262 = vmatprep.subr.mxu0 0.0
    %7263 = vmatpush2.msra.mxu0 0.0
    %7264 = vmatprep.subr.mxu0 0.0
    %7265 = vmatpush2.msra.mxu0 0.0
    %7266 = vmatprep.subr.mxu0 0.0
    %7267 = vmatpush2.msra.mxu0 0.0
    %7268 = vmatprep.subr.mxu0 0.0
    %7269 = vmatpush2.msra.mxu0 0.0
    %7270 = vmatprep.subr.mxu0 0.0
    %7271 = vmatpush2.msra.mxu0 0.0
    %7272 = vmatprep.subr.mxu0 0.0
    %7273 = vmatpush2.msra.mxu0 0.0
    %7274 = vmatprep.subr.mxu0 0.0
    %7275 = vmatpush2.msra.mxu0 0.0
    %7276 = vmatprep.subr.mxu0 0.0
    %7277 = vmatpush2.msra.mxu0 0.0
    %7278 = vmatprep.mubr.f32.mxu0 0.0
    %7279 = vmatmul.mubr.f32.gmra.mxu0 %v7213
    %v7280 = vpop.f32.mrf.mxu0
    %v7281 = vadd.f32 0.0, %v7280
    %v7282 = vpop.f32.mrf.mxu0
    %v7283 = vadd.f32 0.0, %v7282
    %7284 = vdwg.mxu0
    %7285 = vmatprep.subr.mxu0 %v5323
    %7286 = vmatpush1.msra.mxu0 %v5322
    %7287 = vmatprep.subr.mxu0 %v5319
    %7288 = vmatpush1.msra.mxu0 %v5318
    %7289 = vmatprep.subr.mxu0 %v5315
    %7290 = vmatpush1.msra.mxu0 %v5314
    %7291 = vmatprep.subr.mxu0 %v5311
    %7292 = vmatpush1.msra.mxu0 %v5310
    %7293 = vmatprep.subr.mxu0 %v5307
    %7294 = vmatpush1.msra.mxu0 %v5306
    %7295 = vmatprep.subr.mxu0 %v5303
    %7296 = vmatpush1.msra.mxu0 %v5302
    %7297 = vmatprep.subr.mxu0 %v5299
    %7298 = vmatpush1.msra.mxu0 %v5298
    %7299 = vmatprep.subr.mxu0 %v5295
    %7300 = vmatpush1.msra.mxu0 %v5294
    %7301 = vmatprep.subr.mxu0 %v5291
    %7302 = vmatpush1.msra.mxu0 %v5290
    %7303 = vmatprep.subr.mxu0 %v5287
    %7304 = vmatpush1.msra.mxu0 %v5286
    %7305 = vmatprep.subr.mxu0 %v5283
    %7306 = vmatpush1.msra.mxu0 %v5282
    %7307 = vmatprep.subr.mxu0 %v5279
    %7308 = vmatpush1.msra.mxu0 %v5278
    %7309 = vmatprep.subr.mxu0 %v5275
    %7310 = vmatpush1.msra.mxu0 %v5274
    %7311 = vmatprep.subr.mxu0 %v5271
    %7312 = vmatpush1.msra.mxu0 %v5270
    %7313 = vmatprep.subr.mxu0 %v5267
    %7314 = vmatpush1.msra.mxu0 %v5266
    %7315 = vmatprep.subr.mxu0 %v5263
    %7316 = vmatpush1.msra.mxu0 %v5262
    %7317 = vmatprep.subr.mxu0 0.0
    %7318 = vmatpush2.msra.mxu0 0.0
    %7319 = vmatprep.subr.mxu0 0.0
    %7320 = vmatpush2.msra.mxu0 0.0
    %7321 = vmatprep.subr.mxu0 0.0
    %7322 = vmatpush2.msra.mxu0 0.0
    %7323 = vmatprep.subr.mxu0 0.0
    %7324 = vmatpush2.msra.mxu0 0.0
    %7325 = vmatprep.subr.mxu0 0.0
    %7326 = vmatpush2.msra.mxu0 0.0
    %7327 = vmatprep.subr.mxu0 0.0
    %7328 = vmatpush2.msra.mxu0 0.0
    %7329 = vmatprep.subr.mxu0 0.0
    %7330 = vmatpush2.msra.mxu0 0.0
    %7331 = vmatprep.subr.mxu0 0.0
    %7332 = vmatpush2.msra.mxu0 0.0
    %7333 = vmatprep.subr.mxu0 0.0
    %7334 = vmatpush2.msra.mxu0 0.0
    %7335 = vmatprep.subr.mxu0 0.0
    %7336 = vmatpush2.msra.mxu0 0.0
    %7337 = vmatprep.subr.mxu0 0.0
    %7338 = vmatpush2.msra.mxu0 0.0
    %7339 = vmatprep.subr.mxu0 0.0
    %7340 = vmatpush2.msra.mxu0 0.0
    %7341 = vmatprep.subr.mxu0 0.0
    %7342 = vmatpush2.msra.mxu0 0.0
    %7343 = vmatprep.subr.mxu0 0.0
    %7344 = vmatpush2.msra.mxu0 0.0
    %7345 = vmatprep.subr.mxu0 0.0
    %7346 = vmatpush2.msra.mxu0 0.0
    %7347 = vmatprep.subr.mxu0 0.0
    %7348 = vmatpush2.msra.mxu0 0.0
    %7349 = vmatprep.mubr.f32.mxu0 0.0
    %7350 = vmatmul.mubr.f32.gmra.mxu0 %v7213
    %v7351 = vpop.f32.mrf.mxu0
    %v7352 = vadd.f32 0.0, %v7351
    %v7353 = vpop.f32.mrf.mxu0
    %v7354 = vadd.f32 0.0, %v7353
    %7355 = vdwg.mxu0
    %v7360 = vrot.slane %v7281, 6
    %v7361 = vrot.slane %v7283, 6
    %v7362 = vrot.slane %v7352, 6
    %v7363 = vrot.slane %v7354, 6
    %v7368 = vadd.f32 %v5015, %v7360
    %v7369 = vadd.f32 %v5017, %v7361
    %v7370 = vadd.f32 %v5098, %v7362
    %v7371 = vadd.f32 %v5100, %v7363
    %v7372 = vxor.u32 %v7368, 2147483648
    %v7373 = vmul.f32 %v7372, 1.442695
    %v7374 = vpow.pop %v7373
    %v7375 = vadd.f32 %v7374, 1.0
    %v7376 = vrcp.pop %v7375
    %v7377 = vmul.f32 1.0, %v7376
    %v7378 = vxor.u32 %v7369, 2147483648
    %v7379 = vmul.f32 %v7378, 1.442695
    %v7380 = vpow.pop %v7379
    %v7381 = vadd.f32 %v7380, 1.0
    %v7382 = vrcp.pop %v7381
    %v7383 = vmul.f32 1.0, %v7382
    %v7384 = vtanh.pop %v7370
    %v7385 = vxor.u32 %v7371, 2147483648
    %v7386 = vmul.f32 %v7385, 1.442695
    %v7387 = vpow.pop %v7386
    %v7388 = vadd.f32 %v7387, 1.0
    %v7389 = vrcp.pop %v7388
    %v7390 = vmul.f32 1.0, %v7389
    %v7392 = vrot.slane %v7211, 6
    %v7394 = vmul.f32 %v7383, %v7392
    %v7395 = vmul.f32 %v7377, %v7384
    %v7396 = vadd.f32 %v7394, %v7395
    %v7397 = vtanh.pop %v7396
    %v7398 = vmul.f32 %v7390, %v7397
    %v7399 = vld [vmem:[#allocation12] sm:$0xff]
    %v7400 = vld [vmem:[#allocation12 + $0x8] sm:$0xff]
    %v7401 = vld [vmem:[#allocation12 + $0x10] sm:$0xff]
    %v7402 = vld [vmem:[#allocation12 + $0x18] sm:$0xff]
    %v7403 = vld [vmem:[#allocation12 + $0x20] sm:$0xff]
    %v7404 = vld [vmem:[#allocation12 + $0x28] sm:$0xff]
    %v7405 = vld [vmem:[#allocation12 + $0x30] sm:$0xff]
    %v7406 = vld [vmem:[#allocation12 + $0x38] sm:$0xff]
    %v7407 = vld [vmem:[#allocation12 + $0x40] sm:$0xff]
    %v7408 = vld [vmem:[#allocation12 + $0x48] sm:$0xff]
    %v7409 = vld [vmem:[#allocation12 + $0x50] sm:$0xff]
    %v7410 = vld [vmem:[#allocation12 + $0x58] sm:$0xff]
    %v7411 = vld [vmem:[#allocation12 + $0x60] sm:$0xff]
    %v7412 = vld [vmem:[#allocation12 + $0x68] sm:$0xff]
    %v7413 = vld [vmem:[#allocation12 + $0x70] sm:$0xff]
    %v7414 = vld [vmem:[#allocation12 + $0x78] sm:$0xff]
    %v7415 = vld [vmem:[#allocation12 + $0x80] sm:$0xff]
    %v7416 = vld [vmem:[#allocation12 + $0x88] sm:$0xff]
    %v7417 = vld [vmem:[#allocation12 + $0x90] sm:$0xff]
    %v7418 = vld [vmem:[#allocation12 + $0x98] sm:$0xff]
    %v7419 = vld [vmem:[#allocation12 + $0xa0] sm:$0xff]
    %v7420 = vld [vmem:[#allocation12 + $0xa8] sm:$0xff]
    %v7421 = vld [vmem:[#allocation12 + $0xb0] sm:$0xff]
    %v7422 = vld [vmem:[#allocation12 + $0xb8] sm:$0xff]
    %v7423 = vld [vmem:[#allocation12 + $0xc0] sm:$0xff]
    %v7424 = vld [vmem:[#allocation12 + $0xc8] sm:$0xff]
    %v7425 = vld [vmem:[#allocation12 + $0xd0] sm:$0xff]
    %v7426 = vld [vmem:[#allocation12 + $0xd8] sm:$0xff]
    %v7427 = vld [vmem:[#allocation12 + $0xe0] sm:$0xff]
    %v7428 = vld [vmem:[#allocation12 + $0xe8] sm:$0xff]
    %v7429 = vld [vmem:[#allocation12 + $0xf0] sm:$0xff]
    %v7430 = vld [vmem:[#allocation12 + $0xf8] sm:$0xff]
    %v7431 = vld [vmem:[#allocation12 + $0x100] sm:$0xff]
    %v7432 = vld [vmem:[#allocation12 + $0x108] sm:$0xff]
    %v7433 = vld [vmem:[#allocation12 + $0x110] sm:$0xff]
    %v7434 = vld [vmem:[#allocation12 + $0x118] sm:$0xff]
    %v7435 = vld [vmem:[#allocation12 + $0x120] sm:$0xff]
    %v7436 = vld [vmem:[#allocation12 + $0x128] sm:$0xff]
    %v7437 = vld [vmem:[#allocation12 + $0x130] sm:$0xff]
    %v7438 = vld [vmem:[#allocation12 + $0x138] sm:$0xff]
    %v7439 = vld [vmem:[#allocation12 + $0x140] sm:$0xff]
    %v7440 = vld [vmem:[#allocation12 + $0x148] sm:$0xff]
    %v7441 = vld [vmem:[#allocation12 + $0x150] sm:$0xff]
    %v7442 = vld [vmem:[#allocation12 + $0x158] sm:$0xff]
    %v7443 = vld [vmem:[#allocation12 + $0x160] sm:$0xff]
    %v7444 = vld [vmem:[#allocation12 + $0x168] sm:$0xff]
    %v7445 = vld [vmem:[#allocation12 + $0x170] sm:$0xff]
    %v7446 = vld [vmem:[#allocation12 + $0x178] sm:$0xff]
    %v7447 = vld [vmem:[#allocation12 + $0x180] sm:$0xff]
    %v7448 = vld [vmem:[#allocation12 + $0x188] sm:$0xff]
    %v7449 = vld [vmem:[#allocation12 + $0x190] sm:$0xff]
    %v7450 = vld [vmem:[#allocation12 + $0x198] sm:$0xff]
    %v7451 = vld [vmem:[#allocation12 + $0x1a0] sm:$0xff]
    %v7452 = vld [vmem:[#allocation12 + $0x1a8] sm:$0xff]
    %v7453 = vld [vmem:[#allocation12 + $0x1b0] sm:$0xff]
    %v7454 = vld [vmem:[#allocation12 + $0x1b8] sm:$0xff]
    %v7455 = vld [vmem:[#allocation12 + $0x1c0] sm:$0xff]
    %v7456 = vld [vmem:[#allocation12 + $0x1c8] sm:$0xff]
    %v7457 = vld [vmem:[#allocation12 + $0x1d0] sm:$0xff]
    %v7458 = vld [vmem:[#allocation12 + $0x1d8] sm:$0xff]
    %v7459 = vld [vmem:[#allocation12 + $0x1e0] sm:$0xff]
    %v7460 = vld [vmem:[#allocation12 + $0x1e8] sm:$0xff]
    %v7461 = vld [vmem:[#allocation12 + $0x1f0] sm:$0xff]
    %v7462 = vld [vmem:[#allocation12 + $0x1f8] sm:$0xff]
    %v7463 = vld [vmem:[#allocation12 + $0x200] sm:$0xff]
    %v7464 = vld [vmem:[#allocation12 + $0x208] sm:$0xff]
    %v7465 = vld [vmem:[#allocation12 + $0x210] sm:$0xff]
    %v7466 = vld [vmem:[#allocation12 + $0x218] sm:$0xff]
    %v7467 = vld [vmem:[#allocation12 + $0x220] sm:$0xff]
    %v7468 = vld [vmem:[#allocation12 + $0x228] sm:$0xff]
    %v7469 = vld [vmem:[#allocation12 + $0x230] sm:$0xff]
    %v7470 = vld [vmem:[#allocation12 + $0x238] sm:$0xff]
    %v7471 = vld [vmem:[#allocation12 + $0x240] sm:$0xff]
    %v7472 = vld [vmem:[#allocation12 + $0x248] sm:$0xff]
    %v7473 = vld [vmem:[#allocation12 + $0x250] sm:$0xff]
    %v7474 = vld [vmem:[#allocation12 + $0x258] sm:$0xff]
    %v7475 = vld [vmem:[#allocation12 + $0x260] sm:$0xff]
    %v7476 = vld [vmem:[#allocation12 + $0x268] sm:$0xff]
    %v7477 = vld [vmem:[#allocation12 + $0x270] sm:$0xff]
    %v7478 = vld [vmem:[#allocation12 + $0x278] sm:$0xff]
    %v7479 = vld [vmem:[#allocation12 + $0x280] sm:$0xff]
    %v7480 = vld [vmem:[#allocation12 + $0x288] sm:$0xff]
    %v7481 = vld [vmem:[#allocation12 + $0x290] sm:$0xff]
    %v7482 = vld [vmem:[#allocation12 + $0x298] sm:$0xff]
    %v7483 = vld [vmem:[#allocation12 + $0x2a0] sm:$0xff]
    %v7484 = vld [vmem:[#allocation12 + $0x2a8] sm:$0xff]
    %v7485 = vld [vmem:[#allocation12 + $0x2b0] sm:$0xff]
    %v7486 = vld [vmem:[#allocation12 + $0x2b8] sm:$0xff]
    %v7487 = vld [vmem:[#allocation12 + $0x2c0] sm:$0xff]
    %v7488 = vld [vmem:[#allocation12 + $0x2c8] sm:$0xff]
    %v7489 = vld [vmem:[#allocation12 + $0x2d0] sm:$0xff]
    %v7490 = vld [vmem:[#allocation12 + $0x2d8] sm:$0xff]
    %v7491 = vld [vmem:[#allocation12 + $0x2e0] sm:$0xff]
    %v7492 = vld [vmem:[#allocation12 + $0x2e8] sm:$0xff]
    %v7493 = vld [vmem:[#allocation12 + $0x2f0] sm:$0xff]
    %v7494 = vld [vmem:[#allocation12 + $0x2f8] sm:$0xff]
    %v7495 = vld [vmem:[#allocation12 + $0x300] sm:$0xff]
    %v7496 = vld [vmem:[#allocation12 + $0x308] sm:$0xff]
    %v7497 = vld [vmem:[#allocation12 + $0x310] sm:$0xff]
    %v7498 = vld [vmem:[#allocation12 + $0x318] sm:$0xff]
    %v7499 = vld [vmem:[#allocation12 + $0x320] sm:$0xff]
    %v7500 = vld [vmem:[#allocation12 + $0x328] sm:$0xff]
    %v7501 = vld [vmem:[#allocation12 + $0x330] sm:$0xff]
    %v7502 = vld [vmem:[#allocation12 + $0x338] sm:$0xff]
    %v7503 = vld [vmem:[#allocation12 + $0x340] sm:$0xff]
    %v7504 = vld [vmem:[#allocation12 + $0x348] sm:$0xff]
    %v7505 = vld [vmem:[#allocation12 + $0x350] sm:$0xff]
    %v7506 = vld [vmem:[#allocation12 + $0x358] sm:$0xff]
    %v7507 = vld [vmem:[#allocation12 + $0x360] sm:$0xff]
    %v7508 = vld [vmem:[#allocation12 + $0x368] sm:$0xff]
    %v7509 = vld [vmem:[#allocation12 + $0x370] sm:$0xff]
    %v7510 = vld [vmem:[#allocation12 + $0x378] sm:$0xff]
    %v7511 = vld [vmem:[#allocation12 + $0x380] sm:$0xff]
    %v7512 = vld [vmem:[#allocation12 + $0x388] sm:$0xff]
    %v7513 = vld [vmem:[#allocation12 + $0x390] sm:$0xff]
    %v7514 = vld [vmem:[#allocation12 + $0x398] sm:$0xff]
    %v7515 = vld [vmem:[#allocation12 + $0x3a0] sm:$0xff]
    %v7516 = vld [vmem:[#allocation12 + $0x3a8] sm:$0xff]
    %v7517 = vld [vmem:[#allocation12 + $0x3b0] sm:$0xff]
    %v7518 = vld [vmem:[#allocation12 + $0x3b8] sm:$0xff]
    %v7519 = vld [vmem:[#allocation12 + $0x3c0] sm:$0xff]
    %v7520 = vld [vmem:[#allocation12 + $0x3c8] sm:$0xff]
    %v7521 = vld [vmem:[#allocation12 + $0x3d0] sm:$0xff]
    %v7522 = vld [vmem:[#allocation12 + $0x3d8] sm:$0xff]
    %v7523 = vld [vmem:[#allocation12 + $0x3e0] sm:$0xff]
    %v7524 = vld [vmem:[#allocation12 + $0x3e8] sm:$0xff]
    %v7525 = vld [vmem:[#allocation12 + $0x3f0] sm:$0xff]
    %v7526 = vld [vmem:[#allocation12 + $0x3f8] sm:$0xff]
    %v7527 = vld [vmem:[%s14] sm:$0xf]
    %v7529 = vlaneseq
    %v7530 = vshrl.u32 %v7529, 7
    %v7531 = vsub.s32 0, %v7530
    %v7532 = vrot.slane %v7527, %v7531
    %v7533 = vlaneseq
    %v7534 = vshrl.u32 %v7533, 7
    %v7535 = vsub.s32 1, %v7534
    %v7536 = vrot.slane %v7527, %v7535
    %v7537 = vlaneseq
    %v7538 = vshrl.u32 %v7537, 7
    %v7539 = vsub.s32 2, %v7538
    %v7540 = vrot.slane %v7527, %v7539
    %v7541 = vlaneseq
    %v7542 = vshrl.u32 %v7541, 7
    %v7543 = vsub.s32 3, %v7542
    %v7544 = vrot.slane %v7527, %v7543
    %v7551 = vrot.slane %v7398, 2
    %v7552 = vrot.slane %v5739, 2
    %7555 = vmatprep.subr.mxu0 %v7460
    %7556 = vmatpush1.msra.mxu0 %v7459
    %7557 = vmatprep.subr.mxu0 %v7456
    %7558 = vmatpush1.msra.mxu0 %v7455
    %7559 = vmatprep.subr.mxu0 %v7452
    %7560 = vmatpush1.msra.mxu0 %v7451
    %7561 = vmatprep.subr.mxu0 %v7448
    %7562 = vmatpush1.msra.mxu0 %v7447
    %7563 = vmatprep.subr.mxu0 %v7444
    %7564 = vmatpush1.msra.mxu0 %v7443
    %7565 = vmatprep.subr.mxu0 %v7440
    %7566 = vmatpush1.msra.mxu0 %v7439
    %7567 = vmatprep.subr.mxu0 %v7436
    %7568 = vmatpush1.msra.mxu0 %v7435
    %7569 = vmatprep.subr.mxu0 %v7432
    %7570 = vmatpush1.msra.mxu0 %v7431
    %7571 = vmatprep.subr.mxu0 %v7428
    %7572 = vmatpush1.msra.mxu0 %v7427
    %7573 = vmatprep.subr.mxu0 %v7424
    %7574 = vmatpush1.msra.mxu0 %v7423
    %7575 = vmatprep.subr.mxu0 %v7420
    %7576 = vmatpush1.msra.mxu0 %v7419
    %7577 = vmatprep.subr.mxu0 %v7416
    %7578 = vmatpush1.msra.mxu0 %v7415
    %7579 = vmatprep.subr.mxu0 %v7412
    %7580 = vmatpush1.msra.mxu0 %v7411
    %7581 = vmatprep.subr.mxu0 %v7408
    %7582 = vmatpush1.msra.mxu0 %v7407
    %7583 = vmatprep.subr.mxu0 %v7404
    %7584 = vmatpush1.msra.mxu0 %v7403
    %7585 = vmatprep.subr.mxu0 %v7400
    %7586 = vmatpush1.msra.mxu0 %v7399
    %7587 = vmatprep.subr.mxu0 %v7524
    %7588 = vmatpush2.msra.mxu0 %v7523
    %7589 = vmatprep.subr.mxu0 %v7520
    %7590 = vmatpush2.msra.mxu0 %v7519
    %7591 = vmatprep.subr.mxu0 %v7516
    %7592 = vmatpush2.msra.mxu0 %v7515
    %7593 = vmatprep.subr.mxu0 %v7512
    %7594 = vmatpush2.msra.mxu0 %v7511
    %7595 = vmatprep.subr.mxu0 %v7508
    %7596 = vmatpush2.msra.mxu0 %v7507
    %7597 = vmatprep.subr.mxu0 %v7504
    %7598 = vmatpush2.msra.mxu0 %v7503
    %7599 = vmatprep.subr.mxu0 %v7500
    %7600 = vmatpush2.msra.mxu0 %v7499
    %7601 = vmatprep.subr.mxu0 %v7496
    %7602 = vmatpush2.msra.mxu0 %v7495
    %7603 = vmatprep.subr.mxu0 %v7492
    %7604 = vmatpush2.msra.mxu0 %v7491
    %7605 = vmatprep.subr.mxu0 %v7488
    %7606 = vmatpush2.msra.mxu0 %v7487
    %7607 = vmatprep.subr.mxu0 %v7484
    %7608 = vmatpush2.msra.mxu0 %v7483
    %7609 = vmatprep.subr.mxu0 %v7480
    %7610 = vmatpush2.msra.mxu0 %v7479
    %7611 = vmatprep.subr.mxu0 %v7476
    %7612 = vmatpush2.msra.mxu0 %v7475
    %7613 = vmatprep.subr.mxu0 %v7472
    %7614 = vmatpush2.msra.mxu0 %v7471
    %7615 = vmatprep.subr.mxu0 %v7468
    %7616 = vmatpush2.msra.mxu0 %v7467
    %7617 = vmatprep.subr.mxu0 %v7464
    %7618 = vmatpush2.msra.mxu0 %v7463
    %7619 = vmatprep.mubr.f32.mxu0 %v7552
    %7620 = vmatmul.mubr.f32.gmra.mxu0 %v7551
    %v7621 = vpop.f32.mrf.mxu0
    %v7622 = vadd.f32 %v7532, %v7621
    %v7623 = vpop.f32.mrf.mxu0
    %v7624 = vadd.f32 %v7536, %v7623
    %7625 = vdwg.mxu0
    %7626 = vmatprep.subr.mxu0 %v7462
    %7627 = vmatpush1.msra.mxu0 %v7461
    %7628 = vmatprep.subr.mxu0 %v7458
    %7629 = vmatpush1.msra.mxu0 %v7457
    %7630 = vmatprep.subr.mxu0 %v7454
    %7631 = vmatpush1.msra.mxu0 %v7453
    %7632 = vmatprep.subr.mxu0 %v7450
    %7633 = vmatpush1.msra.mxu0 %v7449
    %7634 = vmatprep.subr.mxu0 %v7446
    %7635 = vmatpush1.msra.mxu0 %v7445
    %7636 = vmatprep.subr.mxu0 %v7442
    %7637 = vmatpush1.msra.mxu0 %v7441
    %7638 = vmatprep.subr.mxu0 %v7438
    %7639 = vmatpush1.msra.mxu0 %v7437
    %7640 = vmatprep.subr.mxu0 %v7434
    %7641 = vmatpush1.msra.mxu0 %v7433
    %7642 = vmatprep.subr.mxu0 %v7430
    %7643 = vmatpush1.msra.mxu0 %v7429
    %7644 = vmatprep.subr.mxu0 %v7426
    %7645 = vmatpush1.msra.mxu0 %v7425
    %7646 = vmatprep.subr.mxu0 %v7422
    %7647 = vmatpush1.msra.mxu0 %v7421
    %7648 = vmatprep.subr.mxu0 %v7418
    %7649 = vmatpush1.msra.mxu0 %v7417
    %7650 = vmatprep.subr.mxu0 %v7414
    %7651 = vmatpush1.msra.mxu0 %v7413
    %7652 = vmatprep.subr.mxu0 %v7410
    %7653 = vmatpush1.msra.mxu0 %v7409
    %7654 = vmatprep.subr.mxu0 %v7406
    %7655 = vmatpush1.msra.mxu0 %v7405
    %7656 = vmatprep.subr.mxu0 %v7402
    %7657 = vmatpush1.msra.mxu0 %v7401
    %7658 = vmatprep.subr.mxu0 %v7526
    %7659 = vmatpush2.msra.mxu0 %v7525
    %7660 = vmatprep.subr.mxu0 %v7522
    %7661 = vmatpush2.msra.mxu0 %v7521
    %7662 = vmatprep.subr.mxu0 %v7518
    %7663 = vmatpush2.msra.mxu0 %v7517
    %7664 = vmatprep.subr.mxu0 %v7514
    %7665 = vmatpush2.msra.mxu0 %v7513
    %7666 = vmatprep.subr.mxu0 %v7510
    %7667 = vmatpush2.msra.mxu0 %v7509
    %7668 = vmatprep.subr.mxu0 %v7506
    %7669 = vmatpush2.msra.mxu0 %v7505
    %7670 = vmatprep.subr.mxu0 %v7502
    %7671 = vmatpush2.msra.mxu0 %v7501
    %7672 = vmatprep.subr.mxu0 %v7498
    %7673 = vmatpush2.msra.mxu0 %v7497
    %7674 = vmatprep.subr.mxu0 %v7494
    %7675 = vmatpush2.msra.mxu0 %v7493
    %7676 = vmatprep.subr.mxu0 %v7490
    %7677 = vmatpush2.msra.mxu0 %v7489
    %7678 = vmatprep.subr.mxu0 %v7486
    %7679 = vmatpush2.msra.mxu0 %v7485
    %7680 = vmatprep.subr.mxu0 %v7482
    %7681 = vmatpush2.msra.mxu0 %v7481
    %7682 = vmatprep.subr.mxu0 %v7478
    %7683 = vmatpush2.msra.mxu0 %v7477
    %7684 = vmatprep.subr.mxu0 %v7474
    %7685 = vmatpush2.msra.mxu0 %v7473
    %7686 = vmatprep.subr.mxu0 %v7470
    %7687 = vmatpush2.msra.mxu0 %v7469
    %7688 = vmatprep.subr.mxu0 %v7466
    %7689 = vmatpush2.msra.mxu0 %v7465
    %7690 = vmatprep.mubr.f32.mxu0 %v7552
    %7691 = vmatmul.mubr.f32.gmra.mxu0 %v7551
    %v7692 = vpop.f32.mrf.mxu0
    %v7693 = vadd.f32 %v7540, %v7692
    %v7694 = vpop.f32.mrf.mxu0
    %v7695 = vadd.f32 %v7544, %v7694
    %7696 = vdwg.mxu0
    %v7697 = vmax.f32 %v7622, 0.0
    %v7698 = vmax.f32 %v7624, 0.0
    %v7699 = vmax.f32 %v7693, 0.0
    %v7700 = vmax.f32 %v7695, 0.0
    %v7701 = vld [vmem:[#allocation14] sm:$0xff]
    %v7702 = vld [vmem:[#allocation14 + $0x8] sm:$0xff]
    %v7703 = vld [vmem:[#allocation14 + $0x10] sm:$0xff]
    %v7704 = vld [vmem:[#allocation14 + $0x18] sm:$0xff]
    %v7705 = vld [vmem:[#allocation14 + $0x20] sm:$0xff]
    %v7706 = vld [vmem:[#allocation14 + $0x28] sm:$0xff]
    %v7707 = vld [vmem:[#allocation14 + $0x30] sm:$0xff]
    %v7708 = vld [vmem:[#allocation14 + $0x38] sm:$0xff]
    %v7709 = vld [vmem:[#allocation14 + $0x40] sm:$0xff]
    %v7710 = vld [vmem:[#allocation14 + $0x48] sm:$0xff]
    %v7711 = vld [vmem:[#allocation14 + $0x50] sm:$0xff]
    %v7712 = vld [vmem:[#allocation14 + $0x58] sm:$0xff]
    %v7713 = vld [vmem:[#allocation14 + $0x60] sm:$0xff]
    %v7714 = vld [vmem:[#allocation14 + $0x68] sm:$0xff]
    %v7715 = vld [vmem:[#allocation14 + $0x70] sm:$0xff]
    %v7716 = vld [vmem:[#allocation14 + $0x78] sm:$0xff]
    %v7717 = vld [vmem:[#allocation14 + $0x80] sm:$0xff]
    %v7718 = vld [vmem:[#allocation14 + $0x88] sm:$0xff]
    %v7719 = vld [vmem:[#allocation14 + $0x90] sm:$0xff]
    %v7720 = vld [vmem:[#allocation14 + $0x98] sm:$0xff]
    %v7721 = vld [vmem:[#allocation14 + $0xa0] sm:$0xff]
    %v7722 = vld [vmem:[#allocation14 + $0xa8] sm:$0xff]
    %v7723 = vld [vmem:[#allocation14 + $0xb0] sm:$0xff]
    %v7724 = vld [vmem:[#allocation14 + $0xb8] sm:$0xff]
    %v7725 = vld [vmem:[#allocation14 + $0xc0] sm:$0xff]
    %v7726 = vld [vmem:[#allocation14 + $0xc8] sm:$0xff]
    %v7727 = vld [vmem:[#allocation14 + $0xd0] sm:$0xff]
    %v7728 = vld [vmem:[#allocation14 + $0xd8] sm:$0xff]
    %v7729 = vld [vmem:[#allocation14 + $0xe0] sm:$0xff]
    %v7730 = vld [vmem:[#allocation14 + $0xe8] sm:$0xff]
    %v7731 = vld [vmem:[#allocation14 + $0xf0] sm:$0xff]
    %v7732 = vld [vmem:[#allocation14 + $0xf8] sm:$0xff]
    %v7733 = vld [vmem:[#allocation14 + $0x100] sm:$0xff]
    %v7734 = vld [vmem:[#allocation14 + $0x108] sm:$0xff]
    %v7735 = vld [vmem:[#allocation14 + $0x110] sm:$0xff]
    %v7736 = vld [vmem:[#allocation14 + $0x118] sm:$0xff]
    %v7737 = vld [vmem:[#allocation14 + $0x120] sm:$0xff]
    %v7738 = vld [vmem:[#allocation14 + $0x128] sm:$0xff]
    %v7739 = vld [vmem:[#allocation14 + $0x130] sm:$0xff]
    %v7740 = vld [vmem:[#allocation14 + $0x138] sm:$0xff]
    %v7741 = vld [vmem:[#allocation14 + $0x140] sm:$0xff]
    %v7742 = vld [vmem:[#allocation14 + $0x148] sm:$0xff]
    %v7743 = vld [vmem:[#allocation14 + $0x150] sm:$0xff]
    %v7744 = vld [vmem:[#allocation14 + $0x158] sm:$0xff]
    %v7745 = vld [vmem:[#allocation14 + $0x160] sm:$0xff]
    %v7746 = vld [vmem:[#allocation14 + $0x168] sm:$0xff]
    %v7747 = vld [vmem:[#allocation14 + $0x170] sm:$0xff]
    %v7748 = vld [vmem:[#allocation14 + $0x178] sm:$0xff]
    %v7749 = vld [vmem:[#allocation14 + $0x180] sm:$0xff]
    %v7750 = vld [vmem:[#allocation14 + $0x188] sm:$0xff]
    %v7751 = vld [vmem:[#allocation14 + $0x190] sm:$0xff]
    %v7752 = vld [vmem:[#allocation14 + $0x198] sm:$0xff]
    %v7753 = vld [vmem:[#allocation14 + $0x1a0] sm:$0xff]
    %v7754 = vld [vmem:[#allocation14 + $0x1a8] sm:$0xff]
    %v7755 = vld [vmem:[#allocation14 + $0x1b0] sm:$0xff]
    %v7756 = vld [vmem:[#allocation14 + $0x1b8] sm:$0xff]
    %v7757 = vld [vmem:[#allocation14 + $0x1c0] sm:$0xff]
    %v7758 = vld [vmem:[#allocation14 + $0x1c8] sm:$0xff]
    %v7759 = vld [vmem:[#allocation14 + $0x1d0] sm:$0xff]
    %v7760 = vld [vmem:[#allocation14 + $0x1d8] sm:$0xff]
    %v7761 = vld [vmem:[#allocation14 + $0x1e0] sm:$0xff]
    %v7762 = vld [vmem:[#allocation14 + $0x1e8] sm:$0xff]
    %v7763 = vld [vmem:[#allocation14 + $0x1f0] sm:$0xff]
    %v7764 = vld [vmem:[#allocation14 + $0x1f8] sm:$0xff]
    %v7765 = vld [vmem:[%s16] sm:$0x1]
    %v7767 = vlaneseq
    %v7768 = vshrl.u32 %v7767, 7
    %v7769 = vsub.s32 0, %v7768
    %v7770 = vrot.slane %v7765, %v7769
    %7772 = vmatprep.subr.mxu0 0.0
    %7773 = vmatpush1.msra.mxu0 %v7716
    %7774 = vmatprep.subr.mxu0 0.0
    %7775 = vmatpush1.msra.mxu0 %v7715
    %7776 = vmatprep.subr.mxu0 0.0
    %7777 = vmatpush1.msra.mxu0 %v7714
    %7778 = vmatprep.subr.mxu0 0.0
    %7779 = vmatpush1.msra.mxu0 %v7713
    %7780 = vmatprep.subr.mxu0 0.0
    %7781 = vmatpush1.msra.mxu0 %v7712
    %7782 = vmatprep.subr.mxu0 0.0
    %7783 = vmatpush1.msra.mxu0 %v7711
    %7784 = vmatprep.subr.mxu0 0.0
    %7785 = vmatpush1.msra.mxu0 %v7710
    %7786 = vmatprep.subr.mxu0 0.0
    %7787 = vmatpush1.msra.mxu0 %v7709
    %7788 = vmatprep.subr.mxu0 0.0
    %7789 = vmatpush1.msra.mxu0 %v7708
    %7790 = vmatprep.subr.mxu0 0.0
    %7791 = vmatpush1.msra.mxu0 %v7707
    %7792 = vmatprep.subr.mxu0 0.0
    %7793 = vmatpush1.msra.mxu0 %v7706
    %7794 = vmatprep.subr.mxu0 0.0
    %7795 = vmatpush1.msra.mxu0 %v7705
    %7796 = vmatprep.subr.mxu0 0.0
    %7797 = vmatpush1.msra.mxu0 %v7704
    %7798 = vmatprep.subr.mxu0 0.0
    %7799 = vmatpush1.msra.mxu0 %v7703
    %7800 = vmatprep.subr.mxu0 0.0
    %7801 = vmatpush1.msra.mxu0 %v7702
    %7802 = vmatprep.subr.mxu0 0.0
    %7803 = vmatpush1.msra.mxu0 %v7701
    %7804 = vmatprep.subr.mxu0 0.0
    %7805 = vmatpush2.msra.mxu0 %v7732
    %7806 = vmatprep.subr.mxu0 0.0
    %7807 = vmatpush2.msra.mxu0 %v7731
    %7808 = vmatprep.subr.mxu0 0.0
    %7809 = vmatpush2.msra.mxu0 %v7730
    %7810 = vmatprep.subr.mxu0 0.0
    %7811 = vmatpush2.msra.mxu0 %v7729
    %7812 = vmatprep.subr.mxu0 0.0
    %7813 = vmatpush2.msra.mxu0 %v7728
    %7814 = vmatprep.subr.mxu0 0.0
    %7815 = vmatpush2.msra.mxu0 %v7727
    %7816 = vmatprep.subr.mxu0 0.0
    %7817 = vmatpush2.msra.mxu0 %v7726
    %7818 = vmatprep.subr.mxu0 0.0
    %7819 = vmatpush2.msra.mxu0 %v7725
    %7820 = vmatprep.subr.mxu0 0.0
    %7821 = vmatpush2.msra.mxu0 %v7724
    %7822 = vmatprep.subr.mxu0 0.0
    %7823 = vmatpush2.msra.mxu0 %v7723
    %7824 = vmatprep.subr.mxu0 0.0
    %7825 = vmatpush2.msra.mxu0 %v7722
    %7826 = vmatprep.subr.mxu0 0.0
    %7827 = vmatpush2.msra.mxu0 %v7721
    %7828 = vmatprep.subr.mxu0 0.0
    %7829 = vmatpush2.msra.mxu0 %v7720
    %7830 = vmatprep.subr.mxu0 0.0
    %7831 = vmatpush2.msra.mxu0 %v7719
    %7832 = vmatprep.subr.mxu0 0.0
    %7833 = vmatpush2.msra.mxu0 %v7718
    %7834 = vmatprep.subr.mxu0 0.0
    %7835 = vmatpush2.msra.mxu0 %v7717
    %7836 = vmatprep.mubr.f32.mxu0 %v7698
    %7837 = vmatmul.mubr.f32.gmra.mxu0 %v7697
    %v7838 = vpop.f32.mrf.mxu0
    %v7839 = vadd.f32 %v7770, %v7838
    %v7840 = vpop.f32.mrf.mxu0
    %7841 = vdwg.mxu0
    %7842 = vmatprep.subr.mxu0 0.0
    %7843 = vmatpush1.msra.mxu0 %v7748
    %7844 = vmatprep.subr.mxu0 0.0
    %7845 = vmatpush1.msra.mxu0 %v7747
    %7846 = vmatprep.subr.mxu0 0.0
    %7847 = vmatpush1.msra.mxu0 %v7746
    %7848 = vmatprep.subr.mxu0 0.0
    %7849 = vmatpush1.msra.mxu0 %v7745
    %7850 = vmatprep.subr.mxu0 0.0
    %7851 = vmatpush1.msra.mxu0 %v7744
    %7852 = vmatprep.subr.mxu0 0.0
    %7853 = vmatpush1.msra.mxu0 %v7743
    %7854 = vmatprep.subr.mxu0 0.0
    %7855 = vmatpush1.msra.mxu0 %v7742
    %7856 = vmatprep.subr.mxu0 0.0
    %7857 = vmatpush1.msra.mxu0 %v7741
    %7858 = vmatprep.subr.mxu0 0.0
    %7859 = vmatpush1.msra.mxu0 %v7740
    %7860 = vmatprep.subr.mxu0 0.0
    %7861 = vmatpush1.msra.mxu0 %v7739
    %7862 = vmatprep.subr.mxu0 0.0
    %7863 = vmatpush1.msra.mxu0 %v7738
    %7864 = vmatprep.subr.mxu0 0.0
    %7865 = vmatpush1.msra.mxu0 %v7737
    %7866 = vmatprep.subr.mxu0 0.0
    %7867 = vmatpush1.msra.mxu0 %v7736
    %7868 = vmatprep.subr.mxu0 0.0
    %7869 = vmatpush1.msra.mxu0 %v7735
    %7870 = vmatprep.subr.mxu0 0.0
    %7871 = vmatpush1.msra.mxu0 %v7734
    %7872 = vmatprep.subr.mxu0 0.0
    %7873 = vmatpush1.msra.mxu0 %v7733
    %7874 = vmatprep.subr.mxu0 0.0
    %7875 = vmatpush2.msra.mxu0 %v7764
    %7876 = vmatprep.subr.mxu0 0.0
    %7877 = vmatpush2.msra.mxu0 %v7763
    %7878 = vmatprep.subr.mxu0 0.0
    %7879 = vmatpush2.msra.mxu0 %v7762
    %7880 = vmatprep.subr.mxu0 0.0
    %7881 = vmatpush2.msra.mxu0 %v7761
    %7882 = vmatprep.subr.mxu0 0.0
    %7883 = vmatpush2.msra.mxu0 %v7760
    %7884 = vmatprep.subr.mxu0 0.0
    %7885 = vmatpush2.msra.mxu0 %v7759
    %7886 = vmatprep.subr.mxu0 0.0
    %7887 = vmatpush2.msra.mxu0 %v7758
    %7888 = vmatprep.subr.mxu0 0.0
    %7889 = vmatpush2.msra.mxu0 %v7757
    %7890 = vmatprep.subr.mxu0 0.0
    %7891 = vmatpush2.msra.mxu0 %v7756
    %7892 = vmatprep.subr.mxu0 0.0
    %7893 = vmatpush2.msra.mxu0 %v7755
    %7894 = vmatprep.subr.mxu0 0.0
    %7895 = vmatpush2.msra.mxu0 %v7754
    %7896 = vmatprep.subr.mxu0 0.0
    %7897 = vmatpush2.msra.mxu0 %v7753
    %7898 = vmatprep.subr.mxu0 0.0
    %7899 = vmatpush2.msra.mxu0 %v7752
    %7900 = vmatprep.subr.mxu0 0.0
    %7901 = vmatpush2.msra.mxu0 %v7751
    %7902 = vmatprep.subr.mxu0 0.0
    %7903 = vmatpush2.msra.mxu0 %v7750
    %7904 = vmatprep.subr.mxu0 0.0
    %7905 = vmatpush2.msra.mxu0 %v7749
    %7906 = vmatprep.mubr.f32.mxu0 %v7700
    %7907 = vmatmul.mubr.f32.gmra.mxu0 %v7699
    %v7908 = vpop.f32.mrf.mxu0
    %v7909 = vadd.f32 %v7839, %v7908
    %v7910 = vpop.f32.mrf.mxu0
    %7911 = vdwg.mxu0
    %v7912 = vld [vmem:[%s17] sm:$0xff]
    %v7913 = vld [vmem:[%s17 + $0x8] sm:$0xff]
    %v7914 = vld [vmem:[%s17 + $0x10] sm:$0xff]
    %v7915 = vld [vmem:[%s17 + $0x18] sm:$0xff]
    %v7916 = vld [vmem:[%s17 + $0x20] sm:$0xff]
    %v7917 = vld [vmem:[%s17 + $0x28] sm:$0xff]
    %v7918 = vld [vmem:[%s17 + $0x30] sm:$0xff]
    %v7919 = vld [vmem:[%s17 + $0x38] sm:$0xff]
    %v7920 = vld [vmem:[%s17 + $0x40] sm:$0xff]
    %v7921 = vld [vmem:[%s17 + $0x48] sm:$0xff]
    %v7922 = vld [vmem:[%s17 + $0x50] sm:$0xff]
    %v7923 = vld [vmem:[%s17 + $0x58] sm:$0xff]
    %v7924 = vld [vmem:[%s17 + $0x60] sm:$0xff]
    %v7925 = vld [vmem:[%s17 + $0x68] sm:$0xff]
    %v7926 = vld [vmem:[%s17 + $0x70] sm:$0xff]
    %v7927 = vld [vmem:[%s17 + $0x78] sm:$0xff]
    %v7928 = vld [vmem:[#allocation2] sm:$0x1]
    %v7930 = vlaneseq
    %v7931 = vshrl.u32 %v7930, 7
    %v7932 = vsub.s32 0, %v7931
    %v7933 = vrot.slane %v7928, %v7932
    %7935 = vmatprep.subr.mxu0 0.0
    %7936 = vmatpush1.msra.mxu0 %v7927
    %7937 = vmatprep.subr.mxu0 0.0
    %7938 = vmatpush1.msra.mxu0 %v7926
    %7939 = vmatprep.subr.mxu0 0.0
    %7940 = vmatpush1.msra.mxu0 %v7925
    %7941 = vmatprep.subr.mxu0 0.0
    %7942 = vmatpush1.msra.mxu0 %v7924
    %7943 = vmatprep.subr.mxu0 0.0
    %7944 = vmatpush1.msra.mxu0 %v7923
    %7945 = vmatprep.subr.mxu0 0.0
    %7946 = vmatpush1.msra.mxu0 %v7922
    %7947 = vmatprep.subr.mxu0 0.0
    %7948 = vmatpush1.msra.mxu0 %v7921
    %7949 = vmatprep.subr.mxu0 0.0
    %7950 = vmatpush1.msra.mxu0 %v7920
    %7951 = vmatprep.subr.mxu0 0.0
    %7952 = vmatpush1.msra.mxu0 %v7919
    %7953 = vmatprep.subr.mxu0 0.0
    %7954 = vmatpush1.msra.mxu0 %v7918
    %7955 = vmatprep.subr.mxu0 0.0
    %7956 = vmatpush1.msra.mxu0 %v7917
    %7957 = vmatprep.subr.mxu0 0.0
    %7958 = vmatpush1.msra.mxu0 %v7916
    %7959 = vmatprep.subr.mxu0 0.0
    %7960 = vmatpush1.msra.mxu0 %v7915
    %7961 = vmatprep.subr.mxu0 0.0
    %7962 = vmatpush1.msra.mxu0 %v7914
    %7963 = vmatprep.subr.mxu0 0.0
    %7964 = vmatpush1.msra.mxu0 %v7913
    %7965 = vmatprep.subr.mxu0 0.0
    %7966 = vmatpush1.msra.mxu0 %v7912
    %7967 = vmatprep.subr.mxu0 0.0
    %7968 = vmatpush2.msra.mxu0 0.0
    %7969 = vmatprep.subr.mxu0 0.0
    %7970 = vmatpush2.msra.mxu0 0.0
    %7971 = vmatprep.subr.mxu0 0.0
    %7972 = vmatpush2.msra.mxu0 0.0
    %7973 = vmatprep.subr.mxu0 0.0
    %7974 = vmatpush2.msra.mxu0 0.0
    %7975 = vmatprep.subr.mxu0 0.0
    %7976 = vmatpush2.msra.mxu0 0.0
    %7977 = vmatprep.subr.mxu0 0.0
    %7978 = vmatpush2.msra.mxu0 0.0
    %7979 = vmatprep.subr.mxu0 0.0
    %7980 = vmatpush2.msra.mxu0 0.0
    %7981 = vmatprep.subr.mxu0 0.0
    %7982 = vmatpush2.msra.mxu0 0.0
    %7983 = vmatprep.subr.mxu0 0.0
    %7984 = vmatpush2.msra.mxu0 0.0
    %7985 = vmatprep.subr.mxu0 0.0
    %7986 = vmatpush2.msra.mxu0 0.0
    %7987 = vmatprep.subr.mxu0 0.0
    %7988 = vmatpush2.msra.mxu0 0.0
    %7989 = vmatprep.subr.mxu0 0.0
    %7990 = vmatpush2.msra.mxu0 0.0
    %7991 = vmatprep.subr.mxu0 0.0
    %7992 = vmatpush2.msra.mxu0 0.0
    %7993 = vmatprep.subr.mxu0 0.0
    %7994 = vmatpush2.msra.mxu0 0.0
    %7995 = vmatprep.subr.mxu0 0.0
    %7996 = vmatpush2.msra.mxu0 0.0
    %7997 = vmatprep.subr.mxu0 0.0
    %7998 = vmatpush2.msra.mxu0 0.0
    %7999 = vmatprep.mubr.f32.mxu0 0.0
    %8000 = vmatmul.mubr.f32.gmra.mxu0 %v7909
    %v8001 = vpop.f32.mrf.mxu0
    %v8002 = vadd.f32 %v7933, %v8001
    %v8003 = vpop.f32.mrf.mxu0
    %8004 = vdwg.mxu0
    %8006 = vset.pattern.permute.xlu0 0
    %8007 = vperm.xlu0 %8006, %v8002
    %v8008 = vpop.permute.xlu0 %8007
    %8010 = vst [vmem:[#allocation15] sm:$0x3] %v8008
    // Predicated region
    $region106: #{tpu_custom_call.1} parent=1 // pred_check
      _
    $region107: #{tpu_custom_call.1} parent=1 // pred_check_branch
      %8012 = sbr.rel (0) target = $region109
    $region108: #{tpu_custom_call.1} parent=1 // pred_region
      %s8014 = ssub.s32 32, 32
      %8015 = vsyncadd [#allocation5], %s8014
      %s8017 = sshll.u32 [#allocation15], 4
      %s8018 = int_to_ptr.vmem [resolvable:$true] %s8017
      %8020 = dma.vmem_to_hbm [thread:$0]  %s8018, 32, %s19, [#allocation5]
    $region109: #{tpu_custom_call.1} parent=1 // pred_fallthru
      _
    // Predicated region
    $region110: #{tpu_custom_call.1} parent=1 // pred_check
      _
    $region111: #{tpu_custom_call.1} parent=1 // pred_check_branch
      %8022 = sbr.rel (0) target = $region113
    $region112: #{tpu_custom_call.1} parent=1 // pred_region
      %8023 = dma.done [#allocation5], 32
    $region113: #{tpu_custom_call.1} parent=1 // pred_fallthru
      _
    %8024 = vsyncpa [#allocation4], 1
    %8025 = vsyncpa [#allocation7], 1
    %8026 = vsyncpa [#allocation10], 1
    %8027 = vsyncpa [#allocation13], 1
    %8028 = vsyncpa [#allocation5], 1

</llo_original>
